<compile_context>
chip_gen: v7x
topology: tpu7x:2x2x1
jax: 0.10.0
libtpu: 0.0.40
codegen_flags: <defaults>
</compile_context>

<pallas_src>
import functools

import numpy as np
import jax
import jax.numpy as jnp
from jax import lax
from jax.experimental import pallas as pl
from jax.experimental.pallas import tpu as pltpu


def _tri_mm_kernel(oi_ref, oj_ref, ak_ref,            # scalar prefetch (SMEM)
                   a_ref, b_ref, o_ref, mask_ref,      # VMEM blocks + scratch
                   *, steps_per_core, precision):
    c = pl.program_id(0)
    t = pl.program_id(1)
    s = c * steps_per_core + t

    i = oi_ref[s]                 # output block row
    j = oj_ref[s]                 # output block col
    k_raw = ak_ref[s]             # reduction block index (or no-op sentinel)
    is_pad = k_raw < 0
    k = jnp.maximum(k_raw, -k_raw - 1)   # decode sentinel: -k-1 -> k

    # Build the (bs, bs) lower-triangular 0/1 mask once per core.
    @pl.when(t == 0)
    def _():
        bm, bn = mask_ref.shape
        r = lax.broadcasted_iota(jnp.int32, (bm, bn), 0)
        q = lax.broadcasted_iota(jnp.int32, (bm, bn), 1)
        mask_ref[...] = (r >= q).astype(mask_ref.dtype)

    is_zero_tile = j > i          # strict-upper output tile -> just zero it
    first_k = k == j              # first reduction step of a lower tile
    valid = jnp.logical_not(is_pad)

    # Zero the resident output block on (a) strict-upper "zero" steps and
    # (b) the first reduction step of a lower-triangle tile.
    @pl.when(jnp.logical_and(valid, jnp.logical_or(is_zero_tile, first_k)))
    def _():
        o_ref[...] = jnp.zeros_like(o_ref)

    is_compute = jnp.logical_and(valid, jnp.logical_not(is_zero_tile))
    diag_a = k == i               # A block (i, k) straddles the diagonal
    diag_b = k == j               # B block (k, j) straddles the diagonal
    not_a = jnp.logical_not(diag_a)
    not_b = jnp.logical_not(diag_b)

    @pl.when(jnp.logical_and(is_compute, jnp.logical_and(not_a, not_b)))
    def _():  # interior block: plain MXU dot, no masking work.
        o_ref[...] += jnp.dot(a_ref[...], b_ref[...],
                              preferred_element_type=jnp.float32,
                              precision=precision)

    @pl.when(jnp.logical_and(is_compute, jnp.logical_and(diag_a, not_b)))
    def _():  # only A's block crosses the diagonal (k == i != j).
        o_ref[...] += jnp.dot(a_ref[...] * mask_ref[...], b_ref[...],
                              preferred_element_type=jnp.float32,
                              precision=precision)

    @pl.when(jnp.logical_and(is_compute, jnp.logical_and(not_a, diag_b)))
    def _():  # only B's block crosses the diagonal (k == j != i).
        o_ref[...] += jnp.dot(a_ref[...], b_ref[...] * mask_ref[...],
                              preferred_element_type=jnp.float32,
                              precision=precision)

    @pl.when(jnp.logical_and(is_compute, jnp.logical_and(diag_a, diag_b)))
    def _():  # diagonal output tile (i == j == k): mask both operands.
        o_ref[...] += jnp.dot(a_ref[...] * mask_ref[...],
                              b_ref[...] * mask_ref[...],
                              preferred_element_type=jnp.float32,
                              precision=precision)


@functools.lru_cache(maxsize=None)
def _build_schedule(n_tiles, num_cores):
    """Per-core flattened (oi, oj, ak) step schedules.

    Row i's job = compute steps (i, j, k) for j=0..i, k=j..i, followed by that
    row's strict-upper zero-write steps (block indices repeat -> no input DMA,
    writeback hides under the next row's MXU work).  Rows are greedily packed
    onto `num_cores` cores balanced by MXU work; shorter cores are padded with
    no-op sentinel steps (ak encoded as -k-1) that repeat block indices.
    """
    assert 1 <= num_cores <= n_tiles
    rows, weights = [], []
    for i in range(n_tiles):
        lens = np.arange(i + 1, 0, -1, dtype=np.int64)      # i-j+1 for j=0..i
        n_comp = int(lens.sum())
        j_arr = np.repeat(np.arange(i + 1), lens)
        starts = np.concatenate(([0], np.cumsum(lens)[:-1]))
        k_arr = j_arr + (np.arange(n_comp) - np.repeat(starts, lens))
        i_arr = np.full(n_comp, i)
        nz = n_tiles - 1 - i
        if nz > 0:  # interleaved zero-write steps for this row's upper tiles
            j_arr = np.concatenate([j_arr, np.arange(i + 1, n_tiles)])
            k_arr = np.concatenate([k_arr, np.full(nz, i)])
            i_arr = np.concatenate([i_arr, np.full(nz, i)])
        rows.append((i_arr.astype(np.int32), j_arr.astype(np.int32),
                     k_arr.astype(np.int32)))
        weights.append(4 * n_comp + nz)   # compute steps ~4x cost of zero steps

    order = sorted(range(n_tiles), key=lambda r: -weights[r])
    core_rows = [[] for _ in range(num_cores)]
    core_w = [0] * num_cores
    for r in order:
        c = int(np.argmin(core_w))
        core_rows[c].append(r)
        core_w[c] += weights[r]

    core_arrs = []
    for c in range(num_cores):
        ia = np.concatenate([rows[r][0] for r in core_rows[c]])
        ja = np.concatenate([rows[r][1] for r in core_rows[c]])
        ka = np.concatenate([rows[r][2] for r in core_rows[c]])
        core_arrs.append((ia, ja, ka))

    steps_per_core = max(a[0].shape[0] for a in core_arrs)
    oi = np.empty((num_cores, steps_per_core), np.int32)
    oj = np.empty_like(oi)
    ak = np.empty_like(oi)
    for c, (ia, ja, ka) in enumerate(core_arrs):
        n = ia.shape[0]
        oi[c, :n] = ia
        oj[c, :n] = ja
        ak[c, :n] = ka
        if n < steps_per_core:
            # No-op pads: same block indices as the core's last real step
            # (no DMA), negative-k sentinel (no compute, no store).
            oi[c, n:] = ia[-1]
            oj[c, n:] = ja[-1]
            ak[c, n:] = -int(ka[-1]) - 1
    return oi.reshape(-1), oj.reshape(-1), ak.reshape(-1), steps_per_core


def _pick_block(N):
    # Bias large: higher arithmetic intensity, fewer masked/zero/overhead steps,
    # keeps the 256-wide MXU (v6e/v7x) fed.
    for cand in (1024, 512, 256, 128):
        if N % cand == 0:
            return cand
    # N not a multiple of 128 -> wrapper pads N up to a multiple of `bs`.
    if N >= 1024:
        return 512
    if N >= 256:
        return 256
    return 128


def lower_triangular_matmul(A, B, *, block_size=None,
                            precision=lax.Precision.HIGHEST,
                            num_cores=2):
    """C = tril(tril(A) @ tril(B)) for square float32 A, B."""
    N, N2 = A.shape
    assert N == N2 and B.shape == (N, N), "A and B must be square and same size"
    orig_n = N

    bs = block_size if block_size is not None else _pick_block(N)
    if N % bs != 0:
        padded = pl.cdiv(N, bs) * bs
        pad = padded - N
        A = jnp.pad(A, ((0, pad), (0, pad)))
        B = jnp.pad(B, ((0, pad), (0, pad)))
        N = padded
    n_tiles = N // bs
    num_cores = max(1, min(int(num_cores), n_tiles))

    oi_np, oj_np, ak_np, spc = _build_schedule(n_tiles, num_cores)
    oi = jnp.asarray(oi_np)
    oj = jnp.asarray(oj_np)
    ak = jnp.asarray(ak_np)

    def _dec(kraw):                       # decode no-op sentinel (-k-1 -> k)
        return jnp.maximum(kraw, -kraw - 1)

    def a_map(c, t, oi, oj, ak):
        s = c * spc + t
        return (oi[s], _dec(ak[s]))

    def b_map(c, t, oi, oj, ak):
        s = c * spc + t
        # Compute steps: B column block == oj.  Zero/pad steps: min(oj, oi)
        # repeats the previous step's block -> no input DMA.
        return (_dec(ak[s]), jnp.minimum(oj[s], oi[s]))

    def o_map(c, t, oi, oj, ak):
        s = c * spc + t
        return (oi[s], oj[s])

    n_compute = n_tiles * (n_tiles + 1) * (n_tiles + 2) // 6
    cost = pl.CostEstimate(
        flops=int(2 * n_compute * bs ** 3),
        transcendentals=0,
        bytes_accessed=int((2 * n_compute * bs * bs + N * N) * 4),
    )
    # Double-buffered A/B/O tiles + (bs, bs) mask scratch, ~25% headroom.
    # Safe under v7x's 64 MiB physical VMEM; explicit so bs>=512 also works
    # under v5e's 16 MiB default scoped limit.
    vmem_limit = int(min(max(32 << 20, int(7 * bs * bs * 4 * 1.25)), 48 << 20))

    kernel = functools.partial(_tri_mm_kernel, steps_per_core=spc,
                               precision=precision)

    out = pl.pallas_call(
        kernel,
        out_shape=jax.ShapeDtypeStruct((N, N), A.dtype),
        grid_spec=pltpu.PrefetchScalarGridSpec(
            num_scalar_prefetch=3,
            grid=(num_cores, spc),
            in_specs=[
                pl.BlockSpec((bs, bs), a_map),
                pl.BlockSpec((bs, bs), b_map),
            ],
            out_specs=pl.BlockSpec((bs, bs), o_map),
            scratch_shapes=[pltpu.VMEM((bs, bs), jnp.float32)],
        ),
        compiler_params=pltpu.CompilerParams(
            # Core axis is parallel (sharded across v7x's 2 TensorCores; runs
            # serially and harmlessly on 1-TC v5e/v6e).  The schedule axis
            # accumulates into resident output blocks -> "arbitrary".
            dimension_semantics=("parallel", "arbitrary"),
            vmem_limit_bytes=vmem_limit,
        ),
        cost_estimate=cost,
    )(oi, oj, ak, A, B)

    if N != orig_n:
        out = out[:orig_n, :orig_n]
    return out


if __name__ == "__main__":
    N = 512
    key = jax.random.PRNGKey(0)
    ka, kb = jax.random.split(key)
    # Mirror the PyTorch usage (lower-triangular inputs); kernel masks anyway.
    A = jnp.tril(jax.random.normal(ka, (N, N), dtype=jnp.float32))
    B = jnp.tril(jax.random.normal(kb, (N, N), dtype=jnp.float32))

    # Reference (same semantics as the CUDA kernel): tril(tril(A) @ tril(B)).
    C_ref = jnp.tril(jnp.dot(jnp.tril(A), jnp.tril(B),
                             precision=lax.Precision.HIGHEST))

    # Multi-tile triangular schedule (4x4 tiles of 128) split across 2 cores:
    # exercises interior / one-sided-masked / diagonal / zero-write / pad steps.
    C = jax.block_until_ready(lower_triangular_matmul(A, B, block_size=128))
    assert jnp.allclose(C, C_ref, atol=1e-3, rtol=1e-3), "mismatch (bs=128)"

    # Default (auto) block-size path (single 512 tile).
    C2 = jax.block_until_ready(lower_triangular_matmul(A, B))
    assert jnp.allclose(C2, C_ref, atol=1e-3, rtol=1e-3), "mismatch (auto bs)"

    # N not divisible by 128 -> zero-pad + slice path.
    M = 200
    Ap = jnp.tril(jax.random.normal(ka, (M, M), dtype=jnp.float32))
    Bp = jnp.tril(jax.random.normal(kb, (M, M), dtype=jnp.float32))
    Cp_ref = jnp.tril(jnp.dot(Ap, Bp, precision=lax.Precision.HIGHEST))
    Cp = jax.block_until_ready(lower_triangular_matmul(Ap, Bp))
    assert jnp.allclose(Cp, Cp_ref, atol=1e-3, rtol=1e-3), "mismatch (padded)"

    # TODO(synk): benchmark precision=lax.Precision.HIGH (3-pass bf16 MXU,
    # ~2x compute) against the 1e-3 tolerance before adopting it as default.

    print("KERNEL_OK")
</pallas_src>

<mosaic_0001>
module attributes {stable_mosaic.version = 11 : i64} {
  func.func @_tri_mm_kernel(%arg0: i32, %arg1: i32, %arg2: memref<32xi32, #tpu.memory_space<smem>>, %arg3: memref<32xi32, #tpu.memory_space<smem>>, %arg4: memref<32xi32, #tpu.memory_space<smem>>, %arg5: memref<128x128xf32, #tpu.memory_space<vmem>>, %arg6: memref<128x128xf32, #tpu.memory_space<vmem>>, %arg7: memref<128x128xf32, #tpu.memory_space<vmem>>, %arg8: memref<128x128xf32, #tpu.memory_space<vmem>>) attributes {dimension_semantics = [#tpu.dimension_semantics<parallel>, #tpu.dimension_semantics<arbitrary>], iteration_bounds = array<i64: 2, 16>, scalar_prefetch = 3 : i64, scratch_operands = 1 : i64, tpu.core_type = #tpu.core_type<tc>, window_params = [{transform_indices = @transform_0, window_bounds = array<i64: 128, 128>}, {transform_indices = @transform_1, window_bounds = array<i64: 128, 128>}, {transform_indices = @transform_2, window_bounds = array<i64: 128, 128>}]} {
    %c16_i32 = arith.constant 16 : i32
    %0 = arith.muli %arg0, %c16_i32 : i32
    %1 = arith.addi %0, %arg1 : i32
    %2 = arith.index_cast %1 : i32 to index
    %3 = memref.load %arg2[%2] : memref<32xi32, #tpu.memory_space<smem>>
    %4 = arith.index_cast %1 : i32 to index
    %5 = memref.load %arg3[%4] : memref<32xi32, #tpu.memory_space<smem>>
    %6 = arith.index_cast %1 : i32 to index
    %7 = memref.load %arg4[%6] : memref<32xi32, #tpu.memory_space<smem>>
    %c0_i32 = arith.constant 0 : i32
    %8 = arith.cmpi slt, %7, %c0_i32 : i32
    %c0_i32_0 = arith.constant 0 : i32
    %9 = arith.subi %c0_i32_0, %7 : i32
    %c1_i32 = arith.constant 1 : i32
    %10 = arith.subi %9, %c1_i32 : i32
    %11 = arith.maxsi %7, %10 : i32
    %c0_i32_1 = arith.constant 0 : i32
    %12 = arith.cmpi eq, %arg1, %c0_i32_1 : i32
    %13 = arith.extui %12 : i1 to i32
    %c0_i32_2 = arith.constant 0 : i32
    %14 = arith.cmpi ne, %13, %c0_i32_2 : i32
    scf.if %14 {
      %44 = tpu.iota {dimensions = array<i32: 0>} : vector<128x128xi32>
      %45 = tpu.iota {dimensions = array<i32: 1>} : vector<128x128xi32>
      %46 = arith.cmpi sge, %44, %45 : vector<128x128xi32>
      %47 = arith.extui %46 : vector<128x128xi1> to vector<128x128xi32>
      %48 = arith.sitofp %47 : vector<128x128xi32> to vector<128x128xf32>
      %c0 = arith.constant 0 : index
      %c0_11 = arith.constant 0 : index
      %49 = vector.load %arg8[%c0, %c0_11] : memref<128x128xf32, #tpu.memory_space<vmem>>, vector<128x128xf32>
      tpu.vector_store %arg8[%c0, %c0_11], %48 {strides = array<i32>} : memref<128x128xf32, #tpu.memory_space<vmem>>, vector<128x128xf32>,
    } else {
    }
    %15 = arith.cmpi sgt, %5, %3 : i32
    %16 = arith.cmpi eq, %11, %5 : i32
    %true = arith.constant true
    %17 = arith.xori %8, %true : i1
    %18 = arith.ori %15, %16 : i1
    %19 = arith.andi %17, %18 : i1
    %20 = arith.extui %19 : i1 to i32
    %c0_i32_3 = arith.constant 0 : i32
    %21 = arith.cmpi ne, %20, %c0_i32_3 : i32
    scf.if %21 {
      %cst = arith.constant 0.000000e+00 : f32
      %44 = vector.broadcast %cst : f32 to vector<128x128xf32>
      %c0 = arith.constant 0 : index
      %c0_11 = arith.constant 0 : index
      %45 = vector.load %arg7[%c0, %c0_11] : memref<128x128xf32, #tpu.memory_space<vmem>>, vector<128x128xf32>
      tpu.vector_store %arg7[%c0, %c0_11], %44 {strides = array<i32>} : memref<128x128xf32, #tpu.memory_space<vmem>>, vector<128x128xf32>,
    } else {
    }
    %true_4 = arith.constant true
    %22 = arith.xori %15, %true_4 : i1
    %23 = arith.andi %17, %22 : i1
    %24 = arith.cmpi eq, %11, %3 : i32
    %25 = arith.cmpi eq, %11, %5 : i32
    %true_5 = arith.constant true
    %26 = arith.xori %24, %true_5 : i1
    %true_6 = arith.constant true
    %27 = arith.xori %25, %true_6 : i1
    %28 = arith.andi %26, %27 : i1
    %29 = arith.andi %23, %28 : i1
    %30 = arith.extui %29 : i1 to i32
    %c0_i32_7 = arith.constant 0 : i32
    %31 = arith.cmpi ne, %30, %c0_i32_7 : i32
    scf.if %31 {
      %c0 = arith.constant 0 : index
      %c0_11 = arith.constant 0 : index
      %44 = vector.load %arg7[%c0, %c0_11] : memref<128x128xf32, #tpu.memory_space<vmem>>, vector<128x128xf32>
      %c0_12 = arith.constant 0 : index
      %c0_13 = arith.constant 0 : index
      %45 = vector.load %arg5[%c0_12, %c0_13] : memref<128x128xf32, #tpu.memory_space<vmem>>, vector<128x128xf32>
      %c0_14 = arith.constant 0 : index
      %c0_15 = arith.constant 0 : index
      %46 = vector.load %arg6[%c0_14, %c0_15] : memref<128x128xf32, #tpu.memory_space<vmem>>, vector<128x128xf32>
      %cst = arith.constant dense<0.000000e+00> : vector<128x128xf32>
      %47 = tpu.matmul %45, %46, %cst {dimension_numbers = #tpu.dot_dimension_numbers<[1], [0], [0], [1], [0, 0, 1, 1], [], []>, precision = #tpu.contract_precision<fp32>} : vector<128x128xf32>, vector<128x128xf32>, vector<128x128xf32> -> vector<128x128xf32>
      %48 = arith.addf %44, %47 : vector<128x128xf32>
      %c0_16 = arith.constant 0 : index
      %c0_17 = arith.constant 0 : index
      %49 = vector.load %arg7[%c0_16, %c0_17] : memref<128x128xf32, #tpu.memory_space<vmem>>, vector<128x128xf32>
      tpu.vector_store %arg7[%c0_16, %c0_17], %48 {strides = array<i32>} : memref<128x128xf32, #tpu.memory_space<vmem>>, vector<128x128xf32>,
    } else {
    }
    %32 = arith.andi %24, %27 : i1
    %33 = arith.andi %23, %32 : i1
    %34 = arith.extui %33 : i1 to i32
    %c0_i32_8 = arith.constant 0 : i32
    %35 = arith.cmpi ne, %34, %c0_i32_8 : i32
    scf.if %35 {
      %c0 = arith.constant 0 : index
      %c0_11 = arith.constant 0 : index
      %44 = vector.load %arg7[%c0, %c0_11] : memref<128x128xf32, #tpu.memory_space<vmem>>, vector<128x128xf32>
      %c0_12 = arith.constant 0 : index
      %c0_13 = arith.constant 0 : index
      %45 = vector.load %arg5[%c0_12, %c0_13] : memref<128x128xf32, #tpu.memory_space<vmem>>, vector<128x128xf32>
      %c0_14 = arith.constant 0 : index
      %c0_15 = arith.constant 0 : index
      %46 = vector.load %arg8[%c0_14, %c0_15] : memref<128x128xf32, #tpu.memory_space<vmem>>, vector<128x128xf32>
      %47 = arith.mulf %45, %46 : vector<128x128xf32>
      %c0_16 = arith.constant 0 : index
      %c0_17 = arith.constant 0 : index
      %48 = vector.load %arg6[%c0_16, %c0_17] : memref<128x128xf32, #tpu.memory_space<vmem>>, vector<128x128xf32>
      %cst = arith.constant dense<0.000000e+00> : vector<128x128xf32>
      %49 = tpu.matmul %47, %48, %cst {dimension_numbers = #tpu.dot_dimension_numbers<[1], [0], [0], [1], [0, 0, 1, 1], [], []>, precision = #tpu.contract_precision<fp32>} : vector<128x128xf32>, vector<128x128xf32>, vector<128x128xf32> -> vector<128x128xf32>
      %50 = arith.addf %44, %49 : vector<128x128xf32>
      %c0_18 = arith.constant 0 : index
      %c0_19 = arith.constant 0 : index
      %51 = vector.load %arg7[%c0_18, %c0_19] : memref<128x128xf32, #tpu.memory_space<vmem>>, vector<128x128xf32>
      tpu.vector_store %arg7[%c0_18, %c0_19], %50 {strides = array<i32>} : memref<128x128xf32, #tpu.memory_space<vmem>>, vector<128x128xf32>,
    } else {
    }
    %36 = arith.andi %26, %25 : i1
    %37 = arith.andi %23, %36 : i1
    %38 = arith.extui %37 : i1 to i32
    %c0_i32_9 = arith.constant 0 : i32
    %39 = arith.cmpi ne, %38, %c0_i32_9 : i32
    scf.if %39 {
      %c0 = arith.constant 0 : index
      %c0_11 = arith.constant 0 : index
      %44 = vector.load %arg7[%c0, %c0_11] : memref<128x128xf32, #tpu.memory_space<vmem>>, vector<128x128xf32>
      %c0_12 = arith.constant 0 : index
      %c0_13 = arith.constant 0 : index
      %45 = vector.load %arg5[%c0_12, %c0_13] : memref<128x128xf32, #tpu.memory_space<vmem>>, vector<128x128xf32>
      %c0_14 = arith.constant 0 : index
      %c0_15 = arith.constant 0 : index
      %46 = vector.load %arg6[%c0_14, %c0_15] : memref<128x128xf32, #tpu.memory_space<vmem>>, vector<128x128xf32>
      %c0_16 = arith.constant 0 : index
      %c0_17 = arith.constant 0 : index
      %47 = vector.load %arg8[%c0_16, %c0_17] : memref<128x128xf32, #tpu.memory_space<vmem>>, vector<128x128xf32>
      %48 = arith.mulf %46, %47 : vector<128x128xf32>
      %cst = arith.constant dense<0.000000e+00> : vector<128x128xf32>
      %49 = tpu.matmul %45, %48, %cst {dimension_numbers = #tpu.dot_dimension_numbers<[1], [0], [0], [1], [0, 0, 1, 1], [], []>, precision = #tpu.contract_precision<fp32>} : vector<128x128xf32>, vector<128x128xf32>, vector<128x128xf32> -> vector<128x128xf32>
      %50 = arith.addf %44, %49 : vector<128x128xf32>
      %c0_18 = arith.constant 0 : index
      %c0_19 = arith.constant 0 : index
      %51 = vector.load %arg7[%c0_18, %c0_19] : memref<128x128xf32, #tpu.memory_space<vmem>>, vector<128x128xf32>
      tpu.vector_store %arg7[%c0_18, %c0_19], %50 {strides = array<i32>} : memref<128x128xf32, #tpu.memory_space<vmem>>, vector<128x128xf32>,
    } else {
    }
    %40 = arith.andi %24, %25 : i1
    %41 = arith.andi %23, %40 : i1
    %42 = arith.extui %41 : i1 to i32
    %c0_i32_10 = arith.constant 0 : i32
    %43 = arith.cmpi ne, %42, %c0_i32_10 : i32
    scf.if %43 {
      %c0 = arith.constant 0 : index
      %c0_11 = arith.constant 0 : index
      %44 = vector.load %arg7[%c0, %c0_11] : memref<128x128xf32, #tpu.memory_space<vmem>>, vector<128x128xf32>
      %c0_12 = arith.constant 0 : index
      %c0_13 = arith.constant 0 : index
      %45 = vector.load %arg5[%c0_12, %c0_13] : memref<128x128xf32, #tpu.memory_space<vmem>>, vector<128x128xf32>
      %c0_14 = arith.constant 0 : index
      %c0_15 = arith.constant 0 : index
      %46 = vector.load %arg8[%c0_14, %c0_15] : memref<128x128xf32, #tpu.memory_space<vmem>>, vector<128x128xf32>
      %47 = arith.mulf %45, %46 : vector<128x128xf32>
      %c0_16 = arith.constant 0 : index
      %c0_17 = arith.constant 0 : index
      %48 = vector.load %arg6[%c0_16, %c0_17] : memref<128x128xf32, #tpu.memory_space<vmem>>, vector<128x128xf32>
      %c0_18 = arith.constant 0 : index
      %c0_19 = arith.constant 0 : index
      %49 = vector.load %arg8[%c0_18, %c0_19] : memref<128x128xf32, #tpu.memory_space<vmem>>, vector<128x128xf32>
      %50 = arith.mulf %48, %49 : vector<128x128xf32>
      %cst = arith.constant dense<0.000000e+00> : vector<128x128xf32>
      %51 = tpu.matmul %47, %50, %cst {dimension_numbers = #tpu.dot_dimension_numbers<[1], [0], [0], [1], [0, 0, 1, 1], [], []>, precision = #tpu.contract_precision<fp32>} : vector<128x128xf32>, vector<128x128xf32>, vector<128x128xf32> -> vector<128x128xf32>
      %52 = arith.addf %44, %51 : vector<128x128xf32>
      %c0_20 = arith.constant 0 : index
      %c0_21 = arith.constant 0 : index
      %53 = vector.load %arg7[%c0_20, %c0_21] : memref<128x128xf32, #tpu.memory_space<vmem>>, vector<128x128xf32>
      tpu.vector_store %arg7[%c0_20, %c0_21], %52 {strides = array<i32>} : memref<128x128xf32, #tpu.memory_space<vmem>>, vector<128x128xf32>,
    } else {
    }
    return
  }
  func.func @transform_0(%arg0: i32, %arg1: i32, %arg2: memref<32xi32, #tpu.memory_space<smem>>, %arg3: memref<32xi32, #tpu.memory_space<smem>>, %arg4: memref<32xi32, #tpu.memory_space<smem>>) -> (i32, i32) {
    %c16_i32 = arith.constant 16 : i32
    %0 = arith.muli %arg0, %c16_i32 : i32
    %1 = arith.addi %0, %arg1 : i32
    %2 = arith.index_cast %1 : i32 to index
    %3 = memref.load %arg2[%2] : memref<32xi32, #tpu.memory_space<smem>>
    %4 = arith.index_cast %1 : i32 to index
    %5 = memref.load %arg4[%4] : memref<32xi32, #tpu.memory_space<smem>>
    %c0_i32 = arith.constant 0 : i32
    %6 = arith.subi %c0_i32, %5 : i32
    %c1_i32 = arith.constant 1 : i32
    %7 = arith.subi %6, %c1_i32 : i32
    %8 = arith.maxsi %5, %7 : i32
    %c0_i32_0 = arith.constant 0 : i32
    return %3, %8 : i32, i32
  }
  func.func @transform_1(%arg0: i32, %arg1: i32, %arg2: memref<32xi32, #tpu.memory_space<smem>>, %arg3: memref<32xi32, #tpu.memory_space<smem>>, %arg4: memref<32xi32, #tpu.memory_space<smem>>) -> (i32, i32) {
    %c16_i32 = arith.constant 16 : i32
    %0 = arith.muli %arg0, %c16_i32 : i32
    %1 = arith.addi %0, %arg1 : i32
    %2 = arith.index_cast %1 : i32 to index
    %3 = memref.load %arg4[%2] : memref<32xi32, #tpu.memory_space<smem>>
    %c0_i32 = arith.constant 0 : i32
    %4 = arith.subi %c0_i32, %3 : i32
    %c1_i32 = arith.constant 1 : i32
    %5 = arith.subi %4, %c1_i32 : i32
    %6 = arith.maxsi %3, %5 : i32
    %7 = arith.index_cast %1 : i32 to index
    %8 = memref.load %arg3[%7] : memref<32xi32, #tpu.memory_space<smem>>
    %9 = arith.index_cast %1 : i32 to index
    %10 = memref.load %arg2[%9] : memref<32xi32, #tpu.memory_space<smem>>
    %11 = arith.minsi %8, %10 : i32
    %c0_i32_0 = arith.constant 0 : i32
    return %6, %11 : i32, i32
  }
  func.func @transform_2(%arg0: i32, %arg1: i32, %arg2: memref<32xi32, #tpu.memory_space<smem>>, %arg3: memref<32xi32, #tpu.memory_space<smem>>, %arg4: memref<32xi32, #tpu.memory_space<smem>>) -> (i32, i32) {
    %c16_i32 = arith.constant 16 : i32
    %0 = arith.muli %arg0, %c16_i32 : i32
    %1 = arith.addi %0, %arg1 : i32
    %2 = arith.index_cast %1 : i32 to index
    %3 = memref.load %arg2[%2] : memref<32xi32, #tpu.memory_space<smem>>
    %4 = arith.index_cast %1 : i32 to index
    %5 = memref.load %arg3[%4] : memref<32xi32, #tpu.memory_space<smem>>
    %c0_i32 = arith.constant 0 : i32
    return %3, %5 : i32, i32
  }
}

</mosaic_0001>

<llo_original>
// kernel: tpu_custom_call.1
$region0: #{tpu_custom_call.1}
  #allocation0 [shape = 'u32[]', space=smem, size = 0x4, offset = 0x4, fixed_abs, tag = 'smem constant byte address 0x4 - core index']
  #allocation1 [shape = 'u32[144,128]{1,0:T(1,128)}', space=vmem, size = 0x12000, scoped, tag = 'internal scratch']
  #allocation2 [shape = 'f32[128,128]{1,0:T(8,128)}', space=vmem, size = 0x10000, scoped, tag = 'scratch operand']
  #allocation3 [shape = 's32[1]{0}', space=sflag, size = 0x4, scoped, tag = 'scoped memory for tpu_custom_call.1']
  #allocation4 [shape = 'u8[512]{0}', space=smem, size = 0x200, scoped, tag = 'prefetched SMEM operand 0']
  #allocation5 [shape = 'u8[512]{0}', space=smem, size = 0x200, scoped, tag = 'prefetched SMEM operand 1']
  #allocation6 [shape = 'u8[512]{0}', space=smem, size = 0x200, scoped, tag = 'prefetched SMEM operand 2']
  %s0 = inlined_call_operand.hbm [shape: s32[32], index: 0, kind: input, shape index: {}]
  %s1 = inlined_call_operand.vmem [shape: s32[32], index: 1, kind: input, shape index: {}]
  %s2 = inlined_call_operand.vmem [shape: s32[32], index: 2, kind: input, shape index: {}]
  %s3 = inlined_call_operand.hbm [shape: f32[512,512], index: 3, kind: input, shape index: {}]
  %s4 = inlined_call_operand.hbm [shape: f32[512,512], index: 4, kind: input, shape index: {}]
  %s5 = inlined_call_operand.hbm [shape: f32[512,512], index: 5, kind: output, shape index: {}]
  %s6 = sld [smem:[#allocation0]]
  $region73: #{tpu_custom_call.1} parent=0
    _
  %s8 = ssub.s32 1, %s6
  %s9 = scalar_select 0, %s8, %s6
  %11 = dma.hbm_to_smem %s0, 16, [#allocation4], [#allocation3]
  %s12 = sshll.u32 %s1, 4
  %s13 = int_to_ptr.vmem [resolvable:$true] %s12
  %15 = dma.vmem_to_smem %s13, 16, [#allocation5], [#allocation3]
  %s16 = sshll.u32 %s2, 4
  %s17 = int_to_ptr.vmem [resolvable:$true] %s16
  %19 = dma.vmem_to_smem %s17, 16, [#allocation6], [#allocation3]
  %20 = dma.done [#allocation3], 48
  %21 = sfence
  $region1: #{tpu_custom_call.1} parent=0
    #allocation7 [shape = 'u8[131072]{0}', space=vmem, size = 0x20000, scoped, tag = 'input window, operand 3']
    #allocation8 [shape = 's32[2]{0}', space=sflag, size = 0x8, scoped, tag = 'scoped memory for tpu_custom_call.1']
    #allocation9 [shape = 's32[2]{0}', space=sflag, size = 0x8, scoped, tag = 'scoped memory for tpu_custom_call.1']
    #allocation10 [shape = 'u8[131072]{0}', space=vmem, size = 0x20000, scoped, tag = 'input window, operand 4']
    #allocation11 [shape = 's32[2]{0}', space=sflag, size = 0x8, scoped, tag = 'scoped memory for tpu_custom_call.1']
    #allocation12 [shape = 'u8[131072]{0}', space=vmem, size = 0x20000, scoped, tag = 'output window, operand 0']
    %22 = vsyncpa [#allocation8], 0
    %s23 = scalar_lea.sflag [#allocation8], 1
    %24 = vsyncpa %s23, 0
    %25 = vsyncpa [#allocation11], 0
    %s26 = scalar_lea.sflag [#allocation11], 1
    %27 = vsyncpa %s26, 0
    %28 = vsyncpa [#allocation9], 0
    %s29 = scalar_lea.sflag [#allocation9], 1
    %30 = vsyncpa %s29, 0
    loop: start=0, step=1, limit=34
    $region2: #{tpu_custom_call.1} parent=1 // loop_pre_header
      _
    $region3: #{tpu_custom_call.1} parent=1 // loop_header
      %s32 = sphi 0, %s36
      %p33 = scmp.ge.s32.totalorder %s32, 34
      %s39 = sphi 0, %s51
      %s40 = sphi 0, %s47
      %s41 = sphi 0, %s39
      %s42 = sphi 0, %s40
      %s43 = sphi 0, %s41
      %s44 = sphi 0, %s42
      %s70 = sphi 0, %s72
      %s73 = sphi 0, %s70
      %s74 = sphi 0, %s73
      %s90 = sphi 0, %s74
      %s118 = sphi 0, %s120
      %s121 = sphi 0, %s118
      %s122 = sphi 0, %s121
      %s138 = sphi 0, %s122
      %s154 = sphi 0, %s156
      %s157 = sphi 0, %s154
      %s158 = sphi 0, %s157
      %s174 = sphi 0, %s158
    $region4: #{tpu_custom_call.1} parent=1 // loop_header_branch
      %35 = sbr.rel (%p33) target = $region8
    $region5: #{tpu_custom_call.1} parent=1 // loop_body
      %s37 = ssub.s32 %s32, 1
      %s38 = ssub.s32 %s32, 2
      %s45 = sadd.s32 1, %s40
      %p46 = scmp.ge.s32.totalorder %s45, 16
      %s47 = scalar_select %p46, 0, %s45
      %s48 = sadd.s32 1, %s39
      %s49 = scalar_select %p46, %s48, %s39
      %p50 = scmp.ge.s32.totalorder %s49, 2
      %s51 = scalar_select %p50, 0, %s49
      %s52 = smul.u32 %s39, 16
      %s53 = sadd.s32 %s52, %s40
      %s54 = sld [smem:[#allocation4 + %s53]]
      %s55 = sld [smem:[#allocation6 + %s53]]
      %s56 = ssub.s32 4294967295, %s55
      %p57 = scmp.gt.s32.totalorder %s55, %s56
      %s58 = scalar_select %p57, %s55, %s56
      %s59 = smul.u32 %s51, 16
      %s60 = sadd.s32 %s59, %s47
      %s61 = sld [smem:[#allocation4 + %s60]]
      %s62 = sld [smem:[#allocation6 + %s60]]
      %s63 = ssub.s32 4294967295, %s62
      %p64 = scmp.gt.s32.totalorder %s62, %s63
      %s65 = scalar_select %p64, %s62, %s63
      %s66 = ssub.s32 %s54, %s61
      %s67 = ssub.s32 %s58, %s65
      %s68 = sor.u32 %s66, %s67
      %p69 = scmp.eq.s32.totalorder %s68, 0
      %s71 = sadd.s32 %s70, 1
      %s72 = scalar_select %p69, %s70, %s71
      %p75 = pneg %p69
      %p76 = scmp.eq.s32.totalorder %s32, 31
      %p77 = por %p75, %p76
      %p78 = scmp.ne.s32.totalorder %s70, %s73
      %p79 = scmp.eq.s32.totalorder %s32, 0
      %p80 = por %p78, %p79
      %p81 = scmp.ne.s32.totalorder %s70, %s73
      %p82 = scmp.eq.s32.totalorder %s37, 31
      %p83 = por %p81, %p82
      %p84 = scmp.ne.s32.totalorder %s73, %s74
      %p85 = scmp.eq.s32.totalorder %s37, 0
      %p86 = por %p84, %p85
      %p87 = scmp.ne.s32.totalorder %s73, %s74
      %p88 = scmp.eq.s32.totalorder %s38, 31
      %p89 = por %p87, %p88
      %p91 = scmp.ne.s32.totalorder %s74, %s90
      %p92 = scmp.eq.s32.totalorder %s38, 0
      %p93 = por %p91, %p92
      %s94 = smul.u32 %s39, 16
      %s95 = sadd.s32 %s94, %s40
      %s96 = sld [smem:[#allocation6 + %s95]]
      %s97 = ssub.s32 4294967295, %s96
      %p98 = scmp.gt.s32.totalorder %s96, %s97
      %s99 = scalar_select %p98, %s96, %s97
      %s100 = sld [smem:[#allocation5 + %s95]]
      %s101 = sld [smem:[#allocation4 + %s95]]
      %p102 = scmp.lt.s32.totalorder %s100, %s101
      %s103 = scalar_select %p102, %s100, %s101
      %s104 = smul.u32 %s51, 16
      %s105 = sadd.s32 %s104, %s47
      %s106 = sld [smem:[#allocation6 + %s105]]
      %s107 = ssub.s32 4294967295, %s106
      %p108 = scmp.gt.s32.totalorder %s106, %s107
      %s109 = scalar_select %p108, %s106, %s107
      %s110 = sld [smem:[#allocation5 + %s105]]
      %s111 = sld [smem:[#allocation4 + %s105]]
      %p112 = scmp.lt.s32.totalorder %s110, %s111
      %s113 = scalar_select %p112, %s110, %s111
      %s114 = ssub.s32 %s99, %s109
      %s115 = ssub.s32 %s103, %s113
      %s116 = sor.u32 %s114, %s115
      %p117 = scmp.eq.s32.totalorder %s116, 0
      %s119 = sadd.s32 %s118, 1
      %s120 = scalar_select %p117, %s118, %s119
      %p123 = pneg %p117
      %p124 = scmp.eq.s32.totalorder %s32, 31
      %p125 = por %p123, %p124
      %p126 = scmp.ne.s32.totalorder %s118, %s121
      %p127 = scmp.eq.s32.totalorder %s32, 0
      %p128 = por %p126, %p127
      %p129 = scmp.ne.s32.totalorder %s118, %s121
      %p130 = scmp.eq.s32.totalorder %s37, 31
      %p131 = por %p129, %p130
      %p132 = scmp.ne.s32.totalorder %s121, %s122
      %p133 = scmp.eq.s32.totalorder %s37, 0
      %p134 = por %p132, %p133
      %p135 = scmp.ne.s32.totalorder %s121, %s122
      %p136 = scmp.eq.s32.totalorder %s38, 31
      %p137 = por %p135, %p136
      %p139 = scmp.ne.s32.totalorder %s122, %s138
      %p140 = scmp.eq.s32.totalorder %s38, 0
      %p141 = por %p139, %p140
      %s142 = smul.u32 %s39, 16
      %s143 = sadd.s32 %s142, %s40
      %s144 = sld [smem:[#allocation4 + %s143]]
      %s145 = sld [smem:[#allocation5 + %s143]]
      %s146 = smul.u32 %s51, 16
      %s147 = sadd.s32 %s146, %s47
      %s148 = sld [smem:[#allocation4 + %s147]]
      %s149 = sld [smem:[#allocation5 + %s147]]
      %s150 = ssub.s32 %s144, %s148
      %s151 = ssub.s32 %s145, %s149
      %s152 = sor.u32 %s150, %s151
      %p153 = scmp.eq.s32.totalorder %s152, 0
      %s155 = sadd.s32 %s154, 1
      %s156 = scalar_select %p153, %s154, %s155
      %p159 = pneg %p153
      %p160 = scmp.eq.s32.totalorder %s32, 31
      %p161 = por %p159, %p160
      %p162 = scmp.ne.s32.totalorder %s154, %s157
      %p163 = scmp.eq.s32.totalorder %s32, 0
      %p164 = por %p162, %p163
      %p165 = scmp.ne.s32.totalorder %s154, %s157
      %p166 = scmp.eq.s32.totalorder %s37, 31
      %p167 = por %p165, %p166
      %p168 = scmp.ne.s32.totalorder %s157, %s158
      %p169 = scmp.eq.s32.totalorder %s37, 0
      %p170 = por %p168, %p169
      %p171 = scmp.ne.s32.totalorder %s157, %s158
      %p172 = scmp.eq.s32.totalorder %s38, 31
      %p173 = por %p171, %p172
      %p175 = scmp.ne.s32.totalorder %s158, %s174
      %p176 = scmp.eq.s32.totalorder %s38, 0
      %p177 = por %p175, %p176
      %p178 = scmp.le.s32.totalorder 1, %s32
      %p179 = scmp.lt.s32.totalorder %s32, 33
      %p180 = pnand %p178, %p179
      %p181 = pneg %p180
      // Predicated region
      $region9: #{tpu_custom_call.1} parent=5 // pred_check
        _
      $region10: #{tpu_custom_call.1} parent=5 // pred_check_branch
        %183 = sbr.rel (%p180) target = $region12
      $region11: #{tpu_custom_call.1} parent=5 // pred_region
        %s184 = ssub.s32 %s32, 1
      $region12: #{tpu_custom_call.1} parent=5 // pred_fallthru
        _
      %p185 = scmp.lt.s32.totalorder %s32, 32
      // Predicated region
      $region13: #{tpu_custom_call.1} parent=5 // pred_check
        %p186 = pneg %p185
      $region14: #{tpu_custom_call.1} parent=5 // pred_check_branch
        %188 = sbr.rel (%p186) target = $region16
      $region15: #{tpu_custom_call.1} parent=5 // pred_region
        // Predicated region
        $region17: #{tpu_custom_call.1} parent=15 // pred_check
          %p189 = pneg %p80
        $region18: #{tpu_custom_call.1} parent=15 // pred_check_branch
          %191 = sbr.rel (%p189) target = $region20
        $region19: #{tpu_custom_call.1} parent=15 // pred_region
          %s192 = sand.u32 %s70, 1
          %s193 = scalar_lea.sflag [#allocation8], %s192
          %s194 = sand.u32 %s70, 1
          %s195 = smul.addr %s194, 128
          %s196 = scalar_lea.vmem [#allocation7], %s195
          %s197 = smul.u32 %s39, 16
          %s198 = sadd.s32 %s197, %s40
          %s199 = sld [smem:[#allocation4 + %s198]]
          %s200 = sld [smem:[#allocation6 + %s198]]
          %s201 = ssub.s32 4294967295, %s200
          %p202 = scmp.gt.s32.totalorder %s200, %s201
          %s203 = scalar_select %p202, %s200, %s201
          %s204 = smul.u32 16, %s199
          %s206 = ssub.s32 2048, 2048
          %207 = vsyncadd %s193, %s206
          %s208 = smul.addr %s204, 4
          %s209 = sadd.s32 %s203, %s208
          %s210 = smul.addr %s209, 128
          %s211 = scalar_lea.hbm %s3, %s210
          %s212 = sshll.u32 %s196, 4
          %s213 = int_to_ptr.vmem [resolvable:$true] %s212
          %218 = dma.hbm_to_vmem [thread:$0]  %s211, 2048, %s213, %s193, 512, 128, 8
        $region20: #{tpu_custom_call.1} parent=15 // pred_fallthru
          _
        // Predicated region
        $region21: #{tpu_custom_call.1} parent=15 // pred_check
          %p219 = pneg %p128
        $region22: #{tpu_custom_call.1} parent=15 // pred_check_branch
          %221 = sbr.rel (%p219) target = $region24
        $region23: #{tpu_custom_call.1} parent=15 // pred_region
          %s222 = sand.u32 %s118, 1
          %s223 = scalar_lea.sflag [#allocation11], %s222
          %s224 = sand.u32 %s118, 1
          %s225 = smul.addr %s224, 128
          %s226 = scalar_lea.vmem [#allocation10], %s225
          %s227 = smul.u32 %s39, 16
          %s228 = sadd.s32 %s227, %s40
          %s229 = sld [smem:[#allocation6 + %s228]]
          %s230 = ssub.s32 4294967295, %s229
          %p231 = scmp.gt.s32.totalorder %s229, %s230
          %s232 = scalar_select %p231, %s229, %s230
          %s233 = sld [smem:[#allocation5 + %s228]]
          %s234 = sld [smem:[#allocation4 + %s228]]
          %p235 = scmp.lt.s32.totalorder %s233, %s234
          %s236 = scalar_select %p235, %s233, %s234
          %s237 = smul.u32 16, %s232
          %s239 = ssub.s32 2048, 2048
          %240 = vsyncadd %s223, %s239
          %s241 = smul.addr %s237, 4
          %s242 = sadd.s32 %s236, %s241
          %s243 = smul.addr %s242, 128
          %s244 = scalar_lea.hbm %s4, %s243
          %s245 = sshll.u32 %s226, 4
          %s246 = int_to_ptr.vmem [resolvable:$true] %s245
          %251 = dma.hbm_to_vmem [thread:$0]  %s244, 2048, %s246, %s223, 512, 128, 8
        $region24: #{tpu_custom_call.1} parent=15 // pred_fallthru
          _
      $region16: #{tpu_custom_call.1} parent=5 // pred_fallthru
        _
      %p252 = scmp.le.s32.totalorder 1, %s32
      %p253 = scmp.lt.s32.totalorder %s32, 33
      %p254 = pnand %p252, %p253
      %p255 = pneg %p254
      // Predicated region
      $region25: #{tpu_custom_call.1} parent=5 // pred_check
        _
      $region26: #{tpu_custom_call.1} parent=5 // pred_check_branch
        %257 = sbr.rel (%p254) target = $region28
      $region27: #{tpu_custom_call.1} parent=5 // pred_region
        %s258 = ssub.s32 %s32, 1
        %s259 = sand.u32 %s73, 1
        %s260 = scalar_lea.sflag [#allocation8], %s259
        %s261 = sand.u32 %s73, 1
        %s262 = smul.addr %s261, 128
        %s263 = scalar_lea.vmem [#allocation7], %s262
        // Predicated region
        $region29: #{tpu_custom_call.1} parent=27 // pred_check
          %p264 = pneg %p86
        $region30: #{tpu_custom_call.1} parent=27 // pred_check_branch
          %266 = sbr.rel (%p264) target = $region32
        $region31: #{tpu_custom_call.1} parent=27 // pred_region
          %267 = dma.done %s260, 2048
        $region32: #{tpu_custom_call.1} parent=27 // pred_fallthru
          _
        %s268 = sand.u32 %s121, 1
        %s269 = scalar_lea.sflag [#allocation11], %s268
        %s270 = sand.u32 %s121, 1
        %s271 = smul.addr %s270, 128
        %s272 = scalar_lea.vmem [#allocation10], %s271
        // Predicated region
        $region33: #{tpu_custom_call.1} parent=27 // pred_check
          %p273 = pneg %p134
        $region34: #{tpu_custom_call.1} parent=27 // pred_check_branch
          %275 = sbr.rel (%p273) target = $region36
        $region35: #{tpu_custom_call.1} parent=27 // pred_region
          %276 = dma.done %s269, 2048
        $region36: #{tpu_custom_call.1} parent=27 // pred_fallthru
          _
        %s277 = sand.u32 %s73, 1
        %s278 = scalar_lea.sflag [#allocation8], %s277
        %s279 = sand.u32 %s73, 1
        %s280 = smul.addr %s279, 128
        %s281 = scalar_lea.vmem [#allocation7], %s280
        %p282 = pneg %p86
        %p283 = pneg %p83
        %s284 = sand.u32 %s121, 1
        %s285 = scalar_lea.sflag [#allocation11], %s284
        %s286 = sand.u32 %s121, 1
        %s287 = smul.addr %s286, 128
        %s288 = scalar_lea.vmem [#allocation10], %s287
        %p289 = pneg %p134
        %p290 = pneg %p131
        %p291 = pneg %p170
        %p292 = pneg %p167
        %s293 = sand.u32 %s157, 1
        %s294 = scalar_lea.sflag [#allocation9], %s293
        %s295 = sand.u32 %s157, 1
        %s296 = smul.addr %s295, 128
        %s297 = scalar_lea.vmem [#allocation12], %s296
        %s298 = smul.u32 %s41, 16
        %s299 = sadd.s32 %s298, %s42
        %s300 = sld [smem:[#allocation4 + %s299]]
        %s301 = sld [smem:[#allocation6 + %s299]]
        %s302 = ssub.s32 4294967295, %s301
        %p303 = scmp.gt.s32.totalorder %s301, %s302
        %s304 = scalar_select %p303, %s301, %s302
        %s305 = smul.u32 16, %s300
        %s306 = smul.u32 %s41, 16
        %s307 = sadd.s32 %s306, %s42
        %s308 = sld [smem:[#allocation6 + %s307]]
        %s309 = ssub.s32 4294967295, %s308
        %p310 = scmp.gt.s32.totalorder %s308, %s309
        %s311 = scalar_select %p310, %s308, %s309
        %s312 = sld [smem:[#allocation5 + %s307]]
        %s313 = sld [smem:[#allocation4 + %s307]]
        %p314 = scmp.lt.s32.totalorder %s312, %s313
        %s315 = scalar_select %p314, %s312, %s313
        %s316 = smul.u32 16, %s311
        %s317 = smul.u32 %s41, 16
        %s318 = sadd.s32 %s317, %s42
        %s319 = sld [smem:[#allocation4 + %s318]]
        %s320 = sld [smem:[#allocation5 + %s318]]
        %s321 = smul.u32 16, %s319
        %s322 = smul.u32 %s41, 16
        %s323 = sadd.s32 %s322, %s42
        %s324 = sld [smem:[#allocation4 + %s323]]
        %s325 = sld [smem:[#allocation5 + %s323]]
        %s326 = sld [smem:[#allocation6 + %s323]]
        %s327 = ssub.s32 4294967295, %s326
        %p328 = scmp.gt.s32.totalorder %s326, %s327
        %s329 = scalar_select %p328, %s326, %s327
        %p330 = scmp.eq.s32.totalorder %s42, 0
        // Predicated region
        $region37: #{tpu_custom_call.1} parent=27 // pred_check
          %p331 = pneg %p330
        $region38: #{tpu_custom_call.1} parent=27 // pred_check_branch
          %333 = sbr.rel (%p331) target = $region40
        $region39: #{tpu_custom_call.1} parent=27 // pred_region
          %v334 = vlaneseq
          %v335 = vshrl.u32 %v334, 7
          %v336 = vadd.s32 %v335, 8
          %v337 = vadd.s32 %v335, 16
          %v338 = vadd.s32 %v335, 24
          %v339 = vadd.s32 %v335, 32
          %v340 = vadd.s32 %v335, 40
          %v341 = vadd.s32 %v335, 48
          %v342 = vadd.s32 %v335, 56
          %v343 = vadd.s32 %v335, 64
          %v344 = vadd.s32 %v335, 72
          %v345 = vadd.s32 %v335, 80
          %v346 = vadd.s32 %v335, 88
          %v347 = vadd.s32 %v335, 96
          %v348 = vadd.s32 %v335, 104
          %v349 = vadd.s32 %v335, 112
          %v350 = vadd.s32 %v335, 120
          %v351 = vlaneseq
          %v352 = vand.u32 %v351, 127
          %vm353 = vcmp.ge.s32.totalorder %v335, %v352
          %vm354 = vcmp.ge.s32.totalorder %v336, %v352
          %vm355 = vcmp.ge.s32.totalorder %v337, %v352
          %vm356 = vcmp.ge.s32.totalorder %v338, %v352
          %vm357 = vcmp.ge.s32.totalorder %v339, %v352
          %vm358 = vcmp.ge.s32.totalorder %v340, %v352
          %vm359 = vcmp.ge.s32.totalorder %v341, %v352
          %vm360 = vcmp.ge.s32.totalorder %v342, %v352
          %vm361 = vcmp.ge.s32.totalorder %v343, %v352
          %vm362 = vcmp.ge.s32.totalorder %v344, %v352
          %vm363 = vcmp.ge.s32.totalorder %v345, %v352
          %vm364 = vcmp.ge.s32.totalorder %v346, %v352
          %vm365 = vcmp.ge.s32.totalorder %v347, %v352
          %vm366 = vcmp.ge.s32.totalorder %v348, %v352
          %vm367 = vcmp.ge.s32.totalorder %v349, %v352
          %vm368 = vcmp.ge.s32.totalorder %v350, %v352
          %v369 = vsel %vm353, 1, 0
          %v370 = vsel %vm354, 1, 0
          %v371 = vsel %vm355, 1, 0
          %v372 = vsel %vm356, 1, 0
          %v373 = vsel %vm357, 1, 0
          %v374 = vsel %vm358, 1, 0
          %v375 = vsel %vm359, 1, 0
          %v376 = vsel %vm360, 1, 0
          %v377 = vsel %vm361, 1, 0
          %v378 = vsel %vm362, 1, 0
          %v379 = vsel %vm363, 1, 0
          %v380 = vsel %vm364, 1, 0
          %v381 = vsel %vm365, 1, 0
          %v382 = vsel %vm366, 1, 0
          %v383 = vsel %vm367, 1, 0
          %v384 = vsel %vm368, 1, 0
          %v385 = vcvt.s32.f32 %v369
          %v386 = vcvt.s32.f32 %v370
          %v387 = vcvt.s32.f32 %v371
          %v388 = vcvt.s32.f32 %v372
          %v389 = vcvt.s32.f32 %v373
          %v390 = vcvt.s32.f32 %v374
          %v391 = vcvt.s32.f32 %v375
          %v392 = vcvt.s32.f32 %v376
          %v393 = vcvt.s32.f32 %v377
          %v394 = vcvt.s32.f32 %v378
          %v395 = vcvt.s32.f32 %v379
          %v396 = vcvt.s32.f32 %v380
          %v397 = vcvt.s32.f32 %v381
          %v398 = vcvt.s32.f32 %v382
          %v399 = vcvt.s32.f32 %v383
          %v400 = vcvt.s32.f32 %v384
          %401 = vst [vmem:[#allocation2] sm:$0xff] %v385
          %402 = vst [vmem:[#allocation2 + $0x8] sm:$0xff] %v386
          %403 = vst [vmem:[#allocation2 + $0x10] sm:$0xff] %v387
          %404 = vst [vmem:[#allocation2 + $0x18] sm:$0xff] %v388
          %405 = vst [vmem:[#allocation2 + $0x20] sm:$0xff] %v389
          %406 = vst [vmem:[#allocation2 + $0x28] sm:$0xff] %v390
          %407 = vst [vmem:[#allocation2 + $0x30] sm:$0xff] %v391
          %408 = vst [vmem:[#allocation2 + $0x38] sm:$0xff] %v392
          %409 = vst [vmem:[#allocation2 + $0x40] sm:$0xff] %v393
          %410 = vst [vmem:[#allocation2 + $0x48] sm:$0xff] %v394
          %411 = vst [vmem:[#allocation2 + $0x50] sm:$0xff] %v395
          %412 = vst [vmem:[#allocation2 + $0x58] sm:$0xff] %v396
          %413 = vst [vmem:[#allocation2 + $0x60] sm:$0xff] %v397
          %414 = vst [vmem:[#allocation2 + $0x68] sm:$0xff] %v398
          %415 = vst [vmem:[#allocation2 + $0x70] sm:$0xff] %v399
          %416 = vst [vmem:[#allocation2 + $0x78] sm:$0xff] %v400
        $region40: #{tpu_custom_call.1} parent=27 // pred_fallthru
          _
        %p417 = scmp.gt.s32.totalorder %s325, %s324
        %p418 = scmp.eq.s32.totalorder %s329, %s325
        %p419 = scmp.ge.s32.totalorder %s326, 0
        %p420 = por %p417, %p418
        %p421 = pnand %p419, %p420
        %p422 = pneg %p421
        // Predicated region
        $region41: #{tpu_custom_call.1} parent=27 // pred_check
          _
        $region42: #{tpu_custom_call.1} parent=27 // pred_check_branch
          %424 = sbr.rel (%p421) target = $region44
        $region43: #{tpu_custom_call.1} parent=27 // pred_region
          %425 = vst [vmem:[%s297] sm:$0xff] 0.0
          %426 = vst [vmem:[%s297 + $0x8] sm:$0xff] 0.0
          %427 = vst [vmem:[%s297 + $0x10] sm:$0xff] 0.0
          %428 = vst [vmem:[%s297 + $0x18] sm:$0xff] 0.0
          %429 = vst [vmem:[%s297 + $0x20] sm:$0xff] 0.0
          %430 = vst [vmem:[%s297 + $0x28] sm:$0xff] 0.0
          %431 = vst [vmem:[%s297 + $0x30] sm:$0xff] 0.0
          %432 = vst [vmem:[%s297 + $0x38] sm:$0xff] 0.0
          %433 = vst [vmem:[%s297 + $0x40] sm:$0xff] 0.0
          %434 = vst [vmem:[%s297 + $0x48] sm:$0xff] 0.0
          %435 = vst [vmem:[%s297 + $0x50] sm:$0xff] 0.0
          %436 = vst [vmem:[%s297 + $0x58] sm:$0xff] 0.0
          %437 = vst [vmem:[%s297 + $0x60] sm:$0xff] 0.0
          %438 = vst [vmem:[%s297 + $0x68] sm:$0xff] 0.0
          %439 = vst [vmem:[%s297 + $0x70] sm:$0xff] 0.0
          %440 = vst [vmem:[%s297 + $0x78] sm:$0xff] 0.0
        $region44: #{tpu_custom_call.1} parent=27 // pred_fallthru
          _
        %p441 = scmp.le.s32.totalorder %s325, %s324
        %p442 = pnand %p419, %p441
        %p443 = pneg %p442
        %p444 = scmp.eq.s32.totalorder %s329, %s324
        %p445 = scmp.ne.s32.totalorder %s329, %s324
        %p446 = scmp.ne.s32.totalorder %s329, %s325
        %p447 = pnand %p445, %p446
        %p448 = pneg %p447
        %p449 = pnand %p443, %p448
        %p450 = pneg %p449
        // Predicated region
        $region45: #{tpu_custom_call.1} parent=27 // pred_check
          _
        $region46: #{tpu_custom_call.1} parent=27 // pred_check_branch
          %452 = sbr.rel (%p449) target = $region48
        $region47: #{tpu_custom_call.1} parent=27 // pred_region
          %v453 = vld [vmem:[%s297] sm:$0xff]
          %v454 = vld [vmem:[%s297 + $0x8] sm:$0xff]
          %v455 = vld [vmem:[%s297 + $0x10] sm:$0xff]
          %v456 = vld [vmem:[%s297 + $0x18] sm:$0xff]
          %v457 = vld [vmem:[%s297 + $0x20] sm:$0xff]
          %v458 = vld [vmem:[%s297 + $0x28] sm:$0xff]
          %v459 = vld [vmem:[%s297 + $0x30] sm:$0xff]
          %v460 = vld [vmem:[%s297 + $0x38] sm:$0xff]
          %v461 = vld [vmem:[%s297 + $0x40] sm:$0xff]
          %v462 = vld [vmem:[%s297 + $0x48] sm:$0xff]
          %v463 = vld [vmem:[%s297 + $0x50] sm:$0xff]
          %v464 = vld [vmem:[%s297 + $0x58] sm:$0xff]
          %v465 = vld [vmem:[%s297 + $0x60] sm:$0xff]
          %v466 = vld [vmem:[%s297 + $0x68] sm:$0xff]
          %v467 = vld [vmem:[%s297 + $0x70] sm:$0xff]
          %v468 = vld [vmem:[%s297 + $0x78] sm:$0xff]
          %v469 = vld [vmem:[%s263] sm:$0xff]
          %v470 = vld [vmem:[%s263 + $0x8] sm:$0xff]
          %v471 = vld [vmem:[%s263 + $0x10] sm:$0xff]
          %v472 = vld [vmem:[%s263 + $0x18] sm:$0xff]
          %v473 = vld [vmem:[%s263 + $0x20] sm:$0xff]
          %v474 = vld [vmem:[%s263 + $0x28] sm:$0xff]
          %v475 = vld [vmem:[%s263 + $0x30] sm:$0xff]
          %v476 = vld [vmem:[%s263 + $0x38] sm:$0xff]
          %v477 = vld [vmem:[%s263 + $0x40] sm:$0xff]
          %v478 = vld [vmem:[%s263 + $0x48] sm:$0xff]
          %v479 = vld [vmem:[%s263 + $0x50] sm:$0xff]
          %v480 = vld [vmem:[%s263 + $0x58] sm:$0xff]
          %v481 = vld [vmem:[%s263 + $0x60] sm:$0xff]
          %v482 = vld [vmem:[%s263 + $0x68] sm:$0xff]
          %v483 = vld [vmem:[%s263 + $0x70] sm:$0xff]
          %v484 = vld [vmem:[%s263 + $0x78] sm:$0xff]
          %v485 = vld [vmem:[%s272] sm:$0xff]
          %v486 = vld [vmem:[%s272 + $0x8] sm:$0xff]
          %v487 = vld [vmem:[%s272 + $0x10] sm:$0xff]
          %v488 = vld [vmem:[%s272 + $0x18] sm:$0xff]
          %v489 = vld [vmem:[%s272 + $0x20] sm:$0xff]
          %v490 = vld [vmem:[%s272 + $0x28] sm:$0xff]
          %v491 = vld [vmem:[%s272 + $0x30] sm:$0xff]
          %v492 = vld [vmem:[%s272 + $0x38] sm:$0xff]
          %v493 = vld [vmem:[%s272 + $0x40] sm:$0xff]
          %v494 = vld [vmem:[%s272 + $0x48] sm:$0xff]
          %v495 = vld [vmem:[%s272 + $0x50] sm:$0xff]
          %v496 = vld [vmem:[%s272 + $0x58] sm:$0xff]
          %v497 = vld [vmem:[%s272 + $0x60] sm:$0xff]
          %v498 = vld [vmem:[%s272 + $0x68] sm:$0xff]
          %v499 = vld [vmem:[%s272 + $0x70] sm:$0xff]
          %v500 = vld [vmem:[%s272 + $0x78] sm:$0xff]
          %501 = vmatprep.subr.mxu0 0.0
          %v502 = vand.u32 %v485, 4294901760
          %503 = vmatpush1.msra.mxu0 %v502
          %504 = vmatprep.subr.mxu0 0.0
          %v505 = vand.u32 %v486, 4294901760
          %506 = vmatpush1.msra.mxu0 %v505
          %507 = vmatprep.subr.mxu0 0.0
          %v508 = vand.u32 %v487, 4294901760
          %509 = vmatpush1.msra.mxu0 %v508
          %510 = vmatprep.subr.mxu0 0.0
          %v511 = vand.u32 %v488, 4294901760
          %512 = vmatpush1.msra.mxu0 %v511
          %513 = vmatprep.subr.mxu0 0.0
          %v514 = vand.u32 %v489, 4294901760
          %515 = vmatpush1.msra.mxu0 %v514
          %516 = vmatprep.subr.mxu0 0.0
          %v517 = vand.u32 %v490, 4294901760
          %518 = vmatpush1.msra.mxu0 %v517
          %519 = vmatprep.subr.mxu0 0.0
          %v520 = vand.u32 %v491, 4294901760
          %521 = vmatpush1.msra.mxu0 %v520
          %522 = vmatprep.subr.mxu0 0.0
          %v523 = vand.u32 %v492, 4294901760
          %524 = vmatpush1.msra.mxu0 %v523
          %525 = vmatprep.subr.mxu0 0.0
          %v526 = vand.u32 %v493, 4294901760
          %527 = vmatpush1.msra.mxu0 %v526
          %528 = vmatprep.subr.mxu0 0.0
          %v529 = vand.u32 %v494, 4294901760
          %530 = vmatpush1.msra.mxu0 %v529
          %531 = vmatprep.subr.mxu0 0.0
          %v532 = vand.u32 %v495, 4294901760
          %533 = vmatpush1.msra.mxu0 %v532
          %534 = vmatprep.subr.mxu0 0.0
          %v535 = vand.u32 %v496, 4294901760
          %536 = vmatpush1.msra.mxu0 %v535
          %537 = vmatprep.subr.mxu0 0.0
          %v538 = vand.u32 %v497, 4294901760
          %539 = vmatpush1.msra.mxu0 %v538
          %540 = vmatprep.subr.mxu0 0.0
          %v541 = vand.u32 %v498, 4294901760
          %542 = vmatpush1.msra.mxu0 %v541
          %543 = vmatprep.subr.mxu0 0.0
          %v544 = vand.u32 %v499, 4294901760
          %545 = vmatpush1.msra.mxu0 %v544
          %546 = vmatprep.subr.mxu0 0.0
          %v547 = vand.u32 %v500, 4294901760
          %548 = vmatpush1.msra.mxu0 %v547
          %549 = vmatprep.subr.mxu0 0.0
          %550 = vmatpush1.msra.mxu0 0.0
          %551 = vmatprep.subr.mxu0 0.0
          %552 = vmatpush1.msra.mxu0 0.0
          %553 = vmatprep.subr.mxu0 0.0
          %554 = vmatpush1.msra.mxu0 0.0
          %555 = vmatprep.subr.mxu0 0.0
          %556 = vmatpush1.msra.mxu0 0.0
          %557 = vmatprep.subr.mxu0 0.0
          %558 = vmatpush1.msra.mxu0 0.0
          %559 = vmatprep.subr.mxu0 0.0
          %560 = vmatpush1.msra.mxu0 0.0
          %561 = vmatprep.subr.mxu0 0.0
          %562 = vmatpush1.msra.mxu0 0.0
          %563 = vmatprep.subr.mxu0 0.0
          %564 = vmatpush1.msra.mxu0 0.0
          %565 = vmatprep.subr.mxu0 0.0
          %566 = vmatpush1.msra.mxu0 0.0
          %567 = vmatprep.subr.mxu0 0.0
          %568 = vmatpush1.msra.mxu0 0.0
          %569 = vmatprep.subr.mxu0 0.0
          %570 = vmatpush1.msra.mxu0 0.0
          %571 = vmatprep.subr.mxu0 0.0
          %572 = vmatpush1.msra.mxu0 0.0
          %573 = vmatprep.subr.mxu0 0.0
          %574 = vmatpush1.msra.mxu0 0.0
          %575 = vmatprep.subr.mxu0 0.0
          %576 = vmatpush1.msra.mxu0 0.0
          %577 = vmatprep.subr.mxu0 0.0
          %578 = vmatpush1.msra.mxu0 0.0
          %579 = vmatprep.subr.mxu0 0.0
          %580 = vmatpush1.msra.mxu0 0.0
          %581 = vmatprep.mubr.f32.mxu0 0.0
          %v582 = vand.u32 %v469, 4294901760
          %v583 = vsub.f32 %v469, %v582
          %v584 = vand.u32 %v583, 4294901760
          %v585 = vsub.f32 %v583, %v584
          %v586 = vand.u32 %v585, 4294901760
          %587 = vmatmul.mubr.f32.gmra.mrb[0].mxu0 %v586
          %v588 = vpop.f32.mrb[0].mxu0
          %v589 = vadd.f32 0.0, %v588
          %v590 = vpop.f32.mrb[0].mxu0
          %591 = vmatprep.mubr.f32.mxu0 0.0
          %v592 = vand.u32 %v470, 4294901760
          %v593 = vsub.f32 %v470, %v592
          %v594 = vand.u32 %v593, 4294901760
          %v595 = vsub.f32 %v593, %v594
          %v596 = vand.u32 %v595, 4294901760
          %597 = vmatmul.mubr.f32.gmra.mrb[0].mxu0 %v596
          %v598 = vpop.f32.mrb[0].mxu0
          %v599 = vadd.f32 0.0, %v598
          %v600 = vpop.f32.mrb[0].mxu0
          %601 = vmatprep.mubr.f32.mxu0 0.0
          %v602 = vand.u32 %v471, 4294901760
          %v603 = vsub.f32 %v471, %v602
          %v604 = vand.u32 %v603, 4294901760
          %v605 = vsub.f32 %v603, %v604
          %v606 = vand.u32 %v605, 4294901760
          %607 = vmatmul.mubr.f32.gmra.mrb[0].mxu0 %v606
          %v608 = vpop.f32.mrb[0].mxu0
          %v609 = vadd.f32 0.0, %v608
          %v610 = vpop.f32.mrb[0].mxu0
          %611 = vmatprep.mubr.f32.mxu0 0.0
          %v612 = vand.u32 %v472, 4294901760
          %v613 = vsub.f32 %v472, %v612
          %v614 = vand.u32 %v613, 4294901760
          %v615 = vsub.f32 %v613, %v614
          %v616 = vand.u32 %v615, 4294901760
          %617 = vmatmul.mubr.f32.gmra.mrb[0].mxu0 %v616
          %v618 = vpop.f32.mrb[0].mxu0
          %v619 = vadd.f32 0.0, %v618
          %v620 = vpop.f32.mrb[0].mxu0
          %621 = vmatprep.mubr.f32.mxu0 0.0
          %v622 = vand.u32 %v473, 4294901760
          %v623 = vsub.f32 %v473, %v622
          %v624 = vand.u32 %v623, 4294901760
          %v625 = vsub.f32 %v623, %v624
          %v626 = vand.u32 %v625, 4294901760
          %627 = vmatmul.mubr.f32.gmra.mrb[0].mxu0 %v626
          %v628 = vpop.f32.mrb[0].mxu0
          %v629 = vadd.f32 0.0, %v628
          %v630 = vpop.f32.mrb[0].mxu0
          %631 = vmatprep.mubr.f32.mxu0 0.0
          %v632 = vand.u32 %v474, 4294901760
          %v633 = vsub.f32 %v474, %v632
          %v634 = vand.u32 %v633, 4294901760
          %v635 = vsub.f32 %v633, %v634
          %v636 = vand.u32 %v635, 4294901760
          %637 = vmatmul.mubr.f32.gmra.mrb[0].mxu0 %v636
          %v638 = vpop.f32.mrb[0].mxu0
          %v639 = vadd.f32 0.0, %v638
          %v640 = vpop.f32.mrb[0].mxu0
          %641 = vmatprep.mubr.f32.mxu0 0.0
          %v642 = vand.u32 %v475, 4294901760
          %v643 = vsub.f32 %v475, %v642
          %v644 = vand.u32 %v643, 4294901760
          %v645 = vsub.f32 %v643, %v644
          %v646 = vand.u32 %v645, 4294901760
          %647 = vmatmul.mubr.f32.gmra.mrb[0].mxu0 %v646
          %v648 = vpop.f32.mrb[0].mxu0
          %v649 = vadd.f32 0.0, %v648
          %v650 = vpop.f32.mrb[0].mxu0
          %651 = vmatprep.mubr.f32.mxu0 0.0
          %v652 = vand.u32 %v476, 4294901760
          %v653 = vsub.f32 %v476, %v652
          %v654 = vand.u32 %v653, 4294901760
          %v655 = vsub.f32 %v653, %v654
          %v656 = vand.u32 %v655, 4294901760
          %657 = vmatmul.mubr.f32.gmra.mrb[0].mxu0 %v656
          %v658 = vpop.f32.mrb[0].mxu0
          %v659 = vadd.f32 0.0, %v658
          %v660 = vpop.f32.mrb[0].mxu0
          %661 = vmatprep.mubr.f32.mxu0 0.0
          %v662 = vand.u32 %v477, 4294901760
          %v663 = vsub.f32 %v477, %v662
          %v664 = vand.u32 %v663, 4294901760
          %v665 = vsub.f32 %v663, %v664
          %v666 = vand.u32 %v665, 4294901760
          %667 = vmatmul.mubr.f32.gmra.mrb[0].mxu0 %v666
          %v668 = vpop.f32.mrb[0].mxu0
          %v669 = vadd.f32 0.0, %v668
          %v670 = vpop.f32.mrb[0].mxu0
          %671 = vmatprep.mubr.f32.mxu0 0.0
          %v672 = vand.u32 %v478, 4294901760
          %v673 = vsub.f32 %v478, %v672
          %v674 = vand.u32 %v673, 4294901760
          %v675 = vsub.f32 %v673, %v674
          %v676 = vand.u32 %v675, 4294901760
          %677 = vmatmul.mubr.f32.gmra.mrb[0].mxu0 %v676
          %v678 = vpop.f32.mrb[0].mxu0
          %v679 = vadd.f32 0.0, %v678
          %v680 = vpop.f32.mrb[0].mxu0
          %681 = vmatprep.mubr.f32.mxu0 0.0
          %v682 = vand.u32 %v479, 4294901760
          %v683 = vsub.f32 %v479, %v682
          %v684 = vand.u32 %v683, 4294901760
          %v685 = vsub.f32 %v683, %v684
          %v686 = vand.u32 %v685, 4294901760
          %687 = vmatmul.mubr.f32.gmra.mrb[0].mxu0 %v686
          %v688 = vpop.f32.mrb[0].mxu0
          %v689 = vadd.f32 0.0, %v688
          %v690 = vpop.f32.mrb[0].mxu0
          %691 = vmatprep.mubr.f32.mxu0 0.0
          %v692 = vand.u32 %v480, 4294901760
          %v693 = vsub.f32 %v480, %v692
          %v694 = vand.u32 %v693, 4294901760
          %v695 = vsub.f32 %v693, %v694
          %v696 = vand.u32 %v695, 4294901760
          %697 = vmatmul.mubr.f32.gmra.mrb[0].mxu0 %v696
          %v698 = vpop.f32.mrb[0].mxu0
          %v699 = vadd.f32 0.0, %v698
          %v700 = vpop.f32.mrb[0].mxu0
          %701 = vmatprep.mubr.f32.mxu0 0.0
          %v702 = vand.u32 %v481, 4294901760
          %v703 = vsub.f32 %v481, %v702
          %v704 = vand.u32 %v703, 4294901760
          %v705 = vsub.f32 %v703, %v704
          %v706 = vand.u32 %v705, 4294901760
          %707 = vmatmul.mubr.f32.gmra.mrb[0].mxu0 %v706
          %v708 = vpop.f32.mrb[0].mxu0
          %v709 = vadd.f32 0.0, %v708
          %v710 = vpop.f32.mrb[0].mxu0
          %711 = vmatprep.mubr.f32.mxu0 0.0
          %v712 = vand.u32 %v482, 4294901760
          %v713 = vsub.f32 %v482, %v712
          %v714 = vand.u32 %v713, 4294901760
          %v715 = vsub.f32 %v713, %v714
          %v716 = vand.u32 %v715, 4294901760
          %717 = vmatmul.mubr.f32.gmra.mrb[0].mxu0 %v716
          %v718 = vpop.f32.mrb[0].mxu0
          %v719 = vadd.f32 0.0, %v718
          %v720 = vpop.f32.mrb[0].mxu0
          %721 = vmatprep.mubr.f32.mxu0 0.0
          %v722 = vand.u32 %v483, 4294901760
          %v723 = vsub.f32 %v483, %v722
          %v724 = vand.u32 %v723, 4294901760
          %v725 = vsub.f32 %v723, %v724
          %v726 = vand.u32 %v725, 4294901760
          %727 = vmatmul.mubr.f32.gmra.mrb[0].mxu0 %v726
          %v728 = vpop.f32.mrb[0].mxu0
          %v729 = vadd.f32 0.0, %v728
          %v730 = vpop.f32.mrb[0].mxu0
          %731 = vmatprep.mubr.f32.mxu0 0.0
          %v732 = vand.u32 %v484, 4294901760
          %v733 = vsub.f32 %v484, %v732
          %v734 = vand.u32 %v733, 4294901760
          %v735 = vsub.f32 %v733, %v734
          %v736 = vand.u32 %v735, 4294901760
          %737 = vmatmul.mubr.f32.gmra.mrb[0].mxu0 %v736
          %v738 = vpop.f32.mrb[0].mxu0
          %v739 = vadd.f32 0.0, %v738
          %v740 = vpop.f32.mrb[0].mxu0
          %741 = vdwg.mxu0
          %742 = vmatprep.subr.mxu0 0.0
          %v743 = vand.u32 %v485, 4294901760
          %v744 = vsub.f32 %v485, %v743
          %v745 = vand.u32 %v744, 4294901760
          %v746 = vsub.f32 %v744, %v745
          %v747 = vand.u32 %v746, 4294901760
          %748 = vmatpush1.msra.mxu0 %v747
          %749 = vmatprep.subr.mxu0 0.0
          %v750 = vand.u32 %v486, 4294901760
          %v751 = vsub.f32 %v486, %v750
          %v752 = vand.u32 %v751, 4294901760
          %v753 = vsub.f32 %v751, %v752
          %v754 = vand.u32 %v753, 4294901760
          %755 = vmatpush1.msra.mxu0 %v754
          %756 = vmatprep.subr.mxu0 0.0
          %v757 = vand.u32 %v487, 4294901760
          %v758 = vsub.f32 %v487, %v757
          %v759 = vand.u32 %v758, 4294901760
          %v760 = vsub.f32 %v758, %v759
          %v761 = vand.u32 %v760, 4294901760
          %762 = vmatpush1.msra.mxu0 %v761
          %763 = vmatprep.subr.mxu0 0.0
          %v764 = vand.u32 %v488, 4294901760
          %v765 = vsub.f32 %v488, %v764
          %v766 = vand.u32 %v765, 4294901760
          %v767 = vsub.f32 %v765, %v766
          %v768 = vand.u32 %v767, 4294901760
          %769 = vmatpush1.msra.mxu0 %v768
          %770 = vmatprep.subr.mxu0 0.0
          %v771 = vand.u32 %v489, 4294901760
          %v772 = vsub.f32 %v489, %v771
          %v773 = vand.u32 %v772, 4294901760
          %v774 = vsub.f32 %v772, %v773
          %v775 = vand.u32 %v774, 4294901760
          %776 = vmatpush1.msra.mxu0 %v775
          %777 = vmatprep.subr.mxu0 0.0
          %v778 = vand.u32 %v490, 4294901760
          %v779 = vsub.f32 %v490, %v778
          %v780 = vand.u32 %v779, 4294901760
          %v781 = vsub.f32 %v779, %v780
          %v782 = vand.u32 %v781, 4294901760
          %783 = vmatpush1.msra.mxu0 %v782
          %784 = vmatprep.subr.mxu0 0.0
          %v785 = vand.u32 %v491, 4294901760
          %v786 = vsub.f32 %v491, %v785
          %v787 = vand.u32 %v786, 4294901760
          %v788 = vsub.f32 %v786, %v787
          %v789 = vand.u32 %v788, 4294901760
          %790 = vmatpush1.msra.mxu0 %v789
          %791 = vmatprep.subr.mxu0 0.0
          %v792 = vand.u32 %v492, 4294901760
          %v793 = vsub.f32 %v492, %v792
          %v794 = vand.u32 %v793, 4294901760
          %v795 = vsub.f32 %v793, %v794
          %v796 = vand.u32 %v795, 4294901760
          %797 = vmatpush1.msra.mxu0 %v796
          %798 = vmatprep.subr.mxu0 0.0
          %v799 = vand.u32 %v493, 4294901760
          %v800 = vsub.f32 %v493, %v799
          %v801 = vand.u32 %v800, 4294901760
          %v802 = vsub.f32 %v800, %v801
          %v803 = vand.u32 %v802, 4294901760
          %804 = vmatpush1.msra.mxu0 %v803
          %805 = vmatprep.subr.mxu0 0.0
          %v806 = vand.u32 %v494, 4294901760
          %v807 = vsub.f32 %v494, %v806
          %v808 = vand.u32 %v807, 4294901760
          %v809 = vsub.f32 %v807, %v808
          %v810 = vand.u32 %v809, 4294901760
          %811 = vmatpush1.msra.mxu0 %v810
          %812 = vmatprep.subr.mxu0 0.0
          %v813 = vand.u32 %v495, 4294901760
          %v814 = vsub.f32 %v495, %v813
          %v815 = vand.u32 %v814, 4294901760
          %v816 = vsub.f32 %v814, %v815
          %v817 = vand.u32 %v816, 4294901760
          %818 = vmatpush1.msra.mxu0 %v817
          %819 = vmatprep.subr.mxu0 0.0
          %v820 = vand.u32 %v496, 4294901760
          %v821 = vsub.f32 %v496, %v820
          %v822 = vand.u32 %v821, 4294901760
          %v823 = vsub.f32 %v821, %v822
          %v824 = vand.u32 %v823, 4294901760
          %825 = vmatpush1.msra.mxu0 %v824
          %826 = vmatprep.subr.mxu0 0.0
          %v827 = vand.u32 %v497, 4294901760
          %v828 = vsub.f32 %v497, %v827
          %v829 = vand.u32 %v828, 4294901760
          %v830 = vsub.f32 %v828, %v829
          %v831 = vand.u32 %v830, 4294901760
          %832 = vmatpush1.msra.mxu0 %v831
          %833 = vmatprep.subr.mxu0 0.0
          %v834 = vand.u32 %v498, 4294901760
          %v835 = vsub.f32 %v498, %v834
          %v836 = vand.u32 %v835, 4294901760
          %v837 = vsub.f32 %v835, %v836
          %v838 = vand.u32 %v837, 4294901760
          %839 = vmatpush1.msra.mxu0 %v838
          %840 = vmatprep.subr.mxu0 0.0
          %v841 = vand.u32 %v499, 4294901760
          %v842 = vsub.f32 %v499, %v841
          %v843 = vand.u32 %v842, 4294901760
          %v844 = vsub.f32 %v842, %v843
          %v845 = vand.u32 %v844, 4294901760
          %846 = vmatpush1.msra.mxu0 %v845
          %847 = vmatprep.subr.mxu0 0.0
          %v848 = vand.u32 %v500, 4294901760
          %v849 = vsub.f32 %v500, %v848
          %v850 = vand.u32 %v849, 4294901760
          %v851 = vsub.f32 %v849, %v850
          %v852 = vand.u32 %v851, 4294901760
          %853 = vmatpush1.msra.mxu0 %v852
          %854 = vmatprep.subr.mxu0 0.0
          %855 = vmatpush1.msra.mxu0 0.0
          %856 = vmatprep.subr.mxu0 0.0
          %857 = vmatpush1.msra.mxu0 0.0
          %858 = vmatprep.subr.mxu0 0.0
          %859 = vmatpush1.msra.mxu0 0.0
          %860 = vmatprep.subr.mxu0 0.0
          %861 = vmatpush1.msra.mxu0 0.0
          %862 = vmatprep.subr.mxu0 0.0
          %863 = vmatpush1.msra.mxu0 0.0
          %864 = vmatprep.subr.mxu0 0.0
          %865 = vmatpush1.msra.mxu0 0.0
          %866 = vmatprep.subr.mxu0 0.0
          %867 = vmatpush1.msra.mxu0 0.0
          %868 = vmatprep.subr.mxu0 0.0
          %869 = vmatpush1.msra.mxu0 0.0
          %870 = vmatprep.subr.mxu0 0.0
          %871 = vmatpush1.msra.mxu0 0.0
          %872 = vmatprep.subr.mxu0 0.0
          %873 = vmatpush1.msra.mxu0 0.0
          %874 = vmatprep.subr.mxu0 0.0
          %875 = vmatpush1.msra.mxu0 0.0
          %876 = vmatprep.subr.mxu0 0.0
          %877 = vmatpush1.msra.mxu0 0.0
          %878 = vmatprep.subr.mxu0 0.0
          %879 = vmatpush1.msra.mxu0 0.0
          %880 = vmatprep.subr.mxu0 0.0
          %881 = vmatpush1.msra.mxu0 0.0
          %882 = vmatprep.subr.mxu0 0.0
          %883 = vmatpush1.msra.mxu0 0.0
          %884 = vmatprep.subr.mxu0 0.0
          %885 = vmatpush1.msra.mxu0 0.0
          %886 = vmatprep.mubr.f32.mxu0 0.0
          %v887 = vand.u32 %v469, 4294901760
          %888 = vmatmul.mubr.f32.gmra.mrb[0].mxu0 %v887
          %v889 = vpop.f32.mrb[0].mxu0
          %v890 = vadd.f32 %v589, %v889
          %v891 = vpop.f32.mrb[0].mxu0
          %892 = vmatprep.mubr.f32.mxu0 0.0
          %v893 = vand.u32 %v470, 4294901760
          %894 = vmatmul.mubr.f32.gmra.mrb[0].mxu0 %v893
          %v895 = vpop.f32.mrb[0].mxu0
          %v896 = vadd.f32 %v599, %v895
          %v897 = vpop.f32.mrb[0].mxu0
          %898 = vmatprep.mubr.f32.mxu0 0.0
          %v899 = vand.u32 %v471, 4294901760
          %900 = vmatmul.mubr.f32.gmra.mrb[0].mxu0 %v899
          %v901 = vpop.f32.mrb[0].mxu0
          %v902 = vadd.f32 %v609, %v901
          %v903 = vpop.f32.mrb[0].mxu0
          %904 = vmatprep.mubr.f32.mxu0 0.0
          %v905 = vand.u32 %v472, 4294901760
          %906 = vmatmul.mubr.f32.gmra.mrb[0].mxu0 %v905
          %v907 = vpop.f32.mrb[0].mxu0
          %v908 = vadd.f32 %v619, %v907
          %v909 = vpop.f32.mrb[0].mxu0
          %910 = vmatprep.mubr.f32.mxu0 0.0
          %v911 = vand.u32 %v473, 4294901760
          %912 = vmatmul.mubr.f32.gmra.mrb[0].mxu0 %v911
          %v913 = vpop.f32.mrb[0].mxu0
          %v914 = vadd.f32 %v629, %v913
          %v915 = vpop.f32.mrb[0].mxu0
          %916 = vmatprep.mubr.f32.mxu0 0.0
          %v917 = vand.u32 %v474, 4294901760
          %918 = vmatmul.mubr.f32.gmra.mrb[0].mxu0 %v917
          %v919 = vpop.f32.mrb[0].mxu0
          %v920 = vadd.f32 %v639, %v919
          %v921 = vpop.f32.mrb[0].mxu0
          %922 = vmatprep.mubr.f32.mxu0 0.0
          %v923 = vand.u32 %v475, 4294901760
          %924 = vmatmul.mubr.f32.gmra.mrb[0].mxu0 %v923
          %v925 = vpop.f32.mrb[0].mxu0
          %v926 = vadd.f32 %v649, %v925
          %v927 = vpop.f32.mrb[0].mxu0
          %928 = vmatprep.mubr.f32.mxu0 0.0
          %v929 = vand.u32 %v476, 4294901760
          %930 = vmatmul.mubr.f32.gmra.mrb[0].mxu0 %v929
          %v931 = vpop.f32.mrb[0].mxu0
          %v932 = vadd.f32 %v659, %v931
          %v933 = vpop.f32.mrb[0].mxu0
          %934 = vmatprep.mubr.f32.mxu0 0.0
          %v935 = vand.u32 %v477, 4294901760
          %936 = vmatmul.mubr.f32.gmra.mrb[0].mxu0 %v935
          %v937 = vpop.f32.mrb[0].mxu0
          %v938 = vadd.f32 %v669, %v937
          %v939 = vpop.f32.mrb[0].mxu0
          %940 = vmatprep.mubr.f32.mxu0 0.0
          %v941 = vand.u32 %v478, 4294901760
          %942 = vmatmul.mubr.f32.gmra.mrb[0].mxu0 %v941
          %v943 = vpop.f32.mrb[0].mxu0
          %v944 = vadd.f32 %v679, %v943
          %v945 = vpop.f32.mrb[0].mxu0
          %946 = vmatprep.mubr.f32.mxu0 0.0
          %v947 = vand.u32 %v479, 4294901760
          %948 = vmatmul.mubr.f32.gmra.mrb[0].mxu0 %v947
          %v949 = vpop.f32.mrb[0].mxu0
          %v950 = vadd.f32 %v689, %v949
          %v951 = vpop.f32.mrb[0].mxu0
          %952 = vmatprep.mubr.f32.mxu0 0.0
          %v953 = vand.u32 %v480, 4294901760
          %954 = vmatmul.mubr.f32.gmra.mrb[0].mxu0 %v953
          %v955 = vpop.f32.mrb[0].mxu0
          %v956 = vadd.f32 %v699, %v955
          %v957 = vpop.f32.mrb[0].mxu0
          %958 = vmatprep.mubr.f32.mxu0 0.0
          %v959 = vand.u32 %v481, 4294901760
          %960 = vmatmul.mubr.f32.gmra.mrb[0].mxu0 %v959
          %v961 = vpop.f32.mrb[0].mxu0
          %v962 = vadd.f32 %v709, %v961
          %v963 = vpop.f32.mrb[0].mxu0
          %964 = vmatprep.mubr.f32.mxu0 0.0
          %v965 = vand.u32 %v482, 4294901760
          %966 = vmatmul.mubr.f32.gmra.mrb[0].mxu0 %v965
          %v967 = vpop.f32.mrb[0].mxu0
          %v968 = vadd.f32 %v719, %v967
          %v969 = vpop.f32.mrb[0].mxu0
          %970 = vmatprep.mubr.f32.mxu0 0.0
          %v971 = vand.u32 %v483, 4294901760
          %972 = vmatmul.mubr.f32.gmra.mrb[0].mxu0 %v971
          %v973 = vpop.f32.mrb[0].mxu0
          %v974 = vadd.f32 %v729, %v973
          %v975 = vpop.f32.mrb[0].mxu0
          %976 = vmatprep.mubr.f32.mxu0 0.0
          %v977 = vand.u32 %v484, 4294901760
          %978 = vmatmul.mubr.f32.gmra.mrb[0].mxu0 %v977
          %v979 = vpop.f32.mrb[0].mxu0
          %v980 = vadd.f32 %v739, %v979
          %v981 = vpop.f32.mrb[0].mxu0
          %982 = vdwg.mxu0
          %983 = vmatprep.subr.mxu0 0.0
          %v984 = vand.u32 %v485, 4294901760
          %v985 = vsub.f32 %v485, %v984
          %986 = vmatpush1.msra.mxu0 %v985
          %987 = vmatprep.subr.mxu0 0.0
          %v988 = vand.u32 %v486, 4294901760
          %v989 = vsub.f32 %v486, %v988
          %990 = vmatpush1.msra.mxu0 %v989
          %991 = vmatprep.subr.mxu0 0.0
          %v992 = vand.u32 %v487, 4294901760
          %v993 = vsub.f32 %v487, %v992
          %994 = vmatpush1.msra.mxu0 %v993
          %995 = vmatprep.subr.mxu0 0.0
          %v996 = vand.u32 %v488, 4294901760
          %v997 = vsub.f32 %v488, %v996
          %998 = vmatpush1.msra.mxu0 %v997
          %999 = vmatprep.subr.mxu0 0.0
          %v1000 = vand.u32 %v489, 4294901760
          %v1001 = vsub.f32 %v489, %v1000
          %1002 = vmatpush1.msra.mxu0 %v1001
          %1003 = vmatprep.subr.mxu0 0.0
          %v1004 = vand.u32 %v490, 4294901760
          %v1005 = vsub.f32 %v490, %v1004
          %1006 = vmatpush1.msra.mxu0 %v1005
          %1007 = vmatprep.subr.mxu0 0.0
          %v1008 = vand.u32 %v491, 4294901760
          %v1009 = vsub.f32 %v491, %v1008
          %1010 = vmatpush1.msra.mxu0 %v1009
          %1011 = vmatprep.subr.mxu0 0.0
          %v1012 = vand.u32 %v492, 4294901760
          %v1013 = vsub.f32 %v492, %v1012
          %1014 = vmatpush1.msra.mxu0 %v1013
          %1015 = vmatprep.subr.mxu0 0.0
          %v1016 = vand.u32 %v493, 4294901760
          %v1017 = vsub.f32 %v493, %v1016
          %1018 = vmatpush1.msra.mxu0 %v1017
          %1019 = vmatprep.subr.mxu0 0.0
          %v1020 = vand.u32 %v494, 4294901760
          %v1021 = vsub.f32 %v494, %v1020
          %1022 = vmatpush1.msra.mxu0 %v1021
          %1023 = vmatprep.subr.mxu0 0.0
          %v1024 = vand.u32 %v495, 4294901760
          %v1025 = vsub.f32 %v495, %v1024
          %1026 = vmatpush1.msra.mxu0 %v1025
          %1027 = vmatprep.subr.mxu0 0.0
          %v1028 = vand.u32 %v496, 4294901760
          %v1029 = vsub.f32 %v496, %v1028
          %1030 = vmatpush1.msra.mxu0 %v1029
          %1031 = vmatprep.subr.mxu0 0.0
          %v1032 = vand.u32 %v497, 4294901760
          %v1033 = vsub.f32 %v497, %v1032
          %1034 = vmatpush1.msra.mxu0 %v1033
          %1035 = vmatprep.subr.mxu0 0.0
          %v1036 = vand.u32 %v498, 4294901760
          %v1037 = vsub.f32 %v498, %v1036
          %1038 = vmatpush1.msra.mxu0 %v1037
          %1039 = vmatprep.subr.mxu0 0.0
          %v1040 = vand.u32 %v499, 4294901760
          %v1041 = vsub.f32 %v499, %v1040
          %1042 = vmatpush1.msra.mxu0 %v1041
          %1043 = vmatprep.subr.mxu0 0.0
          %v1044 = vand.u32 %v500, 4294901760
          %v1045 = vsub.f32 %v500, %v1044
          %1046 = vmatpush1.msra.mxu0 %v1045
          %1047 = vmatprep.subr.mxu0 0.0
          %1048 = vmatpush1.msra.mxu0 0.0
          %1049 = vmatprep.subr.mxu0 0.0
          %1050 = vmatpush1.msra.mxu0 0.0
          %1051 = vmatprep.subr.mxu0 0.0
          %1052 = vmatpush1.msra.mxu0 0.0
          %1053 = vmatprep.subr.mxu0 0.0
          %1054 = vmatpush1.msra.mxu0 0.0
          %1055 = vmatprep.subr.mxu0 0.0
          %1056 = vmatpush1.msra.mxu0 0.0
          %1057 = vmatprep.subr.mxu0 0.0
          %1058 = vmatpush1.msra.mxu0 0.0
          %1059 = vmatprep.subr.mxu0 0.0
          %1060 = vmatpush1.msra.mxu0 0.0
          %1061 = vmatprep.subr.mxu0 0.0
          %1062 = vmatpush1.msra.mxu0 0.0
          %1063 = vmatprep.subr.mxu0 0.0
          %1064 = vmatpush1.msra.mxu0 0.0
          %1065 = vmatprep.subr.mxu0 0.0
          %1066 = vmatpush1.msra.mxu0 0.0
          %1067 = vmatprep.subr.mxu0 0.0
          %1068 = vmatpush1.msra.mxu0 0.0
          %1069 = vmatprep.subr.mxu0 0.0
          %1070 = vmatpush1.msra.mxu0 0.0
          %1071 = vmatprep.subr.mxu0 0.0
          %1072 = vmatpush1.msra.mxu0 0.0
          %1073 = vmatprep.subr.mxu0 0.0
          %1074 = vmatpush1.msra.mxu0 0.0
          %1075 = vmatprep.subr.mxu0 0.0
          %1076 = vmatpush1.msra.mxu0 0.0
          %1077 = vmatprep.subr.mxu0 0.0
          %1078 = vmatpush1.msra.mxu0 0.0
          %1079 = vmatprep.mubr.f32.mxu0 0.0
          %v1080 = vand.u32 %v469, 4294901760
          %v1081 = vsub.f32 %v469, %v1080
          %1082 = vmatmul.mubr.f32.gmra.mrb[0].mxu0 %v1081
          %v1083 = vpop.f32.mrb[0].mxu0
          %v1084 = vadd.f32 %v890, %v1083
          %v1085 = vpop.f32.mrb[0].mxu0
          %1086 = vmatprep.mubr.f32.mxu0 0.0
          %v1087 = vand.u32 %v470, 4294901760
          %v1088 = vsub.f32 %v470, %v1087
          %1089 = vmatmul.mubr.f32.gmra.mrb[0].mxu0 %v1088
          %v1090 = vpop.f32.mrb[0].mxu0
          %v1091 = vadd.f32 %v896, %v1090
          %v1092 = vpop.f32.mrb[0].mxu0
          %1093 = vmatprep.mubr.f32.mxu0 0.0
          %v1094 = vand.u32 %v471, 4294901760
          %v1095 = vsub.f32 %v471, %v1094
          %1096 = vmatmul.mubr.f32.gmra.mrb[0].mxu0 %v1095
          %v1097 = vpop.f32.mrb[0].mxu0
          %v1098 = vadd.f32 %v902, %v1097
          %v1099 = vpop.f32.mrb[0].mxu0
          %1100 = vmatprep.mubr.f32.mxu0 0.0
          %v1101 = vand.u32 %v472, 4294901760
          %v1102 = vsub.f32 %v472, %v1101
          %1103 = vmatmul.mubr.f32.gmra.mrb[0].mxu0 %v1102
          %v1104 = vpop.f32.mrb[0].mxu0
          %v1105 = vadd.f32 %v908, %v1104
          %v1106 = vpop.f32.mrb[0].mxu0
          %1107 = vmatprep.mubr.f32.mxu0 0.0
          %v1108 = vand.u32 %v473, 4294901760
          %v1109 = vsub.f32 %v473, %v1108
          %1110 = vmatmul.mubr.f32.gmra.mrb[0].mxu0 %v1109
          %v1111 = vpop.f32.mrb[0].mxu0
          %v1112 = vadd.f32 %v914, %v1111
          %v1113 = vpop.f32.mrb[0].mxu0
          %1114 = vmatprep.mubr.f32.mxu0 0.0
          %v1115 = vand.u32 %v474, 4294901760
          %v1116 = vsub.f32 %v474, %v1115
          %1117 = vmatmul.mubr.f32.gmra.mrb[0].mxu0 %v1116
          %v1118 = vpop.f32.mrb[0].mxu0
          %v1119 = vadd.f32 %v920, %v1118
          %v1120 = vpop.f32.mrb[0].mxu0
          %1121 = vmatprep.mubr.f32.mxu0 0.0
          %v1122 = vand.u32 %v475, 4294901760
          %v1123 = vsub.f32 %v475, %v1122
          %1124 = vmatmul.mubr.f32.gmra.mrb[0].mxu0 %v1123
          %v1125 = vpop.f32.mrb[0].mxu0
          %v1126 = vadd.f32 %v926, %v1125
          %v1127 = vpop.f32.mrb[0].mxu0
          %1128 = vmatprep.mubr.f32.mxu0 0.0
          %v1129 = vand.u32 %v476, 4294901760
          %v1130 = vsub.f32 %v476, %v1129
          %1131 = vmatmul.mubr.f32.gmra.mrb[0].mxu0 %v1130
          %v1132 = vpop.f32.mrb[0].mxu0
          %v1133 = vadd.f32 %v932, %v1132
          %v1134 = vpop.f32.mrb[0].mxu0
          %1135 = vmatprep.mubr.f32.mxu0 0.0
          %v1136 = vand.u32 %v477, 4294901760
          %v1137 = vsub.f32 %v477, %v1136
          %1138 = vmatmul.mubr.f32.gmra.mrb[0].mxu0 %v1137
          %v1139 = vpop.f32.mrb[0].mxu0
          %v1140 = vadd.f32 %v938, %v1139
          %v1141 = vpop.f32.mrb[0].mxu0
          %1142 = vmatprep.mubr.f32.mxu0 0.0
          %v1143 = vand.u32 %v478, 4294901760
          %v1144 = vsub.f32 %v478, %v1143
          %1145 = vmatmul.mubr.f32.gmra.mrb[0].mxu0 %v1144
          %v1146 = vpop.f32.mrb[0].mxu0
          %v1147 = vadd.f32 %v944, %v1146
          %v1148 = vpop.f32.mrb[0].mxu0
          %1149 = vmatprep.mubr.f32.mxu0 0.0
          %v1150 = vand.u32 %v479, 4294901760
          %v1151 = vsub.f32 %v479, %v1150
          %1152 = vmatmul.mubr.f32.gmra.mrb[0].mxu0 %v1151
          %v1153 = vpop.f32.mrb[0].mxu0
          %v1154 = vadd.f32 %v950, %v1153
          %v1155 = vpop.f32.mrb[0].mxu0
          %1156 = vmatprep.mubr.f32.mxu0 0.0
          %v1157 = vand.u32 %v480, 4294901760
          %v1158 = vsub.f32 %v480, %v1157
          %1159 = vmatmul.mubr.f32.gmra.mrb[0].mxu0 %v1158
          %v1160 = vpop.f32.mrb[0].mxu0
          %v1161 = vadd.f32 %v956, %v1160
          %v1162 = vpop.f32.mrb[0].mxu0
          %1163 = vmatprep.mubr.f32.mxu0 0.0
          %v1164 = vand.u32 %v481, 4294901760
          %v1165 = vsub.f32 %v481, %v1164
          %1166 = vmatmul.mubr.f32.gmra.mrb[0].mxu0 %v1165
          %v1167 = vpop.f32.mrb[0].mxu0
          %v1168 = vadd.f32 %v962, %v1167
          %v1169 = vpop.f32.mrb[0].mxu0
          %1170 = vmatprep.mubr.f32.mxu0 0.0
          %v1171 = vand.u32 %v482, 4294901760
          %v1172 = vsub.f32 %v482, %v1171
          %1173 = vmatmul.mubr.f32.gmra.mrb[0].mxu0 %v1172
          %v1174 = vpop.f32.mrb[0].mxu0
          %v1175 = vadd.f32 %v968, %v1174
          %v1176 = vpop.f32.mrb[0].mxu0
          %1177 = vmatprep.mubr.f32.mxu0 0.0
          %v1178 = vand.u32 %v483, 4294901760
          %v1179 = vsub.f32 %v483, %v1178
          %1180 = vmatmul.mubr.f32.gmra.mrb[0].mxu0 %v1179
          %v1181 = vpop.f32.mrb[0].mxu0
          %v1182 = vadd.f32 %v974, %v1181
          %v1183 = vpop.f32.mrb[0].mxu0
          %1184 = vmatprep.mubr.f32.mxu0 0.0
          %v1185 = vand.u32 %v484, 4294901760
          %v1186 = vsub.f32 %v484, %v1185
          %1187 = vmatmul.mubr.f32.gmra.mrb[0].mxu0 %v1186
          %v1188 = vpop.f32.mrb[0].mxu0
          %v1189 = vadd.f32 %v980, %v1188
          %v1190 = vpop.f32.mrb[0].mxu0
          %1191 = vdwg.mxu0
          %1192 = vmatprep.subr.mxu0 0.0
          %v1193 = vand.u32 %v485, 4294901760
          %1194 = vmatpush1.msra.mxu0 %v1193
          %1195 = vmatprep.subr.mxu0 0.0
          %v1196 = vand.u32 %v486, 4294901760
          %1197 = vmatpush1.msra.mxu0 %v1196
          %1198 = vmatprep.subr.mxu0 0.0
          %v1199 = vand.u32 %v487, 4294901760
          %1200 = vmatpush1.msra.mxu0 %v1199
          %1201 = vmatprep.subr.mxu0 0.0
          %v1202 = vand.u32 %v488, 4294901760
          %1203 = vmatpush1.msra.mxu0 %v1202
          %1204 = vmatprep.subr.mxu0 0.0
          %v1205 = vand.u32 %v489, 4294901760
          %1206 = vmatpush1.msra.mxu0 %v1205
          %1207 = vmatprep.subr.mxu0 0.0
          %v1208 = vand.u32 %v490, 4294901760
          %1209 = vmatpush1.msra.mxu0 %v1208
          %1210 = vmatprep.subr.mxu0 0.0
          %v1211 = vand.u32 %v491, 4294901760
          %1212 = vmatpush1.msra.mxu0 %v1211
          %1213 = vmatprep.subr.mxu0 0.0
          %v1214 = vand.u32 %v492, 4294901760
          %1215 = vmatpush1.msra.mxu0 %v1214
          %1216 = vmatprep.subr.mxu0 0.0
          %v1217 = vand.u32 %v493, 4294901760
          %1218 = vmatpush1.msra.mxu0 %v1217
          %1219 = vmatprep.subr.mxu0 0.0
          %v1220 = vand.u32 %v494, 4294901760
          %1221 = vmatpush1.msra.mxu0 %v1220
          %1222 = vmatprep.subr.mxu0 0.0
          %v1223 = vand.u32 %v495, 4294901760
          %1224 = vmatpush1.msra.mxu0 %v1223
          %1225 = vmatprep.subr.mxu0 0.0
          %v1226 = vand.u32 %v496, 4294901760
          %1227 = vmatpush1.msra.mxu0 %v1226
          %1228 = vmatprep.subr.mxu0 0.0
          %v1229 = vand.u32 %v497, 4294901760
          %1230 = vmatpush1.msra.mxu0 %v1229
          %1231 = vmatprep.subr.mxu0 0.0
          %v1232 = vand.u32 %v498, 4294901760
          %1233 = vmatpush1.msra.mxu0 %v1232
          %1234 = vmatprep.subr.mxu0 0.0
          %v1235 = vand.u32 %v499, 4294901760
          %1236 = vmatpush1.msra.mxu0 %v1235
          %1237 = vmatprep.subr.mxu0 0.0
          %v1238 = vand.u32 %v500, 4294901760
          %1239 = vmatpush1.msra.mxu0 %v1238
          %1240 = vmatprep.subr.mxu0 0.0
          %1241 = vmatpush1.msra.mxu0 0.0
          %1242 = vmatprep.subr.mxu0 0.0
          %1243 = vmatpush1.msra.mxu0 0.0
          %1244 = vmatprep.subr.mxu0 0.0
          %1245 = vmatpush1.msra.mxu0 0.0
          %1246 = vmatprep.subr.mxu0 0.0
          %1247 = vmatpush1.msra.mxu0 0.0
          %1248 = vmatprep.subr.mxu0 0.0
          %1249 = vmatpush1.msra.mxu0 0.0
          %1250 = vmatprep.subr.mxu0 0.0
          %1251 = vmatpush1.msra.mxu0 0.0
          %1252 = vmatprep.subr.mxu0 0.0
          %1253 = vmatpush1.msra.mxu0 0.0
          %1254 = vmatprep.subr.mxu0 0.0
          %1255 = vmatpush1.msra.mxu0 0.0
          %1256 = vmatprep.subr.mxu0 0.0
          %1257 = vmatpush1.msra.mxu0 0.0
          %1258 = vmatprep.subr.mxu0 0.0
          %1259 = vmatpush1.msra.mxu0 0.0
          %1260 = vmatprep.subr.mxu0 0.0
          %1261 = vmatpush1.msra.mxu0 0.0
          %1262 = vmatprep.subr.mxu0 0.0
          %1263 = vmatpush1.msra.mxu0 0.0
          %1264 = vmatprep.subr.mxu0 0.0
          %1265 = vmatpush1.msra.mxu0 0.0
          %1266 = vmatprep.subr.mxu0 0.0
          %1267 = vmatpush1.msra.mxu0 0.0
          %1268 = vmatprep.subr.mxu0 0.0
          %1269 = vmatpush1.msra.mxu0 0.0
          %1270 = vmatprep.subr.mxu0 0.0
          %1271 = vmatpush1.msra.mxu0 0.0
          %1272 = vmatprep.mubr.f32.mxu0 0.0
          %v1273 = vand.u32 %v469, 4294901760
          %v1274 = vsub.f32 %v469, %v1273
          %v1275 = vand.u32 %v1274, 4294901760
          %1276 = vmatmul.mubr.f32.gmra.mrb[0].mxu0 %v1275
          %v1277 = vpop.f32.mrb[0].mxu0
          %v1278 = vadd.f32 %v1084, %v1277
          %v1279 = vpop.f32.mrb[0].mxu0
          %1280 = vmatprep.mubr.f32.mxu0 0.0
          %v1281 = vand.u32 %v470, 4294901760
          %v1282 = vsub.f32 %v470, %v1281
          %v1283 = vand.u32 %v1282, 4294901760
          %1284 = vmatmul.mubr.f32.gmra.mrb[0].mxu0 %v1283
          %v1285 = vpop.f32.mrb[0].mxu0
          %v1286 = vadd.f32 %v1091, %v1285
          %v1287 = vpop.f32.mrb[0].mxu0
          %1288 = vmatprep.mubr.f32.mxu0 0.0
          %v1289 = vand.u32 %v471, 4294901760
          %v1290 = vsub.f32 %v471, %v1289
          %v1291 = vand.u32 %v1290, 4294901760
          %1292 = vmatmul.mubr.f32.gmra.mrb[0].mxu0 %v1291
          %v1293 = vpop.f32.mrb[0].mxu0
          %v1294 = vadd.f32 %v1098, %v1293
          %v1295 = vpop.f32.mrb[0].mxu0
          %1296 = vmatprep.mubr.f32.mxu0 0.0
          %v1297 = vand.u32 %v472, 4294901760
          %v1298 = vsub.f32 %v472, %v1297
          %v1299 = vand.u32 %v1298, 4294901760
          %1300 = vmatmul.mubr.f32.gmra.mrb[0].mxu0 %v1299
          %v1301 = vpop.f32.mrb[0].mxu0
          %v1302 = vadd.f32 %v1105, %v1301
          %v1303 = vpop.f32.mrb[0].mxu0
          %1304 = vmatprep.mubr.f32.mxu0 0.0
          %v1305 = vand.u32 %v473, 4294901760
          %v1306 = vsub.f32 %v473, %v1305
          %v1307 = vand.u32 %v1306, 4294901760
          %1308 = vmatmul.mubr.f32.gmra.mrb[0].mxu0 %v1307
          %v1309 = vpop.f32.mrb[0].mxu0
          %v1310 = vadd.f32 %v1112, %v1309
          %v1311 = vpop.f32.mrb[0].mxu0
          %1312 = vmatprep.mubr.f32.mxu0 0.0
          %v1313 = vand.u32 %v474, 4294901760
          %v1314 = vsub.f32 %v474, %v1313
          %v1315 = vand.u32 %v1314, 4294901760
          %1316 = vmatmul.mubr.f32.gmra.mrb[0].mxu0 %v1315
          %v1317 = vpop.f32.mrb[0].mxu0
          %v1318 = vadd.f32 %v1119, %v1317
          %v1319 = vpop.f32.mrb[0].mxu0
          %1320 = vmatprep.mubr.f32.mxu0 0.0
          %v1321 = vand.u32 %v475, 4294901760
          %v1322 = vsub.f32 %v475, %v1321
          %v1323 = vand.u32 %v1322, 4294901760
          %1324 = vmatmul.mubr.f32.gmra.mrb[0].mxu0 %v1323
          %v1325 = vpop.f32.mrb[0].mxu0
          %v1326 = vadd.f32 %v1126, %v1325
          %v1327 = vpop.f32.mrb[0].mxu0
          %1328 = vmatprep.mubr.f32.mxu0 0.0
          %v1329 = vand.u32 %v476, 4294901760
          %v1330 = vsub.f32 %v476, %v1329
          %v1331 = vand.u32 %v1330, 4294901760
          %1332 = vmatmul.mubr.f32.gmra.mrb[0].mxu0 %v1331
          %v1333 = vpop.f32.mrb[0].mxu0
          %v1334 = vadd.f32 %v1133, %v1333
          %v1335 = vpop.f32.mrb[0].mxu0
          %1336 = vmatprep.mubr.f32.mxu0 0.0
          %v1337 = vand.u32 %v477, 4294901760
          %v1338 = vsub.f32 %v477, %v1337
          %v1339 = vand.u32 %v1338, 4294901760
          %1340 = vmatmul.mubr.f32.gmra.mrb[0].mxu0 %v1339
          %v1341 = vpop.f32.mrb[0].mxu0
          %v1342 = vadd.f32 %v1140, %v1341
          %v1343 = vpop.f32.mrb[0].mxu0
          %1344 = vmatprep.mubr.f32.mxu0 0.0
          %v1345 = vand.u32 %v478, 4294901760
          %v1346 = vsub.f32 %v478, %v1345
          %v1347 = vand.u32 %v1346, 4294901760
          %1348 = vmatmul.mubr.f32.gmra.mrb[0].mxu0 %v1347
          %v1349 = vpop.f32.mrb[0].mxu0
          %v1350 = vadd.f32 %v1147, %v1349
          %v1351 = vpop.f32.mrb[0].mxu0
          %1352 = vmatprep.mubr.f32.mxu0 0.0
          %v1353 = vand.u32 %v479, 4294901760
          %v1354 = vsub.f32 %v479, %v1353
          %v1355 = vand.u32 %v1354, 4294901760
          %1356 = vmatmul.mubr.f32.gmra.mrb[0].mxu0 %v1355
          %v1357 = vpop.f32.mrb[0].mxu0
          %v1358 = vadd.f32 %v1154, %v1357
          %v1359 = vpop.f32.mrb[0].mxu0
          %1360 = vmatprep.mubr.f32.mxu0 0.0
          %v1361 = vand.u32 %v480, 4294901760
          %v1362 = vsub.f32 %v480, %v1361
          %v1363 = vand.u32 %v1362, 4294901760
          %1364 = vmatmul.mubr.f32.gmra.mrb[0].mxu0 %v1363
          %v1365 = vpop.f32.mrb[0].mxu0
          %v1366 = vadd.f32 %v1161, %v1365
          %v1367 = vpop.f32.mrb[0].mxu0
          %1368 = vmatprep.mubr.f32.mxu0 0.0
          %v1369 = vand.u32 %v481, 4294901760
          %v1370 = vsub.f32 %v481, %v1369
          %v1371 = vand.u32 %v1370, 4294901760
          %1372 = vmatmul.mubr.f32.gmra.mrb[0].mxu0 %v1371
          %v1373 = vpop.f32.mrb[0].mxu0
          %v1374 = vadd.f32 %v1168, %v1373
          %v1375 = vpop.f32.mrb[0].mxu0
          %1376 = vmatprep.mubr.f32.mxu0 0.0
          %v1377 = vand.u32 %v482, 4294901760
          %v1378 = vsub.f32 %v482, %v1377
          %v1379 = vand.u32 %v1378, 4294901760
          %1380 = vmatmul.mubr.f32.gmra.mrb[0].mxu0 %v1379
          %v1381 = vpop.f32.mrb[0].mxu0
          %v1382 = vadd.f32 %v1175, %v1381
          %v1383 = vpop.f32.mrb[0].mxu0
          %1384 = vmatprep.mubr.f32.mxu0 0.0
          %v1385 = vand.u32 %v483, 4294901760
          %v1386 = vsub.f32 %v483, %v1385
          %v1387 = vand.u32 %v1386, 4294901760
          %1388 = vmatmul.mubr.f32.gmra.mrb[0].mxu0 %v1387
          %v1389 = vpop.f32.mrb[0].mxu0
          %v1390 = vadd.f32 %v1182, %v1389
          %v1391 = vpop.f32.mrb[0].mxu0
          %1392 = vmatprep.mubr.f32.mxu0 0.0
          %v1393 = vand.u32 %v484, 4294901760
          %v1394 = vsub.f32 %v484, %v1393
          %v1395 = vand.u32 %v1394, 4294901760
          %1396 = vmatmul.mubr.f32.gmra.mrb[0].mxu0 %v1395
          %v1397 = vpop.f32.mrb[0].mxu0
          %v1398 = vadd.f32 %v1189, %v1397
          %v1399 = vpop.f32.mrb[0].mxu0
          %1400 = vdwg.mxu0
          %1401 = vmatprep.subr.mxu0 0.0
          %v1402 = vand.u32 %v485, 4294901760
          %v1403 = vsub.f32 %v485, %v1402
          %v1404 = vand.u32 %v1403, 4294901760
          %1405 = vmatpush1.msra.mxu0 %v1404
          %1406 = vmatprep.subr.mxu0 0.0
          %v1407 = vand.u32 %v486, 4294901760
          %v1408 = vsub.f32 %v486, %v1407
          %v1409 = vand.u32 %v1408, 4294901760
          %1410 = vmatpush1.msra.mxu0 %v1409
          %1411 = vmatprep.subr.mxu0 0.0
          %v1412 = vand.u32 %v487, 4294901760
          %v1413 = vsub.f32 %v487, %v1412
          %v1414 = vand.u32 %v1413, 4294901760
          %1415 = vmatpush1.msra.mxu0 %v1414
          %1416 = vmatprep.subr.mxu0 0.0
          %v1417 = vand.u32 %v488, 4294901760
          %v1418 = vsub.f32 %v488, %v1417
          %v1419 = vand.u32 %v1418, 4294901760
          %1420 = vmatpush1.msra.mxu0 %v1419
          %1421 = vmatprep.subr.mxu0 0.0
          %v1422 = vand.u32 %v489, 4294901760
          %v1423 = vsub.f32 %v489, %v1422
          %v1424 = vand.u32 %v1423, 4294901760
          %1425 = vmatpush1.msra.mxu0 %v1424
          %1426 = vmatprep.subr.mxu0 0.0
          %v1427 = vand.u32 %v490, 4294901760
          %v1428 = vsub.f32 %v490, %v1427
          %v1429 = vand.u32 %v1428, 4294901760
          %1430 = vmatpush1.msra.mxu0 %v1429
          %1431 = vmatprep.subr.mxu0 0.0
          %v1432 = vand.u32 %v491, 4294901760
          %v1433 = vsub.f32 %v491, %v1432
          %v1434 = vand.u32 %v1433, 4294901760
          %1435 = vmatpush1.msra.mxu0 %v1434
          %1436 = vmatprep.subr.mxu0 0.0
          %v1437 = vand.u32 %v492, 4294901760
          %v1438 = vsub.f32 %v492, %v1437
          %v1439 = vand.u32 %v1438, 4294901760
          %1440 = vmatpush1.msra.mxu0 %v1439
          %1441 = vmatprep.subr.mxu0 0.0
          %v1442 = vand.u32 %v493, 4294901760
          %v1443 = vsub.f32 %v493, %v1442
          %v1444 = vand.u32 %v1443, 4294901760
          %1445 = vmatpush1.msra.mxu0 %v1444
          %1446 = vmatprep.subr.mxu0 0.0
          %v1447 = vand.u32 %v494, 4294901760
          %v1448 = vsub.f32 %v494, %v1447
          %v1449 = vand.u32 %v1448, 4294901760
          %1450 = vmatpush1.msra.mxu0 %v1449
          %1451 = vmatprep.subr.mxu0 0.0
          %v1452 = vand.u32 %v495, 4294901760
          %v1453 = vsub.f32 %v495, %v1452
          %v1454 = vand.u32 %v1453, 4294901760
          %1455 = vmatpush1.msra.mxu0 %v1454
          %1456 = vmatprep.subr.mxu0 0.0
          %v1457 = vand.u32 %v496, 4294901760
          %v1458 = vsub.f32 %v496, %v1457
          %v1459 = vand.u32 %v1458, 4294901760
          %1460 = vmatpush1.msra.mxu0 %v1459
          %1461 = vmatprep.subr.mxu0 0.0
          %v1462 = vand.u32 %v497, 4294901760
          %v1463 = vsub.f32 %v497, %v1462
          %v1464 = vand.u32 %v1463, 4294901760
          %1465 = vmatpush1.msra.mxu0 %v1464
          %1466 = vmatprep.subr.mxu0 0.0
          %v1467 = vand.u32 %v498, 4294901760
          %v1468 = vsub.f32 %v498, %v1467
          %v1469 = vand.u32 %v1468, 4294901760
          %1470 = vmatpush1.msra.mxu0 %v1469
          %1471 = vmatprep.subr.mxu0 0.0
          %v1472 = vand.u32 %v499, 4294901760
          %v1473 = vsub.f32 %v499, %v1472
          %v1474 = vand.u32 %v1473, 4294901760
          %1475 = vmatpush1.msra.mxu0 %v1474
          %1476 = vmatprep.subr.mxu0 0.0
          %v1477 = vand.u32 %v500, 4294901760
          %v1478 = vsub.f32 %v500, %v1477
          %v1479 = vand.u32 %v1478, 4294901760
          %1480 = vmatpush1.msra.mxu0 %v1479
          %1481 = vmatprep.subr.mxu0 0.0
          %1482 = vmatpush1.msra.mxu0 0.0
          %1483 = vmatprep.subr.mxu0 0.0
          %1484 = vmatpush1.msra.mxu0 0.0
          %1485 = vmatprep.subr.mxu0 0.0
          %1486 = vmatpush1.msra.mxu0 0.0
          %1487 = vmatprep.subr.mxu0 0.0
          %1488 = vmatpush1.msra.mxu0 0.0
          %1489 = vmatprep.subr.mxu0 0.0
          %1490 = vmatpush1.msra.mxu0 0.0
          %1491 = vmatprep.subr.mxu0 0.0
          %1492 = vmatpush1.msra.mxu0 0.0
          %1493 = vmatprep.subr.mxu0 0.0
          %1494 = vmatpush1.msra.mxu0 0.0
          %1495 = vmatprep.subr.mxu0 0.0
          %1496 = vmatpush1.msra.mxu0 0.0
          %1497 = vmatprep.subr.mxu0 0.0
          %1498 = vmatpush1.msra.mxu0 0.0
          %1499 = vmatprep.subr.mxu0 0.0
          %1500 = vmatpush1.msra.mxu0 0.0
          %1501 = vmatprep.subr.mxu0 0.0
          %1502 = vmatpush1.msra.mxu0 0.0
          %1503 = vmatprep.subr.mxu0 0.0
          %1504 = vmatpush1.msra.mxu0 0.0
          %1505 = vmatprep.subr.mxu0 0.0
          %1506 = vmatpush1.msra.mxu0 0.0
          %1507 = vmatprep.subr.mxu0 0.0
          %1508 = vmatpush1.msra.mxu0 0.0
          %1509 = vmatprep.subr.mxu0 0.0
          %1510 = vmatpush1.msra.mxu0 0.0
          %1511 = vmatprep.subr.mxu0 0.0
          %1512 = vmatpush1.msra.mxu0 0.0
          %1513 = vmatprep.mubr.f32.mxu0 0.0
          %v1514 = vand.u32 %v469, 4294901760
          %1515 = vmatmul.mubr.f32.gmra.mrb[0].mxu0 %v1514
          %v1516 = vpop.f32.mrb[0].mxu0
          %v1517 = vadd.f32 %v1278, %v1516
          %v1518 = vpop.f32.mrb[0].mxu0
          %1519 = vmatprep.mubr.f32.mxu0 0.0
          %v1520 = vand.u32 %v470, 4294901760
          %1521 = vmatmul.mubr.f32.gmra.mrb[0].mxu0 %v1520
          %v1522 = vpop.f32.mrb[0].mxu0
          %v1523 = vadd.f32 %v1286, %v1522
          %v1524 = vpop.f32.mrb[0].mxu0
          %1525 = vmatprep.mubr.f32.mxu0 0.0
          %v1526 = vand.u32 %v471, 4294901760
          %1527 = vmatmul.mubr.f32.gmra.mrb[0].mxu0 %v1526
          %v1528 = vpop.f32.mrb[0].mxu0
          %v1529 = vadd.f32 %v1294, %v1528
          %v1530 = vpop.f32.mrb[0].mxu0
          %1531 = vmatprep.mubr.f32.mxu0 0.0
          %v1532 = vand.u32 %v472, 4294901760
          %1533 = vmatmul.mubr.f32.gmra.mrb[0].mxu0 %v1532
          %v1534 = vpop.f32.mrb[0].mxu0
          %v1535 = vadd.f32 %v1302, %v1534
          %v1536 = vpop.f32.mrb[0].mxu0
          %1537 = vmatprep.mubr.f32.mxu0 0.0
          %v1538 = vand.u32 %v473, 4294901760
          %1539 = vmatmul.mubr.f32.gmra.mrb[0].mxu0 %v1538
          %v1540 = vpop.f32.mrb[0].mxu0
          %v1541 = vadd.f32 %v1310, %v1540
          %v1542 = vpop.f32.mrb[0].mxu0
          %1543 = vmatprep.mubr.f32.mxu0 0.0
          %v1544 = vand.u32 %v474, 4294901760
          %1545 = vmatmul.mubr.f32.gmra.mrb[0].mxu0 %v1544
          %v1546 = vpop.f32.mrb[0].mxu0
          %v1547 = vadd.f32 %v1318, %v1546
          %v1548 = vpop.f32.mrb[0].mxu0
          %1549 = vmatprep.mubr.f32.mxu0 0.0
          %v1550 = vand.u32 %v475, 4294901760
          %1551 = vmatmul.mubr.f32.gmra.mrb[0].mxu0 %v1550
          %v1552 = vpop.f32.mrb[0].mxu0
          %v1553 = vadd.f32 %v1326, %v1552
          %v1554 = vpop.f32.mrb[0].mxu0
          %1555 = vmatprep.mubr.f32.mxu0 0.0
          %v1556 = vand.u32 %v476, 4294901760
          %1557 = vmatmul.mubr.f32.gmra.mrb[0].mxu0 %v1556
          %v1558 = vpop.f32.mrb[0].mxu0
          %v1559 = vadd.f32 %v1334, %v1558
          %v1560 = vpop.f32.mrb[0].mxu0
          %1561 = vmatprep.mubr.f32.mxu0 0.0
          %v1562 = vand.u32 %v477, 4294901760
          %1563 = vmatmul.mubr.f32.gmra.mrb[0].mxu0 %v1562
          %v1564 = vpop.f32.mrb[0].mxu0
          %v1565 = vadd.f32 %v1342, %v1564
          %v1566 = vpop.f32.mrb[0].mxu0
          %1567 = vmatprep.mubr.f32.mxu0 0.0
          %v1568 = vand.u32 %v478, 4294901760
          %1569 = vmatmul.mubr.f32.gmra.mrb[0].mxu0 %v1568
          %v1570 = vpop.f32.mrb[0].mxu0
          %v1571 = vadd.f32 %v1350, %v1570
          %v1572 = vpop.f32.mrb[0].mxu0
          %1573 = vmatprep.mubr.f32.mxu0 0.0
          %v1574 = vand.u32 %v479, 4294901760
          %1575 = vmatmul.mubr.f32.gmra.mrb[0].mxu0 %v1574
          %v1576 = vpop.f32.mrb[0].mxu0
          %v1577 = vadd.f32 %v1358, %v1576
          %v1578 = vpop.f32.mrb[0].mxu0
          %1579 = vmatprep.mubr.f32.mxu0 0.0
          %v1580 = vand.u32 %v480, 4294901760
          %1581 = vmatmul.mubr.f32.gmra.mrb[0].mxu0 %v1580
          %v1582 = vpop.f32.mrb[0].mxu0
          %v1583 = vadd.f32 %v1366, %v1582
          %v1584 = vpop.f32.mrb[0].mxu0
          %1585 = vmatprep.mubr.f32.mxu0 0.0
          %v1586 = vand.u32 %v481, 4294901760
          %1587 = vmatmul.mubr.f32.gmra.mrb[0].mxu0 %v1586
          %v1588 = vpop.f32.mrb[0].mxu0
          %v1589 = vadd.f32 %v1374, %v1588
          %v1590 = vpop.f32.mrb[0].mxu0
          %1591 = vmatprep.mubr.f32.mxu0 0.0
          %v1592 = vand.u32 %v482, 4294901760
          %1593 = vmatmul.mubr.f32.gmra.mrb[0].mxu0 %v1592
          %v1594 = vpop.f32.mrb[0].mxu0
          %v1595 = vadd.f32 %v1382, %v1594
          %v1596 = vpop.f32.mrb[0].mxu0
          %1597 = vmatprep.mubr.f32.mxu0 0.0
          %v1598 = vand.u32 %v483, 4294901760
          %1599 = vmatmul.mubr.f32.gmra.mrb[0].mxu0 %v1598
          %v1600 = vpop.f32.mrb[0].mxu0
          %v1601 = vadd.f32 %v1390, %v1600
          %v1602 = vpop.f32.mrb[0].mxu0
          %1603 = vmatprep.mubr.f32.mxu0 0.0
          %v1604 = vand.u32 %v484, 4294901760
          %1605 = vmatmul.mubr.f32.gmra.mrb[0].mxu0 %v1604
          %v1606 = vpop.f32.mrb[0].mxu0
          %v1607 = vadd.f32 %v1398, %v1606
          %v1608 = vpop.f32.mrb[0].mxu0
          %1609 = vdwg.mxu0
          %1610 = vmatprep.subr.mxu0 0.0
          %v1611 = vand.u32 %v485, 4294901760
          %1612 = vmatpush1.msra.mxu0 %v1611
          %1613 = vmatprep.subr.mxu0 0.0
          %v1614 = vand.u32 %v486, 4294901760
          %1615 = vmatpush1.msra.mxu0 %v1614
          %1616 = vmatprep.subr.mxu0 0.0
          %v1617 = vand.u32 %v487, 4294901760
          %1618 = vmatpush1.msra.mxu0 %v1617
          %1619 = vmatprep.subr.mxu0 0.0
          %v1620 = vand.u32 %v488, 4294901760
          %1621 = vmatpush1.msra.mxu0 %v1620
          %1622 = vmatprep.subr.mxu0 0.0
          %v1623 = vand.u32 %v489, 4294901760
          %1624 = vmatpush1.msra.mxu0 %v1623
          %1625 = vmatprep.subr.mxu0 0.0
          %v1626 = vand.u32 %v490, 4294901760
          %1627 = vmatpush1.msra.mxu0 %v1626
          %1628 = vmatprep.subr.mxu0 0.0
          %v1629 = vand.u32 %v491, 4294901760
          %1630 = vmatpush1.msra.mxu0 %v1629
          %1631 = vmatprep.subr.mxu0 0.0
          %v1632 = vand.u32 %v492, 4294901760
          %1633 = vmatpush1.msra.mxu0 %v1632
          %1634 = vmatprep.subr.mxu0 0.0
          %v1635 = vand.u32 %v493, 4294901760
          %1636 = vmatpush1.msra.mxu0 %v1635
          %1637 = vmatprep.subr.mxu0 0.0
          %v1638 = vand.u32 %v494, 4294901760
          %1639 = vmatpush1.msra.mxu0 %v1638
          %1640 = vmatprep.subr.mxu0 0.0
          %v1641 = vand.u32 %v495, 4294901760
          %1642 = vmatpush1.msra.mxu0 %v1641
          %1643 = vmatprep.subr.mxu0 0.0
          %v1644 = vand.u32 %v496, 4294901760
          %1645 = vmatpush1.msra.mxu0 %v1644
          %1646 = vmatprep.subr.mxu0 0.0
          %v1647 = vand.u32 %v497, 4294901760
          %1648 = vmatpush1.msra.mxu0 %v1647
          %1649 = vmatprep.subr.mxu0 0.0
          %v1650 = vand.u32 %v498, 4294901760
          %1651 = vmatpush1.msra.mxu0 %v1650
          %1652 = vmatprep.subr.mxu0 0.0
          %v1653 = vand.u32 %v499, 4294901760
          %1654 = vmatpush1.msra.mxu0 %v1653
          %1655 = vmatprep.subr.mxu0 0.0
          %v1656 = vand.u32 %v500, 4294901760
          %1657 = vmatpush1.msra.mxu0 %v1656
          %1658 = vmatprep.subr.mxu0 0.0
          %1659 = vmatpush1.msra.mxu0 0.0
          %1660 = vmatprep.subr.mxu0 0.0
          %1661 = vmatpush1.msra.mxu0 0.0
          %1662 = vmatprep.subr.mxu0 0.0
          %1663 = vmatpush1.msra.mxu0 0.0
          %1664 = vmatprep.subr.mxu0 0.0
          %1665 = vmatpush1.msra.mxu0 0.0
          %1666 = vmatprep.subr.mxu0 0.0
          %1667 = vmatpush1.msra.mxu0 0.0
          %1668 = vmatprep.subr.mxu0 0.0
          %1669 = vmatpush1.msra.mxu0 0.0
          %1670 = vmatprep.subr.mxu0 0.0
          %1671 = vmatpush1.msra.mxu0 0.0
          %1672 = vmatprep.subr.mxu0 0.0
          %1673 = vmatpush1.msra.mxu0 0.0
          %1674 = vmatprep.subr.mxu0 0.0
          %1675 = vmatpush1.msra.mxu0 0.0
          %1676 = vmatprep.subr.mxu0 0.0
          %1677 = vmatpush1.msra.mxu0 0.0
          %1678 = vmatprep.subr.mxu0 0.0
          %1679 = vmatpush1.msra.mxu0 0.0
          %1680 = vmatprep.subr.mxu0 0.0
          %1681 = vmatpush1.msra.mxu0 0.0
          %1682 = vmatprep.subr.mxu0 0.0
          %1683 = vmatpush1.msra.mxu0 0.0
          %1684 = vmatprep.subr.mxu0 0.0
          %1685 = vmatpush1.msra.mxu0 0.0
          %1686 = vmatprep.subr.mxu0 0.0
          %1687 = vmatpush1.msra.mxu0 0.0
          %1688 = vmatprep.subr.mxu0 0.0
          %1689 = vmatpush1.msra.mxu0 0.0
          %1690 = vmatprep.mubr.f32.mxu0 0.0
          %v1691 = vand.u32 %v469, 4294901760
          %1692 = vmatmul.mubr.f32.gmra.mrb[0].mxu0 %v1691
          %v1693 = vpop.f32.mrb[0].mxu0
          %v1694 = vadd.f32 %v1517, %v1693
          %v1695 = vpop.f32.mrb[0].mxu0
          %1696 = vmatprep.mubr.f32.mxu0 0.0
          %v1697 = vand.u32 %v470, 4294901760
          %1698 = vmatmul.mubr.f32.gmra.mrb[0].mxu0 %v1697
          %v1699 = vpop.f32.mrb[0].mxu0
          %v1700 = vadd.f32 %v1523, %v1699
          %v1701 = vpop.f32.mrb[0].mxu0
          %1702 = vmatprep.mubr.f32.mxu0 0.0
          %v1703 = vand.u32 %v471, 4294901760
          %1704 = vmatmul.mubr.f32.gmra.mrb[0].mxu0 %v1703
          %v1705 = vpop.f32.mrb[0].mxu0
          %v1706 = vadd.f32 %v1529, %v1705
          %v1707 = vpop.f32.mrb[0].mxu0
          %1708 = vmatprep.mubr.f32.mxu0 0.0
          %v1709 = vand.u32 %v472, 4294901760
          %1710 = vmatmul.mubr.f32.gmra.mrb[0].mxu0 %v1709
          %v1711 = vpop.f32.mrb[0].mxu0
          %v1712 = vadd.f32 %v1535, %v1711
          %v1713 = vpop.f32.mrb[0].mxu0
          %1714 = vmatprep.mubr.f32.mxu0 0.0
          %v1715 = vand.u32 %v473, 4294901760
          %1716 = vmatmul.mubr.f32.gmra.mrb[0].mxu0 %v1715
          %v1717 = vpop.f32.mrb[0].mxu0
          %v1718 = vadd.f32 %v1541, %v1717
          %v1719 = vpop.f32.mrb[0].mxu0
          %1720 = vmatprep.mubr.f32.mxu0 0.0
          %v1721 = vand.u32 %v474, 4294901760
          %1722 = vmatmul.mubr.f32.gmra.mrb[0].mxu0 %v1721
          %v1723 = vpop.f32.mrb[0].mxu0
          %v1724 = vadd.f32 %v1547, %v1723
          %v1725 = vpop.f32.mrb[0].mxu0
          %1726 = vmatprep.mubr.f32.mxu0 0.0
          %v1727 = vand.u32 %v475, 4294901760
          %1728 = vmatmul.mubr.f32.gmra.mrb[0].mxu0 %v1727
          %v1729 = vpop.f32.mrb[0].mxu0
          %v1730 = vadd.f32 %v1553, %v1729
          %v1731 = vpop.f32.mrb[0].mxu0
          %1732 = vmatprep.mubr.f32.mxu0 0.0
          %v1733 = vand.u32 %v476, 4294901760
          %1734 = vmatmul.mubr.f32.gmra.mrb[0].mxu0 %v1733
          %v1735 = vpop.f32.mrb[0].mxu0
          %v1736 = vadd.f32 %v1559, %v1735
          %v1737 = vpop.f32.mrb[0].mxu0
          %1738 = vmatprep.mubr.f32.mxu0 0.0
          %v1739 = vand.u32 %v477, 4294901760
          %1740 = vmatmul.mubr.f32.gmra.mrb[0].mxu0 %v1739
          %v1741 = vpop.f32.mrb[0].mxu0
          %v1742 = vadd.f32 %v1565, %v1741
          %v1743 = vpop.f32.mrb[0].mxu0
          %1744 = vmatprep.mubr.f32.mxu0 0.0
          %v1745 = vand.u32 %v478, 4294901760
          %1746 = vmatmul.mubr.f32.gmra.mrb[0].mxu0 %v1745
          %v1747 = vpop.f32.mrb[0].mxu0
          %v1748 = vadd.f32 %v1571, %v1747
          %v1749 = vpop.f32.mrb[0].mxu0
          %1750 = vmatprep.mubr.f32.mxu0 0.0
          %v1751 = vand.u32 %v479, 4294901760
          %1752 = vmatmul.mubr.f32.gmra.mrb[0].mxu0 %v1751
          %v1753 = vpop.f32.mrb[0].mxu0
          %v1754 = vadd.f32 %v1577, %v1753
          %v1755 = vpop.f32.mrb[0].mxu0
          %1756 = vmatprep.mubr.f32.mxu0 0.0
          %v1757 = vand.u32 %v480, 4294901760
          %1758 = vmatmul.mubr.f32.gmra.mrb[0].mxu0 %v1757
          %v1759 = vpop.f32.mrb[0].mxu0
          %v1760 = vadd.f32 %v1583, %v1759
          %v1761 = vpop.f32.mrb[0].mxu0
          %1762 = vmatprep.mubr.f32.mxu0 0.0
          %v1763 = vand.u32 %v481, 4294901760
          %1764 = vmatmul.mubr.f32.gmra.mrb[0].mxu0 %v1763
          %v1765 = vpop.f32.mrb[0].mxu0
          %v1766 = vadd.f32 %v1589, %v1765
          %v1767 = vpop.f32.mrb[0].mxu0
          %1768 = vmatprep.mubr.f32.mxu0 0.0
          %v1769 = vand.u32 %v482, 4294901760
          %1770 = vmatmul.mubr.f32.gmra.mrb[0].mxu0 %v1769
          %v1771 = vpop.f32.mrb[0].mxu0
          %v1772 = vadd.f32 %v1595, %v1771
          %v1773 = vpop.f32.mrb[0].mxu0
          %1774 = vmatprep.mubr.f32.mxu0 0.0
          %v1775 = vand.u32 %v483, 4294901760
          %1776 = vmatmul.mubr.f32.gmra.mrb[0].mxu0 %v1775
          %v1777 = vpop.f32.mrb[0].mxu0
          %v1778 = vadd.f32 %v1601, %v1777
          %v1779 = vpop.f32.mrb[0].mxu0
          %1780 = vmatprep.mubr.f32.mxu0 0.0
          %v1781 = vand.u32 %v484, 4294901760
          %1782 = vmatmul.mubr.f32.gmra.mrb[0].mxu0 %v1781
          %v1783 = vpop.f32.mrb[0].mxu0
          %v1784 = vadd.f32 %v1607, %v1783
          %v1785 = vpop.f32.mrb[0].mxu0
          %1786 = vdwg.mxu0
          %v1787 = vadd.f32 %v453, %v1694
          %v1788 = vadd.f32 %v454, %v1700
          %v1789 = vadd.f32 %v455, %v1706
          %v1790 = vadd.f32 %v456, %v1712
          %v1791 = vadd.f32 %v457, %v1718
          %v1792 = vadd.f32 %v458, %v1724
          %v1793 = vadd.f32 %v459, %v1730
          %v1794 = vadd.f32 %v460, %v1736
          %v1795 = vadd.f32 %v461, %v1742
          %v1796 = vadd.f32 %v462, %v1748
          %v1797 = vadd.f32 %v463, %v1754
          %v1798 = vadd.f32 %v464, %v1760
          %v1799 = vadd.f32 %v465, %v1766
          %v1800 = vadd.f32 %v466, %v1772
          %v1801 = vadd.f32 %v467, %v1778
          %v1802 = vadd.f32 %v468, %v1784
          %1803 = vst [vmem:[%s297] sm:$0xff] %v1787
          %1804 = vst [vmem:[%s297 + $0x8] sm:$0xff] %v1788
          %1805 = vst [vmem:[%s297 + $0x10] sm:$0xff] %v1789
          %1806 = vst [vmem:[%s297 + $0x18] sm:$0xff] %v1790
          %1807 = vst [vmem:[%s297 + $0x20] sm:$0xff] %v1791
          %1808 = vst [vmem:[%s297 + $0x28] sm:$0xff] %v1792
          %1809 = vst [vmem:[%s297 + $0x30] sm:$0xff] %v1793
          %1810 = vst [vmem:[%s297 + $0x38] sm:$0xff] %v1794
          %1811 = vst [vmem:[%s297 + $0x40] sm:$0xff] %v1795
          %1812 = vst [vmem:[%s297 + $0x48] sm:$0xff] %v1796
          %1813 = vst [vmem:[%s297 + $0x50] sm:$0xff] %v1797
          %1814 = vst [vmem:[%s297 + $0x58] sm:$0xff] %v1798
          %1815 = vst [vmem:[%s297 + $0x60] sm:$0xff] %v1799
          %1816 = vst [vmem:[%s297 + $0x68] sm:$0xff] %v1800
          %1817 = vst [vmem:[%s297 + $0x70] sm:$0xff] %v1801
          %1818 = vst [vmem:[%s297 + $0x78] sm:$0xff] %v1802
        $region48: #{tpu_custom_call.1} parent=27 // pred_fallthru
          _
        %p1819 = pnand %p444, %p446
        %p1820 = pneg %p1819
        %p1821 = pnand %p443, %p1820
        %p1822 = pneg %p1821
        // Predicated region
        $region49: #{tpu_custom_call.1} parent=27 // pred_check
          _
        $region50: #{tpu_custom_call.1} parent=27 // pred_check_branch
          %1824 = sbr.rel (%p1821) target = $region52
        $region51: #{tpu_custom_call.1} parent=27 // pred_region
          %v1825 = vld [vmem:[%s297] sm:$0xff]
          %v1826 = vld [vmem:[%s297 + $0x8] sm:$0xff]
          %v1827 = vld [vmem:[%s297 + $0x10] sm:$0xff]
          %v1828 = vld [vmem:[%s297 + $0x18] sm:$0xff]
          %v1829 = vld [vmem:[%s297 + $0x20] sm:$0xff]
          %v1830 = vld [vmem:[%s297 + $0x28] sm:$0xff]
          %v1831 = vld [vmem:[%s297 + $0x30] sm:$0xff]
          %v1832 = vld [vmem:[%s297 + $0x38] sm:$0xff]
          %v1833 = vld [vmem:[%s297 + $0x40] sm:$0xff]
          %v1834 = vld [vmem:[%s297 + $0x48] sm:$0xff]
          %v1835 = vld [vmem:[%s297 + $0x50] sm:$0xff]
          %v1836 = vld [vmem:[%s297 + $0x58] sm:$0xff]
          %v1837 = vld [vmem:[%s297 + $0x60] sm:$0xff]
          %v1838 = vld [vmem:[%s297 + $0x68] sm:$0xff]
          %v1839 = vld [vmem:[%s297 + $0x70] sm:$0xff]
          %v1840 = vld [vmem:[%s297 + $0x78] sm:$0xff]
          %v1841 = vld [vmem:[%s263] sm:$0xff]
          %v1842 = vld [vmem:[%s263 + $0x8] sm:$0xff]
          %v1843 = vld [vmem:[%s263 + $0x10] sm:$0xff]
          %v1844 = vld [vmem:[%s263 + $0x18] sm:$0xff]
          %v1845 = vld [vmem:[%s263 + $0x20] sm:$0xff]
          %v1846 = vld [vmem:[%s263 + $0x28] sm:$0xff]
          %v1847 = vld [vmem:[%s263 + $0x30] sm:$0xff]
          %v1848 = vld [vmem:[%s263 + $0x38] sm:$0xff]
          %v1849 = vld [vmem:[%s263 + $0x40] sm:$0xff]
          %v1850 = vld [vmem:[%s263 + $0x48] sm:$0xff]
          %v1851 = vld [vmem:[%s263 + $0x50] sm:$0xff]
          %v1852 = vld [vmem:[%s263 + $0x58] sm:$0xff]
          %v1853 = vld [vmem:[%s263 + $0x60] sm:$0xff]
          %v1854 = vld [vmem:[%s263 + $0x68] sm:$0xff]
          %v1855 = vld [vmem:[%s263 + $0x70] sm:$0xff]
          %v1856 = vld [vmem:[%s263 + $0x78] sm:$0xff]
          %v1857 = vld [vmem:[#allocation2] sm:$0xff]
          %v1858 = vld [vmem:[#allocation2 + $0x8] sm:$0xff]
          %v1859 = vld [vmem:[#allocation2 + $0x10] sm:$0xff]
          %v1860 = vld [vmem:[#allocation2 + $0x18] sm:$0xff]
          %v1861 = vld [vmem:[#allocation2 + $0x20] sm:$0xff]
          %v1862 = vld [vmem:[#allocation2 + $0x28] sm:$0xff]
          %v1863 = vld [vmem:[#allocation2 + $0x30] sm:$0xff]
          %v1864 = vld [vmem:[#allocation2 + $0x38] sm:$0xff]
          %v1865 = vld [vmem:[#allocation2 + $0x40] sm:$0xff]
          %v1866 = vld [vmem:[#allocation2 + $0x48] sm:$0xff]
          %v1867 = vld [vmem:[#allocation2 + $0x50] sm:$0xff]
          %v1868 = vld [vmem:[#allocation2 + $0x58] sm:$0xff]
          %v1869 = vld [vmem:[#allocation2 + $0x60] sm:$0xff]
          %v1870 = vld [vmem:[#allocation2 + $0x68] sm:$0xff]
          %v1871 = vld [vmem:[#allocation2 + $0x70] sm:$0xff]
          %v1872 = vld [vmem:[#allocation2 + $0x78] sm:$0xff]
          %v1873 = vmul.f32 %v1841, %v1857
          %v1874 = vmul.f32 %v1842, %v1858
          %v1875 = vmul.f32 %v1843, %v1859
          %v1876 = vmul.f32 %v1844, %v1860
          %v1877 = vmul.f32 %v1845, %v1861
          %v1878 = vmul.f32 %v1846, %v1862
          %v1879 = vmul.f32 %v1847, %v1863
          %v1880 = vmul.f32 %v1848, %v1864
          %v1881 = vmul.f32 %v1849, %v1865
          %v1882 = vmul.f32 %v1850, %v1866
          %v1883 = vmul.f32 %v1851, %v1867
          %v1884 = vmul.f32 %v1852, %v1868
          %v1885 = vmul.f32 %v1853, %v1869
          %v1886 = vmul.f32 %v1854, %v1870
          %v1887 = vmul.f32 %v1855, %v1871
          %v1888 = vmul.f32 %v1856, %v1872
          %v1889 = vld [vmem:[%s272] sm:$0xff]
          %v1890 = vld [vmem:[%s272 + $0x8] sm:$0xff]
          %v1891 = vld [vmem:[%s272 + $0x10] sm:$0xff]
          %v1892 = vld [vmem:[%s272 + $0x18] sm:$0xff]
          %v1893 = vld [vmem:[%s272 + $0x20] sm:$0xff]
          %v1894 = vld [vmem:[%s272 + $0x28] sm:$0xff]
          %v1895 = vld [vmem:[%s272 + $0x30] sm:$0xff]
          %v1896 = vld [vmem:[%s272 + $0x38] sm:$0xff]
          %v1897 = vld [vmem:[%s272 + $0x40] sm:$0xff]
          %v1898 = vld [vmem:[%s272 + $0x48] sm:$0xff]
          %v1899 = vld [vmem:[%s272 + $0x50] sm:$0xff]
          %v1900 = vld [vmem:[%s272 + $0x58] sm:$0xff]
          %v1901 = vld [vmem:[%s272 + $0x60] sm:$0xff]
          %v1902 = vld [vmem:[%s272 + $0x68] sm:$0xff]
          %v1903 = vld [vmem:[%s272 + $0x70] sm:$0xff]
          %v1904 = vld [vmem:[%s272 + $0x78] sm:$0xff]
          %1905 = vmatprep.subr.mxu0 0.0
          %v1906 = vand.u32 %v1889, 4294901760
          %1907 = vmatpush1.msra.mxu0 %v1906
          %1908 = vmatprep.subr.mxu0 0.0
          %v1909 = vand.u32 %v1890, 4294901760
          %1910 = vmatpush1.msra.mxu0 %v1909
          %1911 = vmatprep.subr.mxu0 0.0
          %v1912 = vand.u32 %v1891, 4294901760
          %1913 = vmatpush1.msra.mxu0 %v1912
          %1914 = vmatprep.subr.mxu0 0.0
          %v1915 = vand.u32 %v1892, 4294901760
          %1916 = vmatpush1.msra.mxu0 %v1915
          %1917 = vmatprep.subr.mxu0 0.0
          %v1918 = vand.u32 %v1893, 4294901760
          %1919 = vmatpush1.msra.mxu0 %v1918
          %1920 = vmatprep.subr.mxu0 0.0
          %v1921 = vand.u32 %v1894, 4294901760
          %1922 = vmatpush1.msra.mxu0 %v1921
          %1923 = vmatprep.subr.mxu0 0.0
          %v1924 = vand.u32 %v1895, 4294901760
          %1925 = vmatpush1.msra.mxu0 %v1924
          %1926 = vmatprep.subr.mxu0 0.0
          %v1927 = vand.u32 %v1896, 4294901760
          %1928 = vmatpush1.msra.mxu0 %v1927
          %1929 = vmatprep.subr.mxu0 0.0
          %v1930 = vand.u32 %v1897, 4294901760
          %1931 = vmatpush1.msra.mxu0 %v1930
          %1932 = vmatprep.subr.mxu0 0.0
          %v1933 = vand.u32 %v1898, 4294901760
          %1934 = vmatpush1.msra.mxu0 %v1933
          %1935 = vmatprep.subr.mxu0 0.0
          %v1936 = vand.u32 %v1899, 4294901760
          %1937 = vmatpush1.msra.mxu0 %v1936
          %1938 = vmatprep.subr.mxu0 0.0
          %v1939 = vand.u32 %v1900, 4294901760
          %1940 = vmatpush1.msra.mxu0 %v1939
          %1941 = vmatprep.subr.mxu0 0.0
          %v1942 = vand.u32 %v1901, 4294901760
          %1943 = vmatpush1.msra.mxu0 %v1942
          %1944 = vmatprep.subr.mxu0 0.0
          %v1945 = vand.u32 %v1902, 4294901760
          %1946 = vmatpush1.msra.mxu0 %v1945
          %1947 = vmatprep.subr.mxu0 0.0
          %v1948 = vand.u32 %v1903, 4294901760
          %1949 = vmatpush1.msra.mxu0 %v1948
          %1950 = vmatprep.subr.mxu0 0.0
          %v1951 = vand.u32 %v1904, 4294901760
          %1952 = vmatpush1.msra.mxu0 %v1951
          %1953 = vmatprep.subr.mxu0 0.0
          %1954 = vmatpush1.msra.mxu0 0.0
          %1955 = vmatprep.subr.mxu0 0.0
          %1956 = vmatpush1.msra.mxu0 0.0
          %1957 = vmatprep.subr.mxu0 0.0
          %1958 = vmatpush1.msra.mxu0 0.0
          %1959 = vmatprep.subr.mxu0 0.0
          %1960 = vmatpush1.msra.mxu0 0.0
          %1961 = vmatprep.subr.mxu0 0.0
          %1962 = vmatpush1.msra.mxu0 0.0
          %1963 = vmatprep.subr.mxu0 0.0
          %1964 = vmatpush1.msra.mxu0 0.0
          %1965 = vmatprep.subr.mxu0 0.0
          %1966 = vmatpush1.msra.mxu0 0.0
          %1967 = vmatprep.subr.mxu0 0.0
          %1968 = vmatpush1.msra.mxu0 0.0
          %1969 = vmatprep.subr.mxu0 0.0
          %1970 = vmatpush1.msra.mxu0 0.0
          %1971 = vmatprep.subr.mxu0 0.0
          %1972 = vmatpush1.msra.mxu0 0.0
          %1973 = vmatprep.subr.mxu0 0.0
          %1974 = vmatpush1.msra.mxu0 0.0
          %1975 = vmatprep.subr.mxu0 0.0
          %1976 = vmatpush1.msra.mxu0 0.0
          %1977 = vmatprep.subr.mxu0 0.0
          %1978 = vmatpush1.msra.mxu0 0.0
          %1979 = vmatprep.subr.mxu0 0.0
          %1980 = vmatpush1.msra.mxu0 0.0
          %1981 = vmatprep.subr.mxu0 0.0
          %1982 = vmatpush1.msra.mxu0 0.0
          %1983 = vmatprep.subr.mxu0 0.0
          %1984 = vmatpush1.msra.mxu0 0.0
          %1985 = vmatprep.mubr.f32.mxu0 0.0
          %v1986 = vand.u32 %v1873, 4294901760
          %v1987 = vsub.f32 %v1873, %v1986
          %v1988 = vand.u32 %v1987, 4294901760
          %v1989 = vsub.f32 %v1987, %v1988
          %v1990 = vand.u32 %v1989, 4294901760
          %1991 = vmatmul.mubr.f32.gmra.mrb[0].mxu0 %v1990
          %v1992 = vpop.f32.mrb[0].mxu0
          %v1993 = vadd.f32 0.0, %v1992
          %v1994 = vpop.f32.mrb[0].mxu0
          %1995 = vmatprep.mubr.f32.mxu0 0.0
          %v1996 = vand.u32 %v1874, 4294901760
          %v1997 = vsub.f32 %v1874, %v1996
          %v1998 = vand.u32 %v1997, 4294901760
          %v1999 = vsub.f32 %v1997, %v1998
          %v2000 = vand.u32 %v1999, 4294901760
          %2001 = vmatmul.mubr.f32.gmra.mrb[0].mxu0 %v2000
          %v2002 = vpop.f32.mrb[0].mxu0
          %v2003 = vadd.f32 0.0, %v2002
          %v2004 = vpop.f32.mrb[0].mxu0
          %2005 = vmatprep.mubr.f32.mxu0 0.0
          %v2006 = vand.u32 %v1875, 4294901760
          %v2007 = vsub.f32 %v1875, %v2006
          %v2008 = vand.u32 %v2007, 4294901760
          %v2009 = vsub.f32 %v2007, %v2008
          %v2010 = vand.u32 %v2009, 4294901760
          %2011 = vmatmul.mubr.f32.gmra.mrb[0].mxu0 %v2010
          %v2012 = vpop.f32.mrb[0].mxu0
          %v2013 = vadd.f32 0.0, %v2012
          %v2014 = vpop.f32.mrb[0].mxu0
          %2015 = vmatprep.mubr.f32.mxu0 0.0
          %v2016 = vand.u32 %v1876, 4294901760
          %v2017 = vsub.f32 %v1876, %v2016
          %v2018 = vand.u32 %v2017, 4294901760
          %v2019 = vsub.f32 %v2017, %v2018
          %v2020 = vand.u32 %v2019, 4294901760
          %2021 = vmatmul.mubr.f32.gmra.mrb[0].mxu0 %v2020
          %v2022 = vpop.f32.mrb[0].mxu0
          %v2023 = vadd.f32 0.0, %v2022
          %v2024 = vpop.f32.mrb[0].mxu0
          %2025 = vmatprep.mubr.f32.mxu0 0.0
          %v2026 = vand.u32 %v1877, 4294901760
          %v2027 = vsub.f32 %v1877, %v2026
          %v2028 = vand.u32 %v2027, 4294901760
          %v2029 = vsub.f32 %v2027, %v2028
          %v2030 = vand.u32 %v2029, 4294901760
          %2031 = vmatmul.mubr.f32.gmra.mrb[0].mxu0 %v2030
          %v2032 = vpop.f32.mrb[0].mxu0
          %v2033 = vadd.f32 0.0, %v2032
          %v2034 = vpop.f32.mrb[0].mxu0
          %2035 = vmatprep.mubr.f32.mxu0 0.0
          %v2036 = vand.u32 %v1878, 4294901760
          %v2037 = vsub.f32 %v1878, %v2036
          %v2038 = vand.u32 %v2037, 4294901760
          %v2039 = vsub.f32 %v2037, %v2038
          %v2040 = vand.u32 %v2039, 4294901760
          %2041 = vmatmul.mubr.f32.gmra.mrb[0].mxu0 %v2040
          %v2042 = vpop.f32.mrb[0].mxu0
          %v2043 = vadd.f32 0.0, %v2042
          %v2044 = vpop.f32.mrb[0].mxu0
          %2045 = vmatprep.mubr.f32.mxu0 0.0
          %v2046 = vand.u32 %v1879, 4294901760
          %v2047 = vsub.f32 %v1879, %v2046
          %v2048 = vand.u32 %v2047, 4294901760
          %v2049 = vsub.f32 %v2047, %v2048
          %v2050 = vand.u32 %v2049, 4294901760
          %2051 = vmatmul.mubr.f32.gmra.mrb[0].mxu0 %v2050
          %v2052 = vpop.f32.mrb[0].mxu0
          %v2053 = vadd.f32 0.0, %v2052
          %v2054 = vpop.f32.mrb[0].mxu0
          %2055 = vmatprep.mubr.f32.mxu0 0.0
          %v2056 = vand.u32 %v1880, 4294901760
          %v2057 = vsub.f32 %v1880, %v2056
          %v2058 = vand.u32 %v2057, 4294901760
          %v2059 = vsub.f32 %v2057, %v2058
          %v2060 = vand.u32 %v2059, 4294901760
          %2061 = vmatmul.mubr.f32.gmra.mrb[0].mxu0 %v2060
          %v2062 = vpop.f32.mrb[0].mxu0
          %v2063 = vadd.f32 0.0, %v2062
          %v2064 = vpop.f32.mrb[0].mxu0
          %2065 = vmatprep.mubr.f32.mxu0 0.0
          %v2066 = vand.u32 %v1881, 4294901760
          %v2067 = vsub.f32 %v1881, %v2066
          %v2068 = vand.u32 %v2067, 4294901760
          %v2069 = vsub.f32 %v2067, %v2068
          %v2070 = vand.u32 %v2069, 4294901760
          %2071 = vmatmul.mubr.f32.gmra.mrb[0].mxu0 %v2070
          %v2072 = vpop.f32.mrb[0].mxu0
          %v2073 = vadd.f32 0.0, %v2072
          %v2074 = vpop.f32.mrb[0].mxu0
          %2075 = vmatprep.mubr.f32.mxu0 0.0
          %v2076 = vand.u32 %v1882, 4294901760
          %v2077 = vsub.f32 %v1882, %v2076
          %v2078 = vand.u32 %v2077, 4294901760
          %v2079 = vsub.f32 %v2077, %v2078
          %v2080 = vand.u32 %v2079, 4294901760
          %2081 = vmatmul.mubr.f32.gmra.mrb[0].mxu0 %v2080
          %v2082 = vpop.f32.mrb[0].mxu0
          %v2083 = vadd.f32 0.0, %v2082
          %v2084 = vpop.f32.mrb[0].mxu0
          %2085 = vmatprep.mubr.f32.mxu0 0.0
          %v2086 = vand.u32 %v1883, 4294901760
          %v2087 = vsub.f32 %v1883, %v2086
          %v2088 = vand.u32 %v2087, 4294901760
          %v2089 = vsub.f32 %v2087, %v2088
          %v2090 = vand.u32 %v2089, 4294901760
          %2091 = vmatmul.mubr.f32.gmra.mrb[0].mxu0 %v2090
          %v2092 = vpop.f32.mrb[0].mxu0
          %v2093 = vadd.f32 0.0, %v2092
          %v2094 = vpop.f32.mrb[0].mxu0
          %2095 = vmatprep.mubr.f32.mxu0 0.0
          %v2096 = vand.u32 %v1884, 4294901760
          %v2097 = vsub.f32 %v1884, %v2096
          %v2098 = vand.u32 %v2097, 4294901760
          %v2099 = vsub.f32 %v2097, %v2098
          %v2100 = vand.u32 %v2099, 4294901760
          %2101 = vmatmul.mubr.f32.gmra.mrb[0].mxu0 %v2100
          %v2102 = vpop.f32.mrb[0].mxu0
          %v2103 = vadd.f32 0.0, %v2102
          %v2104 = vpop.f32.mrb[0].mxu0
          %2105 = vmatprep.mubr.f32.mxu0 0.0
          %v2106 = vand.u32 %v1885, 4294901760
          %v2107 = vsub.f32 %v1885, %v2106
          %v2108 = vand.u32 %v2107, 4294901760
          %v2109 = vsub.f32 %v2107, %v2108
          %v2110 = vand.u32 %v2109, 4294901760
          %2111 = vmatmul.mubr.f32.gmra.mrb[0].mxu0 %v2110
          %v2112 = vpop.f32.mrb[0].mxu0
          %v2113 = vadd.f32 0.0, %v2112
          %v2114 = vpop.f32.mrb[0].mxu0
          %2115 = vmatprep.mubr.f32.mxu0 0.0
          %v2116 = vand.u32 %v1886, 4294901760
          %v2117 = vsub.f32 %v1886, %v2116
          %v2118 = vand.u32 %v2117, 4294901760
          %v2119 = vsub.f32 %v2117, %v2118
          %v2120 = vand.u32 %v2119, 4294901760
          %2121 = vmatmul.mubr.f32.gmra.mrb[0].mxu0 %v2120
          %v2122 = vpop.f32.mrb[0].mxu0
          %v2123 = vadd.f32 0.0, %v2122
          %v2124 = vpop.f32.mrb[0].mxu0
          %2125 = vmatprep.mubr.f32.mxu0 0.0
          %v2126 = vand.u32 %v1887, 4294901760
          %v2127 = vsub.f32 %v1887, %v2126
          %v2128 = vand.u32 %v2127, 4294901760
          %v2129 = vsub.f32 %v2127, %v2128
          %v2130 = vand.u32 %v2129, 4294901760
          %2131 = vmatmul.mubr.f32.gmra.mrb[0].mxu0 %v2130
          %v2132 = vpop.f32.mrb[0].mxu0
          %v2133 = vadd.f32 0.0, %v2132
          %v2134 = vpop.f32.mrb[0].mxu0
          %2135 = vmatprep.mubr.f32.mxu0 0.0
          %v2136 = vand.u32 %v1888, 4294901760
          %v2137 = vsub.f32 %v1888, %v2136
          %v2138 = vand.u32 %v2137, 4294901760
          %v2139 = vsub.f32 %v2137, %v2138
          %v2140 = vand.u32 %v2139, 4294901760
          %2141 = vmatmul.mubr.f32.gmra.mrb[0].mxu0 %v2140
          %v2142 = vpop.f32.mrb[0].mxu0
          %v2143 = vadd.f32 0.0, %v2142
          %v2144 = vpop.f32.mrb[0].mxu0
          %2145 = vdwg.mxu0
          %2146 = vmatprep.subr.mxu0 0.0
          %v2147 = vand.u32 %v1889, 4294901760
          %v2148 = vsub.f32 %v1889, %v2147
          %v2149 = vand.u32 %v2148, 4294901760
          %v2150 = vsub.f32 %v2148, %v2149
          %v2151 = vand.u32 %v2150, 4294901760
          %2152 = vmatpush1.msra.mxu0 %v2151
          %2153 = vmatprep.subr.mxu0 0.0
          %v2154 = vand.u32 %v1890, 4294901760
          %v2155 = vsub.f32 %v1890, %v2154
          %v2156 = vand.u32 %v2155, 4294901760
          %v2157 = vsub.f32 %v2155, %v2156
          %v2158 = vand.u32 %v2157, 4294901760
          %2159 = vmatpush1.msra.mxu0 %v2158
          %2160 = vmatprep.subr.mxu0 0.0
          %v2161 = vand.u32 %v1891, 4294901760
          %v2162 = vsub.f32 %v1891, %v2161
          %v2163 = vand.u32 %v2162, 4294901760
          %v2164 = vsub.f32 %v2162, %v2163
          %v2165 = vand.u32 %v2164, 4294901760
          %2166 = vmatpush1.msra.mxu0 %v2165
          %2167 = vmatprep.subr.mxu0 0.0
          %v2168 = vand.u32 %v1892, 4294901760
          %v2169 = vsub.f32 %v1892, %v2168
          %v2170 = vand.u32 %v2169, 4294901760
          %v2171 = vsub.f32 %v2169, %v2170
          %v2172 = vand.u32 %v2171, 4294901760
          %2173 = vmatpush1.msra.mxu0 %v2172
          %2174 = vmatprep.subr.mxu0 0.0
          %v2175 = vand.u32 %v1893, 4294901760
          %v2176 = vsub.f32 %v1893, %v2175
          %v2177 = vand.u32 %v2176, 4294901760
          %v2178 = vsub.f32 %v2176, %v2177
          %v2179 = vand.u32 %v2178, 4294901760
          %2180 = vmatpush1.msra.mxu0 %v2179
          %2181 = vmatprep.subr.mxu0 0.0
          %v2182 = vand.u32 %v1894, 4294901760
          %v2183 = vsub.f32 %v1894, %v2182
          %v2184 = vand.u32 %v2183, 4294901760
          %v2185 = vsub.f32 %v2183, %v2184
          %v2186 = vand.u32 %v2185, 4294901760
          %2187 = vmatpush1.msra.mxu0 %v2186
          %2188 = vmatprep.subr.mxu0 0.0
          %v2189 = vand.u32 %v1895, 4294901760
          %v2190 = vsub.f32 %v1895, %v2189
          %v2191 = vand.u32 %v2190, 4294901760
          %v2192 = vsub.f32 %v2190, %v2191
          %v2193 = vand.u32 %v2192, 4294901760
          %2194 = vmatpush1.msra.mxu0 %v2193
          %2195 = vmatprep.subr.mxu0 0.0
          %v2196 = vand.u32 %v1896, 4294901760
          %v2197 = vsub.f32 %v1896, %v2196
          %v2198 = vand.u32 %v2197, 4294901760
          %v2199 = vsub.f32 %v2197, %v2198
          %v2200 = vand.u32 %v2199, 4294901760
          %2201 = vmatpush1.msra.mxu0 %v2200
          %2202 = vmatprep.subr.mxu0 0.0
          %v2203 = vand.u32 %v1897, 4294901760
          %v2204 = vsub.f32 %v1897, %v2203
          %v2205 = vand.u32 %v2204, 4294901760
          %v2206 = vsub.f32 %v2204, %v2205
          %v2207 = vand.u32 %v2206, 4294901760
          %2208 = vmatpush1.msra.mxu0 %v2207
          %2209 = vmatprep.subr.mxu0 0.0
          %v2210 = vand.u32 %v1898, 4294901760
          %v2211 = vsub.f32 %v1898, %v2210
          %v2212 = vand.u32 %v2211, 4294901760
          %v2213 = vsub.f32 %v2211, %v2212
          %v2214 = vand.u32 %v2213, 4294901760
          %2215 = vmatpush1.msra.mxu0 %v2214
          %2216 = vmatprep.subr.mxu0 0.0
          %v2217 = vand.u32 %v1899, 4294901760
          %v2218 = vsub.f32 %v1899, %v2217
          %v2219 = vand.u32 %v2218, 4294901760
          %v2220 = vsub.f32 %v2218, %v2219
          %v2221 = vand.u32 %v2220, 4294901760
          %2222 = vmatpush1.msra.mxu0 %v2221
          %2223 = vmatprep.subr.mxu0 0.0
          %v2224 = vand.u32 %v1900, 4294901760
          %v2225 = vsub.f32 %v1900, %v2224
          %v2226 = vand.u32 %v2225, 4294901760
          %v2227 = vsub.f32 %v2225, %v2226
          %v2228 = vand.u32 %v2227, 4294901760
          %2229 = vmatpush1.msra.mxu0 %v2228
          %2230 = vmatprep.subr.mxu0 0.0
          %v2231 = vand.u32 %v1901, 4294901760
          %v2232 = vsub.f32 %v1901, %v2231
          %v2233 = vand.u32 %v2232, 4294901760
          %v2234 = vsub.f32 %v2232, %v2233
          %v2235 = vand.u32 %v2234, 4294901760
          %2236 = vmatpush1.msra.mxu0 %v2235
          %2237 = vmatprep.subr.mxu0 0.0
          %v2238 = vand.u32 %v1902, 4294901760
          %v2239 = vsub.f32 %v1902, %v2238
          %v2240 = vand.u32 %v2239, 4294901760
          %v2241 = vsub.f32 %v2239, %v2240
          %v2242 = vand.u32 %v2241, 4294901760
          %2243 = vmatpush1.msra.mxu0 %v2242
          %2244 = vmatprep.subr.mxu0 0.0
          %v2245 = vand.u32 %v1903, 4294901760
          %v2246 = vsub.f32 %v1903, %v2245
          %v2247 = vand.u32 %v2246, 4294901760
          %v2248 = vsub.f32 %v2246, %v2247
          %v2249 = vand.u32 %v2248, 4294901760
          %2250 = vmatpush1.msra.mxu0 %v2249
          %2251 = vmatprep.subr.mxu0 0.0
          %v2252 = vand.u32 %v1904, 4294901760
          %v2253 = vsub.f32 %v1904, %v2252
          %v2254 = vand.u32 %v2253, 4294901760
          %v2255 = vsub.f32 %v2253, %v2254
          %v2256 = vand.u32 %v2255, 4294901760
          %2257 = vmatpush1.msra.mxu0 %v2256
          %2258 = vmatprep.subr.mxu0 0.0
          %2259 = vmatpush1.msra.mxu0 0.0
          %2260 = vmatprep.subr.mxu0 0.0
          %2261 = vmatpush1.msra.mxu0 0.0
          %2262 = vmatprep.subr.mxu0 0.0
          %2263 = vmatpush1.msra.mxu0 0.0
          %2264 = vmatprep.subr.mxu0 0.0
          %2265 = vmatpush1.msra.mxu0 0.0
          %2266 = vmatprep.subr.mxu0 0.0
          %2267 = vmatpush1.msra.mxu0 0.0
          %2268 = vmatprep.subr.mxu0 0.0
          %2269 = vmatpush1.msra.mxu0 0.0
          %2270 = vmatprep.subr.mxu0 0.0
          %2271 = vmatpush1.msra.mxu0 0.0
          %2272 = vmatprep.subr.mxu0 0.0
          %2273 = vmatpush1.msra.mxu0 0.0
          %2274 = vmatprep.subr.mxu0 0.0
          %2275 = vmatpush1.msra.mxu0 0.0
          %2276 = vmatprep.subr.mxu0 0.0
          %2277 = vmatpush1.msra.mxu0 0.0
          %2278 = vmatprep.subr.mxu0 0.0
          %2279 = vmatpush1.msra.mxu0 0.0
          %2280 = vmatprep.subr.mxu0 0.0
          %2281 = vmatpush1.msra.mxu0 0.0
          %2282 = vmatprep.subr.mxu0 0.0
          %2283 = vmatpush1.msra.mxu0 0.0
          %2284 = vmatprep.subr.mxu0 0.0
          %2285 = vmatpush1.msra.mxu0 0.0
          %2286 = vmatprep.subr.mxu0 0.0
          %2287 = vmatpush1.msra.mxu0 0.0
          %2288 = vmatprep.subr.mxu0 0.0
          %2289 = vmatpush1.msra.mxu0 0.0
          %2290 = vmatprep.mubr.f32.mxu0 0.0
          %v2291 = vand.u32 %v1873, 4294901760
          %2292 = vmatmul.mubr.f32.gmra.mrb[0].mxu0 %v2291
          %v2293 = vpop.f32.mrb[0].mxu0
          %v2294 = vadd.f32 %v1993, %v2293
          %v2295 = vpop.f32.mrb[0].mxu0
          %2296 = vmatprep.mubr.f32.mxu0 0.0
          %v2297 = vand.u32 %v1874, 4294901760
          %2298 = vmatmul.mubr.f32.gmra.mrb[0].mxu0 %v2297
          %v2299 = vpop.f32.mrb[0].mxu0
          %v2300 = vadd.f32 %v2003, %v2299
          %v2301 = vpop.f32.mrb[0].mxu0
          %2302 = vmatprep.mubr.f32.mxu0 0.0
          %v2303 = vand.u32 %v1875, 4294901760
          %2304 = vmatmul.mubr.f32.gmra.mrb[0].mxu0 %v2303
          %v2305 = vpop.f32.mrb[0].mxu0
          %v2306 = vadd.f32 %v2013, %v2305
          %v2307 = vpop.f32.mrb[0].mxu0
          %2308 = vmatprep.mubr.f32.mxu0 0.0
          %v2309 = vand.u32 %v1876, 4294901760
          %2310 = vmatmul.mubr.f32.gmra.mrb[0].mxu0 %v2309
          %v2311 = vpop.f32.mrb[0].mxu0
          %v2312 = vadd.f32 %v2023, %v2311
          %v2313 = vpop.f32.mrb[0].mxu0
          %2314 = vmatprep.mubr.f32.mxu0 0.0
          %v2315 = vand.u32 %v1877, 4294901760
          %2316 = vmatmul.mubr.f32.gmra.mrb[0].mxu0 %v2315
          %v2317 = vpop.f32.mrb[0].mxu0
          %v2318 = vadd.f32 %v2033, %v2317
          %v2319 = vpop.f32.mrb[0].mxu0
          %2320 = vmatprep.mubr.f32.mxu0 0.0
          %v2321 = vand.u32 %v1878, 4294901760
          %2322 = vmatmul.mubr.f32.gmra.mrb[0].mxu0 %v2321
          %v2323 = vpop.f32.mrb[0].mxu0
          %v2324 = vadd.f32 %v2043, %v2323
          %v2325 = vpop.f32.mrb[0].mxu0
          %2326 = vmatprep.mubr.f32.mxu0 0.0
          %v2327 = vand.u32 %v1879, 4294901760
          %2328 = vmatmul.mubr.f32.gmra.mrb[0].mxu0 %v2327
          %v2329 = vpop.f32.mrb[0].mxu0
          %v2330 = vadd.f32 %v2053, %v2329
          %v2331 = vpop.f32.mrb[0].mxu0
          %2332 = vmatprep.mubr.f32.mxu0 0.0
          %v2333 = vand.u32 %v1880, 4294901760
          %2334 = vmatmul.mubr.f32.gmra.mrb[0].mxu0 %v2333
          %v2335 = vpop.f32.mrb[0].mxu0
          %v2336 = vadd.f32 %v2063, %v2335
          %v2337 = vpop.f32.mrb[0].mxu0
          %2338 = vmatprep.mubr.f32.mxu0 0.0
          %v2339 = vand.u32 %v1881, 4294901760
          %2340 = vmatmul.mubr.f32.gmra.mrb[0].mxu0 %v2339
          %v2341 = vpop.f32.mrb[0].mxu0
          %v2342 = vadd.f32 %v2073, %v2341
          %v2343 = vpop.f32.mrb[0].mxu0
          %2344 = vmatprep.mubr.f32.mxu0 0.0
          %v2345 = vand.u32 %v1882, 4294901760
          %2346 = vmatmul.mubr.f32.gmra.mrb[0].mxu0 %v2345
          %v2347 = vpop.f32.mrb[0].mxu0
          %v2348 = vadd.f32 %v2083, %v2347
          %v2349 = vpop.f32.mrb[0].mxu0
          %2350 = vmatprep.mubr.f32.mxu0 0.0
          %v2351 = vand.u32 %v1883, 4294901760
          %2352 = vmatmul.mubr.f32.gmra.mrb[0].mxu0 %v2351
          %v2353 = vpop.f32.mrb[0].mxu0
          %v2354 = vadd.f32 %v2093, %v2353
          %v2355 = vpop.f32.mrb[0].mxu0
          %2356 = vmatprep.mubr.f32.mxu0 0.0
          %v2357 = vand.u32 %v1884, 4294901760
          %2358 = vmatmul.mubr.f32.gmra.mrb[0].mxu0 %v2357
          %v2359 = vpop.f32.mrb[0].mxu0
          %v2360 = vadd.f32 %v2103, %v2359
          %v2361 = vpop.f32.mrb[0].mxu0
          %2362 = vmatprep.mubr.f32.mxu0 0.0
          %v2363 = vand.u32 %v1885, 4294901760
          %2364 = vmatmul.mubr.f32.gmra.mrb[0].mxu0 %v2363
          %v2365 = vpop.f32.mrb[0].mxu0
          %v2366 = vadd.f32 %v2113, %v2365
          %v2367 = vpop.f32.mrb[0].mxu0
          %2368 = vmatprep.mubr.f32.mxu0 0.0
          %v2369 = vand.u32 %v1886, 4294901760
          %2370 = vmatmul.mubr.f32.gmra.mrb[0].mxu0 %v2369
          %v2371 = vpop.f32.mrb[0].mxu0
          %v2372 = vadd.f32 %v2123, %v2371
          %v2373 = vpop.f32.mrb[0].mxu0
          %2374 = vmatprep.mubr.f32.mxu0 0.0
          %v2375 = vand.u32 %v1887, 4294901760
          %2376 = vmatmul.mubr.f32.gmra.mrb[0].mxu0 %v2375
          %v2377 = vpop.f32.mrb[0].mxu0
          %v2378 = vadd.f32 %v2133, %v2377
          %v2379 = vpop.f32.mrb[0].mxu0
          %2380 = vmatprep.mubr.f32.mxu0 0.0
          %v2381 = vand.u32 %v1888, 4294901760
          %2382 = vmatmul.mubr.f32.gmra.mrb[0].mxu0 %v2381
          %v2383 = vpop.f32.mrb[0].mxu0
          %v2384 = vadd.f32 %v2143, %v2383
          %v2385 = vpop.f32.mrb[0].mxu0
          %2386 = vdwg.mxu0
          %2387 = vmatprep.subr.mxu0 0.0
          %v2388 = vand.u32 %v1889, 4294901760
          %v2389 = vsub.f32 %v1889, %v2388
          %2390 = vmatpush1.msra.mxu0 %v2389
          %2391 = vmatprep.subr.mxu0 0.0
          %v2392 = vand.u32 %v1890, 4294901760
          %v2393 = vsub.f32 %v1890, %v2392
          %2394 = vmatpush1.msra.mxu0 %v2393
          %2395 = vmatprep.subr.mxu0 0.0
          %v2396 = vand.u32 %v1891, 4294901760
          %v2397 = vsub.f32 %v1891, %v2396
          %2398 = vmatpush1.msra.mxu0 %v2397
          %2399 = vmatprep.subr.mxu0 0.0
          %v2400 = vand.u32 %v1892, 4294901760
          %v2401 = vsub.f32 %v1892, %v2400
          %2402 = vmatpush1.msra.mxu0 %v2401
          %2403 = vmatprep.subr.mxu0 0.0
          %v2404 = vand.u32 %v1893, 4294901760
          %v2405 = vsub.f32 %v1893, %v2404
          %2406 = vmatpush1.msra.mxu0 %v2405
          %2407 = vmatprep.subr.mxu0 0.0
          %v2408 = vand.u32 %v1894, 4294901760
          %v2409 = vsub.f32 %v1894, %v2408
          %2410 = vmatpush1.msra.mxu0 %v2409
          %2411 = vmatprep.subr.mxu0 0.0
          %v2412 = vand.u32 %v1895, 4294901760
          %v2413 = vsub.f32 %v1895, %v2412
          %2414 = vmatpush1.msra.mxu0 %v2413
          %2415 = vmatprep.subr.mxu0 0.0
          %v2416 = vand.u32 %v1896, 4294901760
          %v2417 = vsub.f32 %v1896, %v2416
          %2418 = vmatpush1.msra.mxu0 %v2417
          %2419 = vmatprep.subr.mxu0 0.0
          %v2420 = vand.u32 %v1897, 4294901760
          %v2421 = vsub.f32 %v1897, %v2420
          %2422 = vmatpush1.msra.mxu0 %v2421
          %2423 = vmatprep.subr.mxu0 0.0
          %v2424 = vand.u32 %v1898, 4294901760
          %v2425 = vsub.f32 %v1898, %v2424
          %2426 = vmatpush1.msra.mxu0 %v2425
          %2427 = vmatprep.subr.mxu0 0.0
          %v2428 = vand.u32 %v1899, 4294901760
          %v2429 = vsub.f32 %v1899, %v2428
          %2430 = vmatpush1.msra.mxu0 %v2429
          %2431 = vmatprep.subr.mxu0 0.0
          %v2432 = vand.u32 %v1900, 4294901760
          %v2433 = vsub.f32 %v1900, %v2432
          %2434 = vmatpush1.msra.mxu0 %v2433
          %2435 = vmatprep.subr.mxu0 0.0
          %v2436 = vand.u32 %v1901, 4294901760
          %v2437 = vsub.f32 %v1901, %v2436
          %2438 = vmatpush1.msra.mxu0 %v2437
          %2439 = vmatprep.subr.mxu0 0.0
          %v2440 = vand.u32 %v1902, 4294901760
          %v2441 = vsub.f32 %v1902, %v2440
          %2442 = vmatpush1.msra.mxu0 %v2441
          %2443 = vmatprep.subr.mxu0 0.0
          %v2444 = vand.u32 %v1903, 4294901760
          %v2445 = vsub.f32 %v1903, %v2444
          %2446 = vmatpush1.msra.mxu0 %v2445
          %2447 = vmatprep.subr.mxu0 0.0
          %v2448 = vand.u32 %v1904, 4294901760
          %v2449 = vsub.f32 %v1904, %v2448
          %2450 = vmatpush1.msra.mxu0 %v2449
          %2451 = vmatprep.subr.mxu0 0.0
          %2452 = vmatpush1.msra.mxu0 0.0
          %2453 = vmatprep.subr.mxu0 0.0
          %2454 = vmatpush1.msra.mxu0 0.0
          %2455 = vmatprep.subr.mxu0 0.0
          %2456 = vmatpush1.msra.mxu0 0.0
          %2457 = vmatprep.subr.mxu0 0.0
          %2458 = vmatpush1.msra.mxu0 0.0
          %2459 = vmatprep.subr.mxu0 0.0
          %2460 = vmatpush1.msra.mxu0 0.0
          %2461 = vmatprep.subr.mxu0 0.0
          %2462 = vmatpush1.msra.mxu0 0.0
          %2463 = vmatprep.subr.mxu0 0.0
          %2464 = vmatpush1.msra.mxu0 0.0
          %2465 = vmatprep.subr.mxu0 0.0
          %2466 = vmatpush1.msra.mxu0 0.0
          %2467 = vmatprep.subr.mxu0 0.0
          %2468 = vmatpush1.msra.mxu0 0.0
          %2469 = vmatprep.subr.mxu0 0.0
          %2470 = vmatpush1.msra.mxu0 0.0
          %2471 = vmatprep.subr.mxu0 0.0
          %2472 = vmatpush1.msra.mxu0 0.0
          %2473 = vmatprep.subr.mxu0 0.0
          %2474 = vmatpush1.msra.mxu0 0.0
          %2475 = vmatprep.subr.mxu0 0.0
          %2476 = vmatpush1.msra.mxu0 0.0
          %2477 = vmatprep.subr.mxu0 0.0
          %2478 = vmatpush1.msra.mxu0 0.0
          %2479 = vmatprep.subr.mxu0 0.0
          %2480 = vmatpush1.msra.mxu0 0.0
          %2481 = vmatprep.subr.mxu0 0.0
          %2482 = vmatpush1.msra.mxu0 0.0
          %2483 = vmatprep.mubr.f32.mxu0 0.0
          %v2484 = vand.u32 %v1873, 4294901760
          %v2485 = vsub.f32 %v1873, %v2484
          %2486 = vmatmul.mubr.f32.gmra.mrb[0].mxu0 %v2485
          %v2487 = vpop.f32.mrb[0].mxu0
          %v2488 = vadd.f32 %v2294, %v2487
          %v2489 = vpop.f32.mrb[0].mxu0
          %2490 = vmatprep.mubr.f32.mxu0 0.0
          %v2491 = vand.u32 %v1874, 4294901760
          %v2492 = vsub.f32 %v1874, %v2491
          %2493 = vmatmul.mubr.f32.gmra.mrb[0].mxu0 %v2492
          %v2494 = vpop.f32.mrb[0].mxu0
          %v2495 = vadd.f32 %v2300, %v2494
          %v2496 = vpop.f32.mrb[0].mxu0
          %2497 = vmatprep.mubr.f32.mxu0 0.0
          %v2498 = vand.u32 %v1875, 4294901760
          %v2499 = vsub.f32 %v1875, %v2498
          %2500 = vmatmul.mubr.f32.gmra.mrb[0].mxu0 %v2499
          %v2501 = vpop.f32.mrb[0].mxu0
          %v2502 = vadd.f32 %v2306, %v2501
          %v2503 = vpop.f32.mrb[0].mxu0
          %2504 = vmatprep.mubr.f32.mxu0 0.0
          %v2505 = vand.u32 %v1876, 4294901760
          %v2506 = vsub.f32 %v1876, %v2505
          %2507 = vmatmul.mubr.f32.gmra.mrb[0].mxu0 %v2506
          %v2508 = vpop.f32.mrb[0].mxu0
          %v2509 = vadd.f32 %v2312, %v2508
          %v2510 = vpop.f32.mrb[0].mxu0
          %2511 = vmatprep.mubr.f32.mxu0 0.0
          %v2512 = vand.u32 %v1877, 4294901760
          %v2513 = vsub.f32 %v1877, %v2512
          %2514 = vmatmul.mubr.f32.gmra.mrb[0].mxu0 %v2513
          %v2515 = vpop.f32.mrb[0].mxu0
          %v2516 = vadd.f32 %v2318, %v2515
          %v2517 = vpop.f32.mrb[0].mxu0
          %2518 = vmatprep.mubr.f32.mxu0 0.0
          %v2519 = vand.u32 %v1878, 4294901760
          %v2520 = vsub.f32 %v1878, %v2519
          %2521 = vmatmul.mubr.f32.gmra.mrb[0].mxu0 %v2520
          %v2522 = vpop.f32.mrb[0].mxu0
          %v2523 = vadd.f32 %v2324, %v2522
          %v2524 = vpop.f32.mrb[0].mxu0
          %2525 = vmatprep.mubr.f32.mxu0 0.0
          %v2526 = vand.u32 %v1879, 4294901760
          %v2527 = vsub.f32 %v1879, %v2526
          %2528 = vmatmul.mubr.f32.gmra.mrb[0].mxu0 %v2527
          %v2529 = vpop.f32.mrb[0].mxu0
          %v2530 = vadd.f32 %v2330, %v2529
          %v2531 = vpop.f32.mrb[0].mxu0
          %2532 = vmatprep.mubr.f32.mxu0 0.0
          %v2533 = vand.u32 %v1880, 4294901760
          %v2534 = vsub.f32 %v1880, %v2533
          %2535 = vmatmul.mubr.f32.gmra.mrb[0].mxu0 %v2534
          %v2536 = vpop.f32.mrb[0].mxu0
          %v2537 = vadd.f32 %v2336, %v2536
          %v2538 = vpop.f32.mrb[0].mxu0
          %2539 = vmatprep.mubr.f32.mxu0 0.0
          %v2540 = vand.u32 %v1881, 4294901760
          %v2541 = vsub.f32 %v1881, %v2540
          %2542 = vmatmul.mubr.f32.gmra.mrb[0].mxu0 %v2541
          %v2543 = vpop.f32.mrb[0].mxu0
          %v2544 = vadd.f32 %v2342, %v2543
          %v2545 = vpop.f32.mrb[0].mxu0
          %2546 = vmatprep.mubr.f32.mxu0 0.0
          %v2547 = vand.u32 %v1882, 4294901760
          %v2548 = vsub.f32 %v1882, %v2547
          %2549 = vmatmul.mubr.f32.gmra.mrb[0].mxu0 %v2548
          %v2550 = vpop.f32.mrb[0].mxu0
          %v2551 = vadd.f32 %v2348, %v2550
          %v2552 = vpop.f32.mrb[0].mxu0
          %2553 = vmatprep.mubr.f32.mxu0 0.0
          %v2554 = vand.u32 %v1883, 4294901760
          %v2555 = vsub.f32 %v1883, %v2554
          %2556 = vmatmul.mubr.f32.gmra.mrb[0].mxu0 %v2555
          %v2557 = vpop.f32.mrb[0].mxu0
          %v2558 = vadd.f32 %v2354, %v2557
          %v2559 = vpop.f32.mrb[0].mxu0
          %2560 = vmatprep.mubr.f32.mxu0 0.0
          %v2561 = vand.u32 %v1884, 4294901760
          %v2562 = vsub.f32 %v1884, %v2561
          %2563 = vmatmul.mubr.f32.gmra.mrb[0].mxu0 %v2562
          %v2564 = vpop.f32.mrb[0].mxu0
          %v2565 = vadd.f32 %v2360, %v2564
          %v2566 = vpop.f32.mrb[0].mxu0
          %2567 = vmatprep.mubr.f32.mxu0 0.0
          %v2568 = vand.u32 %v1885, 4294901760
          %v2569 = vsub.f32 %v1885, %v2568
          %2570 = vmatmul.mubr.f32.gmra.mrb[0].mxu0 %v2569
          %v2571 = vpop.f32.mrb[0].mxu0
          %v2572 = vadd.f32 %v2366, %v2571
          %v2573 = vpop.f32.mrb[0].mxu0
          %2574 = vmatprep.mubr.f32.mxu0 0.0
          %v2575 = vand.u32 %v1886, 4294901760
          %v2576 = vsub.f32 %v1886, %v2575
          %2577 = vmatmul.mubr.f32.gmra.mrb[0].mxu0 %v2576
          %v2578 = vpop.f32.mrb[0].mxu0
          %v2579 = vadd.f32 %v2372, %v2578
          %v2580 = vpop.f32.mrb[0].mxu0
          %2581 = vmatprep.mubr.f32.mxu0 0.0
          %v2582 = vand.u32 %v1887, 4294901760
          %v2583 = vsub.f32 %v1887, %v2582
          %2584 = vmatmul.mubr.f32.gmra.mrb[0].mxu0 %v2583
          %v2585 = vpop.f32.mrb[0].mxu0
          %v2586 = vadd.f32 %v2378, %v2585
          %v2587 = vpop.f32.mrb[0].mxu0
          %2588 = vmatprep.mubr.f32.mxu0 0.0
          %v2589 = vand.u32 %v1888, 4294901760
          %v2590 = vsub.f32 %v1888, %v2589
          %2591 = vmatmul.mubr.f32.gmra.mrb[0].mxu0 %v2590
          %v2592 = vpop.f32.mrb[0].mxu0
          %v2593 = vadd.f32 %v2384, %v2592
          %v2594 = vpop.f32.mrb[0].mxu0
          %2595 = vdwg.mxu0
          %2596 = vmatprep.subr.mxu0 0.0
          %v2597 = vand.u32 %v1889, 4294901760
          %2598 = vmatpush1.msra.mxu0 %v2597
          %2599 = vmatprep.subr.mxu0 0.0
          %v2600 = vand.u32 %v1890, 4294901760
          %2601 = vmatpush1.msra.mxu0 %v2600
          %2602 = vmatprep.subr.mxu0 0.0
          %v2603 = vand.u32 %v1891, 4294901760
          %2604 = vmatpush1.msra.mxu0 %v2603
          %2605 = vmatprep.subr.mxu0 0.0
          %v2606 = vand.u32 %v1892, 4294901760
          %2607 = vmatpush1.msra.mxu0 %v2606
          %2608 = vmatprep.subr.mxu0 0.0
          %v2609 = vand.u32 %v1893, 4294901760
          %2610 = vmatpush1.msra.mxu0 %v2609
          %2611 = vmatprep.subr.mxu0 0.0
          %v2612 = vand.u32 %v1894, 4294901760
          %2613 = vmatpush1.msra.mxu0 %v2612
          %2614 = vmatprep.subr.mxu0 0.0
          %v2615 = vand.u32 %v1895, 4294901760
          %2616 = vmatpush1.msra.mxu0 %v2615
          %2617 = vmatprep.subr.mxu0 0.0
          %v2618 = vand.u32 %v1896, 4294901760
          %2619 = vmatpush1.msra.mxu0 %v2618
          %2620 = vmatprep.subr.mxu0 0.0
          %v2621 = vand.u32 %v1897, 4294901760
          %2622 = vmatpush1.msra.mxu0 %v2621
          %2623 = vmatprep.subr.mxu0 0.0
          %v2624 = vand.u32 %v1898, 4294901760
          %2625 = vmatpush1.msra.mxu0 %v2624
          %2626 = vmatprep.subr.mxu0 0.0
          %v2627 = vand.u32 %v1899, 4294901760
          %2628 = vmatpush1.msra.mxu0 %v2627
          %2629 = vmatprep.subr.mxu0 0.0
          %v2630 = vand.u32 %v1900, 4294901760
          %2631 = vmatpush1.msra.mxu0 %v2630
          %2632 = vmatprep.subr.mxu0 0.0
          %v2633 = vand.u32 %v1901, 4294901760
          %2634 = vmatpush1.msra.mxu0 %v2633
          %2635 = vmatprep.subr.mxu0 0.0
          %v2636 = vand.u32 %v1902, 4294901760
          %2637 = vmatpush1.msra.mxu0 %v2636
          %2638 = vmatprep.subr.mxu0 0.0
          %v2639 = vand.u32 %v1903, 4294901760
          %2640 = vmatpush1.msra.mxu0 %v2639
          %2641 = vmatprep.subr.mxu0 0.0
          %v2642 = vand.u32 %v1904, 4294901760
          %2643 = vmatpush1.msra.mxu0 %v2642
          %2644 = vmatprep.subr.mxu0 0.0
          %2645 = vmatpush1.msra.mxu0 0.0
          %2646 = vmatprep.subr.mxu0 0.0
          %2647 = vmatpush1.msra.mxu0 0.0
          %2648 = vmatprep.subr.mxu0 0.0
          %2649 = vmatpush1.msra.mxu0 0.0
          %2650 = vmatprep.subr.mxu0 0.0
          %2651 = vmatpush1.msra.mxu0 0.0
          %2652 = vmatprep.subr.mxu0 0.0
          %2653 = vmatpush1.msra.mxu0 0.0
          %2654 = vmatprep.subr.mxu0 0.0
          %2655 = vmatpush1.msra.mxu0 0.0
          %2656 = vmatprep.subr.mxu0 0.0
          %2657 = vmatpush1.msra.mxu0 0.0
          %2658 = vmatprep.subr.mxu0 0.0
          %2659 = vmatpush1.msra.mxu0 0.0
          %2660 = vmatprep.subr.mxu0 0.0
          %2661 = vmatpush1.msra.mxu0 0.0
          %2662 = vmatprep.subr.mxu0 0.0
          %2663 = vmatpush1.msra.mxu0 0.0
          %2664 = vmatprep.subr.mxu0 0.0
          %2665 = vmatpush1.msra.mxu0 0.0
          %2666 = vmatprep.subr.mxu0 0.0
          %2667 = vmatpush1.msra.mxu0 0.0
          %2668 = vmatprep.subr.mxu0 0.0
          %2669 = vmatpush1.msra.mxu0 0.0
          %2670 = vmatprep.subr.mxu0 0.0
          %2671 = vmatpush1.msra.mxu0 0.0
          %2672 = vmatprep.subr.mxu0 0.0
          %2673 = vmatpush1.msra.mxu0 0.0
          %2674 = vmatprep.subr.mxu0 0.0
          %2675 = vmatpush1.msra.mxu0 0.0
          %2676 = vmatprep.mubr.f32.mxu0 0.0
          %v2677 = vand.u32 %v1873, 4294901760
          %v2678 = vsub.f32 %v1873, %v2677
          %v2679 = vand.u32 %v2678, 4294901760
          %2680 = vmatmul.mubr.f32.gmra.mrb[0].mxu0 %v2679
          %v2681 = vpop.f32.mrb[0].mxu0
          %v2682 = vadd.f32 %v2488, %v2681
          %v2683 = vpop.f32.mrb[0].mxu0
          %2684 = vmatprep.mubr.f32.mxu0 0.0
          %v2685 = vand.u32 %v1874, 4294901760
          %v2686 = vsub.f32 %v1874, %v2685
          %v2687 = vand.u32 %v2686, 4294901760
          %2688 = vmatmul.mubr.f32.gmra.mrb[0].mxu0 %v2687
          %v2689 = vpop.f32.mrb[0].mxu0
          %v2690 = vadd.f32 %v2495, %v2689
          %v2691 = vpop.f32.mrb[0].mxu0
          %2692 = vmatprep.mubr.f32.mxu0 0.0
          %v2693 = vand.u32 %v1875, 4294901760
          %v2694 = vsub.f32 %v1875, %v2693
          %v2695 = vand.u32 %v2694, 4294901760
          %2696 = vmatmul.mubr.f32.gmra.mrb[0].mxu0 %v2695
          %v2697 = vpop.f32.mrb[0].mxu0
          %v2698 = vadd.f32 %v2502, %v2697
          %v2699 = vpop.f32.mrb[0].mxu0
          %2700 = vmatprep.mubr.f32.mxu0 0.0
          %v2701 = vand.u32 %v1876, 4294901760
          %v2702 = vsub.f32 %v1876, %v2701
          %v2703 = vand.u32 %v2702, 4294901760
          %2704 = vmatmul.mubr.f32.gmra.mrb[0].mxu0 %v2703
          %v2705 = vpop.f32.mrb[0].mxu0
          %v2706 = vadd.f32 %v2509, %v2705
          %v2707 = vpop.f32.mrb[0].mxu0
          %2708 = vmatprep.mubr.f32.mxu0 0.0
          %v2709 = vand.u32 %v1877, 4294901760
          %v2710 = vsub.f32 %v1877, %v2709
          %v2711 = vand.u32 %v2710, 4294901760
          %2712 = vmatmul.mubr.f32.gmra.mrb[0].mxu0 %v2711
          %v2713 = vpop.f32.mrb[0].mxu0
          %v2714 = vadd.f32 %v2516, %v2713
          %v2715 = vpop.f32.mrb[0].mxu0
          %2716 = vmatprep.mubr.f32.mxu0 0.0
          %v2717 = vand.u32 %v1878, 4294901760
          %v2718 = vsub.f32 %v1878, %v2717
          %v2719 = vand.u32 %v2718, 4294901760
          %2720 = vmatmul.mubr.f32.gmra.mrb[0].mxu0 %v2719
          %v2721 = vpop.f32.mrb[0].mxu0
          %v2722 = vadd.f32 %v2523, %v2721
          %v2723 = vpop.f32.mrb[0].mxu0
          %2724 = vmatprep.mubr.f32.mxu0 0.0
          %v2725 = vand.u32 %v1879, 4294901760
          %v2726 = vsub.f32 %v1879, %v2725
          %v2727 = vand.u32 %v2726, 4294901760
          %2728 = vmatmul.mubr.f32.gmra.mrb[0].mxu0 %v2727
          %v2729 = vpop.f32.mrb[0].mxu0
          %v2730 = vadd.f32 %v2530, %v2729
          %v2731 = vpop.f32.mrb[0].mxu0
          %2732 = vmatprep.mubr.f32.mxu0 0.0
          %v2733 = vand.u32 %v1880, 4294901760
          %v2734 = vsub.f32 %v1880, %v2733
          %v2735 = vand.u32 %v2734, 4294901760
          %2736 = vmatmul.mubr.f32.gmra.mrb[0].mxu0 %v2735
          %v2737 = vpop.f32.mrb[0].mxu0
          %v2738 = vadd.f32 %v2537, %v2737
          %v2739 = vpop.f32.mrb[0].mxu0
          %2740 = vmatprep.mubr.f32.mxu0 0.0
          %v2741 = vand.u32 %v1881, 4294901760
          %v2742 = vsub.f32 %v1881, %v2741
          %v2743 = vand.u32 %v2742, 4294901760
          %2744 = vmatmul.mubr.f32.gmra.mrb[0].mxu0 %v2743
          %v2745 = vpop.f32.mrb[0].mxu0
          %v2746 = vadd.f32 %v2544, %v2745
          %v2747 = vpop.f32.mrb[0].mxu0
          %2748 = vmatprep.mubr.f32.mxu0 0.0
          %v2749 = vand.u32 %v1882, 4294901760
          %v2750 = vsub.f32 %v1882, %v2749
          %v2751 = vand.u32 %v2750, 4294901760
          %2752 = vmatmul.mubr.f32.gmra.mrb[0].mxu0 %v2751
          %v2753 = vpop.f32.mrb[0].mxu0
          %v2754 = vadd.f32 %v2551, %v2753
          %v2755 = vpop.f32.mrb[0].mxu0
          %2756 = vmatprep.mubr.f32.mxu0 0.0
          %v2757 = vand.u32 %v1883, 4294901760
          %v2758 = vsub.f32 %v1883, %v2757
          %v2759 = vand.u32 %v2758, 4294901760
          %2760 = vmatmul.mubr.f32.gmra.mrb[0].mxu0 %v2759
          %v2761 = vpop.f32.mrb[0].mxu0
          %v2762 = vadd.f32 %v2558, %v2761
          %v2763 = vpop.f32.mrb[0].mxu0
          %2764 = vmatprep.mubr.f32.mxu0 0.0
          %v2765 = vand.u32 %v1884, 4294901760
          %v2766 = vsub.f32 %v1884, %v2765
          %v2767 = vand.u32 %v2766, 4294901760
          %2768 = vmatmul.mubr.f32.gmra.mrb[0].mxu0 %v2767
          %v2769 = vpop.f32.mrb[0].mxu0
          %v2770 = vadd.f32 %v2565, %v2769
          %v2771 = vpop.f32.mrb[0].mxu0
          %2772 = vmatprep.mubr.f32.mxu0 0.0
          %v2773 = vand.u32 %v1885, 4294901760
          %v2774 = vsub.f32 %v1885, %v2773
          %v2775 = vand.u32 %v2774, 4294901760
          %2776 = vmatmul.mubr.f32.gmra.mrb[0].mxu0 %v2775
          %v2777 = vpop.f32.mrb[0].mxu0
          %v2778 = vadd.f32 %v2572, %v2777
          %v2779 = vpop.f32.mrb[0].mxu0
          %2780 = vmatprep.mubr.f32.mxu0 0.0
          %v2781 = vand.u32 %v1886, 4294901760
          %v2782 = vsub.f32 %v1886, %v2781
          %v2783 = vand.u32 %v2782, 4294901760
          %2784 = vmatmul.mubr.f32.gmra.mrb[0].mxu0 %v2783
          %v2785 = vpop.f32.mrb[0].mxu0
          %v2786 = vadd.f32 %v2579, %v2785
          %v2787 = vpop.f32.mrb[0].mxu0
          %2788 = vmatprep.mubr.f32.mxu0 0.0
          %v2789 = vand.u32 %v1887, 4294901760
          %v2790 = vsub.f32 %v1887, %v2789
          %v2791 = vand.u32 %v2790, 4294901760
          %2792 = vmatmul.mubr.f32.gmra.mrb[0].mxu0 %v2791
          %v2793 = vpop.f32.mrb[0].mxu0
          %v2794 = vadd.f32 %v2586, %v2793
          %v2795 = vpop.f32.mrb[0].mxu0
          %2796 = vmatprep.mubr.f32.mxu0 0.0
          %v2797 = vand.u32 %v1888, 4294901760
          %v2798 = vsub.f32 %v1888, %v2797
          %v2799 = vand.u32 %v2798, 4294901760
          %2800 = vmatmul.mubr.f32.gmra.mrb[0].mxu0 %v2799
          %v2801 = vpop.f32.mrb[0].mxu0
          %v2802 = vadd.f32 %v2593, %v2801
          %v2803 = vpop.f32.mrb[0].mxu0
          %2804 = vdwg.mxu0
          %2805 = vmatprep.subr.mxu0 0.0
          %v2806 = vand.u32 %v1889, 4294901760
          %v2807 = vsub.f32 %v1889, %v2806
          %v2808 = vand.u32 %v2807, 4294901760
          %2809 = vmatpush1.msra.mxu0 %v2808
          %2810 = vmatprep.subr.mxu0 0.0
          %v2811 = vand.u32 %v1890, 4294901760
          %v2812 = vsub.f32 %v1890, %v2811
          %v2813 = vand.u32 %v2812, 4294901760
          %2814 = vmatpush1.msra.mxu0 %v2813
          %2815 = vmatprep.subr.mxu0 0.0
          %v2816 = vand.u32 %v1891, 4294901760
          %v2817 = vsub.f32 %v1891, %v2816
          %v2818 = vand.u32 %v2817, 4294901760
          %2819 = vmatpush1.msra.mxu0 %v2818
          %2820 = vmatprep.subr.mxu0 0.0
          %v2821 = vand.u32 %v1892, 4294901760
          %v2822 = vsub.f32 %v1892, %v2821
          %v2823 = vand.u32 %v2822, 4294901760
          %2824 = vmatpush1.msra.mxu0 %v2823
          %2825 = vmatprep.subr.mxu0 0.0
          %v2826 = vand.u32 %v1893, 4294901760
          %v2827 = vsub.f32 %v1893, %v2826
          %v2828 = vand.u32 %v2827, 4294901760
          %2829 = vmatpush1.msra.mxu0 %v2828
          %2830 = vmatprep.subr.mxu0 0.0
          %v2831 = vand.u32 %v1894, 4294901760
          %v2832 = vsub.f32 %v1894, %v2831
          %v2833 = vand.u32 %v2832, 4294901760
          %2834 = vmatpush1.msra.mxu0 %v2833
          %2835 = vmatprep.subr.mxu0 0.0
          %v2836 = vand.u32 %v1895, 4294901760
          %v2837 = vsub.f32 %v1895, %v2836
          %v2838 = vand.u32 %v2837, 4294901760
          %2839 = vmatpush1.msra.mxu0 %v2838
          %2840 = vmatprep.subr.mxu0 0.0
          %v2841 = vand.u32 %v1896, 4294901760
          %v2842 = vsub.f32 %v1896, %v2841
          %v2843 = vand.u32 %v2842, 4294901760
          %2844 = vmatpush1.msra.mxu0 %v2843
          %2845 = vmatprep.subr.mxu0 0.0
          %v2846 = vand.u32 %v1897, 4294901760
          %v2847 = vsub.f32 %v1897, %v2846
          %v2848 = vand.u32 %v2847, 4294901760
          %2849 = vmatpush1.msra.mxu0 %v2848
          %2850 = vmatprep.subr.mxu0 0.0
          %v2851 = vand.u32 %v1898, 4294901760
          %v2852 = vsub.f32 %v1898, %v2851
          %v2853 = vand.u32 %v2852, 4294901760
          %2854 = vmatpush1.msra.mxu0 %v2853
          %2855 = vmatprep.subr.mxu0 0.0
          %v2856 = vand.u32 %v1899, 4294901760
          %v2857 = vsub.f32 %v1899, %v2856
          %v2858 = vand.u32 %v2857, 4294901760
          %2859 = vmatpush1.msra.mxu0 %v2858
          %2860 = vmatprep.subr.mxu0 0.0
          %v2861 = vand.u32 %v1900, 4294901760
          %v2862 = vsub.f32 %v1900, %v2861
          %v2863 = vand.u32 %v2862, 4294901760
          %2864 = vmatpush1.msra.mxu0 %v2863
          %2865 = vmatprep.subr.mxu0 0.0
          %v2866 = vand.u32 %v1901, 4294901760
          %v2867 = vsub.f32 %v1901, %v2866
          %v2868 = vand.u32 %v2867, 4294901760
          %2869 = vmatpush1.msra.mxu0 %v2868
          %2870 = vmatprep.subr.mxu0 0.0
          %v2871 = vand.u32 %v1902, 4294901760
          %v2872 = vsub.f32 %v1902, %v2871
          %v2873 = vand.u32 %v2872, 4294901760
          %2874 = vmatpush1.msra.mxu0 %v2873
          %2875 = vmatprep.subr.mxu0 0.0
          %v2876 = vand.u32 %v1903, 4294901760
          %v2877 = vsub.f32 %v1903, %v2876
          %v2878 = vand.u32 %v2877, 4294901760
          %2879 = vmatpush1.msra.mxu0 %v2878
          %2880 = vmatprep.subr.mxu0 0.0
          %v2881 = vand.u32 %v1904, 4294901760
          %v2882 = vsub.f32 %v1904, %v2881
          %v2883 = vand.u32 %v2882, 4294901760
          %2884 = vmatpush1.msra.mxu0 %v2883
          %2885 = vmatprep.subr.mxu0 0.0
          %2886 = vmatpush1.msra.mxu0 0.0
          %2887 = vmatprep.subr.mxu0 0.0
          %2888 = vmatpush1.msra.mxu0 0.0
          %2889 = vmatprep.subr.mxu0 0.0
          %2890 = vmatpush1.msra.mxu0 0.0
          %2891 = vmatprep.subr.mxu0 0.0
          %2892 = vmatpush1.msra.mxu0 0.0
          %2893 = vmatprep.subr.mxu0 0.0
          %2894 = vmatpush1.msra.mxu0 0.0
          %2895 = vmatprep.subr.mxu0 0.0
          %2896 = vmatpush1.msra.mxu0 0.0
          %2897 = vmatprep.subr.mxu0 0.0
          %2898 = vmatpush1.msra.mxu0 0.0
          %2899 = vmatprep.subr.mxu0 0.0
          %2900 = vmatpush1.msra.mxu0 0.0
          %2901 = vmatprep.subr.mxu0 0.0
          %2902 = vmatpush1.msra.mxu0 0.0
          %2903 = vmatprep.subr.mxu0 0.0
          %2904 = vmatpush1.msra.mxu0 0.0
          %2905 = vmatprep.subr.mxu0 0.0
          %2906 = vmatpush1.msra.mxu0 0.0
          %2907 = vmatprep.subr.mxu0 0.0
          %2908 = vmatpush1.msra.mxu0 0.0
          %2909 = vmatprep.subr.mxu0 0.0
          %2910 = vmatpush1.msra.mxu0 0.0
          %2911 = vmatprep.subr.mxu0 0.0
          %2912 = vmatpush1.msra.mxu0 0.0
          %2913 = vmatprep.subr.mxu0 0.0
          %2914 = vmatpush1.msra.mxu0 0.0
          %2915 = vmatprep.subr.mxu0 0.0
          %2916 = vmatpush1.msra.mxu0 0.0
          %2917 = vmatprep.mubr.f32.mxu0 0.0
          %v2918 = vand.u32 %v1873, 4294901760
          %2919 = vmatmul.mubr.f32.gmra.mrb[0].mxu0 %v2918
          %v2920 = vpop.f32.mrb[0].mxu0
          %v2921 = vadd.f32 %v2682, %v2920
          %v2922 = vpop.f32.mrb[0].mxu0
          %2923 = vmatprep.mubr.f32.mxu0 0.0
          %v2924 = vand.u32 %v1874, 4294901760
          %2925 = vmatmul.mubr.f32.gmra.mrb[0].mxu0 %v2924
          %v2926 = vpop.f32.mrb[0].mxu0
          %v2927 = vadd.f32 %v2690, %v2926
          %v2928 = vpop.f32.mrb[0].mxu0
          %2929 = vmatprep.mubr.f32.mxu0 0.0
          %v2930 = vand.u32 %v1875, 4294901760
          %2931 = vmatmul.mubr.f32.gmra.mrb[0].mxu0 %v2930
          %v2932 = vpop.f32.mrb[0].mxu0
          %v2933 = vadd.f32 %v2698, %v2932
          %v2934 = vpop.f32.mrb[0].mxu0
          %2935 = vmatprep.mubr.f32.mxu0 0.0
          %v2936 = vand.u32 %v1876, 4294901760
          %2937 = vmatmul.mubr.f32.gmra.mrb[0].mxu0 %v2936
          %v2938 = vpop.f32.mrb[0].mxu0
          %v2939 = vadd.f32 %v2706, %v2938
          %v2940 = vpop.f32.mrb[0].mxu0
          %2941 = vmatprep.mubr.f32.mxu0 0.0
          %v2942 = vand.u32 %v1877, 4294901760
          %2943 = vmatmul.mubr.f32.gmra.mrb[0].mxu0 %v2942
          %v2944 = vpop.f32.mrb[0].mxu0
          %v2945 = vadd.f32 %v2714, %v2944
          %v2946 = vpop.f32.mrb[0].mxu0
          %2947 = vmatprep.mubr.f32.mxu0 0.0
          %v2948 = vand.u32 %v1878, 4294901760
          %2949 = vmatmul.mubr.f32.gmra.mrb[0].mxu0 %v2948
          %v2950 = vpop.f32.mrb[0].mxu0
          %v2951 = vadd.f32 %v2722, %v2950
          %v2952 = vpop.f32.mrb[0].mxu0
          %2953 = vmatprep.mubr.f32.mxu0 0.0
          %v2954 = vand.u32 %v1879, 4294901760
          %2955 = vmatmul.mubr.f32.gmra.mrb[0].mxu0 %v2954
          %v2956 = vpop.f32.mrb[0].mxu0
          %v2957 = vadd.f32 %v2730, %v2956
          %v2958 = vpop.f32.mrb[0].mxu0
          %2959 = vmatprep.mubr.f32.mxu0 0.0
          %v2960 = vand.u32 %v1880, 4294901760
          %2961 = vmatmul.mubr.f32.gmra.mrb[0].mxu0 %v2960
          %v2962 = vpop.f32.mrb[0].mxu0
          %v2963 = vadd.f32 %v2738, %v2962
          %v2964 = vpop.f32.mrb[0].mxu0
          %2965 = vmatprep.mubr.f32.mxu0 0.0
          %v2966 = vand.u32 %v1881, 4294901760
          %2967 = vmatmul.mubr.f32.gmra.mrb[0].mxu0 %v2966
          %v2968 = vpop.f32.mrb[0].mxu0
          %v2969 = vadd.f32 %v2746, %v2968
          %v2970 = vpop.f32.mrb[0].mxu0
          %2971 = vmatprep.mubr.f32.mxu0 0.0
          %v2972 = vand.u32 %v1882, 4294901760
          %2973 = vmatmul.mubr.f32.gmra.mrb[0].mxu0 %v2972
          %v2974 = vpop.f32.mrb[0].mxu0
          %v2975 = vadd.f32 %v2754, %v2974
          %v2976 = vpop.f32.mrb[0].mxu0
          %2977 = vmatprep.mubr.f32.mxu0 0.0
          %v2978 = vand.u32 %v1883, 4294901760
          %2979 = vmatmul.mubr.f32.gmra.mrb[0].mxu0 %v2978
          %v2980 = vpop.f32.mrb[0].mxu0
          %v2981 = vadd.f32 %v2762, %v2980
          %v2982 = vpop.f32.mrb[0].mxu0
          %2983 = vmatprep.mubr.f32.mxu0 0.0
          %v2984 = vand.u32 %v1884, 4294901760
          %2985 = vmatmul.mubr.f32.gmra.mrb[0].mxu0 %v2984
          %v2986 = vpop.f32.mrb[0].mxu0
          %v2987 = vadd.f32 %v2770, %v2986
          %v2988 = vpop.f32.mrb[0].mxu0
          %2989 = vmatprep.mubr.f32.mxu0 0.0
          %v2990 = vand.u32 %v1885, 4294901760
          %2991 = vmatmul.mubr.f32.gmra.mrb[0].mxu0 %v2990
          %v2992 = vpop.f32.mrb[0].mxu0
          %v2993 = vadd.f32 %v2778, %v2992
          %v2994 = vpop.f32.mrb[0].mxu0
          %2995 = vmatprep.mubr.f32.mxu0 0.0
          %v2996 = vand.u32 %v1886, 4294901760
          %2997 = vmatmul.mubr.f32.gmra.mrb[0].mxu0 %v2996
          %v2998 = vpop.f32.mrb[0].mxu0
          %v2999 = vadd.f32 %v2786, %v2998
          %v3000 = vpop.f32.mrb[0].mxu0
          %3001 = vmatprep.mubr.f32.mxu0 0.0
          %v3002 = vand.u32 %v1887, 4294901760
          %3003 = vmatmul.mubr.f32.gmra.mrb[0].mxu0 %v3002
          %v3004 = vpop.f32.mrb[0].mxu0
          %v3005 = vadd.f32 %v2794, %v3004
          %v3006 = vpop.f32.mrb[0].mxu0
          %3007 = vmatprep.mubr.f32.mxu0 0.0
          %v3008 = vand.u32 %v1888, 4294901760
          %3009 = vmatmul.mubr.f32.gmra.mrb[0].mxu0 %v3008
          %v3010 = vpop.f32.mrb[0].mxu0
          %v3011 = vadd.f32 %v2802, %v3010
          %v3012 = vpop.f32.mrb[0].mxu0
          %3013 = vdwg.mxu0
          %3014 = vmatprep.subr.mxu0 0.0
          %v3015 = vand.u32 %v1889, 4294901760
          %3016 = vmatpush1.msra.mxu0 %v3015
          %3017 = vmatprep.subr.mxu0 0.0
          %v3018 = vand.u32 %v1890, 4294901760
          %3019 = vmatpush1.msra.mxu0 %v3018
          %3020 = vmatprep.subr.mxu0 0.0
          %v3021 = vand.u32 %v1891, 4294901760
          %3022 = vmatpush1.msra.mxu0 %v3021
          %3023 = vmatprep.subr.mxu0 0.0
          %v3024 = vand.u32 %v1892, 4294901760
          %3025 = vmatpush1.msra.mxu0 %v3024
          %3026 = vmatprep.subr.mxu0 0.0
          %v3027 = vand.u32 %v1893, 4294901760
          %3028 = vmatpush1.msra.mxu0 %v3027
          %3029 = vmatprep.subr.mxu0 0.0
          %v3030 = vand.u32 %v1894, 4294901760
          %3031 = vmatpush1.msra.mxu0 %v3030
          %3032 = vmatprep.subr.mxu0 0.0
          %v3033 = vand.u32 %v1895, 4294901760
          %3034 = vmatpush1.msra.mxu0 %v3033
          %3035 = vmatprep.subr.mxu0 0.0
          %v3036 = vand.u32 %v1896, 4294901760
          %3037 = vmatpush1.msra.mxu0 %v3036
          %3038 = vmatprep.subr.mxu0 0.0
          %v3039 = vand.u32 %v1897, 4294901760
          %3040 = vmatpush1.msra.mxu0 %v3039
          %3041 = vmatprep.subr.mxu0 0.0
          %v3042 = vand.u32 %v1898, 4294901760
          %3043 = vmatpush1.msra.mxu0 %v3042
          %3044 = vmatprep.subr.mxu0 0.0
          %v3045 = vand.u32 %v1899, 4294901760
          %3046 = vmatpush1.msra.mxu0 %v3045
          %3047 = vmatprep.subr.mxu0 0.0
          %v3048 = vand.u32 %v1900, 4294901760
          %3049 = vmatpush1.msra.mxu0 %v3048
          %3050 = vmatprep.subr.mxu0 0.0
          %v3051 = vand.u32 %v1901, 4294901760
          %3052 = vmatpush1.msra.mxu0 %v3051
          %3053 = vmatprep.subr.mxu0 0.0
          %v3054 = vand.u32 %v1902, 4294901760
          %3055 = vmatpush1.msra.mxu0 %v3054
          %3056 = vmatprep.subr.mxu0 0.0
          %v3057 = vand.u32 %v1903, 4294901760
          %3058 = vmatpush1.msra.mxu0 %v3057
          %3059 = vmatprep.subr.mxu0 0.0
          %v3060 = vand.u32 %v1904, 4294901760
          %3061 = vmatpush1.msra.mxu0 %v3060
          %3062 = vmatprep.subr.mxu0 0.0
          %3063 = vmatpush1.msra.mxu0 0.0
          %3064 = vmatprep.subr.mxu0 0.0
          %3065 = vmatpush1.msra.mxu0 0.0
          %3066 = vmatprep.subr.mxu0 0.0
          %3067 = vmatpush1.msra.mxu0 0.0
          %3068 = vmatprep.subr.mxu0 0.0
          %3069 = vmatpush1.msra.mxu0 0.0
          %3070 = vmatprep.subr.mxu0 0.0
          %3071 = vmatpush1.msra.mxu0 0.0
          %3072 = vmatprep.subr.mxu0 0.0
          %3073 = vmatpush1.msra.mxu0 0.0
          %3074 = vmatprep.subr.mxu0 0.0
          %3075 = vmatpush1.msra.mxu0 0.0
          %3076 = vmatprep.subr.mxu0 0.0
          %3077 = vmatpush1.msra.mxu0 0.0
          %3078 = vmatprep.subr.mxu0 0.0
          %3079 = vmatpush1.msra.mxu0 0.0
          %3080 = vmatprep.subr.mxu0 0.0
          %3081 = vmatpush1.msra.mxu0 0.0
          %3082 = vmatprep.subr.mxu0 0.0
          %3083 = vmatpush1.msra.mxu0 0.0
          %3084 = vmatprep.subr.mxu0 0.0
          %3085 = vmatpush1.msra.mxu0 0.0
          %3086 = vmatprep.subr.mxu0 0.0
          %3087 = vmatpush1.msra.mxu0 0.0
          %3088 = vmatprep.subr.mxu0 0.0
          %3089 = vmatpush1.msra.mxu0 0.0
          %3090 = vmatprep.subr.mxu0 0.0
          %3091 = vmatpush1.msra.mxu0 0.0
          %3092 = vmatprep.subr.mxu0 0.0
          %3093 = vmatpush1.msra.mxu0 0.0
          %3094 = vmatprep.mubr.f32.mxu0 0.0
          %v3095 = vand.u32 %v1873, 4294901760
          %3096 = vmatmul.mubr.f32.gmra.mrb[0].mxu0 %v3095
          %v3097 = vpop.f32.mrb[0].mxu0
          %v3098 = vadd.f32 %v2921, %v3097
          %v3099 = vpop.f32.mrb[0].mxu0
          %3100 = vmatprep.mubr.f32.mxu0 0.0
          %v3101 = vand.u32 %v1874, 4294901760
          %3102 = vmatmul.mubr.f32.gmra.mrb[0].mxu0 %v3101
          %v3103 = vpop.f32.mrb[0].mxu0
          %v3104 = vadd.f32 %v2927, %v3103
          %v3105 = vpop.f32.mrb[0].mxu0
          %3106 = vmatprep.mubr.f32.mxu0 0.0
          %v3107 = vand.u32 %v1875, 4294901760
          %3108 = vmatmul.mubr.f32.gmra.mrb[0].mxu0 %v3107
          %v3109 = vpop.f32.mrb[0].mxu0
          %v3110 = vadd.f32 %v2933, %v3109
          %v3111 = vpop.f32.mrb[0].mxu0
          %3112 = vmatprep.mubr.f32.mxu0 0.0
          %v3113 = vand.u32 %v1876, 4294901760
          %3114 = vmatmul.mubr.f32.gmra.mrb[0].mxu0 %v3113
          %v3115 = vpop.f32.mrb[0].mxu0
          %v3116 = vadd.f32 %v2939, %v3115
          %v3117 = vpop.f32.mrb[0].mxu0
          %3118 = vmatprep.mubr.f32.mxu0 0.0
          %v3119 = vand.u32 %v1877, 4294901760
          %3120 = vmatmul.mubr.f32.gmra.mrb[0].mxu0 %v3119
          %v3121 = vpop.f32.mrb[0].mxu0
          %v3122 = vadd.f32 %v2945, %v3121
          %v3123 = vpop.f32.mrb[0].mxu0
          %3124 = vmatprep.mubr.f32.mxu0 0.0
          %v3125 = vand.u32 %v1878, 4294901760
          %3126 = vmatmul.mubr.f32.gmra.mrb[0].mxu0 %v3125
          %v3127 = vpop.f32.mrb[0].mxu0
          %v3128 = vadd.f32 %v2951, %v3127
          %v3129 = vpop.f32.mrb[0].mxu0
          %3130 = vmatprep.mubr.f32.mxu0 0.0
          %v3131 = vand.u32 %v1879, 4294901760
          %3132 = vmatmul.mubr.f32.gmra.mrb[0].mxu0 %v3131
          %v3133 = vpop.f32.mrb[0].mxu0
          %v3134 = vadd.f32 %v2957, %v3133
          %v3135 = vpop.f32.mrb[0].mxu0
          %3136 = vmatprep.mubr.f32.mxu0 0.0
          %v3137 = vand.u32 %v1880, 4294901760
          %3138 = vmatmul.mubr.f32.gmra.mrb[0].mxu0 %v3137
          %v3139 = vpop.f32.mrb[0].mxu0
          %v3140 = vadd.f32 %v2963, %v3139
          %v3141 = vpop.f32.mrb[0].mxu0
          %3142 = vmatprep.mubr.f32.mxu0 0.0
          %v3143 = vand.u32 %v1881, 4294901760
          %3144 = vmatmul.mubr.f32.gmra.mrb[0].mxu0 %v3143
          %v3145 = vpop.f32.mrb[0].mxu0
          %v3146 = vadd.f32 %v2969, %v3145
          %v3147 = vpop.f32.mrb[0].mxu0
          %3148 = vmatprep.mubr.f32.mxu0 0.0
          %v3149 = vand.u32 %v1882, 4294901760
          %3150 = vmatmul.mubr.f32.gmra.mrb[0].mxu0 %v3149
          %v3151 = vpop.f32.mrb[0].mxu0
          %v3152 = vadd.f32 %v2975, %v3151
          %v3153 = vpop.f32.mrb[0].mxu0
          %3154 = vmatprep.mubr.f32.mxu0 0.0
          %v3155 = vand.u32 %v1883, 4294901760
          %3156 = vmatmul.mubr.f32.gmra.mrb[0].mxu0 %v3155
          %v3157 = vpop.f32.mrb[0].mxu0
          %v3158 = vadd.f32 %v2981, %v3157
          %v3159 = vpop.f32.mrb[0].mxu0
          %3160 = vmatprep.mubr.f32.mxu0 0.0
          %v3161 = vand.u32 %v1884, 4294901760
          %3162 = vmatmul.mubr.f32.gmra.mrb[0].mxu0 %v3161
          %v3163 = vpop.f32.mrb[0].mxu0
          %v3164 = vadd.f32 %v2987, %v3163
          %v3165 = vpop.f32.mrb[0].mxu0
          %3166 = vmatprep.mubr.f32.mxu0 0.0
          %v3167 = vand.u32 %v1885, 4294901760
          %3168 = vmatmul.mubr.f32.gmra.mrb[0].mxu0 %v3167
          %v3169 = vpop.f32.mrb[0].mxu0
          %v3170 = vadd.f32 %v2993, %v3169
          %v3171 = vpop.f32.mrb[0].mxu0
          %3172 = vmatprep.mubr.f32.mxu0 0.0
          %v3173 = vand.u32 %v1886, 4294901760
          %3174 = vmatmul.mubr.f32.gmra.mrb[0].mxu0 %v3173
          %v3175 = vpop.f32.mrb[0].mxu0
          %v3176 = vadd.f32 %v2999, %v3175
          %v3177 = vpop.f32.mrb[0].mxu0
          %3178 = vmatprep.mubr.f32.mxu0 0.0
          %v3179 = vand.u32 %v1887, 4294901760
          %3180 = vmatmul.mubr.f32.gmra.mrb[0].mxu0 %v3179
          %v3181 = vpop.f32.mrb[0].mxu0
          %v3182 = vadd.f32 %v3005, %v3181
          %v3183 = vpop.f32.mrb[0].mxu0
          %3184 = vmatprep.mubr.f32.mxu0 0.0
          %v3185 = vand.u32 %v1888, 4294901760
          %3186 = vmatmul.mubr.f32.gmra.mrb[0].mxu0 %v3185
          %v3187 = vpop.f32.mrb[0].mxu0
          %v3188 = vadd.f32 %v3011, %v3187
          %v3189 = vpop.f32.mrb[0].mxu0
          %3190 = vdwg.mxu0
          %v3191 = vadd.f32 %v1825, %v3098
          %v3192 = vadd.f32 %v1826, %v3104
          %v3193 = vadd.f32 %v1827, %v3110
          %v3194 = vadd.f32 %v1828, %v3116
          %v3195 = vadd.f32 %v1829, %v3122
          %v3196 = vadd.f32 %v1830, %v3128
          %v3197 = vadd.f32 %v1831, %v3134
          %v3198 = vadd.f32 %v1832, %v3140
          %v3199 = vadd.f32 %v1833, %v3146
          %v3200 = vadd.f32 %v1834, %v3152
          %v3201 = vadd.f32 %v1835, %v3158
          %v3202 = vadd.f32 %v1836, %v3164
          %v3203 = vadd.f32 %v1837, %v3170
          %v3204 = vadd.f32 %v1838, %v3176
          %v3205 = vadd.f32 %v1839, %v3182
          %v3206 = vadd.f32 %v1840, %v3188
          %3207 = vst [vmem:[%s297] sm:$0xff] %v3191
          %3208 = vst [vmem:[%s297 + $0x8] sm:$0xff] %v3192
          %3209 = vst [vmem:[%s297 + $0x10] sm:$0xff] %v3193
          %3210 = vst [vmem:[%s297 + $0x18] sm:$0xff] %v3194
          %3211 = vst [vmem:[%s297 + $0x20] sm:$0xff] %v3195
          %3212 = vst [vmem:[%s297 + $0x28] sm:$0xff] %v3196
          %3213 = vst [vmem:[%s297 + $0x30] sm:$0xff] %v3197
          %3214 = vst [vmem:[%s297 + $0x38] sm:$0xff] %v3198
          %3215 = vst [vmem:[%s297 + $0x40] sm:$0xff] %v3199
          %3216 = vst [vmem:[%s297 + $0x48] sm:$0xff] %v3200
          %3217 = vst [vmem:[%s297 + $0x50] sm:$0xff] %v3201
          %3218 = vst [vmem:[%s297 + $0x58] sm:$0xff] %v3202
          %3219 = vst [vmem:[%s297 + $0x60] sm:$0xff] %v3203
          %3220 = vst [vmem:[%s297 + $0x68] sm:$0xff] %v3204
          %3221 = vst [vmem:[%s297 + $0x70] sm:$0xff] %v3205
          %3222 = vst [vmem:[%s297 + $0x78] sm:$0xff] %v3206
        $region52: #{tpu_custom_call.1} parent=27 // pred_fallthru
          _
        %p3223 = pnand %p445, %p418
        %p3224 = pneg %p3223
        %p3225 = pnand %p443, %p3224
        %p3226 = pneg %p3225
        // Predicated region
        $region53: #{tpu_custom_call.1} parent=27 // pred_check
          _
        $region54: #{tpu_custom_call.1} parent=27 // pred_check_branch
          %3228 = sbr.rel (%p3225) target = $region56
        $region55: #{tpu_custom_call.1} parent=27 // pred_region
          %v3229 = vld [vmem:[%s297] sm:$0xff]
          %v3230 = vld [vmem:[%s297 + $0x8] sm:$0xff]
          %v3231 = vld [vmem:[%s297 + $0x10] sm:$0xff]
          %v3232 = vld [vmem:[%s297 + $0x18] sm:$0xff]
          %v3233 = vld [vmem:[%s297 + $0x20] sm:$0xff]
          %v3234 = vld [vmem:[%s297 + $0x28] sm:$0xff]
          %v3235 = vld [vmem:[%s297 + $0x30] sm:$0xff]
          %v3236 = vld [vmem:[%s297 + $0x38] sm:$0xff]
          %v3237 = vld [vmem:[%s297 + $0x40] sm:$0xff]
          %v3238 = vld [vmem:[%s297 + $0x48] sm:$0xff]
          %v3239 = vld [vmem:[%s297 + $0x50] sm:$0xff]
          %v3240 = vld [vmem:[%s297 + $0x58] sm:$0xff]
          %v3241 = vld [vmem:[%s297 + $0x60] sm:$0xff]
          %v3242 = vld [vmem:[%s297 + $0x68] sm:$0xff]
          %v3243 = vld [vmem:[%s297 + $0x70] sm:$0xff]
          %v3244 = vld [vmem:[%s297 + $0x78] sm:$0xff]
          %v3245 = vld [vmem:[%s263] sm:$0xff]
          %v3246 = vld [vmem:[%s263 + $0x8] sm:$0xff]
          %v3247 = vld [vmem:[%s263 + $0x10] sm:$0xff]
          %v3248 = vld [vmem:[%s263 + $0x18] sm:$0xff]
          %v3249 = vld [vmem:[%s263 + $0x20] sm:$0xff]
          %v3250 = vld [vmem:[%s263 + $0x28] sm:$0xff]
          %v3251 = vld [vmem:[%s263 + $0x30] sm:$0xff]
          %v3252 = vld [vmem:[%s263 + $0x38] sm:$0xff]
          %v3253 = vld [vmem:[%s263 + $0x40] sm:$0xff]
          %v3254 = vld [vmem:[%s263 + $0x48] sm:$0xff]
          %v3255 = vld [vmem:[%s263 + $0x50] sm:$0xff]
          %v3256 = vld [vmem:[%s263 + $0x58] sm:$0xff]
          %v3257 = vld [vmem:[%s263 + $0x60] sm:$0xff]
          %v3258 = vld [vmem:[%s263 + $0x68] sm:$0xff]
          %v3259 = vld [vmem:[%s263 + $0x70] sm:$0xff]
          %v3260 = vld [vmem:[%s263 + $0x78] sm:$0xff]
          %v3261 = vld [vmem:[%s272] sm:$0xff]
          %v3262 = vld [vmem:[%s272 + $0x8] sm:$0xff]
          %v3263 = vld [vmem:[%s272 + $0x10] sm:$0xff]
          %v3264 = vld [vmem:[%s272 + $0x18] sm:$0xff]
          %v3265 = vld [vmem:[%s272 + $0x20] sm:$0xff]
          %v3266 = vld [vmem:[%s272 + $0x28] sm:$0xff]
          %v3267 = vld [vmem:[%s272 + $0x30] sm:$0xff]
          %v3268 = vld [vmem:[%s272 + $0x38] sm:$0xff]
          %v3269 = vld [vmem:[%s272 + $0x40] sm:$0xff]
          %v3270 = vld [vmem:[%s272 + $0x48] sm:$0xff]
          %v3271 = vld [vmem:[%s272 + $0x50] sm:$0xff]
          %v3272 = vld [vmem:[%s272 + $0x58] sm:$0xff]
          %v3273 = vld [vmem:[%s272 + $0x60] sm:$0xff]
          %v3274 = vld [vmem:[%s272 + $0x68] sm:$0xff]
          %v3275 = vld [vmem:[%s272 + $0x70] sm:$0xff]
          %v3276 = vld [vmem:[%s272 + $0x78] sm:$0xff]
          %v3277 = vld [vmem:[#allocation2] sm:$0xff]
          %v3278 = vld [vmem:[#allocation2 + $0x8] sm:$0xff]
          %v3279 = vld [vmem:[#allocation2 + $0x10] sm:$0xff]
          %v3280 = vld [vmem:[#allocation2 + $0x18] sm:$0xff]
          %v3281 = vld [vmem:[#allocation2 + $0x20] sm:$0xff]
          %v3282 = vld [vmem:[#allocation2 + $0x28] sm:$0xff]
          %v3283 = vld [vmem:[#allocation2 + $0x30] sm:$0xff]
          %v3284 = vld [vmem:[#allocation2 + $0x38] sm:$0xff]
          %v3285 = vld [vmem:[#allocation2 + $0x40] sm:$0xff]
          %v3286 = vld [vmem:[#allocation2 + $0x48] sm:$0xff]
          %v3287 = vld [vmem:[#allocation2 + $0x50] sm:$0xff]
          %v3288 = vld [vmem:[#allocation2 + $0x58] sm:$0xff]
          %v3289 = vld [vmem:[#allocation2 + $0x60] sm:$0xff]
          %v3290 = vld [vmem:[#allocation2 + $0x68] sm:$0xff]
          %v3291 = vld [vmem:[#allocation2 + $0x70] sm:$0xff]
          %v3292 = vld [vmem:[#allocation2 + $0x78] sm:$0xff]
          %v3293 = vmul.f32 %v3261, %v3277
          %v3294 = vmul.f32 %v3262, %v3278
          %v3295 = vmul.f32 %v3263, %v3279
          %v3296 = vmul.f32 %v3264, %v3280
          %v3297 = vmul.f32 %v3265, %v3281
          %v3298 = vmul.f32 %v3266, %v3282
          %v3299 = vmul.f32 %v3267, %v3283
          %v3300 = vmul.f32 %v3268, %v3284
          %v3301 = vmul.f32 %v3269, %v3285
          %v3302 = vmul.f32 %v3270, %v3286
          %v3303 = vmul.f32 %v3271, %v3287
          %v3304 = vmul.f32 %v3272, %v3288
          %v3305 = vmul.f32 %v3273, %v3289
          %v3306 = vmul.f32 %v3274, %v3290
          %v3307 = vmul.f32 %v3275, %v3291
          %v3308 = vmul.f32 %v3276, %v3292
          %3309 = vmatprep.subr.mxu0 0.0
          %v3310 = vand.u32 %v3293, 4294901760
          %3311 = vmatpush1.msra.mxu0 %v3310
          %3312 = vmatprep.subr.mxu0 0.0
          %v3313 = vand.u32 %v3294, 4294901760
          %3314 = vmatpush1.msra.mxu0 %v3313
          %3315 = vmatprep.subr.mxu0 0.0
          %v3316 = vand.u32 %v3295, 4294901760
          %3317 = vmatpush1.msra.mxu0 %v3316
          %3318 = vmatprep.subr.mxu0 0.0
          %v3319 = vand.u32 %v3296, 4294901760
          %3320 = vmatpush1.msra.mxu0 %v3319
          %3321 = vmatprep.subr.mxu0 0.0
          %v3322 = vand.u32 %v3297, 4294901760
          %3323 = vmatpush1.msra.mxu0 %v3322
          %3324 = vmatprep.subr.mxu0 0.0
          %v3325 = vand.u32 %v3298, 4294901760
          %3326 = vmatpush1.msra.mxu0 %v3325
          %3327 = vmatprep.subr.mxu0 0.0
          %v3328 = vand.u32 %v3299, 4294901760
          %3329 = vmatpush1.msra.mxu0 %v3328
          %3330 = vmatprep.subr.mxu0 0.0
          %v3331 = vand.u32 %v3300, 4294901760
          %3332 = vmatpush1.msra.mxu0 %v3331
          %3333 = vmatprep.subr.mxu0 0.0
          %v3334 = vand.u32 %v3301, 4294901760
          %3335 = vmatpush1.msra.mxu0 %v3334
          %3336 = vmatprep.subr.mxu0 0.0
          %v3337 = vand.u32 %v3302, 4294901760
          %3338 = vmatpush1.msra.mxu0 %v3337
          %3339 = vmatprep.subr.mxu0 0.0
          %v3340 = vand.u32 %v3303, 4294901760
          %3341 = vmatpush1.msra.mxu0 %v3340
          %3342 = vmatprep.subr.mxu0 0.0
          %v3343 = vand.u32 %v3304, 4294901760
          %3344 = vmatpush1.msra.mxu0 %v3343
          %3345 = vmatprep.subr.mxu0 0.0
          %v3346 = vand.u32 %v3305, 4294901760
          %3347 = vmatpush1.msra.mxu0 %v3346
          %3348 = vmatprep.subr.mxu0 0.0
          %v3349 = vand.u32 %v3306, 4294901760
          %3350 = vmatpush1.msra.mxu0 %v3349
          %3351 = vmatprep.subr.mxu0 0.0
          %v3352 = vand.u32 %v3307, 4294901760
          %3353 = vmatpush1.msra.mxu0 %v3352
          %3354 = vmatprep.subr.mxu0 0.0
          %v3355 = vand.u32 %v3308, 4294901760
          %3356 = vmatpush1.msra.mxu0 %v3355
          %3357 = vmatprep.subr.mxu0 0.0
          %3358 = vmatpush1.msra.mxu0 0.0
          %3359 = vmatprep.subr.mxu0 0.0
          %3360 = vmatpush1.msra.mxu0 0.0
          %3361 = vmatprep.subr.mxu0 0.0
          %3362 = vmatpush1.msra.mxu0 0.0
          %3363 = vmatprep.subr.mxu0 0.0
          %3364 = vmatpush1.msra.mxu0 0.0
          %3365 = vmatprep.subr.mxu0 0.0
          %3366 = vmatpush1.msra.mxu0 0.0
          %3367 = vmatprep.subr.mxu0 0.0
          %3368 = vmatpush1.msra.mxu0 0.0
          %3369 = vmatprep.subr.mxu0 0.0
          %3370 = vmatpush1.msra.mxu0 0.0
          %3371 = vmatprep.subr.mxu0 0.0
          %3372 = vmatpush1.msra.mxu0 0.0
          %3373 = vmatprep.subr.mxu0 0.0
          %3374 = vmatpush1.msra.mxu0 0.0
          %3375 = vmatprep.subr.mxu0 0.0
          %3376 = vmatpush1.msra.mxu0 0.0
          %3377 = vmatprep.subr.mxu0 0.0
          %3378 = vmatpush1.msra.mxu0 0.0
          %3379 = vmatprep.subr.mxu0 0.0
          %3380 = vmatpush1.msra.mxu0 0.0
          %3381 = vmatprep.subr.mxu0 0.0
          %3382 = vmatpush1.msra.mxu0 0.0
          %3383 = vmatprep.subr.mxu0 0.0
          %3384 = vmatpush1.msra.mxu0 0.0
          %3385 = vmatprep.subr.mxu0 0.0
          %3386 = vmatpush1.msra.mxu0 0.0
          %3387 = vmatprep.subr.mxu0 0.0
          %3388 = vmatpush1.msra.mxu0 0.0
          %3389 = vmatprep.mubr.f32.mxu0 0.0
          %v3390 = vand.u32 %v3245, 4294901760
          %v3391 = vsub.f32 %v3245, %v3390
          %v3392 = vand.u32 %v3391, 4294901760
          %v3393 = vsub.f32 %v3391, %v3392
          %v3394 = vand.u32 %v3393, 4294901760
          %3395 = vmatmul.mubr.f32.gmra.mrb[0].mxu0 %v3394
          %v3396 = vpop.f32.mrb[0].mxu0
          %v3397 = vadd.f32 0.0, %v3396
          %v3398 = vpop.f32.mrb[0].mxu0
          %3399 = vmatprep.mubr.f32.mxu0 0.0
          %v3400 = vand.u32 %v3246, 4294901760
          %v3401 = vsub.f32 %v3246, %v3400
          %v3402 = vand.u32 %v3401, 4294901760
          %v3403 = vsub.f32 %v3401, %v3402
          %v3404 = vand.u32 %v3403, 4294901760
          %3405 = vmatmul.mubr.f32.gmra.mrb[0].mxu0 %v3404
          %v3406 = vpop.f32.mrb[0].mxu0
          %v3407 = vadd.f32 0.0, %v3406
          %v3408 = vpop.f32.mrb[0].mxu0
          %3409 = vmatprep.mubr.f32.mxu0 0.0
          %v3410 = vand.u32 %v3247, 4294901760
          %v3411 = vsub.f32 %v3247, %v3410
          %v3412 = vand.u32 %v3411, 4294901760
          %v3413 = vsub.f32 %v3411, %v3412
          %v3414 = vand.u32 %v3413, 4294901760
          %3415 = vmatmul.mubr.f32.gmra.mrb[0].mxu0 %v3414
          %v3416 = vpop.f32.mrb[0].mxu0
          %v3417 = vadd.f32 0.0, %v3416
          %v3418 = vpop.f32.mrb[0].mxu0
          %3419 = vmatprep.mubr.f32.mxu0 0.0
          %v3420 = vand.u32 %v3248, 4294901760
          %v3421 = vsub.f32 %v3248, %v3420
          %v3422 = vand.u32 %v3421, 4294901760
          %v3423 = vsub.f32 %v3421, %v3422
          %v3424 = vand.u32 %v3423, 4294901760
          %3425 = vmatmul.mubr.f32.gmra.mrb[0].mxu0 %v3424
          %v3426 = vpop.f32.mrb[0].mxu0
          %v3427 = vadd.f32 0.0, %v3426
          %v3428 = vpop.f32.mrb[0].mxu0
          %3429 = vmatprep.mubr.f32.mxu0 0.0
          %v3430 = vand.u32 %v3249, 4294901760
          %v3431 = vsub.f32 %v3249, %v3430
          %v3432 = vand.u32 %v3431, 4294901760
          %v3433 = vsub.f32 %v3431, %v3432
          %v3434 = vand.u32 %v3433, 4294901760
          %3435 = vmatmul.mubr.f32.gmra.mrb[0].mxu0 %v3434
          %v3436 = vpop.f32.mrb[0].mxu0
          %v3437 = vadd.f32 0.0, %v3436
          %v3438 = vpop.f32.mrb[0].mxu0
          %3439 = vmatprep.mubr.f32.mxu0 0.0
          %v3440 = vand.u32 %v3250, 4294901760
          %v3441 = vsub.f32 %v3250, %v3440
          %v3442 = vand.u32 %v3441, 4294901760
          %v3443 = vsub.f32 %v3441, %v3442
          %v3444 = vand.u32 %v3443, 4294901760
          %3445 = vmatmul.mubr.f32.gmra.mrb[0].mxu0 %v3444
          %v3446 = vpop.f32.mrb[0].mxu0
          %v3447 = vadd.f32 0.0, %v3446
          %v3448 = vpop.f32.mrb[0].mxu0
          %3449 = vmatprep.mubr.f32.mxu0 0.0
          %v3450 = vand.u32 %v3251, 4294901760
          %v3451 = vsub.f32 %v3251, %v3450
          %v3452 = vand.u32 %v3451, 4294901760
          %v3453 = vsub.f32 %v3451, %v3452
          %v3454 = vand.u32 %v3453, 4294901760
          %3455 = vmatmul.mubr.f32.gmra.mrb[0].mxu0 %v3454
          %v3456 = vpop.f32.mrb[0].mxu0
          %v3457 = vadd.f32 0.0, %v3456
          %v3458 = vpop.f32.mrb[0].mxu0
          %3459 = vmatprep.mubr.f32.mxu0 0.0
          %v3460 = vand.u32 %v3252, 4294901760
          %v3461 = vsub.f32 %v3252, %v3460
          %v3462 = vand.u32 %v3461, 4294901760
          %v3463 = vsub.f32 %v3461, %v3462
          %v3464 = vand.u32 %v3463, 4294901760
          %3465 = vmatmul.mubr.f32.gmra.mrb[0].mxu0 %v3464
          %v3466 = vpop.f32.mrb[0].mxu0
          %v3467 = vadd.f32 0.0, %v3466
          %v3468 = vpop.f32.mrb[0].mxu0
          %3469 = vmatprep.mubr.f32.mxu0 0.0
          %v3470 = vand.u32 %v3253, 4294901760
          %v3471 = vsub.f32 %v3253, %v3470
          %v3472 = vand.u32 %v3471, 4294901760
          %v3473 = vsub.f32 %v3471, %v3472
          %v3474 = vand.u32 %v3473, 4294901760
          %3475 = vmatmul.mubr.f32.gmra.mrb[0].mxu0 %v3474
          %v3476 = vpop.f32.mrb[0].mxu0
          %v3477 = vadd.f32 0.0, %v3476
          %v3478 = vpop.f32.mrb[0].mxu0
          %3479 = vmatprep.mubr.f32.mxu0 0.0
          %v3480 = vand.u32 %v3254, 4294901760
          %v3481 = vsub.f32 %v3254, %v3480
          %v3482 = vand.u32 %v3481, 4294901760
          %v3483 = vsub.f32 %v3481, %v3482
          %v3484 = vand.u32 %v3483, 4294901760
          %3485 = vmatmul.mubr.f32.gmra.mrb[0].mxu0 %v3484
          %v3486 = vpop.f32.mrb[0].mxu0
          %v3487 = vadd.f32 0.0, %v3486
          %v3488 = vpop.f32.mrb[0].mxu0
          %3489 = vmatprep.mubr.f32.mxu0 0.0
          %v3490 = vand.u32 %v3255, 4294901760
          %v3491 = vsub.f32 %v3255, %v3490
          %v3492 = vand.u32 %v3491, 4294901760
          %v3493 = vsub.f32 %v3491, %v3492
          %v3494 = vand.u32 %v3493, 4294901760
          %3495 = vmatmul.mubr.f32.gmra.mrb[0].mxu0 %v3494
          %v3496 = vpop.f32.mrb[0].mxu0
          %v3497 = vadd.f32 0.0, %v3496
          %v3498 = vpop.f32.mrb[0].mxu0
          %3499 = vmatprep.mubr.f32.mxu0 0.0
          %v3500 = vand.u32 %v3256, 4294901760
          %v3501 = vsub.f32 %v3256, %v3500
          %v3502 = vand.u32 %v3501, 4294901760
          %v3503 = vsub.f32 %v3501, %v3502
          %v3504 = vand.u32 %v3503, 4294901760
          %3505 = vmatmul.mubr.f32.gmra.mrb[0].mxu0 %v3504
          %v3506 = vpop.f32.mrb[0].mxu0
          %v3507 = vadd.f32 0.0, %v3506
          %v3508 = vpop.f32.mrb[0].mxu0
          %3509 = vmatprep.mubr.f32.mxu0 0.0
          %v3510 = vand.u32 %v3257, 4294901760
          %v3511 = vsub.f32 %v3257, %v3510
          %v3512 = vand.u32 %v3511, 4294901760
          %v3513 = vsub.f32 %v3511, %v3512
          %v3514 = vand.u32 %v3513, 4294901760
          %3515 = vmatmul.mubr.f32.gmra.mrb[0].mxu0 %v3514
          %v3516 = vpop.f32.mrb[0].mxu0
          %v3517 = vadd.f32 0.0, %v3516
          %v3518 = vpop.f32.mrb[0].mxu0
          %3519 = vmatprep.mubr.f32.mxu0 0.0
          %v3520 = vand.u32 %v3258, 4294901760
          %v3521 = vsub.f32 %v3258, %v3520
          %v3522 = vand.u32 %v3521, 4294901760
          %v3523 = vsub.f32 %v3521, %v3522
          %v3524 = vand.u32 %v3523, 4294901760
          %3525 = vmatmul.mubr.f32.gmra.mrb[0].mxu0 %v3524
          %v3526 = vpop.f32.mrb[0].mxu0
          %v3527 = vadd.f32 0.0, %v3526
          %v3528 = vpop.f32.mrb[0].mxu0
          %3529 = vmatprep.mubr.f32.mxu0 0.0
          %v3530 = vand.u32 %v3259, 4294901760
          %v3531 = vsub.f32 %v3259, %v3530
          %v3532 = vand.u32 %v3531, 4294901760
          %v3533 = vsub.f32 %v3531, %v3532
          %v3534 = vand.u32 %v3533, 4294901760
          %3535 = vmatmul.mubr.f32.gmra.mrb[0].mxu0 %v3534
          %v3536 = vpop.f32.mrb[0].mxu0
          %v3537 = vadd.f32 0.0, %v3536
          %v3538 = vpop.f32.mrb[0].mxu0
          %3539 = vmatprep.mubr.f32.mxu0 0.0
          %v3540 = vand.u32 %v3260, 4294901760
          %v3541 = vsub.f32 %v3260, %v3540
          %v3542 = vand.u32 %v3541, 4294901760
          %v3543 = vsub.f32 %v3541, %v3542
          %v3544 = vand.u32 %v3543, 4294901760
          %3545 = vmatmul.mubr.f32.gmra.mrb[0].mxu0 %v3544
          %v3546 = vpop.f32.mrb[0].mxu0
          %v3547 = vadd.f32 0.0, %v3546
          %v3548 = vpop.f32.mrb[0].mxu0
          %3549 = vdwg.mxu0
          %3550 = vmatprep.subr.mxu0 0.0
          %v3551 = vand.u32 %v3293, 4294901760
          %v3552 = vsub.f32 %v3293, %v3551
          %v3553 = vand.u32 %v3552, 4294901760
          %v3554 = vsub.f32 %v3552, %v3553
          %v3555 = vand.u32 %v3554, 4294901760
          %3556 = vmatpush1.msra.mxu0 %v3555
          %3557 = vmatprep.subr.mxu0 0.0
          %v3558 = vand.u32 %v3294, 4294901760
          %v3559 = vsub.f32 %v3294, %v3558
          %v3560 = vand.u32 %v3559, 4294901760
          %v3561 = vsub.f32 %v3559, %v3560
          %v3562 = vand.u32 %v3561, 4294901760
          %3563 = vmatpush1.msra.mxu0 %v3562
          %3564 = vmatprep.subr.mxu0 0.0
          %v3565 = vand.u32 %v3295, 4294901760
          %v3566 = vsub.f32 %v3295, %v3565
          %v3567 = vand.u32 %v3566, 4294901760
          %v3568 = vsub.f32 %v3566, %v3567
          %v3569 = vand.u32 %v3568, 4294901760
          %3570 = vmatpush1.msra.mxu0 %v3569
          %3571 = vmatprep.subr.mxu0 0.0
          %v3572 = vand.u32 %v3296, 4294901760
          %v3573 = vsub.f32 %v3296, %v3572
          %v3574 = vand.u32 %v3573, 4294901760
          %v3575 = vsub.f32 %v3573, %v3574
          %v3576 = vand.u32 %v3575, 4294901760
          %3577 = vmatpush1.msra.mxu0 %v3576
          %3578 = vmatprep.subr.mxu0 0.0
          %v3579 = vand.u32 %v3297, 4294901760
          %v3580 = vsub.f32 %v3297, %v3579
          %v3581 = vand.u32 %v3580, 4294901760
          %v3582 = vsub.f32 %v3580, %v3581
          %v3583 = vand.u32 %v3582, 4294901760
          %3584 = vmatpush1.msra.mxu0 %v3583
          %3585 = vmatprep.subr.mxu0 0.0
          %v3586 = vand.u32 %v3298, 4294901760
          %v3587 = vsub.f32 %v3298, %v3586
          %v3588 = vand.u32 %v3587, 4294901760
          %v3589 = vsub.f32 %v3587, %v3588
          %v3590 = vand.u32 %v3589, 4294901760
          %3591 = vmatpush1.msra.mxu0 %v3590
          %3592 = vmatprep.subr.mxu0 0.0
          %v3593 = vand.u32 %v3299, 4294901760
          %v3594 = vsub.f32 %v3299, %v3593
          %v3595 = vand.u32 %v3594, 4294901760
          %v3596 = vsub.f32 %v3594, %v3595
          %v3597 = vand.u32 %v3596, 4294901760
          %3598 = vmatpush1.msra.mxu0 %v3597
          %3599 = vmatprep.subr.mxu0 0.0
          %v3600 = vand.u32 %v3300, 4294901760
          %v3601 = vsub.f32 %v3300, %v3600
          %v3602 = vand.u32 %v3601, 4294901760
          %v3603 = vsub.f32 %v3601, %v3602
          %v3604 = vand.u32 %v3603, 4294901760
          %3605 = vmatpush1.msra.mxu0 %v3604
          %3606 = vmatprep.subr.mxu0 0.0
          %v3607 = vand.u32 %v3301, 4294901760
          %v3608 = vsub.f32 %v3301, %v3607
          %v3609 = vand.u32 %v3608, 4294901760
          %v3610 = vsub.f32 %v3608, %v3609
          %v3611 = vand.u32 %v3610, 4294901760
          %3612 = vmatpush1.msra.mxu0 %v3611
          %3613 = vmatprep.subr.mxu0 0.0
          %v3614 = vand.u32 %v3302, 4294901760
          %v3615 = vsub.f32 %v3302, %v3614
          %v3616 = vand.u32 %v3615, 4294901760
          %v3617 = vsub.f32 %v3615, %v3616
          %v3618 = vand.u32 %v3617, 4294901760
          %3619 = vmatpush1.msra.mxu0 %v3618
          %3620 = vmatprep.subr.mxu0 0.0
          %v3621 = vand.u32 %v3303, 4294901760
          %v3622 = vsub.f32 %v3303, %v3621
          %v3623 = vand.u32 %v3622, 4294901760
          %v3624 = vsub.f32 %v3622, %v3623
          %v3625 = vand.u32 %v3624, 4294901760
          %3626 = vmatpush1.msra.mxu0 %v3625
          %3627 = vmatprep.subr.mxu0 0.0
          %v3628 = vand.u32 %v3304, 4294901760
          %v3629 = vsub.f32 %v3304, %v3628
          %v3630 = vand.u32 %v3629, 4294901760
          %v3631 = vsub.f32 %v3629, %v3630
          %v3632 = vand.u32 %v3631, 4294901760
          %3633 = vmatpush1.msra.mxu0 %v3632
          %3634 = vmatprep.subr.mxu0 0.0
          %v3635 = vand.u32 %v3305, 4294901760
          %v3636 = vsub.f32 %v3305, %v3635
          %v3637 = vand.u32 %v3636, 4294901760
          %v3638 = vsub.f32 %v3636, %v3637
          %v3639 = vand.u32 %v3638, 4294901760
          %3640 = vmatpush1.msra.mxu0 %v3639
          %3641 = vmatprep.subr.mxu0 0.0
          %v3642 = vand.u32 %v3306, 4294901760
          %v3643 = vsub.f32 %v3306, %v3642
          %v3644 = vand.u32 %v3643, 4294901760
          %v3645 = vsub.f32 %v3643, %v3644
          %v3646 = vand.u32 %v3645, 4294901760
          %3647 = vmatpush1.msra.mxu0 %v3646
          %3648 = vmatprep.subr.mxu0 0.0
          %v3649 = vand.u32 %v3307, 4294901760
          %v3650 = vsub.f32 %v3307, %v3649
          %v3651 = vand.u32 %v3650, 4294901760
          %v3652 = vsub.f32 %v3650, %v3651
          %v3653 = vand.u32 %v3652, 4294901760
          %3654 = vmatpush1.msra.mxu0 %v3653
          %3655 = vmatprep.subr.mxu0 0.0
          %v3656 = vand.u32 %v3308, 4294901760
          %v3657 = vsub.f32 %v3308, %v3656
          %v3658 = vand.u32 %v3657, 4294901760
          %v3659 = vsub.f32 %v3657, %v3658
          %v3660 = vand.u32 %v3659, 4294901760
          %3661 = vmatpush1.msra.mxu0 %v3660
          %3662 = vmatprep.subr.mxu0 0.0
          %3663 = vmatpush1.msra.mxu0 0.0
          %3664 = vmatprep.subr.mxu0 0.0
          %3665 = vmatpush1.msra.mxu0 0.0
          %3666 = vmatprep.subr.mxu0 0.0
          %3667 = vmatpush1.msra.mxu0 0.0
          %3668 = vmatprep.subr.mxu0 0.0
          %3669 = vmatpush1.msra.mxu0 0.0
          %3670 = vmatprep.subr.mxu0 0.0
          %3671 = vmatpush1.msra.mxu0 0.0
          %3672 = vmatprep.subr.mxu0 0.0
          %3673 = vmatpush1.msra.mxu0 0.0
          %3674 = vmatprep.subr.mxu0 0.0
          %3675 = vmatpush1.msra.mxu0 0.0
          %3676 = vmatprep.subr.mxu0 0.0
          %3677 = vmatpush1.msra.mxu0 0.0
          %3678 = vmatprep.subr.mxu0 0.0
          %3679 = vmatpush1.msra.mxu0 0.0
          %3680 = vmatprep.subr.mxu0 0.0
          %3681 = vmatpush1.msra.mxu0 0.0
          %3682 = vmatprep.subr.mxu0 0.0
          %3683 = vmatpush1.msra.mxu0 0.0
          %3684 = vmatprep.subr.mxu0 0.0
          %3685 = vmatpush1.msra.mxu0 0.0
          %3686 = vmatprep.subr.mxu0 0.0
          %3687 = vmatpush1.msra.mxu0 0.0
          %3688 = vmatprep.subr.mxu0 0.0
          %3689 = vmatpush1.msra.mxu0 0.0
          %3690 = vmatprep.subr.mxu0 0.0
          %3691 = vmatpush1.msra.mxu0 0.0
          %3692 = vmatprep.subr.mxu0 0.0
          %3693 = vmatpush1.msra.mxu0 0.0
          %3694 = vmatprep.mubr.f32.mxu0 0.0
          %v3695 = vand.u32 %v3245, 4294901760
          %3696 = vmatmul.mubr.f32.gmra.mrb[0].mxu0 %v3695
          %v3697 = vpop.f32.mrb[0].mxu0
          %v3698 = vadd.f32 %v3397, %v3697
          %v3699 = vpop.f32.mrb[0].mxu0
          %3700 = vmatprep.mubr.f32.mxu0 0.0
          %v3701 = vand.u32 %v3246, 4294901760
          %3702 = vmatmul.mubr.f32.gmra.mrb[0].mxu0 %v3701
          %v3703 = vpop.f32.mrb[0].mxu0
          %v3704 = vadd.f32 %v3407, %v3703
          %v3705 = vpop.f32.mrb[0].mxu0
          %3706 = vmatprep.mubr.f32.mxu0 0.0
          %v3707 = vand.u32 %v3247, 4294901760
          %3708 = vmatmul.mubr.f32.gmra.mrb[0].mxu0 %v3707
          %v3709 = vpop.f32.mrb[0].mxu0
          %v3710 = vadd.f32 %v3417, %v3709
          %v3711 = vpop.f32.mrb[0].mxu0
          %3712 = vmatprep.mubr.f32.mxu0 0.0
          %v3713 = vand.u32 %v3248, 4294901760
          %3714 = vmatmul.mubr.f32.gmra.mrb[0].mxu0 %v3713
          %v3715 = vpop.f32.mrb[0].mxu0
          %v3716 = vadd.f32 %v3427, %v3715
          %v3717 = vpop.f32.mrb[0].mxu0
          %3718 = vmatprep.mubr.f32.mxu0 0.0
          %v3719 = vand.u32 %v3249, 4294901760
          %3720 = vmatmul.mubr.f32.gmra.mrb[0].mxu0 %v3719
          %v3721 = vpop.f32.mrb[0].mxu0
          %v3722 = vadd.f32 %v3437, %v3721
          %v3723 = vpop.f32.mrb[0].mxu0
          %3724 = vmatprep.mubr.f32.mxu0 0.0
          %v3725 = vand.u32 %v3250, 4294901760
          %3726 = vmatmul.mubr.f32.gmra.mrb[0].mxu0 %v3725
          %v3727 = vpop.f32.mrb[0].mxu0
          %v3728 = vadd.f32 %v3447, %v3727
          %v3729 = vpop.f32.mrb[0].mxu0
          %3730 = vmatprep.mubr.f32.mxu0 0.0
          %v3731 = vand.u32 %v3251, 4294901760
          %3732 = vmatmul.mubr.f32.gmra.mrb[0].mxu0 %v3731
          %v3733 = vpop.f32.mrb[0].mxu0
          %v3734 = vadd.f32 %v3457, %v3733
          %v3735 = vpop.f32.mrb[0].mxu0
          %3736 = vmatprep.mubr.f32.mxu0 0.0
          %v3737 = vand.u32 %v3252, 4294901760
          %3738 = vmatmul.mubr.f32.gmra.mrb[0].mxu0 %v3737
          %v3739 = vpop.f32.mrb[0].mxu0
          %v3740 = vadd.f32 %v3467, %v3739
          %v3741 = vpop.f32.mrb[0].mxu0
          %3742 = vmatprep.mubr.f32.mxu0 0.0
          %v3743 = vand.u32 %v3253, 4294901760
          %3744 = vmatmul.mubr.f32.gmra.mrb[0].mxu0 %v3743
          %v3745 = vpop.f32.mrb[0].mxu0
          %v3746 = vadd.f32 %v3477, %v3745
          %v3747 = vpop.f32.mrb[0].mxu0
          %3748 = vmatprep.mubr.f32.mxu0 0.0
          %v3749 = vand.u32 %v3254, 4294901760
          %3750 = vmatmul.mubr.f32.gmra.mrb[0].mxu0 %v3749
          %v3751 = vpop.f32.mrb[0].mxu0
          %v3752 = vadd.f32 %v3487, %v3751
          %v3753 = vpop.f32.mrb[0].mxu0
          %3754 = vmatprep.mubr.f32.mxu0 0.0
          %v3755 = vand.u32 %v3255, 4294901760
          %3756 = vmatmul.mubr.f32.gmra.mrb[0].mxu0 %v3755
          %v3757 = vpop.f32.mrb[0].mxu0
          %v3758 = vadd.f32 %v3497, %v3757
          %v3759 = vpop.f32.mrb[0].mxu0
          %3760 = vmatprep.mubr.f32.mxu0 0.0
          %v3761 = vand.u32 %v3256, 4294901760
          %3762 = vmatmul.mubr.f32.gmra.mrb[0].mxu0 %v3761
          %v3763 = vpop.f32.mrb[0].mxu0
          %v3764 = vadd.f32 %v3507, %v3763
          %v3765 = vpop.f32.mrb[0].mxu0
          %3766 = vmatprep.mubr.f32.mxu0 0.0
          %v3767 = vand.u32 %v3257, 4294901760
          %3768 = vmatmul.mubr.f32.gmra.mrb[0].mxu0 %v3767
          %v3769 = vpop.f32.mrb[0].mxu0
          %v3770 = vadd.f32 %v3517, %v3769
          %v3771 = vpop.f32.mrb[0].mxu0
          %3772 = vmatprep.mubr.f32.mxu0 0.0
          %v3773 = vand.u32 %v3258, 4294901760
          %3774 = vmatmul.mubr.f32.gmra.mrb[0].mxu0 %v3773
          %v3775 = vpop.f32.mrb[0].mxu0
          %v3776 = vadd.f32 %v3527, %v3775
          %v3777 = vpop.f32.mrb[0].mxu0
          %3778 = vmatprep.mubr.f32.mxu0 0.0
          %v3779 = vand.u32 %v3259, 4294901760
          %3780 = vmatmul.mubr.f32.gmra.mrb[0].mxu0 %v3779
          %v3781 = vpop.f32.mrb[0].mxu0
          %v3782 = vadd.f32 %v3537, %v3781
          %v3783 = vpop.f32.mrb[0].mxu0
          %3784 = vmatprep.mubr.f32.mxu0 0.0
          %v3785 = vand.u32 %v3260, 4294901760
          %3786 = vmatmul.mubr.f32.gmra.mrb[0].mxu0 %v3785
          %v3787 = vpop.f32.mrb[0].mxu0
          %v3788 = vadd.f32 %v3547, %v3787
          %v3789 = vpop.f32.mrb[0].mxu0
          %3790 = vdwg.mxu0
          %3791 = vmatprep.subr.mxu0 0.0
          %v3792 = vand.u32 %v3293, 4294901760
          %v3793 = vsub.f32 %v3293, %v3792
          %3794 = vmatpush1.msra.mxu0 %v3793
          %3795 = vmatprep.subr.mxu0 0.0
          %v3796 = vand.u32 %v3294, 4294901760
          %v3797 = vsub.f32 %v3294, %v3796
          %3798 = vmatpush1.msra.mxu0 %v3797
          %3799 = vmatprep.subr.mxu0 0.0
          %v3800 = vand.u32 %v3295, 4294901760
          %v3801 = vsub.f32 %v3295, %v3800
          %3802 = vmatpush1.msra.mxu0 %v3801
          %3803 = vmatprep.subr.mxu0 0.0
          %v3804 = vand.u32 %v3296, 4294901760
          %v3805 = vsub.f32 %v3296, %v3804
          %3806 = vmatpush1.msra.mxu0 %v3805
          %3807 = vmatprep.subr.mxu0 0.0
          %v3808 = vand.u32 %v3297, 4294901760
          %v3809 = vsub.f32 %v3297, %v3808
          %3810 = vmatpush1.msra.mxu0 %v3809
          %3811 = vmatprep.subr.mxu0 0.0
          %v3812 = vand.u32 %v3298, 4294901760
          %v3813 = vsub.f32 %v3298, %v3812
          %3814 = vmatpush1.msra.mxu0 %v3813
          %3815 = vmatprep.subr.mxu0 0.0
          %v3816 = vand.u32 %v3299, 4294901760
          %v3817 = vsub.f32 %v3299, %v3816
          %3818 = vmatpush1.msra.mxu0 %v3817
          %3819 = vmatprep.subr.mxu0 0.0
          %v3820 = vand.u32 %v3300, 4294901760
          %v3821 = vsub.f32 %v3300, %v3820
          %3822 = vmatpush1.msra.mxu0 %v3821
          %3823 = vmatprep.subr.mxu0 0.0
          %v3824 = vand.u32 %v3301, 4294901760
          %v3825 = vsub.f32 %v3301, %v3824
          %3826 = vmatpush1.msra.mxu0 %v3825
          %3827 = vmatprep.subr.mxu0 0.0
          %v3828 = vand.u32 %v3302, 4294901760
          %v3829 = vsub.f32 %v3302, %v3828
          %3830 = vmatpush1.msra.mxu0 %v3829
          %3831 = vmatprep.subr.mxu0 0.0
          %v3832 = vand.u32 %v3303, 4294901760
          %v3833 = vsub.f32 %v3303, %v3832
          %3834 = vmatpush1.msra.mxu0 %v3833
          %3835 = vmatprep.subr.mxu0 0.0
          %v3836 = vand.u32 %v3304, 4294901760
          %v3837 = vsub.f32 %v3304, %v3836
          %3838 = vmatpush1.msra.mxu0 %v3837
          %3839 = vmatprep.subr.mxu0 0.0
          %v3840 = vand.u32 %v3305, 4294901760
          %v3841 = vsub.f32 %v3305, %v3840
          %3842 = vmatpush1.msra.mxu0 %v3841
          %3843 = vmatprep.subr.mxu0 0.0
          %v3844 = vand.u32 %v3306, 4294901760
          %v3845 = vsub.f32 %v3306, %v3844
          %3846 = vmatpush1.msra.mxu0 %v3845
          %3847 = vmatprep.subr.mxu0 0.0
          %v3848 = vand.u32 %v3307, 4294901760
          %v3849 = vsub.f32 %v3307, %v3848
          %3850 = vmatpush1.msra.mxu0 %v3849
          %3851 = vmatprep.subr.mxu0 0.0
          %v3852 = vand.u32 %v3308, 4294901760
          %v3853 = vsub.f32 %v3308, %v3852
          %3854 = vmatpush1.msra.mxu0 %v3853
          %3855 = vmatprep.subr.mxu0 0.0
          %3856 = vmatpush1.msra.mxu0 0.0
          %3857 = vmatprep.subr.mxu0 0.0
          %3858 = vmatpush1.msra.mxu0 0.0
          %3859 = vmatprep.subr.mxu0 0.0
          %3860 = vmatpush1.msra.mxu0 0.0
          %3861 = vmatprep.subr.mxu0 0.0
          %3862 = vmatpush1.msra.mxu0 0.0
          %3863 = vmatprep.subr.mxu0 0.0
          %3864 = vmatpush1.msra.mxu0 0.0
          %3865 = vmatprep.subr.mxu0 0.0
          %3866 = vmatpush1.msra.mxu0 0.0
          %3867 = vmatprep.subr.mxu0 0.0
          %3868 = vmatpush1.msra.mxu0 0.0
          %3869 = vmatprep.subr.mxu0 0.0
          %3870 = vmatpush1.msra.mxu0 0.0
          %3871 = vmatprep.subr.mxu0 0.0
          %3872 = vmatpush1.msra.mxu0 0.0
          %3873 = vmatprep.subr.mxu0 0.0
          %3874 = vmatpush1.msra.mxu0 0.0
          %3875 = vmatprep.subr.mxu0 0.0
          %3876 = vmatpush1.msra.mxu0 0.0
          %3877 = vmatprep.subr.mxu0 0.0
          %3878 = vmatpush1.msra.mxu0 0.0
          %3879 = vmatprep.subr.mxu0 0.0
          %3880 = vmatpush1.msra.mxu0 0.0
          %3881 = vmatprep.subr.mxu0 0.0
          %3882 = vmatpush1.msra.mxu0 0.0
          %3883 = vmatprep.subr.mxu0 0.0
          %3884 = vmatpush1.msra.mxu0 0.0
          %3885 = vmatprep.subr.mxu0 0.0
          %3886 = vmatpush1.msra.mxu0 0.0
          %3887 = vmatprep.mubr.f32.mxu0 0.0
          %v3888 = vand.u32 %v3245, 4294901760
          %v3889 = vsub.f32 %v3245, %v3888
          %3890 = vmatmul.mubr.f32.gmra.mrb[0].mxu0 %v3889
          %v3891 = vpop.f32.mrb[0].mxu0
          %v3892 = vadd.f32 %v3698, %v3891
          %v3893 = vpop.f32.mrb[0].mxu0
          %3894 = vmatprep.mubr.f32.mxu0 0.0
          %v3895 = vand.u32 %v3246, 4294901760
          %v3896 = vsub.f32 %v3246, %v3895
          %3897 = vmatmul.mubr.f32.gmra.mrb[0].mxu0 %v3896
          %v3898 = vpop.f32.mrb[0].mxu0
          %v3899 = vadd.f32 %v3704, %v3898
          %v3900 = vpop.f32.mrb[0].mxu0
          %3901 = vmatprep.mubr.f32.mxu0 0.0
          %v3902 = vand.u32 %v3247, 4294901760
          %v3903 = vsub.f32 %v3247, %v3902
          %3904 = vmatmul.mubr.f32.gmra.mrb[0].mxu0 %v3903
          %v3905 = vpop.f32.mrb[0].mxu0
          %v3906 = vadd.f32 %v3710, %v3905
          %v3907 = vpop.f32.mrb[0].mxu0
          %3908 = vmatprep.mubr.f32.mxu0 0.0
          %v3909 = vand.u32 %v3248, 4294901760
          %v3910 = vsub.f32 %v3248, %v3909
          %3911 = vmatmul.mubr.f32.gmra.mrb[0].mxu0 %v3910
          %v3912 = vpop.f32.mrb[0].mxu0
          %v3913 = vadd.f32 %v3716, %v3912
          %v3914 = vpop.f32.mrb[0].mxu0
          %3915 = vmatprep.mubr.f32.mxu0 0.0
          %v3916 = vand.u32 %v3249, 4294901760
          %v3917 = vsub.f32 %v3249, %v3916
          %3918 = vmatmul.mubr.f32.gmra.mrb[0].mxu0 %v3917
          %v3919 = vpop.f32.mrb[0].mxu0
          %v3920 = vadd.f32 %v3722, %v3919
          %v3921 = vpop.f32.mrb[0].mxu0
          %3922 = vmatprep.mubr.f32.mxu0 0.0
          %v3923 = vand.u32 %v3250, 4294901760
          %v3924 = vsub.f32 %v3250, %v3923
          %3925 = vmatmul.mubr.f32.gmra.mrb[0].mxu0 %v3924
          %v3926 = vpop.f32.mrb[0].mxu0
          %v3927 = vadd.f32 %v3728, %v3926
          %v3928 = vpop.f32.mrb[0].mxu0
          %3929 = vmatprep.mubr.f32.mxu0 0.0
          %v3930 = vand.u32 %v3251, 4294901760
          %v3931 = vsub.f32 %v3251, %v3930
          %3932 = vmatmul.mubr.f32.gmra.mrb[0].mxu0 %v3931
          %v3933 = vpop.f32.mrb[0].mxu0
          %v3934 = vadd.f32 %v3734, %v3933
          %v3935 = vpop.f32.mrb[0].mxu0
          %3936 = vmatprep.mubr.f32.mxu0 0.0
          %v3937 = vand.u32 %v3252, 4294901760
          %v3938 = vsub.f32 %v3252, %v3937
          %3939 = vmatmul.mubr.f32.gmra.mrb[0].mxu0 %v3938
          %v3940 = vpop.f32.mrb[0].mxu0
          %v3941 = vadd.f32 %v3740, %v3940
          %v3942 = vpop.f32.mrb[0].mxu0
          %3943 = vmatprep.mubr.f32.mxu0 0.0
          %v3944 = vand.u32 %v3253, 4294901760
          %v3945 = vsub.f32 %v3253, %v3944
          %3946 = vmatmul.mubr.f32.gmra.mrb[0].mxu0 %v3945
          %v3947 = vpop.f32.mrb[0].mxu0
          %v3948 = vadd.f32 %v3746, %v3947
          %v3949 = vpop.f32.mrb[0].mxu0
          %3950 = vmatprep.mubr.f32.mxu0 0.0
          %v3951 = vand.u32 %v3254, 4294901760
          %v3952 = vsub.f32 %v3254, %v3951
          %3953 = vmatmul.mubr.f32.gmra.mrb[0].mxu0 %v3952
          %v3954 = vpop.f32.mrb[0].mxu0
          %v3955 = vadd.f32 %v3752, %v3954
          %v3956 = vpop.f32.mrb[0].mxu0
          %3957 = vmatprep.mubr.f32.mxu0 0.0
          %v3958 = vand.u32 %v3255, 4294901760
          %v3959 = vsub.f32 %v3255, %v3958
          %3960 = vmatmul.mubr.f32.gmra.mrb[0].mxu0 %v3959
          %v3961 = vpop.f32.mrb[0].mxu0
          %v3962 = vadd.f32 %v3758, %v3961
          %v3963 = vpop.f32.mrb[0].mxu0
          %3964 = vmatprep.mubr.f32.mxu0 0.0
          %v3965 = vand.u32 %v3256, 4294901760
          %v3966 = vsub.f32 %v3256, %v3965
          %3967 = vmatmul.mubr.f32.gmra.mrb[0].mxu0 %v3966
          %v3968 = vpop.f32.mrb[0].mxu0
          %v3969 = vadd.f32 %v3764, %v3968
          %v3970 = vpop.f32.mrb[0].mxu0
          %3971 = vmatprep.mubr.f32.mxu0 0.0
          %v3972 = vand.u32 %v3257, 4294901760
          %v3973 = vsub.f32 %v3257, %v3972
          %3974 = vmatmul.mubr.f32.gmra.mrb[0].mxu0 %v3973
          %v3975 = vpop.f32.mrb[0].mxu0
          %v3976 = vadd.f32 %v3770, %v3975
          %v3977 = vpop.f32.mrb[0].mxu0
          %3978 = vmatprep.mubr.f32.mxu0 0.0
          %v3979 = vand.u32 %v3258, 4294901760
          %v3980 = vsub.f32 %v3258, %v3979
          %3981 = vmatmul.mubr.f32.gmra.mrb[0].mxu0 %v3980
          %v3982 = vpop.f32.mrb[0].mxu0
          %v3983 = vadd.f32 %v3776, %v3982
          %v3984 = vpop.f32.mrb[0].mxu0
          %3985 = vmatprep.mubr.f32.mxu0 0.0
          %v3986 = vand.u32 %v3259, 4294901760
          %v3987 = vsub.f32 %v3259, %v3986
          %3988 = vmatmul.mubr.f32.gmra.mrb[0].mxu0 %v3987
          %v3989 = vpop.f32.mrb[0].mxu0
          %v3990 = vadd.f32 %v3782, %v3989
          %v3991 = vpop.f32.mrb[0].mxu0
          %3992 = vmatprep.mubr.f32.mxu0 0.0
          %v3993 = vand.u32 %v3260, 4294901760
          %v3994 = vsub.f32 %v3260, %v3993
          %3995 = vmatmul.mubr.f32.gmra.mrb[0].mxu0 %v3994
          %v3996 = vpop.f32.mrb[0].mxu0
          %v3997 = vadd.f32 %v3788, %v3996
          %v3998 = vpop.f32.mrb[0].mxu0
          %3999 = vdwg.mxu0
          %4000 = vmatprep.subr.mxu0 0.0
          %v4001 = vand.u32 %v3293, 4294901760
          %4002 = vmatpush1.msra.mxu0 %v4001
          %4003 = vmatprep.subr.mxu0 0.0
          %v4004 = vand.u32 %v3294, 4294901760
          %4005 = vmatpush1.msra.mxu0 %v4004
          %4006 = vmatprep.subr.mxu0 0.0
          %v4007 = vand.u32 %v3295, 4294901760
          %4008 = vmatpush1.msra.mxu0 %v4007
          %4009 = vmatprep.subr.mxu0 0.0
          %v4010 = vand.u32 %v3296, 4294901760
          %4011 = vmatpush1.msra.mxu0 %v4010
          %4012 = vmatprep.subr.mxu0 0.0
          %v4013 = vand.u32 %v3297, 4294901760
          %4014 = vmatpush1.msra.mxu0 %v4013
          %4015 = vmatprep.subr.mxu0 0.0
          %v4016 = vand.u32 %v3298, 4294901760
          %4017 = vmatpush1.msra.mxu0 %v4016
          %4018 = vmatprep.subr.mxu0 0.0
          %v4019 = vand.u32 %v3299, 4294901760
          %4020 = vmatpush1.msra.mxu0 %v4019
          %4021 = vmatprep.subr.mxu0 0.0
          %v4022 = vand.u32 %v3300, 4294901760
          %4023 = vmatpush1.msra.mxu0 %v4022
          %4024 = vmatprep.subr.mxu0 0.0
          %v4025 = vand.u32 %v3301, 4294901760
          %4026 = vmatpush1.msra.mxu0 %v4025
          %4027 = vmatprep.subr.mxu0 0.0
          %v4028 = vand.u32 %v3302, 4294901760
          %4029 = vmatpush1.msra.mxu0 %v4028
          %4030 = vmatprep.subr.mxu0 0.0
          %v4031 = vand.u32 %v3303, 4294901760
          %4032 = vmatpush1.msra.mxu0 %v4031
          %4033 = vmatprep.subr.mxu0 0.0
          %v4034 = vand.u32 %v3304, 4294901760
          %4035 = vmatpush1.msra.mxu0 %v4034
          %4036 = vmatprep.subr.mxu0 0.0
          %v4037 = vand.u32 %v3305, 4294901760
          %4038 = vmatpush1.msra.mxu0 %v4037
          %4039 = vmatprep.subr.mxu0 0.0
          %v4040 = vand.u32 %v3306, 4294901760
          %4041 = vmatpush1.msra.mxu0 %v4040
          %4042 = vmatprep.subr.mxu0 0.0
          %v4043 = vand.u32 %v3307, 4294901760
          %4044 = vmatpush1.msra.mxu0 %v4043
          %4045 = vmatprep.subr.mxu0 0.0
          %v4046 = vand.u32 %v3308, 4294901760
          %4047 = vmatpush1.msra.mxu0 %v4046
          %4048 = vmatprep.subr.mxu0 0.0
          %4049 = vmatpush1.msra.mxu0 0.0
          %4050 = vmatprep.subr.mxu0 0.0
          %4051 = vmatpush1.msra.mxu0 0.0
          %4052 = vmatprep.subr.mxu0 0.0
          %4053 = vmatpush1.msra.mxu0 0.0
          %4054 = vmatprep.subr.mxu0 0.0
          %4055 = vmatpush1.msra.mxu0 0.0
          %4056 = vmatprep.subr.mxu0 0.0
          %4057 = vmatpush1.msra.mxu0 0.0
          %4058 = vmatprep.subr.mxu0 0.0
          %4059 = vmatpush1.msra.mxu0 0.0
          %4060 = vmatprep.subr.mxu0 0.0
          %4061 = vmatpush1.msra.mxu0 0.0
          %4062 = vmatprep.subr.mxu0 0.0
          %4063 = vmatpush1.msra.mxu0 0.0
          %4064 = vmatprep.subr.mxu0 0.0
          %4065 = vmatpush1.msra.mxu0 0.0
          %4066 = vmatprep.subr.mxu0 0.0
          %4067 = vmatpush1.msra.mxu0 0.0
          %4068 = vmatprep.subr.mxu0 0.0
          %4069 = vmatpush1.msra.mxu0 0.0
          %4070 = vmatprep.subr.mxu0 0.0
          %4071 = vmatpush1.msra.mxu0 0.0
          %4072 = vmatprep.subr.mxu0 0.0
          %4073 = vmatpush1.msra.mxu0 0.0
          %4074 = vmatprep.subr.mxu0 0.0
          %4075 = vmatpush1.msra.mxu0 0.0
          %4076 = vmatprep.subr.mxu0 0.0
          %4077 = vmatpush1.msra.mxu0 0.0
          %4078 = vmatprep.subr.mxu0 0.0
          %4079 = vmatpush1.msra.mxu0 0.0
          %4080 = vmatprep.mubr.f32.mxu0 0.0
          %v4081 = vand.u32 %v3245, 4294901760
          %v4082 = vsub.f32 %v3245, %v4081
          %v4083 = vand.u32 %v4082, 4294901760
          %4084 = vmatmul.mubr.f32.gmra.mrb[0].mxu0 %v4083
          %v4085 = vpop.f32.mrb[0].mxu0
          %v4086 = vadd.f32 %v3892, %v4085
          %v4087 = vpop.f32.mrb[0].mxu0
          %4088 = vmatprep.mubr.f32.mxu0 0.0
          %v4089 = vand.u32 %v3246, 4294901760
          %v4090 = vsub.f32 %v3246, %v4089
          %v4091 = vand.u32 %v4090, 4294901760
          %4092 = vmatmul.mubr.f32.gmra.mrb[0].mxu0 %v4091
          %v4093 = vpop.f32.mrb[0].mxu0
          %v4094 = vadd.f32 %v3899, %v4093
          %v4095 = vpop.f32.mrb[0].mxu0
          %4096 = vmatprep.mubr.f32.mxu0 0.0
          %v4097 = vand.u32 %v3247, 4294901760
          %v4098 = vsub.f32 %v3247, %v4097
          %v4099 = vand.u32 %v4098, 4294901760
          %4100 = vmatmul.mubr.f32.gmra.mrb[0].mxu0 %v4099
          %v4101 = vpop.f32.mrb[0].mxu0
          %v4102 = vadd.f32 %v3906, %v4101
          %v4103 = vpop.f32.mrb[0].mxu0
          %4104 = vmatprep.mubr.f32.mxu0 0.0
          %v4105 = vand.u32 %v3248, 4294901760
          %v4106 = vsub.f32 %v3248, %v4105
          %v4107 = vand.u32 %v4106, 4294901760
          %4108 = vmatmul.mubr.f32.gmra.mrb[0].mxu0 %v4107
          %v4109 = vpop.f32.mrb[0].mxu0
          %v4110 = vadd.f32 %v3913, %v4109
          %v4111 = vpop.f32.mrb[0].mxu0
          %4112 = vmatprep.mubr.f32.mxu0 0.0
          %v4113 = vand.u32 %v3249, 4294901760
          %v4114 = vsub.f32 %v3249, %v4113
          %v4115 = vand.u32 %v4114, 4294901760
          %4116 = vmatmul.mubr.f32.gmra.mrb[0].mxu0 %v4115
          %v4117 = vpop.f32.mrb[0].mxu0
          %v4118 = vadd.f32 %v3920, %v4117
          %v4119 = vpop.f32.mrb[0].mxu0
          %4120 = vmatprep.mubr.f32.mxu0 0.0
          %v4121 = vand.u32 %v3250, 4294901760
          %v4122 = vsub.f32 %v3250, %v4121
          %v4123 = vand.u32 %v4122, 4294901760
          %4124 = vmatmul.mubr.f32.gmra.mrb[0].mxu0 %v4123
          %v4125 = vpop.f32.mrb[0].mxu0
          %v4126 = vadd.f32 %v3927, %v4125
          %v4127 = vpop.f32.mrb[0].mxu0
          %4128 = vmatprep.mubr.f32.mxu0 0.0
          %v4129 = vand.u32 %v3251, 4294901760
          %v4130 = vsub.f32 %v3251, %v4129
          %v4131 = vand.u32 %v4130, 4294901760
          %4132 = vmatmul.mubr.f32.gmra.mrb[0].mxu0 %v4131
          %v4133 = vpop.f32.mrb[0].mxu0
          %v4134 = vadd.f32 %v3934, %v4133
          %v4135 = vpop.f32.mrb[0].mxu0
          %4136 = vmatprep.mubr.f32.mxu0 0.0
          %v4137 = vand.u32 %v3252, 4294901760
          %v4138 = vsub.f32 %v3252, %v4137
          %v4139 = vand.u32 %v4138, 4294901760
          %4140 = vmatmul.mubr.f32.gmra.mrb[0].mxu0 %v4139
          %v4141 = vpop.f32.mrb[0].mxu0
          %v4142 = vadd.f32 %v3941, %v4141
          %v4143 = vpop.f32.mrb[0].mxu0
          %4144 = vmatprep.mubr.f32.mxu0 0.0
          %v4145 = vand.u32 %v3253, 4294901760
          %v4146 = vsub.f32 %v3253, %v4145
          %v4147 = vand.u32 %v4146, 4294901760
          %4148 = vmatmul.mubr.f32.gmra.mrb[0].mxu0 %v4147
          %v4149 = vpop.f32.mrb[0].mxu0
          %v4150 = vadd.f32 %v3948, %v4149
          %v4151 = vpop.f32.mrb[0].mxu0
          %4152 = vmatprep.mubr.f32.mxu0 0.0
          %v4153 = vand.u32 %v3254, 4294901760
          %v4154 = vsub.f32 %v3254, %v4153
          %v4155 = vand.u32 %v4154, 4294901760
          %4156 = vmatmul.mubr.f32.gmra.mrb[0].mxu0 %v4155
          %v4157 = vpop.f32.mrb[0].mxu0
          %v4158 = vadd.f32 %v3955, %v4157
          %v4159 = vpop.f32.mrb[0].mxu0
          %4160 = vmatprep.mubr.f32.mxu0 0.0
          %v4161 = vand.u32 %v3255, 4294901760
          %v4162 = vsub.f32 %v3255, %v4161
          %v4163 = vand.u32 %v4162, 4294901760
          %4164 = vmatmul.mubr.f32.gmra.mrb[0].mxu0 %v4163
          %v4165 = vpop.f32.mrb[0].mxu0
          %v4166 = vadd.f32 %v3962, %v4165
          %v4167 = vpop.f32.mrb[0].mxu0
          %4168 = vmatprep.mubr.f32.mxu0 0.0
          %v4169 = vand.u32 %v3256, 4294901760
          %v4170 = vsub.f32 %v3256, %v4169
          %v4171 = vand.u32 %v4170, 4294901760
          %4172 = vmatmul.mubr.f32.gmra.mrb[0].mxu0 %v4171
          %v4173 = vpop.f32.mrb[0].mxu0
          %v4174 = vadd.f32 %v3969, %v4173
          %v4175 = vpop.f32.mrb[0].mxu0
          %4176 = vmatprep.mubr.f32.mxu0 0.0
          %v4177 = vand.u32 %v3257, 4294901760
          %v4178 = vsub.f32 %v3257, %v4177
          %v4179 = vand.u32 %v4178, 4294901760
          %4180 = vmatmul.mubr.f32.gmra.mrb[0].mxu0 %v4179
          %v4181 = vpop.f32.mrb[0].mxu0
          %v4182 = vadd.f32 %v3976, %v4181
          %v4183 = vpop.f32.mrb[0].mxu0
          %4184 = vmatprep.mubr.f32.mxu0 0.0
          %v4185 = vand.u32 %v3258, 4294901760
          %v4186 = vsub.f32 %v3258, %v4185
          %v4187 = vand.u32 %v4186, 4294901760
          %4188 = vmatmul.mubr.f32.gmra.mrb[0].mxu0 %v4187
          %v4189 = vpop.f32.mrb[0].mxu0
          %v4190 = vadd.f32 %v3983, %v4189
          %v4191 = vpop.f32.mrb[0].mxu0
          %4192 = vmatprep.mubr.f32.mxu0 0.0
          %v4193 = vand.u32 %v3259, 4294901760
          %v4194 = vsub.f32 %v3259, %v4193
          %v4195 = vand.u32 %v4194, 4294901760
          %4196 = vmatmul.mubr.f32.gmra.mrb[0].mxu0 %v4195
          %v4197 = vpop.f32.mrb[0].mxu0
          %v4198 = vadd.f32 %v3990, %v4197
          %v4199 = vpop.f32.mrb[0].mxu0
          %4200 = vmatprep.mubr.f32.mxu0 0.0
          %v4201 = vand.u32 %v3260, 4294901760
          %v4202 = vsub.f32 %v3260, %v4201
          %v4203 = vand.u32 %v4202, 4294901760
          %4204 = vmatmul.mubr.f32.gmra.mrb[0].mxu0 %v4203
          %v4205 = vpop.f32.mrb[0].mxu0
          %v4206 = vadd.f32 %v3997, %v4205
          %v4207 = vpop.f32.mrb[0].mxu0
          %4208 = vdwg.mxu0
          %4209 = vmatprep.subr.mxu0 0.0
          %v4210 = vand.u32 %v3293, 4294901760
          %v4211 = vsub.f32 %v3293, %v4210
          %v4212 = vand.u32 %v4211, 4294901760
          %4213 = vmatpush1.msra.mxu0 %v4212
          %4214 = vmatprep.subr.mxu0 0.0
          %v4215 = vand.u32 %v3294, 4294901760
          %v4216 = vsub.f32 %v3294, %v4215
          %v4217 = vand.u32 %v4216, 4294901760
          %4218 = vmatpush1.msra.mxu0 %v4217
          %4219 = vmatprep.subr.mxu0 0.0
          %v4220 = vand.u32 %v3295, 4294901760
          %v4221 = vsub.f32 %v3295, %v4220
          %v4222 = vand.u32 %v4221, 4294901760
          %4223 = vmatpush1.msra.mxu0 %v4222
          %4224 = vmatprep.subr.mxu0 0.0
          %v4225 = vand.u32 %v3296, 4294901760
          %v4226 = vsub.f32 %v3296, %v4225
          %v4227 = vand.u32 %v4226, 4294901760
          %4228 = vmatpush1.msra.mxu0 %v4227
          %4229 = vmatprep.subr.mxu0 0.0
          %v4230 = vand.u32 %v3297, 4294901760
          %v4231 = vsub.f32 %v3297, %v4230
          %v4232 = vand.u32 %v4231, 4294901760
          %4233 = vmatpush1.msra.mxu0 %v4232
          %4234 = vmatprep.subr.mxu0 0.0
          %v4235 = vand.u32 %v3298, 4294901760
          %v4236 = vsub.f32 %v3298, %v4235
          %v4237 = vand.u32 %v4236, 4294901760
          %4238 = vmatpush1.msra.mxu0 %v4237
          %4239 = vmatprep.subr.mxu0 0.0
          %v4240 = vand.u32 %v3299, 4294901760
          %v4241 = vsub.f32 %v3299, %v4240
          %v4242 = vand.u32 %v4241, 4294901760
          %4243 = vmatpush1.msra.mxu0 %v4242
          %4244 = vmatprep.subr.mxu0 0.0
          %v4245 = vand.u32 %v3300, 4294901760
          %v4246 = vsub.f32 %v3300, %v4245
          %v4247 = vand.u32 %v4246, 4294901760
          %4248 = vmatpush1.msra.mxu0 %v4247
          %4249 = vmatprep.subr.mxu0 0.0
          %v4250 = vand.u32 %v3301, 4294901760
          %v4251 = vsub.f32 %v3301, %v4250
          %v4252 = vand.u32 %v4251, 4294901760
          %4253 = vmatpush1.msra.mxu0 %v4252
          %4254 = vmatprep.subr.mxu0 0.0
          %v4255 = vand.u32 %v3302, 4294901760
          %v4256 = vsub.f32 %v3302, %v4255
          %v4257 = vand.u32 %v4256, 4294901760
          %4258 = vmatpush1.msra.mxu0 %v4257
          %4259 = vmatprep.subr.mxu0 0.0
          %v4260 = vand.u32 %v3303, 4294901760
          %v4261 = vsub.f32 %v3303, %v4260
          %v4262 = vand.u32 %v4261, 4294901760
          %4263 = vmatpush1.msra.mxu0 %v4262
          %4264 = vmatprep.subr.mxu0 0.0
          %v4265 = vand.u32 %v3304, 4294901760
          %v4266 = vsub.f32 %v3304, %v4265
          %v4267 = vand.u32 %v4266, 4294901760
          %4268 = vmatpush1.msra.mxu0 %v4267
          %4269 = vmatprep.subr.mxu0 0.0
          %v4270 = vand.u32 %v3305, 4294901760
          %v4271 = vsub.f32 %v3305, %v4270
          %v4272 = vand.u32 %v4271, 4294901760
          %4273 = vmatpush1.msra.mxu0 %v4272
          %4274 = vmatprep.subr.mxu0 0.0
          %v4275 = vand.u32 %v3306, 4294901760
          %v4276 = vsub.f32 %v3306, %v4275
          %v4277 = vand.u32 %v4276, 4294901760
          %4278 = vmatpush1.msra.mxu0 %v4277
          %4279 = vmatprep.subr.mxu0 0.0
          %v4280 = vand.u32 %v3307, 4294901760
          %v4281 = vsub.f32 %v3307, %v4280
          %v4282 = vand.u32 %v4281, 4294901760
          %4283 = vmatpush1.msra.mxu0 %v4282
          %4284 = vmatprep.subr.mxu0 0.0
          %v4285 = vand.u32 %v3308, 4294901760
          %v4286 = vsub.f32 %v3308, %v4285
          %v4287 = vand.u32 %v4286, 4294901760
          %4288 = vmatpush1.msra.mxu0 %v4287
          %4289 = vmatprep.subr.mxu0 0.0
          %4290 = vmatpush1.msra.mxu0 0.0
          %4291 = vmatprep.subr.mxu0 0.0
          %4292 = vmatpush1.msra.mxu0 0.0
          %4293 = vmatprep.subr.mxu0 0.0
          %4294 = vmatpush1.msra.mxu0 0.0
          %4295 = vmatprep.subr.mxu0 0.0
          %4296 = vmatpush1.msra.mxu0 0.0
          %4297 = vmatprep.subr.mxu0 0.0
          %4298 = vmatpush1.msra.mxu0 0.0
          %4299 = vmatprep.subr.mxu0 0.0
          %4300 = vmatpush1.msra.mxu0 0.0
          %4301 = vmatprep.subr.mxu0 0.0
          %4302 = vmatpush1.msra.mxu0 0.0
          %4303 = vmatprep.subr.mxu0 0.0
          %4304 = vmatpush1.msra.mxu0 0.0
          %4305 = vmatprep.subr.mxu0 0.0
          %4306 = vmatpush1.msra.mxu0 0.0
          %4307 = vmatprep.subr.mxu0 0.0
          %4308 = vmatpush1.msra.mxu0 0.0
          %4309 = vmatprep.subr.mxu0 0.0
          %4310 = vmatpush1.msra.mxu0 0.0
          %4311 = vmatprep.subr.mxu0 0.0
          %4312 = vmatpush1.msra.mxu0 0.0
          %4313 = vmatprep.subr.mxu0 0.0
          %4314 = vmatpush1.msra.mxu0 0.0
          %4315 = vmatprep.subr.mxu0 0.0
          %4316 = vmatpush1.msra.mxu0 0.0
          %4317 = vmatprep.subr.mxu0 0.0
          %4318 = vmatpush1.msra.mxu0 0.0
          %4319 = vmatprep.subr.mxu0 0.0
          %4320 = vmatpush1.msra.mxu0 0.0
          %4321 = vmatprep.mubr.f32.mxu0 0.0
          %v4322 = vand.u32 %v3245, 4294901760
          %4323 = vmatmul.mubr.f32.gmra.mrb[0].mxu0 %v4322
          %v4324 = vpop.f32.mrb[0].mxu0
          %v4325 = vadd.f32 %v4086, %v4324
          %v4326 = vpop.f32.mrb[0].mxu0
          %4327 = vmatprep.mubr.f32.mxu0 0.0
          %v4328 = vand.u32 %v3246, 4294901760
          %4329 = vmatmul.mubr.f32.gmra.mrb[0].mxu0 %v4328
          %v4330 = vpop.f32.mrb[0].mxu0
          %v4331 = vadd.f32 %v4094, %v4330
          %v4332 = vpop.f32.mrb[0].mxu0
          %4333 = vmatprep.mubr.f32.mxu0 0.0
          %v4334 = vand.u32 %v3247, 4294901760
          %4335 = vmatmul.mubr.f32.gmra.mrb[0].mxu0 %v4334
          %v4336 = vpop.f32.mrb[0].mxu0
          %v4337 = vadd.f32 %v4102, %v4336
          %v4338 = vpop.f32.mrb[0].mxu0
          %4339 = vmatprep.mubr.f32.mxu0 0.0
          %v4340 = vand.u32 %v3248, 4294901760
          %4341 = vmatmul.mubr.f32.gmra.mrb[0].mxu0 %v4340
          %v4342 = vpop.f32.mrb[0].mxu0
          %v4343 = vadd.f32 %v4110, %v4342
          %v4344 = vpop.f32.mrb[0].mxu0
          %4345 = vmatprep.mubr.f32.mxu0 0.0
          %v4346 = vand.u32 %v3249, 4294901760
          %4347 = vmatmul.mubr.f32.gmra.mrb[0].mxu0 %v4346
          %v4348 = vpop.f32.mrb[0].mxu0
          %v4349 = vadd.f32 %v4118, %v4348
          %v4350 = vpop.f32.mrb[0].mxu0
          %4351 = vmatprep.mubr.f32.mxu0 0.0
          %v4352 = vand.u32 %v3250, 4294901760
          %4353 = vmatmul.mubr.f32.gmra.mrb[0].mxu0 %v4352
          %v4354 = vpop.f32.mrb[0].mxu0
          %v4355 = vadd.f32 %v4126, %v4354
          %v4356 = vpop.f32.mrb[0].mxu0
          %4357 = vmatprep.mubr.f32.mxu0 0.0
          %v4358 = vand.u32 %v3251, 4294901760
          %4359 = vmatmul.mubr.f32.gmra.mrb[0].mxu0 %v4358
          %v4360 = vpop.f32.mrb[0].mxu0
          %v4361 = vadd.f32 %v4134, %v4360
          %v4362 = vpop.f32.mrb[0].mxu0
          %4363 = vmatprep.mubr.f32.mxu0 0.0
          %v4364 = vand.u32 %v3252, 4294901760
          %4365 = vmatmul.mubr.f32.gmra.mrb[0].mxu0 %v4364
          %v4366 = vpop.f32.mrb[0].mxu0
          %v4367 = vadd.f32 %v4142, %v4366
          %v4368 = vpop.f32.mrb[0].mxu0
          %4369 = vmatprep.mubr.f32.mxu0 0.0
          %v4370 = vand.u32 %v3253, 4294901760
          %4371 = vmatmul.mubr.f32.gmra.mrb[0].mxu0 %v4370
          %v4372 = vpop.f32.mrb[0].mxu0
          %v4373 = vadd.f32 %v4150, %v4372
          %v4374 = vpop.f32.mrb[0].mxu0
          %4375 = vmatprep.mubr.f32.mxu0 0.0
          %v4376 = vand.u32 %v3254, 4294901760
          %4377 = vmatmul.mubr.f32.gmra.mrb[0].mxu0 %v4376
          %v4378 = vpop.f32.mrb[0].mxu0
          %v4379 = vadd.f32 %v4158, %v4378
          %v4380 = vpop.f32.mrb[0].mxu0
          %4381 = vmatprep.mubr.f32.mxu0 0.0
          %v4382 = vand.u32 %v3255, 4294901760
          %4383 = vmatmul.mubr.f32.gmra.mrb[0].mxu0 %v4382
          %v4384 = vpop.f32.mrb[0].mxu0
          %v4385 = vadd.f32 %v4166, %v4384
          %v4386 = vpop.f32.mrb[0].mxu0
          %4387 = vmatprep.mubr.f32.mxu0 0.0
          %v4388 = vand.u32 %v3256, 4294901760
          %4389 = vmatmul.mubr.f32.gmra.mrb[0].mxu0 %v4388
          %v4390 = vpop.f32.mrb[0].mxu0
          %v4391 = vadd.f32 %v4174, %v4390
          %v4392 = vpop.f32.mrb[0].mxu0
          %4393 = vmatprep.mubr.f32.mxu0 0.0
          %v4394 = vand.u32 %v3257, 4294901760
          %4395 = vmatmul.mubr.f32.gmra.mrb[0].mxu0 %v4394
          %v4396 = vpop.f32.mrb[0].mxu0
          %v4397 = vadd.f32 %v4182, %v4396
          %v4398 = vpop.f32.mrb[0].mxu0
          %4399 = vmatprep.mubr.f32.mxu0 0.0
          %v4400 = vand.u32 %v3258, 4294901760
          %4401 = vmatmul.mubr.f32.gmra.mrb[0].mxu0 %v4400
          %v4402 = vpop.f32.mrb[0].mxu0
          %v4403 = vadd.f32 %v4190, %v4402
          %v4404 = vpop.f32.mrb[0].mxu0
          %4405 = vmatprep.mubr.f32.mxu0 0.0
          %v4406 = vand.u32 %v3259, 4294901760
          %4407 = vmatmul.mubr.f32.gmra.mrb[0].mxu0 %v4406
          %v4408 = vpop.f32.mrb[0].mxu0
          %v4409 = vadd.f32 %v4198, %v4408
          %v4410 = vpop.f32.mrb[0].mxu0
          %4411 = vmatprep.mubr.f32.mxu0 0.0
          %v4412 = vand.u32 %v3260, 4294901760
          %4413 = vmatmul.mubr.f32.gmra.mrb[0].mxu0 %v4412
          %v4414 = vpop.f32.mrb[0].mxu0
          %v4415 = vadd.f32 %v4206, %v4414
          %v4416 = vpop.f32.mrb[0].mxu0
          %4417 = vdwg.mxu0
          %4418 = vmatprep.subr.mxu0 0.0
          %v4419 = vand.u32 %v3293, 4294901760
          %4420 = vmatpush1.msra.mxu0 %v4419
          %4421 = vmatprep.subr.mxu0 0.0
          %v4422 = vand.u32 %v3294, 4294901760
          %4423 = vmatpush1.msra.mxu0 %v4422
          %4424 = vmatprep.subr.mxu0 0.0
          %v4425 = vand.u32 %v3295, 4294901760
          %4426 = vmatpush1.msra.mxu0 %v4425
          %4427 = vmatprep.subr.mxu0 0.0
          %v4428 = vand.u32 %v3296, 4294901760
          %4429 = vmatpush1.msra.mxu0 %v4428
          %4430 = vmatprep.subr.mxu0 0.0
          %v4431 = vand.u32 %v3297, 4294901760
          %4432 = vmatpush1.msra.mxu0 %v4431
          %4433 = vmatprep.subr.mxu0 0.0
          %v4434 = vand.u32 %v3298, 4294901760
          %4435 = vmatpush1.msra.mxu0 %v4434
          %4436 = vmatprep.subr.mxu0 0.0
          %v4437 = vand.u32 %v3299, 4294901760
          %4438 = vmatpush1.msra.mxu0 %v4437
          %4439 = vmatprep.subr.mxu0 0.0
          %v4440 = vand.u32 %v3300, 4294901760
          %4441 = vmatpush1.msra.mxu0 %v4440
          %4442 = vmatprep.subr.mxu0 0.0
          %v4443 = vand.u32 %v3301, 4294901760
          %4444 = vmatpush1.msra.mxu0 %v4443
          %4445 = vmatprep.subr.mxu0 0.0
          %v4446 = vand.u32 %v3302, 4294901760
          %4447 = vmatpush1.msra.mxu0 %v4446
          %4448 = vmatprep.subr.mxu0 0.0
          %v4449 = vand.u32 %v3303, 4294901760
          %4450 = vmatpush1.msra.mxu0 %v4449
          %4451 = vmatprep.subr.mxu0 0.0
          %v4452 = vand.u32 %v3304, 4294901760
          %4453 = vmatpush1.msra.mxu0 %v4452
          %4454 = vmatprep.subr.mxu0 0.0
          %v4455 = vand.u32 %v3305, 4294901760
          %4456 = vmatpush1.msra.mxu0 %v4455
          %4457 = vmatprep.subr.mxu0 0.0
          %v4458 = vand.u32 %v3306, 4294901760
          %4459 = vmatpush1.msra.mxu0 %v4458
          %4460 = vmatprep.subr.mxu0 0.0
          %v4461 = vand.u32 %v3307, 4294901760
          %4462 = vmatpush1.msra.mxu0 %v4461
          %4463 = vmatprep.subr.mxu0 0.0
          %v4464 = vand.u32 %v3308, 4294901760
          %4465 = vmatpush1.msra.mxu0 %v4464
          %4466 = vmatprep.subr.mxu0 0.0
          %4467 = vmatpush1.msra.mxu0 0.0
          %4468 = vmatprep.subr.mxu0 0.0
          %4469 = vmatpush1.msra.mxu0 0.0
          %4470 = vmatprep.subr.mxu0 0.0
          %4471 = vmatpush1.msra.mxu0 0.0
          %4472 = vmatprep.subr.mxu0 0.0
          %4473 = vmatpush1.msra.mxu0 0.0
          %4474 = vmatprep.subr.mxu0 0.0
          %4475 = vmatpush1.msra.mxu0 0.0
          %4476 = vmatprep.subr.mxu0 0.0
          %4477 = vmatpush1.msra.mxu0 0.0
          %4478 = vmatprep.subr.mxu0 0.0
          %4479 = vmatpush1.msra.mxu0 0.0
          %4480 = vmatprep.subr.mxu0 0.0
          %4481 = vmatpush1.msra.mxu0 0.0
          %4482 = vmatprep.subr.mxu0 0.0
          %4483 = vmatpush1.msra.mxu0 0.0
          %4484 = vmatprep.subr.mxu0 0.0
          %4485 = vmatpush1.msra.mxu0 0.0
          %4486 = vmatprep.subr.mxu0 0.0
          %4487 = vmatpush1.msra.mxu0 0.0
          %4488 = vmatprep.subr.mxu0 0.0
          %4489 = vmatpush1.msra.mxu0 0.0
          %4490 = vmatprep.subr.mxu0 0.0
          %4491 = vmatpush1.msra.mxu0 0.0
          %4492 = vmatprep.subr.mxu0 0.0
          %4493 = vmatpush1.msra.mxu0 0.0
          %4494 = vmatprep.subr.mxu0 0.0
          %4495 = vmatpush1.msra.mxu0 0.0
          %4496 = vmatprep.subr.mxu0 0.0
          %4497 = vmatpush1.msra.mxu0 0.0
          %4498 = vmatprep.mubr.f32.mxu0 0.0
          %v4499 = vand.u32 %v3245, 4294901760
          %4500 = vmatmul.mubr.f32.gmra.mrb[0].mxu0 %v4499
          %v4501 = vpop.f32.mrb[0].mxu0
          %v4502 = vadd.f32 %v4325, %v4501
          %v4503 = vpop.f32.mrb[0].mxu0
          %4504 = vmatprep.mubr.f32.mxu0 0.0
          %v4505 = vand.u32 %v3246, 4294901760
          %4506 = vmatmul.mubr.f32.gmra.mrb[0].mxu0 %v4505
          %v4507 = vpop.f32.mrb[0].mxu0
          %v4508 = vadd.f32 %v4331, %v4507
          %v4509 = vpop.f32.mrb[0].mxu0
          %4510 = vmatprep.mubr.f32.mxu0 0.0
          %v4511 = vand.u32 %v3247, 4294901760
          %4512 = vmatmul.mubr.f32.gmra.mrb[0].mxu0 %v4511
          %v4513 = vpop.f32.mrb[0].mxu0
          %v4514 = vadd.f32 %v4337, %v4513
          %v4515 = vpop.f32.mrb[0].mxu0
          %4516 = vmatprep.mubr.f32.mxu0 0.0
          %v4517 = vand.u32 %v3248, 4294901760
          %4518 = vmatmul.mubr.f32.gmra.mrb[0].mxu0 %v4517
          %v4519 = vpop.f32.mrb[0].mxu0
          %v4520 = vadd.f32 %v4343, %v4519
          %v4521 = vpop.f32.mrb[0].mxu0
          %4522 = vmatprep.mubr.f32.mxu0 0.0
          %v4523 = vand.u32 %v3249, 4294901760
          %4524 = vmatmul.mubr.f32.gmra.mrb[0].mxu0 %v4523
          %v4525 = vpop.f32.mrb[0].mxu0
          %v4526 = vadd.f32 %v4349, %v4525
          %v4527 = vpop.f32.mrb[0].mxu0
          %4528 = vmatprep.mubr.f32.mxu0 0.0
          %v4529 = vand.u32 %v3250, 4294901760
          %4530 = vmatmul.mubr.f32.gmra.mrb[0].mxu0 %v4529
          %v4531 = vpop.f32.mrb[0].mxu0
          %v4532 = vadd.f32 %v4355, %v4531
          %v4533 = vpop.f32.mrb[0].mxu0
          %4534 = vmatprep.mubr.f32.mxu0 0.0
          %v4535 = vand.u32 %v3251, 4294901760
          %4536 = vmatmul.mubr.f32.gmra.mrb[0].mxu0 %v4535
          %v4537 = vpop.f32.mrb[0].mxu0
          %v4538 = vadd.f32 %v4361, %v4537
          %v4539 = vpop.f32.mrb[0].mxu0
          %4540 = vmatprep.mubr.f32.mxu0 0.0
          %v4541 = vand.u32 %v3252, 4294901760
          %4542 = vmatmul.mubr.f32.gmra.mrb[0].mxu0 %v4541
          %v4543 = vpop.f32.mrb[0].mxu0
          %v4544 = vadd.f32 %v4367, %v4543
          %v4545 = vpop.f32.mrb[0].mxu0
          %4546 = vmatprep.mubr.f32.mxu0 0.0
          %v4547 = vand.u32 %v3253, 4294901760
          %4548 = vmatmul.mubr.f32.gmra.mrb[0].mxu0 %v4547
          %v4549 = vpop.f32.mrb[0].mxu0
          %v4550 = vadd.f32 %v4373, %v4549
          %v4551 = vpop.f32.mrb[0].mxu0
          %4552 = vmatprep.mubr.f32.mxu0 0.0
          %v4553 = vand.u32 %v3254, 4294901760
          %4554 = vmatmul.mubr.f32.gmra.mrb[0].mxu0 %v4553
          %v4555 = vpop.f32.mrb[0].mxu0
          %v4556 = vadd.f32 %v4379, %v4555
          %v4557 = vpop.f32.mrb[0].mxu0
          %4558 = vmatprep.mubr.f32.mxu0 0.0
          %v4559 = vand.u32 %v3255, 4294901760
          %4560 = vmatmul.mubr.f32.gmra.mrb[0].mxu0 %v4559
          %v4561 = vpop.f32.mrb[0].mxu0
          %v4562 = vadd.f32 %v4385, %v4561
          %v4563 = vpop.f32.mrb[0].mxu0
          %4564 = vmatprep.mubr.f32.mxu0 0.0
          %v4565 = vand.u32 %v3256, 4294901760
          %4566 = vmatmul.mubr.f32.gmra.mrb[0].mxu0 %v4565
          %v4567 = vpop.f32.mrb[0].mxu0
          %v4568 = vadd.f32 %v4391, %v4567
          %v4569 = vpop.f32.mrb[0].mxu0
          %4570 = vmatprep.mubr.f32.mxu0 0.0
          %v4571 = vand.u32 %v3257, 4294901760
          %4572 = vmatmul.mubr.f32.gmra.mrb[0].mxu0 %v4571
          %v4573 = vpop.f32.mrb[0].mxu0
          %v4574 = vadd.f32 %v4397, %v4573
          %v4575 = vpop.f32.mrb[0].mxu0
          %4576 = vmatprep.mubr.f32.mxu0 0.0
          %v4577 = vand.u32 %v3258, 4294901760
          %4578 = vmatmul.mubr.f32.gmra.mrb[0].mxu0 %v4577
          %v4579 = vpop.f32.mrb[0].mxu0
          %v4580 = vadd.f32 %v4403, %v4579
          %v4581 = vpop.f32.mrb[0].mxu0
          %4582 = vmatprep.mubr.f32.mxu0 0.0
          %v4583 = vand.u32 %v3259, 4294901760
          %4584 = vmatmul.mubr.f32.gmra.mrb[0].mxu0 %v4583
          %v4585 = vpop.f32.mrb[0].mxu0
          %v4586 = vadd.f32 %v4409, %v4585
          %v4587 = vpop.f32.mrb[0].mxu0
          %4588 = vmatprep.mubr.f32.mxu0 0.0
          %v4589 = vand.u32 %v3260, 4294901760
          %4590 = vmatmul.mubr.f32.gmra.mrb[0].mxu0 %v4589
          %v4591 = vpop.f32.mrb[0].mxu0
          %v4592 = vadd.f32 %v4415, %v4591
          %v4593 = vpop.f32.mrb[0].mxu0
          %4594 = vdwg.mxu0
          %v4595 = vadd.f32 %v3229, %v4502
          %v4596 = vadd.f32 %v3230, %v4508
          %v4597 = vadd.f32 %v3231, %v4514
          %v4598 = vadd.f32 %v3232, %v4520
          %v4599 = vadd.f32 %v3233, %v4526
          %v4600 = vadd.f32 %v3234, %v4532
          %v4601 = vadd.f32 %v3235, %v4538
          %v4602 = vadd.f32 %v3236, %v4544
          %v4603 = vadd.f32 %v3237, %v4550
          %v4604 = vadd.f32 %v3238, %v4556
          %v4605 = vadd.f32 %v3239, %v4562
          %v4606 = vadd.f32 %v3240, %v4568
          %v4607 = vadd.f32 %v3241, %v4574
          %v4608 = vadd.f32 %v3242, %v4580
          %v4609 = vadd.f32 %v3243, %v4586
          %v4610 = vadd.f32 %v3244, %v4592
          %4611 = vst [vmem:[%s297] sm:$0xff] %v4595
          %4612 = vst [vmem:[%s297 + $0x8] sm:$0xff] %v4596
          %4613 = vst [vmem:[%s297 + $0x10] sm:$0xff] %v4597
          %4614 = vst [vmem:[%s297 + $0x18] sm:$0xff] %v4598
          %4615 = vst [vmem:[%s297 + $0x20] sm:$0xff] %v4599
          %4616 = vst [vmem:[%s297 + $0x28] sm:$0xff] %v4600
          %4617 = vst [vmem:[%s297 + $0x30] sm:$0xff] %v4601
          %4618 = vst [vmem:[%s297 + $0x38] sm:$0xff] %v4602
          %4619 = vst [vmem:[%s297 + $0x40] sm:$0xff] %v4603
          %4620 = vst [vmem:[%s297 + $0x48] sm:$0xff] %v4604
          %4621 = vst [vmem:[%s297 + $0x50] sm:$0xff] %v4605
          %4622 = vst [vmem:[%s297 + $0x58] sm:$0xff] %v4606
          %4623 = vst [vmem:[%s297 + $0x60] sm:$0xff] %v4607
          %4624 = vst [vmem:[%s297 + $0x68] sm:$0xff] %v4608
          %4625 = vst [vmem:[%s297 + $0x70] sm:$0xff] %v4609
          %4626 = vst [vmem:[%s297 + $0x78] sm:$0xff] %v4610
        $region56: #{tpu_custom_call.1} parent=27 // pred_fallthru
          _
        %p4627 = pnand %p444, %p418
        %p4628 = pneg %p4627
        %p4629 = pnand %p443, %p4628
        %p4630 = pneg %p4629
        // Predicated region
        $region57: #{tpu_custom_call.1} parent=27 // pred_check
          _
        $region58: #{tpu_custom_call.1} parent=27 // pred_check_branch
          %4632 = sbr.rel (%p4629) target = $region60
        $region59: #{tpu_custom_call.1} parent=27 // pred_region
          %v4633 = vld [vmem:[%s297] sm:$0xff]
          %v4634 = vld [vmem:[%s297 + $0x8] sm:$0xff]
          %v4635 = vld [vmem:[%s297 + $0x10] sm:$0xff]
          %v4636 = vld [vmem:[%s297 + $0x18] sm:$0xff]
          %v4637 = vld [vmem:[%s297 + $0x20] sm:$0xff]
          %v4638 = vld [vmem:[%s297 + $0x28] sm:$0xff]
          %v4639 = vld [vmem:[%s297 + $0x30] sm:$0xff]
          %v4640 = vld [vmem:[%s297 + $0x38] sm:$0xff]
          %v4641 = vld [vmem:[%s297 + $0x40] sm:$0xff]
          %v4642 = vld [vmem:[%s297 + $0x48] sm:$0xff]
          %v4643 = vld [vmem:[%s297 + $0x50] sm:$0xff]
          %v4644 = vld [vmem:[%s297 + $0x58] sm:$0xff]
          %v4645 = vld [vmem:[%s297 + $0x60] sm:$0xff]
          %v4646 = vld [vmem:[%s297 + $0x68] sm:$0xff]
          %v4647 = vld [vmem:[%s297 + $0x70] sm:$0xff]
          %v4648 = vld [vmem:[%s297 + $0x78] sm:$0xff]
          %v4649 = vld [vmem:[%s263] sm:$0xff]
          %v4650 = vld [vmem:[%s263 + $0x8] sm:$0xff]
          %v4651 = vld [vmem:[%s263 + $0x10] sm:$0xff]
          %v4652 = vld [vmem:[%s263 + $0x18] sm:$0xff]
          %v4653 = vld [vmem:[%s263 + $0x20] sm:$0xff]
          %v4654 = vld [vmem:[%s263 + $0x28] sm:$0xff]
          %v4655 = vld [vmem:[%s263 + $0x30] sm:$0xff]
          %v4656 = vld [vmem:[%s263 + $0x38] sm:$0xff]
          %v4657 = vld [vmem:[%s263 + $0x40] sm:$0xff]
          %v4658 = vld [vmem:[%s263 + $0x48] sm:$0xff]
          %v4659 = vld [vmem:[%s263 + $0x50] sm:$0xff]
          %v4660 = vld [vmem:[%s263 + $0x58] sm:$0xff]
          %v4661 = vld [vmem:[%s263 + $0x60] sm:$0xff]
          %v4662 = vld [vmem:[%s263 + $0x68] sm:$0xff]
          %v4663 = vld [vmem:[%s263 + $0x70] sm:$0xff]
          %v4664 = vld [vmem:[%s263 + $0x78] sm:$0xff]
          %v4665 = vld [vmem:[#allocation2] sm:$0xff]
          %v4666 = vld [vmem:[#allocation2 + $0x8] sm:$0xff]
          %v4667 = vld [vmem:[#allocation2 + $0x10] sm:$0xff]
          %v4668 = vld [vmem:[#allocation2 + $0x18] sm:$0xff]
          %v4669 = vld [vmem:[#allocation2 + $0x20] sm:$0xff]
          %v4670 = vld [vmem:[#allocation2 + $0x28] sm:$0xff]
          %v4671 = vld [vmem:[#allocation2 + $0x30] sm:$0xff]
          %v4672 = vld [vmem:[#allocation2 + $0x38] sm:$0xff]
          %v4673 = vld [vmem:[#allocation2 + $0x40] sm:$0xff]
          %v4674 = vld [vmem:[#allocation2 + $0x48] sm:$0xff]
          %v4675 = vld [vmem:[#allocation2 + $0x50] sm:$0xff]
          %v4676 = vld [vmem:[#allocation2 + $0x58] sm:$0xff]
          %v4677 = vld [vmem:[#allocation2 + $0x60] sm:$0xff]
          %v4678 = vld [vmem:[#allocation2 + $0x68] sm:$0xff]
          %v4679 = vld [vmem:[#allocation2 + $0x70] sm:$0xff]
          %v4680 = vld [vmem:[#allocation2 + $0x78] sm:$0xff]
          %v4681 = vmul.f32 %v4649, %v4665
          %v4682 = vmul.f32 %v4650, %v4666
          %v4683 = vmul.f32 %v4651, %v4667
          %v4684 = vmul.f32 %v4652, %v4668
          %v4685 = vmul.f32 %v4653, %v4669
          %v4686 = vmul.f32 %v4654, %v4670
          %v4687 = vmul.f32 %v4655, %v4671
          %v4688 = vmul.f32 %v4656, %v4672
          %v4689 = vmul.f32 %v4657, %v4673
          %v4690 = vmul.f32 %v4658, %v4674
          %v4691 = vmul.f32 %v4659, %v4675
          %v4692 = vmul.f32 %v4660, %v4676
          %v4693 = vmul.f32 %v4661, %v4677
          %v4694 = vmul.f32 %v4662, %v4678
          %v4695 = vmul.f32 %v4663, %v4679
          %v4696 = vmul.f32 %v4664, %v4680
          %v4697 = vld [vmem:[%s272] sm:$0xff]
          %v4698 = vld [vmem:[%s272 + $0x8] sm:$0xff]
          %v4699 = vld [vmem:[%s272 + $0x10] sm:$0xff]
          %v4700 = vld [vmem:[%s272 + $0x18] sm:$0xff]
          %v4701 = vld [vmem:[%s272 + $0x20] sm:$0xff]
          %v4702 = vld [vmem:[%s272 + $0x28] sm:$0xff]
          %v4703 = vld [vmem:[%s272 + $0x30] sm:$0xff]
          %v4704 = vld [vmem:[%s272 + $0x38] sm:$0xff]
          %v4705 = vld [vmem:[%s272 + $0x40] sm:$0xff]
          %v4706 = vld [vmem:[%s272 + $0x48] sm:$0xff]
          %v4707 = vld [vmem:[%s272 + $0x50] sm:$0xff]
          %v4708 = vld [vmem:[%s272 + $0x58] sm:$0xff]
          %v4709 = vld [vmem:[%s272 + $0x60] sm:$0xff]
          %v4710 = vld [vmem:[%s272 + $0x68] sm:$0xff]
          %v4711 = vld [vmem:[%s272 + $0x70] sm:$0xff]
          %v4712 = vld [vmem:[%s272 + $0x78] sm:$0xff]
          %v4713 = vmul.f32 %v4697, %v4665
          %v4714 = vmul.f32 %v4698, %v4666
          %v4715 = vmul.f32 %v4699, %v4667
          %v4716 = vmul.f32 %v4700, %v4668
          %v4717 = vmul.f32 %v4701, %v4669
          %v4718 = vmul.f32 %v4702, %v4670
          %v4719 = vmul.f32 %v4703, %v4671
          %v4720 = vmul.f32 %v4704, %v4672
          %v4721 = vmul.f32 %v4705, %v4673
          %v4722 = vmul.f32 %v4706, %v4674
          %v4723 = vmul.f32 %v4707, %v4675
          %v4724 = vmul.f32 %v4708, %v4676
          %v4725 = vmul.f32 %v4709, %v4677
          %v4726 = vmul.f32 %v4710, %v4678
          %v4727 = vmul.f32 %v4711, %v4679
          %v4728 = vmul.f32 %v4712, %v4680
          %4729 = vmatprep.subr.mxu0 0.0
          %v4730 = vand.u32 %v4713, 4294901760
          %4731 = vmatpush1.msra.mxu0 %v4730
          %4732 = vmatprep.subr.mxu0 0.0
          %v4733 = vand.u32 %v4714, 4294901760
          %4734 = vmatpush1.msra.mxu0 %v4733
          %4735 = vmatprep.subr.mxu0 0.0
          %v4736 = vand.u32 %v4715, 4294901760
          %4737 = vmatpush1.msra.mxu0 %v4736
          %4738 = vmatprep.subr.mxu0 0.0
          %v4739 = vand.u32 %v4716, 4294901760
          %4740 = vmatpush1.msra.mxu0 %v4739
          %4741 = vmatprep.subr.mxu0 0.0
          %v4742 = vand.u32 %v4717, 4294901760
          %4743 = vmatpush1.msra.mxu0 %v4742
          %4744 = vmatprep.subr.mxu0 0.0
          %v4745 = vand.u32 %v4718, 4294901760
          %4746 = vmatpush1.msra.mxu0 %v4745
          %4747 = vmatprep.subr.mxu0 0.0
          %v4748 = vand.u32 %v4719, 4294901760
          %4749 = vmatpush1.msra.mxu0 %v4748
          %4750 = vmatprep.subr.mxu0 0.0
          %v4751 = vand.u32 %v4720, 4294901760
          %4752 = vmatpush1.msra.mxu0 %v4751
          %4753 = vmatprep.subr.mxu0 0.0
          %v4754 = vand.u32 %v4721, 4294901760
          %4755 = vmatpush1.msra.mxu0 %v4754
          %4756 = vmatprep.subr.mxu0 0.0
          %v4757 = vand.u32 %v4722, 4294901760
          %4758 = vmatpush1.msra.mxu0 %v4757
          %4759 = vmatprep.subr.mxu0 0.0
          %v4760 = vand.u32 %v4723, 4294901760
          %4761 = vmatpush1.msra.mxu0 %v4760
          %4762 = vmatprep.subr.mxu0 0.0
          %v4763 = vand.u32 %v4724, 4294901760
          %4764 = vmatpush1.msra.mxu0 %v4763
          %4765 = vmatprep.subr.mxu0 0.0
          %v4766 = vand.u32 %v4725, 4294901760
          %4767 = vmatpush1.msra.mxu0 %v4766
          %4768 = vmatprep.subr.mxu0 0.0
          %v4769 = vand.u32 %v4726, 4294901760
          %4770 = vmatpush1.msra.mxu0 %v4769
          %4771 = vmatprep.subr.mxu0 0.0
          %v4772 = vand.u32 %v4727, 4294901760
          %4773 = vmatpush1.msra.mxu0 %v4772
          %4774 = vmatprep.subr.mxu0 0.0
          %v4775 = vand.u32 %v4728, 4294901760
          %4776 = vmatpush1.msra.mxu0 %v4775
          %4777 = vmatprep.subr.mxu0 0.0
          %4778 = vmatpush1.msra.mxu0 0.0
          %4779 = vmatprep.subr.mxu0 0.0
          %4780 = vmatpush1.msra.mxu0 0.0
          %4781 = vmatprep.subr.mxu0 0.0
          %4782 = vmatpush1.msra.mxu0 0.0
          %4783 = vmatprep.subr.mxu0 0.0
          %4784 = vmatpush1.msra.mxu0 0.0
          %4785 = vmatprep.subr.mxu0 0.0
          %4786 = vmatpush1.msra.mxu0 0.0
          %4787 = vmatprep.subr.mxu0 0.0
          %4788 = vmatpush1.msra.mxu0 0.0
          %4789 = vmatprep.subr.mxu0 0.0
          %4790 = vmatpush1.msra.mxu0 0.0
          %4791 = vmatprep.subr.mxu0 0.0
          %4792 = vmatpush1.msra.mxu0 0.0
          %4793 = vmatprep.subr.mxu0 0.0
          %4794 = vmatpush1.msra.mxu0 0.0
          %4795 = vmatprep.subr.mxu0 0.0
          %4796 = vmatpush1.msra.mxu0 0.0
          %4797 = vmatprep.subr.mxu0 0.0
          %4798 = vmatpush1.msra.mxu0 0.0
          %4799 = vmatprep.subr.mxu0 0.0
          %4800 = vmatpush1.msra.mxu0 0.0
          %4801 = vmatprep.subr.mxu0 0.0
          %4802 = vmatpush1.msra.mxu0 0.0
          %4803 = vmatprep.subr.mxu0 0.0
          %4804 = vmatpush1.msra.mxu0 0.0
          %4805 = vmatprep.subr.mxu0 0.0
          %4806 = vmatpush1.msra.mxu0 0.0
          %4807 = vmatprep.subr.mxu0 0.0
          %4808 = vmatpush1.msra.mxu0 0.0
          %4809 = vmatprep.mubr.f32.mxu0 0.0
          %v4810 = vand.u32 %v4681, 4294901760
          %v4811 = vsub.f32 %v4681, %v4810
          %v4812 = vand.u32 %v4811, 4294901760
          %v4813 = vsub.f32 %v4811, %v4812
          %v4814 = vand.u32 %v4813, 4294901760
          %4815 = vmatmul.mubr.f32.gmra.mrb[0].mxu0 %v4814
          %v4816 = vpop.f32.mrb[0].mxu0
          %v4817 = vadd.f32 0.0, %v4816
          %v4818 = vpop.f32.mrb[0].mxu0
          %4819 = vmatprep.mubr.f32.mxu0 0.0
          %v4820 = vand.u32 %v4682, 4294901760
          %v4821 = vsub.f32 %v4682, %v4820
          %v4822 = vand.u32 %v4821, 4294901760
          %v4823 = vsub.f32 %v4821, %v4822
          %v4824 = vand.u32 %v4823, 4294901760
          %4825 = vmatmul.mubr.f32.gmra.mrb[0].mxu0 %v4824
          %v4826 = vpop.f32.mrb[0].mxu0
          %v4827 = vadd.f32 0.0, %v4826
          %v4828 = vpop.f32.mrb[0].mxu0
          %4829 = vmatprep.mubr.f32.mxu0 0.0
          %v4830 = vand.u32 %v4683, 4294901760
          %v4831 = vsub.f32 %v4683, %v4830
          %v4832 = vand.u32 %v4831, 4294901760
          %v4833 = vsub.f32 %v4831, %v4832
          %v4834 = vand.u32 %v4833, 4294901760
          %4835 = vmatmul.mubr.f32.gmra.mrb[0].mxu0 %v4834
          %v4836 = vpop.f32.mrb[0].mxu0
          %v4837 = vadd.f32 0.0, %v4836
          %v4838 = vpop.f32.mrb[0].mxu0
          %4839 = vmatprep.mubr.f32.mxu0 0.0
          %v4840 = vand.u32 %v4684, 4294901760
          %v4841 = vsub.f32 %v4684, %v4840
          %v4842 = vand.u32 %v4841, 4294901760
          %v4843 = vsub.f32 %v4841, %v4842
          %v4844 = vand.u32 %v4843, 4294901760
          %4845 = vmatmul.mubr.f32.gmra.mrb[0].mxu0 %v4844
          %v4846 = vpop.f32.mrb[0].mxu0
          %v4847 = vadd.f32 0.0, %v4846
          %v4848 = vpop.f32.mrb[0].mxu0
          %4849 = vmatprep.mubr.f32.mxu0 0.0
          %v4850 = vand.u32 %v4685, 4294901760
          %v4851 = vsub.f32 %v4685, %v4850
          %v4852 = vand.u32 %v4851, 4294901760
          %v4853 = vsub.f32 %v4851, %v4852
          %v4854 = vand.u32 %v4853, 4294901760
          %4855 = vmatmul.mubr.f32.gmra.mrb[0].mxu0 %v4854
          %v4856 = vpop.f32.mrb[0].mxu0
          %v4857 = vadd.f32 0.0, %v4856
          %v4858 = vpop.f32.mrb[0].mxu0
          %4859 = vmatprep.mubr.f32.mxu0 0.0
          %v4860 = vand.u32 %v4686, 4294901760
          %v4861 = vsub.f32 %v4686, %v4860
          %v4862 = vand.u32 %v4861, 4294901760
          %v4863 = vsub.f32 %v4861, %v4862
          %v4864 = vand.u32 %v4863, 4294901760
          %4865 = vmatmul.mubr.f32.gmra.mrb[0].mxu0 %v4864
          %v4866 = vpop.f32.mrb[0].mxu0
          %v4867 = vadd.f32 0.0, %v4866
          %v4868 = vpop.f32.mrb[0].mxu0
          %4869 = vmatprep.mubr.f32.mxu0 0.0
          %v4870 = vand.u32 %v4687, 4294901760
          %v4871 = vsub.f32 %v4687, %v4870
          %v4872 = vand.u32 %v4871, 4294901760
          %v4873 = vsub.f32 %v4871, %v4872
          %v4874 = vand.u32 %v4873, 4294901760
          %4875 = vmatmul.mubr.f32.gmra.mrb[0].mxu0 %v4874
          %v4876 = vpop.f32.mrb[0].mxu0
          %v4877 = vadd.f32 0.0, %v4876
          %v4878 = vpop.f32.mrb[0].mxu0
          %4879 = vmatprep.mubr.f32.mxu0 0.0
          %v4880 = vand.u32 %v4688, 4294901760
          %v4881 = vsub.f32 %v4688, %v4880
          %v4882 = vand.u32 %v4881, 4294901760
          %v4883 = vsub.f32 %v4881, %v4882
          %v4884 = vand.u32 %v4883, 4294901760
          %4885 = vmatmul.mubr.f32.gmra.mrb[0].mxu0 %v4884
          %v4886 = vpop.f32.mrb[0].mxu0
          %v4887 = vadd.f32 0.0, %v4886
          %v4888 = vpop.f32.mrb[0].mxu0
          %4889 = vmatprep.mubr.f32.mxu0 0.0
          %v4890 = vand.u32 %v4689, 4294901760
          %v4891 = vsub.f32 %v4689, %v4890
          %v4892 = vand.u32 %v4891, 4294901760
          %v4893 = vsub.f32 %v4891, %v4892
          %v4894 = vand.u32 %v4893, 4294901760
          %4895 = vmatmul.mubr.f32.gmra.mrb[0].mxu0 %v4894
          %v4896 = vpop.f32.mrb[0].mxu0
          %v4897 = vadd.f32 0.0, %v4896
          %v4898 = vpop.f32.mrb[0].mxu0
          %4899 = vmatprep.mubr.f32.mxu0 0.0
          %v4900 = vand.u32 %v4690, 4294901760
          %v4901 = vsub.f32 %v4690, %v4900
          %v4902 = vand.u32 %v4901, 4294901760
          %v4903 = vsub.f32 %v4901, %v4902
          %v4904 = vand.u32 %v4903, 4294901760
          %4905 = vmatmul.mubr.f32.gmra.mrb[0].mxu0 %v4904
          %v4906 = vpop.f32.mrb[0].mxu0
          %v4907 = vadd.f32 0.0, %v4906
          %v4908 = vpop.f32.mrb[0].mxu0
          %4909 = vmatprep.mubr.f32.mxu0 0.0
          %v4910 = vand.u32 %v4691, 4294901760
          %v4911 = vsub.f32 %v4691, %v4910
          %v4912 = vand.u32 %v4911, 4294901760
          %v4913 = vsub.f32 %v4911, %v4912
          %v4914 = vand.u32 %v4913, 4294901760
          %4915 = vmatmul.mubr.f32.gmra.mrb[0].mxu0 %v4914
          %v4916 = vpop.f32.mrb[0].mxu0
          %v4917 = vadd.f32 0.0, %v4916
          %v4918 = vpop.f32.mrb[0].mxu0
          %4919 = vmatprep.mubr.f32.mxu0 0.0
          %v4920 = vand.u32 %v4692, 4294901760
          %v4921 = vsub.f32 %v4692, %v4920
          %v4922 = vand.u32 %v4921, 4294901760
          %v4923 = vsub.f32 %v4921, %v4922
          %v4924 = vand.u32 %v4923, 4294901760
          %4925 = vmatmul.mubr.f32.gmra.mrb[0].mxu0 %v4924
          %v4926 = vpop.f32.mrb[0].mxu0
          %v4927 = vadd.f32 0.0, %v4926
          %v4928 = vpop.f32.mrb[0].mxu0
          %4929 = vmatprep.mubr.f32.mxu0 0.0
          %v4930 = vand.u32 %v4693, 4294901760
          %v4931 = vsub.f32 %v4693, %v4930
          %v4932 = vand.u32 %v4931, 4294901760
          %v4933 = vsub.f32 %v4931, %v4932
          %v4934 = vand.u32 %v4933, 4294901760
          %4935 = vmatmul.mubr.f32.gmra.mrb[0].mxu0 %v4934
          %v4936 = vpop.f32.mrb[0].mxu0
          %v4937 = vadd.f32 0.0, %v4936
          %v4938 = vpop.f32.mrb[0].mxu0
          %4939 = vmatprep.mubr.f32.mxu0 0.0
          %v4940 = vand.u32 %v4694, 4294901760
          %v4941 = vsub.f32 %v4694, %v4940
          %v4942 = vand.u32 %v4941, 4294901760
          %v4943 = vsub.f32 %v4941, %v4942
          %v4944 = vand.u32 %v4943, 4294901760
          %4945 = vmatmul.mubr.f32.gmra.mrb[0].mxu0 %v4944
          %v4946 = vpop.f32.mrb[0].mxu0
          %v4947 = vadd.f32 0.0, %v4946
          %v4948 = vpop.f32.mrb[0].mxu0
          %4949 = vmatprep.mubr.f32.mxu0 0.0
          %v4950 = vand.u32 %v4695, 4294901760
          %v4951 = vsub.f32 %v4695, %v4950
          %v4952 = vand.u32 %v4951, 4294901760
          %v4953 = vsub.f32 %v4951, %v4952
          %v4954 = vand.u32 %v4953, 4294901760
          %4955 = vmatmul.mubr.f32.gmra.mrb[0].mxu0 %v4954
          %v4956 = vpop.f32.mrb[0].mxu0
          %v4957 = vadd.f32 0.0, %v4956
          %v4958 = vpop.f32.mrb[0].mxu0
          %4959 = vmatprep.mubr.f32.mxu0 0.0
          %v4960 = vand.u32 %v4696, 4294901760
          %v4961 = vsub.f32 %v4696, %v4960
          %v4962 = vand.u32 %v4961, 4294901760
          %v4963 = vsub.f32 %v4961, %v4962
          %v4964 = vand.u32 %v4963, 4294901760
          %4965 = vmatmul.mubr.f32.gmra.mrb[0].mxu0 %v4964
          %v4966 = vpop.f32.mrb[0].mxu0
          %v4967 = vadd.f32 0.0, %v4966
          %v4968 = vpop.f32.mrb[0].mxu0
          %4969 = vdwg.mxu0
          %4970 = vmatprep.subr.mxu0 0.0
          %v4971 = vand.u32 %v4713, 4294901760
          %v4972 = vsub.f32 %v4713, %v4971
          %v4973 = vand.u32 %v4972, 4294901760
          %v4974 = vsub.f32 %v4972, %v4973
          %v4975 = vand.u32 %v4974, 4294901760
          %4976 = vmatpush1.msra.mxu0 %v4975
          %4977 = vmatprep.subr.mxu0 0.0
          %v4978 = vand.u32 %v4714, 4294901760
          %v4979 = vsub.f32 %v4714, %v4978
          %v4980 = vand.u32 %v4979, 4294901760
          %v4981 = vsub.f32 %v4979, %v4980
          %v4982 = vand.u32 %v4981, 4294901760
          %4983 = vmatpush1.msra.mxu0 %v4982
          %4984 = vmatprep.subr.mxu0 0.0
          %v4985 = vand.u32 %v4715, 4294901760
          %v4986 = vsub.f32 %v4715, %v4985
          %v4987 = vand.u32 %v4986, 4294901760
          %v4988 = vsub.f32 %v4986, %v4987
          %v4989 = vand.u32 %v4988, 4294901760
          %4990 = vmatpush1.msra.mxu0 %v4989
          %4991 = vmatprep.subr.mxu0 0.0
          %v4992 = vand.u32 %v4716, 4294901760
          %v4993 = vsub.f32 %v4716, %v4992
          %v4994 = vand.u32 %v4993, 4294901760
          %v4995 = vsub.f32 %v4993, %v4994
          %v4996 = vand.u32 %v4995, 4294901760
          %4997 = vmatpush1.msra.mxu0 %v4996
          %4998 = vmatprep.subr.mxu0 0.0
          %v4999 = vand.u32 %v4717, 4294901760
          %v5000 = vsub.f32 %v4717, %v4999
          %v5001 = vand.u32 %v5000, 4294901760
          %v5002 = vsub.f32 %v5000, %v5001
          %v5003 = vand.u32 %v5002, 4294901760
          %5004 = vmatpush1.msra.mxu0 %v5003
          %5005 = vmatprep.subr.mxu0 0.0
          %v5006 = vand.u32 %v4718, 4294901760
          %v5007 = vsub.f32 %v4718, %v5006
          %v5008 = vand.u32 %v5007, 4294901760
          %v5009 = vsub.f32 %v5007, %v5008
          %v5010 = vand.u32 %v5009, 4294901760
          %5011 = vmatpush1.msra.mxu0 %v5010
          %5012 = vmatprep.subr.mxu0 0.0
          %v5013 = vand.u32 %v4719, 4294901760
          %v5014 = vsub.f32 %v4719, %v5013
          %v5015 = vand.u32 %v5014, 4294901760
          %v5016 = vsub.f32 %v5014, %v5015
          %v5017 = vand.u32 %v5016, 4294901760
          %5018 = vmatpush1.msra.mxu0 %v5017
          %5019 = vmatprep.subr.mxu0 0.0
          %v5020 = vand.u32 %v4720, 4294901760
          %v5021 = vsub.f32 %v4720, %v5020
          %v5022 = vand.u32 %v5021, 4294901760
          %v5023 = vsub.f32 %v5021, %v5022
          %v5024 = vand.u32 %v5023, 4294901760
          %5025 = vmatpush1.msra.mxu0 %v5024
          %5026 = vmatprep.subr.mxu0 0.0
          %v5027 = vand.u32 %v4721, 4294901760
          %v5028 = vsub.f32 %v4721, %v5027
          %v5029 = vand.u32 %v5028, 4294901760
          %v5030 = vsub.f32 %v5028, %v5029
          %v5031 = vand.u32 %v5030, 4294901760
          %5032 = vmatpush1.msra.mxu0 %v5031
          %5033 = vmatprep.subr.mxu0 0.0
          %v5034 = vand.u32 %v4722, 4294901760
          %v5035 = vsub.f32 %v4722, %v5034
          %v5036 = vand.u32 %v5035, 4294901760
          %v5037 = vsub.f32 %v5035, %v5036
          %v5038 = vand.u32 %v5037, 4294901760
          %5039 = vmatpush1.msra.mxu0 %v5038
          %5040 = vmatprep.subr.mxu0 0.0
          %v5041 = vand.u32 %v4723, 4294901760
          %v5042 = vsub.f32 %v4723, %v5041
          %v5043 = vand.u32 %v5042, 4294901760
          %v5044 = vsub.f32 %v5042, %v5043
          %v5045 = vand.u32 %v5044, 4294901760
          %5046 = vmatpush1.msra.mxu0 %v5045
          %5047 = vmatprep.subr.mxu0 0.0
          %v5048 = vand.u32 %v4724, 4294901760
          %v5049 = vsub.f32 %v4724, %v5048
          %v5050 = vand.u32 %v5049, 4294901760
          %v5051 = vsub.f32 %v5049, %v5050
          %v5052 = vand.u32 %v5051, 4294901760
          %5053 = vmatpush1.msra.mxu0 %v5052
          %5054 = vmatprep.subr.mxu0 0.0
          %v5055 = vand.u32 %v4725, 4294901760
          %v5056 = vsub.f32 %v4725, %v5055
          %v5057 = vand.u32 %v5056, 4294901760
          %v5058 = vsub.f32 %v5056, %v5057
          %v5059 = vand.u32 %v5058, 4294901760
          %5060 = vmatpush1.msra.mxu0 %v5059
          %5061 = vmatprep.subr.mxu0 0.0
          %v5062 = vand.u32 %v4726, 4294901760
          %v5063 = vsub.f32 %v4726, %v5062
          %v5064 = vand.u32 %v5063, 4294901760
          %v5065 = vsub.f32 %v5063, %v5064
          %v5066 = vand.u32 %v5065, 4294901760
          %5067 = vmatpush1.msra.mxu0 %v5066
          %5068 = vmatprep.subr.mxu0 0.0
          %v5069 = vand.u32 %v4727, 4294901760
          %v5070 = vsub.f32 %v4727, %v5069
          %v5071 = vand.u32 %v5070, 4294901760
          %v5072 = vsub.f32 %v5070, %v5071
          %v5073 = vand.u32 %v5072, 4294901760
          %5074 = vmatpush1.msra.mxu0 %v5073
          %5075 = vmatprep.subr.mxu0 0.0
          %v5076 = vand.u32 %v4728, 4294901760
          %v5077 = vsub.f32 %v4728, %v5076
          %v5078 = vand.u32 %v5077, 4294901760
          %v5079 = vsub.f32 %v5077, %v5078
          %v5080 = vand.u32 %v5079, 4294901760
          %5081 = vmatpush1.msra.mxu0 %v5080
          %5082 = vmatprep.subr.mxu0 0.0
          %5083 = vmatpush1.msra.mxu0 0.0
          %5084 = vmatprep.subr.mxu0 0.0
          %5085 = vmatpush1.msra.mxu0 0.0
          %5086 = vmatprep.subr.mxu0 0.0
          %5087 = vmatpush1.msra.mxu0 0.0
          %5088 = vmatprep.subr.mxu0 0.0
          %5089 = vmatpush1.msra.mxu0 0.0
          %5090 = vmatprep.subr.mxu0 0.0
          %5091 = vmatpush1.msra.mxu0 0.0
          %5092 = vmatprep.subr.mxu0 0.0
          %5093 = vmatpush1.msra.mxu0 0.0
          %5094 = vmatprep.subr.mxu0 0.0
          %5095 = vmatpush1.msra.mxu0 0.0
          %5096 = vmatprep.subr.mxu0 0.0
          %5097 = vmatpush1.msra.mxu0 0.0
          %5098 = vmatprep.subr.mxu0 0.0
          %5099 = vmatpush1.msra.mxu0 0.0
          %5100 = vmatprep.subr.mxu0 0.0
          %5101 = vmatpush1.msra.mxu0 0.0
          %5102 = vmatprep.subr.mxu0 0.0
          %5103 = vmatpush1.msra.mxu0 0.0
          %5104 = vmatprep.subr.mxu0 0.0
          %5105 = vmatpush1.msra.mxu0 0.0
          %5106 = vmatprep.subr.mxu0 0.0
          %5107 = vmatpush1.msra.mxu0 0.0
          %5108 = vmatprep.subr.mxu0 0.0
          %5109 = vmatpush1.msra.mxu0 0.0
          %5110 = vmatprep.subr.mxu0 0.0
          %5111 = vmatpush1.msra.mxu0 0.0
          %5112 = vmatprep.subr.mxu0 0.0
          %5113 = vmatpush1.msra.mxu0 0.0
          %5114 = vmatprep.mubr.f32.mxu0 0.0
          %v5115 = vand.u32 %v4681, 4294901760
          %5116 = vmatmul.mubr.f32.gmra.mrb[0].mxu0 %v5115
          %v5117 = vpop.f32.mrb[0].mxu0
          %v5118 = vadd.f32 %v4817, %v5117
          %v5119 = vpop.f32.mrb[0].mxu0
          %5120 = vmatprep.mubr.f32.mxu0 0.0
          %v5121 = vand.u32 %v4682, 4294901760
          %5122 = vmatmul.mubr.f32.gmra.mrb[0].mxu0 %v5121
          %v5123 = vpop.f32.mrb[0].mxu0
          %v5124 = vadd.f32 %v4827, %v5123
          %v5125 = vpop.f32.mrb[0].mxu0
          %5126 = vmatprep.mubr.f32.mxu0 0.0
          %v5127 = vand.u32 %v4683, 4294901760
          %5128 = vmatmul.mubr.f32.gmra.mrb[0].mxu0 %v5127
          %v5129 = vpop.f32.mrb[0].mxu0
          %v5130 = vadd.f32 %v4837, %v5129
          %v5131 = vpop.f32.mrb[0].mxu0
          %5132 = vmatprep.mubr.f32.mxu0 0.0
          %v5133 = vand.u32 %v4684, 4294901760
          %5134 = vmatmul.mubr.f32.gmra.mrb[0].mxu0 %v5133
          %v5135 = vpop.f32.mrb[0].mxu0
          %v5136 = vadd.f32 %v4847, %v5135
          %v5137 = vpop.f32.mrb[0].mxu0
          %5138 = vmatprep.mubr.f32.mxu0 0.0
          %v5139 = vand.u32 %v4685, 4294901760
          %5140 = vmatmul.mubr.f32.gmra.mrb[0].mxu0 %v5139
          %v5141 = vpop.f32.mrb[0].mxu0
          %v5142 = vadd.f32 %v4857, %v5141
          %v5143 = vpop.f32.mrb[0].mxu0
          %5144 = vmatprep.mubr.f32.mxu0 0.0
          %v5145 = vand.u32 %v4686, 4294901760
          %5146 = vmatmul.mubr.f32.gmra.mrb[0].mxu0 %v5145
          %v5147 = vpop.f32.mrb[0].mxu0
          %v5148 = vadd.f32 %v4867, %v5147
          %v5149 = vpop.f32.mrb[0].mxu0
          %5150 = vmatprep.mubr.f32.mxu0 0.0
          %v5151 = vand.u32 %v4687, 4294901760
          %5152 = vmatmul.mubr.f32.gmra.mrb[0].mxu0 %v5151
          %v5153 = vpop.f32.mrb[0].mxu0
          %v5154 = vadd.f32 %v4877, %v5153
          %v5155 = vpop.f32.mrb[0].mxu0
          %5156 = vmatprep.mubr.f32.mxu0 0.0
          %v5157 = vand.u32 %v4688, 4294901760
          %5158 = vmatmul.mubr.f32.gmra.mrb[0].mxu0 %v5157
          %v5159 = vpop.f32.mrb[0].mxu0
          %v5160 = vadd.f32 %v4887, %v5159
          %v5161 = vpop.f32.mrb[0].mxu0
          %5162 = vmatprep.mubr.f32.mxu0 0.0
          %v5163 = vand.u32 %v4689, 4294901760
          %5164 = vmatmul.mubr.f32.gmra.mrb[0].mxu0 %v5163
          %v5165 = vpop.f32.mrb[0].mxu0
          %v5166 = vadd.f32 %v4897, %v5165
          %v5167 = vpop.f32.mrb[0].mxu0
          %5168 = vmatprep.mubr.f32.mxu0 0.0
          %v5169 = vand.u32 %v4690, 4294901760
          %5170 = vmatmul.mubr.f32.gmra.mrb[0].mxu0 %v5169
          %v5171 = vpop.f32.mrb[0].mxu0
          %v5172 = vadd.f32 %v4907, %v5171
          %v5173 = vpop.f32.mrb[0].mxu0
          %5174 = vmatprep.mubr.f32.mxu0 0.0
          %v5175 = vand.u32 %v4691, 4294901760
          %5176 = vmatmul.mubr.f32.gmra.mrb[0].mxu0 %v5175
          %v5177 = vpop.f32.mrb[0].mxu0
          %v5178 = vadd.f32 %v4917, %v5177
          %v5179 = vpop.f32.mrb[0].mxu0
          %5180 = vmatprep.mubr.f32.mxu0 0.0
          %v5181 = vand.u32 %v4692, 4294901760
          %5182 = vmatmul.mubr.f32.gmra.mrb[0].mxu0 %v5181
          %v5183 = vpop.f32.mrb[0].mxu0
          %v5184 = vadd.f32 %v4927, %v5183
          %v5185 = vpop.f32.mrb[0].mxu0
          %5186 = vmatprep.mubr.f32.mxu0 0.0
          %v5187 = vand.u32 %v4693, 4294901760
          %5188 = vmatmul.mubr.f32.gmra.mrb[0].mxu0 %v5187
          %v5189 = vpop.f32.mrb[0].mxu0
          %v5190 = vadd.f32 %v4937, %v5189
          %v5191 = vpop.f32.mrb[0].mxu0
          %5192 = vmatprep.mubr.f32.mxu0 0.0
          %v5193 = vand.u32 %v4694, 4294901760
          %5194 = vmatmul.mubr.f32.gmra.mrb[0].mxu0 %v5193
          %v5195 = vpop.f32.mrb[0].mxu0
          %v5196 = vadd.f32 %v4947, %v5195
          %v5197 = vpop.f32.mrb[0].mxu0
          %5198 = vmatprep.mubr.f32.mxu0 0.0
          %v5199 = vand.u32 %v4695, 4294901760
          %5200 = vmatmul.mubr.f32.gmra.mrb[0].mxu0 %v5199
          %v5201 = vpop.f32.mrb[0].mxu0
          %v5202 = vadd.f32 %v4957, %v5201
          %v5203 = vpop.f32.mrb[0].mxu0
          %5204 = vmatprep.mubr.f32.mxu0 0.0
          %v5205 = vand.u32 %v4696, 4294901760
          %5206 = vmatmul.mubr.f32.gmra.mrb[0].mxu0 %v5205
          %v5207 = vpop.f32.mrb[0].mxu0
          %v5208 = vadd.f32 %v4967, %v5207
          %v5209 = vpop.f32.mrb[0].mxu0
          %5210 = vdwg.mxu0
          %5211 = vmatprep.subr.mxu0 0.0
          %v5212 = vand.u32 %v4713, 4294901760
          %v5213 = vsub.f32 %v4713, %v5212
          %5214 = vmatpush1.msra.mxu0 %v5213
          %5215 = vmatprep.subr.mxu0 0.0
          %v5216 = vand.u32 %v4714, 4294901760
          %v5217 = vsub.f32 %v4714, %v5216
          %5218 = vmatpush1.msra.mxu0 %v5217
          %5219 = vmatprep.subr.mxu0 0.0
          %v5220 = vand.u32 %v4715, 4294901760
          %v5221 = vsub.f32 %v4715, %v5220
          %5222 = vmatpush1.msra.mxu0 %v5221
          %5223 = vmatprep.subr.mxu0 0.0
          %v5224 = vand.u32 %v4716, 4294901760
          %v5225 = vsub.f32 %v4716, %v5224
          %5226 = vmatpush1.msra.mxu0 %v5225
          %5227 = vmatprep.subr.mxu0 0.0
          %v5228 = vand.u32 %v4717, 4294901760
          %v5229 = vsub.f32 %v4717, %v5228
          %5230 = vmatpush1.msra.mxu0 %v5229
          %5231 = vmatprep.subr.mxu0 0.0
          %v5232 = vand.u32 %v4718, 4294901760
          %v5233 = vsub.f32 %v4718, %v5232
          %5234 = vmatpush1.msra.mxu0 %v5233
          %5235 = vmatprep.subr.mxu0 0.0
          %v5236 = vand.u32 %v4719, 4294901760
          %v5237 = vsub.f32 %v4719, %v5236
          %5238 = vmatpush1.msra.mxu0 %v5237
          %5239 = vmatprep.subr.mxu0 0.0
          %v5240 = vand.u32 %v4720, 4294901760
          %v5241 = vsub.f32 %v4720, %v5240
          %5242 = vmatpush1.msra.mxu0 %v5241
          %5243 = vmatprep.subr.mxu0 0.0
          %v5244 = vand.u32 %v4721, 4294901760
          %v5245 = vsub.f32 %v4721, %v5244
          %5246 = vmatpush1.msra.mxu0 %v5245
          %5247 = vmatprep.subr.mxu0 0.0
          %v5248 = vand.u32 %v4722, 4294901760
          %v5249 = vsub.f32 %v4722, %v5248
          %5250 = vmatpush1.msra.mxu0 %v5249
          %5251 = vmatprep.subr.mxu0 0.0
          %v5252 = vand.u32 %v4723, 4294901760
          %v5253 = vsub.f32 %v4723, %v5252
          %5254 = vmatpush1.msra.mxu0 %v5253
          %5255 = vmatprep.subr.mxu0 0.0
          %v5256 = vand.u32 %v4724, 4294901760
          %v5257 = vsub.f32 %v4724, %v5256
          %5258 = vmatpush1.msra.mxu0 %v5257
          %5259 = vmatprep.subr.mxu0 0.0
          %v5260 = vand.u32 %v4725, 4294901760
          %v5261 = vsub.f32 %v4725, %v5260
          %5262 = vmatpush1.msra.mxu0 %v5261
          %5263 = vmatprep.subr.mxu0 0.0
          %v5264 = vand.u32 %v4726, 4294901760
          %v5265 = vsub.f32 %v4726, %v5264
          %5266 = vmatpush1.msra.mxu0 %v5265
          %5267 = vmatprep.subr.mxu0 0.0
          %v5268 = vand.u32 %v4727, 4294901760
          %v5269 = vsub.f32 %v4727, %v5268
          %5270 = vmatpush1.msra.mxu0 %v5269
          %5271 = vmatprep.subr.mxu0 0.0
          %v5272 = vand.u32 %v4728, 4294901760
          %v5273 = vsub.f32 %v4728, %v5272
          %5274 = vmatpush1.msra.mxu0 %v5273
          %5275 = vmatprep.subr.mxu0 0.0
          %5276 = vmatpush1.msra.mxu0 0.0
          %5277 = vmatprep.subr.mxu0 0.0
          %5278 = vmatpush1.msra.mxu0 0.0
          %5279 = vmatprep.subr.mxu0 0.0
          %5280 = vmatpush1.msra.mxu0 0.0
          %5281 = vmatprep.subr.mxu0 0.0
          %5282 = vmatpush1.msra.mxu0 0.0
          %5283 = vmatprep.subr.mxu0 0.0
          %5284 = vmatpush1.msra.mxu0 0.0
          %5285 = vmatprep.subr.mxu0 0.0
          %5286 = vmatpush1.msra.mxu0 0.0
          %5287 = vmatprep.subr.mxu0 0.0
          %5288 = vmatpush1.msra.mxu0 0.0
          %5289 = vmatprep.subr.mxu0 0.0
          %5290 = vmatpush1.msra.mxu0 0.0
          %5291 = vmatprep.subr.mxu0 0.0
          %5292 = vmatpush1.msra.mxu0 0.0
          %5293 = vmatprep.subr.mxu0 0.0
          %5294 = vmatpush1.msra.mxu0 0.0
          %5295 = vmatprep.subr.mxu0 0.0
          %5296 = vmatpush1.msra.mxu0 0.0
          %5297 = vmatprep.subr.mxu0 0.0
          %5298 = vmatpush1.msra.mxu0 0.0
          %5299 = vmatprep.subr.mxu0 0.0
          %5300 = vmatpush1.msra.mxu0 0.0
          %5301 = vmatprep.subr.mxu0 0.0
          %5302 = vmatpush1.msra.mxu0 0.0
          %5303 = vmatprep.subr.mxu0 0.0
          %5304 = vmatpush1.msra.mxu0 0.0
          %5305 = vmatprep.subr.mxu0 0.0
          %5306 = vmatpush1.msra.mxu0 0.0
          %5307 = vmatprep.mubr.f32.mxu0 0.0
          %v5308 = vand.u32 %v4681, 4294901760
          %v5309 = vsub.f32 %v4681, %v5308
          %5310 = vmatmul.mubr.f32.gmra.mrb[0].mxu0 %v5309
          %v5311 = vpop.f32.mrb[0].mxu0
          %v5312 = vadd.f32 %v5118, %v5311
          %v5313 = vpop.f32.mrb[0].mxu0
          %5314 = vmatprep.mubr.f32.mxu0 0.0
          %v5315 = vand.u32 %v4682, 4294901760
          %v5316 = vsub.f32 %v4682, %v5315
          %5317 = vmatmul.mubr.f32.gmra.mrb[0].mxu0 %v5316
          %v5318 = vpop.f32.mrb[0].mxu0
          %v5319 = vadd.f32 %v5124, %v5318
          %v5320 = vpop.f32.mrb[0].mxu0
          %5321 = vmatprep.mubr.f32.mxu0 0.0
          %v5322 = vand.u32 %v4683, 4294901760
          %v5323 = vsub.f32 %v4683, %v5322
          %5324 = vmatmul.mubr.f32.gmra.mrb[0].mxu0 %v5323
          %v5325 = vpop.f32.mrb[0].mxu0
          %v5326 = vadd.f32 %v5130, %v5325
          %v5327 = vpop.f32.mrb[0].mxu0
          %5328 = vmatprep.mubr.f32.mxu0 0.0
          %v5329 = vand.u32 %v4684, 4294901760
          %v5330 = vsub.f32 %v4684, %v5329
          %5331 = vmatmul.mubr.f32.gmra.mrb[0].mxu0 %v5330
          %v5332 = vpop.f32.mrb[0].mxu0
          %v5333 = vadd.f32 %v5136, %v5332
          %v5334 = vpop.f32.mrb[0].mxu0
          %5335 = vmatprep.mubr.f32.mxu0 0.0
          %v5336 = vand.u32 %v4685, 4294901760
          %v5337 = vsub.f32 %v4685, %v5336
          %5338 = vmatmul.mubr.f32.gmra.mrb[0].mxu0 %v5337
          %v5339 = vpop.f32.mrb[0].mxu0
          %v5340 = vadd.f32 %v5142, %v5339
          %v5341 = vpop.f32.mrb[0].mxu0
          %5342 = vmatprep.mubr.f32.mxu0 0.0
          %v5343 = vand.u32 %v4686, 4294901760
          %v5344 = vsub.f32 %v4686, %v5343
          %5345 = vmatmul.mubr.f32.gmra.mrb[0].mxu0 %v5344
          %v5346 = vpop.f32.mrb[0].mxu0
          %v5347 = vadd.f32 %v5148, %v5346
          %v5348 = vpop.f32.mrb[0].mxu0
          %5349 = vmatprep.mubr.f32.mxu0 0.0
          %v5350 = vand.u32 %v4687, 4294901760
          %v5351 = vsub.f32 %v4687, %v5350
          %5352 = vmatmul.mubr.f32.gmra.mrb[0].mxu0 %v5351
          %v5353 = vpop.f32.mrb[0].mxu0
          %v5354 = vadd.f32 %v5154, %v5353
          %v5355 = vpop.f32.mrb[0].mxu0
          %5356 = vmatprep.mubr.f32.mxu0 0.0
          %v5357 = vand.u32 %v4688, 4294901760
          %v5358 = vsub.f32 %v4688, %v5357
          %5359 = vmatmul.mubr.f32.gmra.mrb[0].mxu0 %v5358
          %v5360 = vpop.f32.mrb[0].mxu0
          %v5361 = vadd.f32 %v5160, %v5360
          %v5362 = vpop.f32.mrb[0].mxu0
          %5363 = vmatprep.mubr.f32.mxu0 0.0
          %v5364 = vand.u32 %v4689, 4294901760
          %v5365 = vsub.f32 %v4689, %v5364
          %5366 = vmatmul.mubr.f32.gmra.mrb[0].mxu0 %v5365
          %v5367 = vpop.f32.mrb[0].mxu0
          %v5368 = vadd.f32 %v5166, %v5367
          %v5369 = vpop.f32.mrb[0].mxu0
          %5370 = vmatprep.mubr.f32.mxu0 0.0
          %v5371 = vand.u32 %v4690, 4294901760
          %v5372 = vsub.f32 %v4690, %v5371
          %5373 = vmatmul.mubr.f32.gmra.mrb[0].mxu0 %v5372
          %v5374 = vpop.f32.mrb[0].mxu0
          %v5375 = vadd.f32 %v5172, %v5374
          %v5376 = vpop.f32.mrb[0].mxu0
          %5377 = vmatprep.mubr.f32.mxu0 0.0
          %v5378 = vand.u32 %v4691, 4294901760
          %v5379 = vsub.f32 %v4691, %v5378
          %5380 = vmatmul.mubr.f32.gmra.mrb[0].mxu0 %v5379
          %v5381 = vpop.f32.mrb[0].mxu0
          %v5382 = vadd.f32 %v5178, %v5381
          %v5383 = vpop.f32.mrb[0].mxu0
          %5384 = vmatprep.mubr.f32.mxu0 0.0
          %v5385 = vand.u32 %v4692, 4294901760
          %v5386 = vsub.f32 %v4692, %v5385
          %5387 = vmatmul.mubr.f32.gmra.mrb[0].mxu0 %v5386
          %v5388 = vpop.f32.mrb[0].mxu0
          %v5389 = vadd.f32 %v5184, %v5388
          %v5390 = vpop.f32.mrb[0].mxu0
          %5391 = vmatprep.mubr.f32.mxu0 0.0
          %v5392 = vand.u32 %v4693, 4294901760
          %v5393 = vsub.f32 %v4693, %v5392
          %5394 = vmatmul.mubr.f32.gmra.mrb[0].mxu0 %v5393
          %v5395 = vpop.f32.mrb[0].mxu0
          %v5396 = vadd.f32 %v5190, %v5395
          %v5397 = vpop.f32.mrb[0].mxu0
          %5398 = vmatprep.mubr.f32.mxu0 0.0
          %v5399 = vand.u32 %v4694, 4294901760
          %v5400 = vsub.f32 %v4694, %v5399
          %5401 = vmatmul.mubr.f32.gmra.mrb[0].mxu0 %v5400
          %v5402 = vpop.f32.mrb[0].mxu0
          %v5403 = vadd.f32 %v5196, %v5402
          %v5404 = vpop.f32.mrb[0].mxu0
          %5405 = vmatprep.mubr.f32.mxu0 0.0
          %v5406 = vand.u32 %v4695, 4294901760
          %v5407 = vsub.f32 %v4695, %v5406
          %5408 = vmatmul.mubr.f32.gmra.mrb[0].mxu0 %v5407
          %v5409 = vpop.f32.mrb[0].mxu0
          %v5410 = vadd.f32 %v5202, %v5409
          %v5411 = vpop.f32.mrb[0].mxu0
          %5412 = vmatprep.mubr.f32.mxu0 0.0
          %v5413 = vand.u32 %v4696, 4294901760
          %v5414 = vsub.f32 %v4696, %v5413
          %5415 = vmatmul.mubr.f32.gmra.mrb[0].mxu0 %v5414
          %v5416 = vpop.f32.mrb[0].mxu0
          %v5417 = vadd.f32 %v5208, %v5416
          %v5418 = vpop.f32.mrb[0].mxu0
          %5419 = vdwg.mxu0
          %5420 = vmatprep.subr.mxu0 0.0
          %v5421 = vand.u32 %v4713, 4294901760
          %5422 = vmatpush1.msra.mxu0 %v5421
          %5423 = vmatprep.subr.mxu0 0.0
          %v5424 = vand.u32 %v4714, 4294901760
          %5425 = vmatpush1.msra.mxu0 %v5424
          %5426 = vmatprep.subr.mxu0 0.0
          %v5427 = vand.u32 %v4715, 4294901760
          %5428 = vmatpush1.msra.mxu0 %v5427
          %5429 = vmatprep.subr.mxu0 0.0
          %v5430 = vand.u32 %v4716, 4294901760
          %5431 = vmatpush1.msra.mxu0 %v5430
          %5432 = vmatprep.subr.mxu0 0.0
          %v5433 = vand.u32 %v4717, 4294901760
          %5434 = vmatpush1.msra.mxu0 %v5433
          %5435 = vmatprep.subr.mxu0 0.0
          %v5436 = vand.u32 %v4718, 4294901760
          %5437 = vmatpush1.msra.mxu0 %v5436
          %5438 = vmatprep.subr.mxu0 0.0
          %v5439 = vand.u32 %v4719, 4294901760
          %5440 = vmatpush1.msra.mxu0 %v5439
          %5441 = vmatprep.subr.mxu0 0.0
          %v5442 = vand.u32 %v4720, 4294901760
          %5443 = vmatpush1.msra.mxu0 %v5442
          %5444 = vmatprep.subr.mxu0 0.0
          %v5445 = vand.u32 %v4721, 4294901760
          %5446 = vmatpush1.msra.mxu0 %v5445
          %5447 = vmatprep.subr.mxu0 0.0
          %v5448 = vand.u32 %v4722, 4294901760
          %5449 = vmatpush1.msra.mxu0 %v5448
          %5450 = vmatprep.subr.mxu0 0.0
          %v5451 = vand.u32 %v4723, 4294901760
          %5452 = vmatpush1.msra.mxu0 %v5451
          %5453 = vmatprep.subr.mxu0 0.0
          %v5454 = vand.u32 %v4724, 4294901760
          %5455 = vmatpush1.msra.mxu0 %v5454
          %5456 = vmatprep.subr.mxu0 0.0
          %v5457 = vand.u32 %v4725, 4294901760
          %5458 = vmatpush1.msra.mxu0 %v5457
          %5459 = vmatprep.subr.mxu0 0.0
          %v5460 = vand.u32 %v4726, 4294901760
          %5461 = vmatpush1.msra.mxu0 %v5460
          %5462 = vmatprep.subr.mxu0 0.0
          %v5463 = vand.u32 %v4727, 4294901760
          %5464 = vmatpush1.msra.mxu0 %v5463
          %5465 = vmatprep.subr.mxu0 0.0
          %v5466 = vand.u32 %v4728, 4294901760
          %5467 = vmatpush1.msra.mxu0 %v5466
          %5468 = vmatprep.subr.mxu0 0.0
          %5469 = vmatpush1.msra.mxu0 0.0
          %5470 = vmatprep.subr.mxu0 0.0
          %5471 = vmatpush1.msra.mxu0 0.0
          %5472 = vmatprep.subr.mxu0 0.0
          %5473 = vmatpush1.msra.mxu0 0.0
          %5474 = vmatprep.subr.mxu0 0.0
          %5475 = vmatpush1.msra.mxu0 0.0
          %5476 = vmatprep.subr.mxu0 0.0
          %5477 = vmatpush1.msra.mxu0 0.0
          %5478 = vmatprep.subr.mxu0 0.0
          %5479 = vmatpush1.msra.mxu0 0.0
          %5480 = vmatprep.subr.mxu0 0.0
          %5481 = vmatpush1.msra.mxu0 0.0
          %5482 = vmatprep.subr.mxu0 0.0
          %5483 = vmatpush1.msra.mxu0 0.0
          %5484 = vmatprep.subr.mxu0 0.0
          %5485 = vmatpush1.msra.mxu0 0.0
          %5486 = vmatprep.subr.mxu0 0.0
          %5487 = vmatpush1.msra.mxu0 0.0
          %5488 = vmatprep.subr.mxu0 0.0
          %5489 = vmatpush1.msra.mxu0 0.0
          %5490 = vmatprep.subr.mxu0 0.0
          %5491 = vmatpush1.msra.mxu0 0.0
          %5492 = vmatprep.subr.mxu0 0.0
          %5493 = vmatpush1.msra.mxu0 0.0
          %5494 = vmatprep.subr.mxu0 0.0
          %5495 = vmatpush1.msra.mxu0 0.0
          %5496 = vmatprep.subr.mxu0 0.0
          %5497 = vmatpush1.msra.mxu0 0.0
          %5498 = vmatprep.subr.mxu0 0.0
          %5499 = vmatpush1.msra.mxu0 0.0
          %5500 = vmatprep.mubr.f32.mxu0 0.0
          %v5501 = vand.u32 %v4681, 4294901760
          %v5502 = vsub.f32 %v4681, %v5501
          %v5503 = vand.u32 %v5502, 4294901760
          %5504 = vmatmul.mubr.f32.gmra.mrb[0].mxu0 %v5503
          %v5505 = vpop.f32.mrb[0].mxu0
          %v5506 = vadd.f32 %v5312, %v5505
          %v5507 = vpop.f32.mrb[0].mxu0
          %5508 = vmatprep.mubr.f32.mxu0 0.0
          %v5509 = vand.u32 %v4682, 4294901760
          %v5510 = vsub.f32 %v4682, %v5509
          %v5511 = vand.u32 %v5510, 4294901760
          %5512 = vmatmul.mubr.f32.gmra.mrb[0].mxu0 %v5511
          %v5513 = vpop.f32.mrb[0].mxu0
          %v5514 = vadd.f32 %v5319, %v5513
          %v5515 = vpop.f32.mrb[0].mxu0
          %5516 = vmatprep.mubr.f32.mxu0 0.0
          %v5517 = vand.u32 %v4683, 4294901760
          %v5518 = vsub.f32 %v4683, %v5517
          %v5519 = vand.u32 %v5518, 4294901760
          %5520 = vmatmul.mubr.f32.gmra.mrb[0].mxu0 %v5519
          %v5521 = vpop.f32.mrb[0].mxu0
          %v5522 = vadd.f32 %v5326, %v5521
          %v5523 = vpop.f32.mrb[0].mxu0
          %5524 = vmatprep.mubr.f32.mxu0 0.0
          %v5525 = vand.u32 %v4684, 4294901760
          %v5526 = vsub.f32 %v4684, %v5525
          %v5527 = vand.u32 %v5526, 4294901760
          %5528 = vmatmul.mubr.f32.gmra.mrb[0].mxu0 %v5527
          %v5529 = vpop.f32.mrb[0].mxu0
          %v5530 = vadd.f32 %v5333, %v5529
          %v5531 = vpop.f32.mrb[0].mxu0
          %5532 = vmatprep.mubr.f32.mxu0 0.0
          %v5533 = vand.u32 %v4685, 4294901760
          %v5534 = vsub.f32 %v4685, %v5533
          %v5535 = vand.u32 %v5534, 4294901760
          %5536 = vmatmul.mubr.f32.gmra.mrb[0].mxu0 %v5535
          %v5537 = vpop.f32.mrb[0].mxu0
          %v5538 = vadd.f32 %v5340, %v5537
          %v5539 = vpop.f32.mrb[0].mxu0
          %5540 = vmatprep.mubr.f32.mxu0 0.0
          %v5541 = vand.u32 %v4686, 4294901760
          %v5542 = vsub.f32 %v4686, %v5541
          %v5543 = vand.u32 %v5542, 4294901760
          %5544 = vmatmul.mubr.f32.gmra.mrb[0].mxu0 %v5543
          %v5545 = vpop.f32.mrb[0].mxu0
          %v5546 = vadd.f32 %v5347, %v5545
          %v5547 = vpop.f32.mrb[0].mxu0
          %5548 = vmatprep.mubr.f32.mxu0 0.0
          %v5549 = vand.u32 %v4687, 4294901760
          %v5550 = vsub.f32 %v4687, %v5549
          %v5551 = vand.u32 %v5550, 4294901760
          %5552 = vmatmul.mubr.f32.gmra.mrb[0].mxu0 %v5551
          %v5553 = vpop.f32.mrb[0].mxu0
          %v5554 = vadd.f32 %v5354, %v5553
          %v5555 = vpop.f32.mrb[0].mxu0
          %5556 = vmatprep.mubr.f32.mxu0 0.0
          %v5557 = vand.u32 %v4688, 4294901760
          %v5558 = vsub.f32 %v4688, %v5557
          %v5559 = vand.u32 %v5558, 4294901760
          %5560 = vmatmul.mubr.f32.gmra.mrb[0].mxu0 %v5559
          %v5561 = vpop.f32.mrb[0].mxu0
          %v5562 = vadd.f32 %v5361, %v5561
          %v5563 = vpop.f32.mrb[0].mxu0
          %5564 = vmatprep.mubr.f32.mxu0 0.0
          %v5565 = vand.u32 %v4689, 4294901760
          %v5566 = vsub.f32 %v4689, %v5565
          %v5567 = vand.u32 %v5566, 4294901760
          %5568 = vmatmul.mubr.f32.gmra.mrb[0].mxu0 %v5567
          %v5569 = vpop.f32.mrb[0].mxu0
          %v5570 = vadd.f32 %v5368, %v5569
          %v5571 = vpop.f32.mrb[0].mxu0
          %5572 = vmatprep.mubr.f32.mxu0 0.0
          %v5573 = vand.u32 %v4690, 4294901760
          %v5574 = vsub.f32 %v4690, %v5573
          %v5575 = vand.u32 %v5574, 4294901760
          %5576 = vmatmul.mubr.f32.gmra.mrb[0].mxu0 %v5575
          %v5577 = vpop.f32.mrb[0].mxu0
          %v5578 = vadd.f32 %v5375, %v5577
          %v5579 = vpop.f32.mrb[0].mxu0
          %5580 = vmatprep.mubr.f32.mxu0 0.0
          %v5581 = vand.u32 %v4691, 4294901760
          %v5582 = vsub.f32 %v4691, %v5581
          %v5583 = vand.u32 %v5582, 4294901760
          %5584 = vmatmul.mubr.f32.gmra.mrb[0].mxu0 %v5583
          %v5585 = vpop.f32.mrb[0].mxu0
          %v5586 = vadd.f32 %v5382, %v5585
          %v5587 = vpop.f32.mrb[0].mxu0
          %5588 = vmatprep.mubr.f32.mxu0 0.0
          %v5589 = vand.u32 %v4692, 4294901760
          %v5590 = vsub.f32 %v4692, %v5589
          %v5591 = vand.u32 %v5590, 4294901760
          %5592 = vmatmul.mubr.f32.gmra.mrb[0].mxu0 %v5591
          %v5593 = vpop.f32.mrb[0].mxu0
          %v5594 = vadd.f32 %v5389, %v5593
          %v5595 = vpop.f32.mrb[0].mxu0
          %5596 = vmatprep.mubr.f32.mxu0 0.0
          %v5597 = vand.u32 %v4693, 4294901760
          %v5598 = vsub.f32 %v4693, %v5597
          %v5599 = vand.u32 %v5598, 4294901760
          %5600 = vmatmul.mubr.f32.gmra.mrb[0].mxu0 %v5599
          %v5601 = vpop.f32.mrb[0].mxu0
          %v5602 = vadd.f32 %v5396, %v5601
          %v5603 = vpop.f32.mrb[0].mxu0
          %5604 = vmatprep.mubr.f32.mxu0 0.0
          %v5605 = vand.u32 %v4694, 4294901760
          %v5606 = vsub.f32 %v4694, %v5605
          %v5607 = vand.u32 %v5606, 4294901760
          %5608 = vmatmul.mubr.f32.gmra.mrb[0].mxu0 %v5607
          %v5609 = vpop.f32.mrb[0].mxu0
          %v5610 = vadd.f32 %v5403, %v5609
          %v5611 = vpop.f32.mrb[0].mxu0
          %5612 = vmatprep.mubr.f32.mxu0 0.0
          %v5613 = vand.u32 %v4695, 4294901760
          %v5614 = vsub.f32 %v4695, %v5613
          %v5615 = vand.u32 %v5614, 4294901760
          %5616 = vmatmul.mubr.f32.gmra.mrb[0].mxu0 %v5615
          %v5617 = vpop.f32.mrb[0].mxu0
          %v5618 = vadd.f32 %v5410, %v5617
          %v5619 = vpop.f32.mrb[0].mxu0
          %5620 = vmatprep.mubr.f32.mxu0 0.0
          %v5621 = vand.u32 %v4696, 4294901760
          %v5622 = vsub.f32 %v4696, %v5621
          %v5623 = vand.u32 %v5622, 4294901760
          %5624 = vmatmul.mubr.f32.gmra.mrb[0].mxu0 %v5623
          %v5625 = vpop.f32.mrb[0].mxu0
          %v5626 = vadd.f32 %v5417, %v5625
          %v5627 = vpop.f32.mrb[0].mxu0
          %5628 = vdwg.mxu0
          %5629 = vmatprep.subr.mxu0 0.0
          %v5630 = vand.u32 %v4713, 4294901760
          %v5631 = vsub.f32 %v4713, %v5630
          %v5632 = vand.u32 %v5631, 4294901760
          %5633 = vmatpush1.msra.mxu0 %v5632
          %5634 = vmatprep.subr.mxu0 0.0
          %v5635 = vand.u32 %v4714, 4294901760
          %v5636 = vsub.f32 %v4714, %v5635
          %v5637 = vand.u32 %v5636, 4294901760
          %5638 = vmatpush1.msra.mxu0 %v5637
          %5639 = vmatprep.subr.mxu0 0.0
          %v5640 = vand.u32 %v4715, 4294901760
          %v5641 = vsub.f32 %v4715, %v5640
          %v5642 = vand.u32 %v5641, 4294901760
          %5643 = vmatpush1.msra.mxu0 %v5642
          %5644 = vmatprep.subr.mxu0 0.0
          %v5645 = vand.u32 %v4716, 4294901760
          %v5646 = vsub.f32 %v4716, %v5645
          %v5647 = vand.u32 %v5646, 4294901760
          %5648 = vmatpush1.msra.mxu0 %v5647
          %5649 = vmatprep.subr.mxu0 0.0
          %v5650 = vand.u32 %v4717, 4294901760
          %v5651 = vsub.f32 %v4717, %v5650
          %v5652 = vand.u32 %v5651, 4294901760
          %5653 = vmatpush1.msra.mxu0 %v5652
          %5654 = vmatprep.subr.mxu0 0.0
          %v5655 = vand.u32 %v4718, 4294901760
          %v5656 = vsub.f32 %v4718, %v5655
          %v5657 = vand.u32 %v5656, 4294901760
          %5658 = vmatpush1.msra.mxu0 %v5657
          %5659 = vmatprep.subr.mxu0 0.0
          %v5660 = vand.u32 %v4719, 4294901760
          %v5661 = vsub.f32 %v4719, %v5660
          %v5662 = vand.u32 %v5661, 4294901760
          %5663 = vmatpush1.msra.mxu0 %v5662
          %5664 = vmatprep.subr.mxu0 0.0
          %v5665 = vand.u32 %v4720, 4294901760
          %v5666 = vsub.f32 %v4720, %v5665
          %v5667 = vand.u32 %v5666, 4294901760
          %5668 = vmatpush1.msra.mxu0 %v5667
          %5669 = vmatprep.subr.mxu0 0.0
          %v5670 = vand.u32 %v4721, 4294901760
          %v5671 = vsub.f32 %v4721, %v5670
          %v5672 = vand.u32 %v5671, 4294901760
          %5673 = vmatpush1.msra.mxu0 %v5672
          %5674 = vmatprep.subr.mxu0 0.0
          %v5675 = vand.u32 %v4722, 4294901760
          %v5676 = vsub.f32 %v4722, %v5675
          %v5677 = vand.u32 %v5676, 4294901760
          %5678 = vmatpush1.msra.mxu0 %v5677
          %5679 = vmatprep.subr.mxu0 0.0
          %v5680 = vand.u32 %v4723, 4294901760
          %v5681 = vsub.f32 %v4723, %v5680
          %v5682 = vand.u32 %v5681, 4294901760
          %5683 = vmatpush1.msra.mxu0 %v5682
          %5684 = vmatprep.subr.mxu0 0.0
          %v5685 = vand.u32 %v4724, 4294901760
          %v5686 = vsub.f32 %v4724, %v5685
          %v5687 = vand.u32 %v5686, 4294901760
          %5688 = vmatpush1.msra.mxu0 %v5687
          %5689 = vmatprep.subr.mxu0 0.0
          %v5690 = vand.u32 %v4725, 4294901760
          %v5691 = vsub.f32 %v4725, %v5690
          %v5692 = vand.u32 %v5691, 4294901760
          %5693 = vmatpush1.msra.mxu0 %v5692
          %5694 = vmatprep.subr.mxu0 0.0
          %v5695 = vand.u32 %v4726, 4294901760
          %v5696 = vsub.f32 %v4726, %v5695
          %v5697 = vand.u32 %v5696, 4294901760
          %5698 = vmatpush1.msra.mxu0 %v5697
          %5699 = vmatprep.subr.mxu0 0.0
          %v5700 = vand.u32 %v4727, 4294901760
          %v5701 = vsub.f32 %v4727, %v5700
          %v5702 = vand.u32 %v5701, 4294901760
          %5703 = vmatpush1.msra.mxu0 %v5702
          %5704 = vmatprep.subr.mxu0 0.0
          %v5705 = vand.u32 %v4728, 4294901760
          %v5706 = vsub.f32 %v4728, %v5705
          %v5707 = vand.u32 %v5706, 4294901760
          %5708 = vmatpush1.msra.mxu0 %v5707
          %5709 = vmatprep.subr.mxu0 0.0
          %5710 = vmatpush1.msra.mxu0 0.0
          %5711 = vmatprep.subr.mxu0 0.0
          %5712 = vmatpush1.msra.mxu0 0.0
          %5713 = vmatprep.subr.mxu0 0.0
          %5714 = vmatpush1.msra.mxu0 0.0
          %5715 = vmatprep.subr.mxu0 0.0
          %5716 = vmatpush1.msra.mxu0 0.0
          %5717 = vmatprep.subr.mxu0 0.0
          %5718 = vmatpush1.msra.mxu0 0.0
          %5719 = vmatprep.subr.mxu0 0.0
          %5720 = vmatpush1.msra.mxu0 0.0
          %5721 = vmatprep.subr.mxu0 0.0
          %5722 = vmatpush1.msra.mxu0 0.0
          %5723 = vmatprep.subr.mxu0 0.0
          %5724 = vmatpush1.msra.mxu0 0.0
          %5725 = vmatprep.subr.mxu0 0.0
          %5726 = vmatpush1.msra.mxu0 0.0
          %5727 = vmatprep.subr.mxu0 0.0
          %5728 = vmatpush1.msra.mxu0 0.0
          %5729 = vmatprep.subr.mxu0 0.0
          %5730 = vmatpush1.msra.mxu0 0.0
          %5731 = vmatprep.subr.mxu0 0.0
          %5732 = vmatpush1.msra.mxu0 0.0
          %5733 = vmatprep.subr.mxu0 0.0
          %5734 = vmatpush1.msra.mxu0 0.0
          %5735 = vmatprep.subr.mxu0 0.0
          %5736 = vmatpush1.msra.mxu0 0.0
          %5737 = vmatprep.subr.mxu0 0.0
          %5738 = vmatpush1.msra.mxu0 0.0
          %5739 = vmatprep.subr.mxu0 0.0
          %5740 = vmatpush1.msra.mxu0 0.0
          %5741 = vmatprep.mubr.f32.mxu0 0.0
          %v5742 = vand.u32 %v4681, 4294901760
          %5743 = vmatmul.mubr.f32.gmra.mrb[0].mxu0 %v5742
          %v5744 = vpop.f32.mrb[0].mxu0
          %v5745 = vadd.f32 %v5506, %v5744
          %v5746 = vpop.f32.mrb[0].mxu0
          %5747 = vmatprep.mubr.f32.mxu0 0.0
          %v5748 = vand.u32 %v4682, 4294901760
          %5749 = vmatmul.mubr.f32.gmra.mrb[0].mxu0 %v5748
          %v5750 = vpop.f32.mrb[0].mxu0
          %v5751 = vadd.f32 %v5514, %v5750
          %v5752 = vpop.f32.mrb[0].mxu0
          %5753 = vmatprep.mubr.f32.mxu0 0.0
          %v5754 = vand.u32 %v4683, 4294901760
          %5755 = vmatmul.mubr.f32.gmra.mrb[0].mxu0 %v5754
          %v5756 = vpop.f32.mrb[0].mxu0
          %v5757 = vadd.f32 %v5522, %v5756
          %v5758 = vpop.f32.mrb[0].mxu0
          %5759 = vmatprep.mubr.f32.mxu0 0.0
          %v5760 = vand.u32 %v4684, 4294901760
          %5761 = vmatmul.mubr.f32.gmra.mrb[0].mxu0 %v5760
          %v5762 = vpop.f32.mrb[0].mxu0
          %v5763 = vadd.f32 %v5530, %v5762
          %v5764 = vpop.f32.mrb[0].mxu0
          %5765 = vmatprep.mubr.f32.mxu0 0.0
          %v5766 = vand.u32 %v4685, 4294901760
          %5767 = vmatmul.mubr.f32.gmra.mrb[0].mxu0 %v5766
          %v5768 = vpop.f32.mrb[0].mxu0
          %v5769 = vadd.f32 %v5538, %v5768
          %v5770 = vpop.f32.mrb[0].mxu0
          %5771 = vmatprep.mubr.f32.mxu0 0.0
          %v5772 = vand.u32 %v4686, 4294901760
          %5773 = vmatmul.mubr.f32.gmra.mrb[0].mxu0 %v5772
          %v5774 = vpop.f32.mrb[0].mxu0
          %v5775 = vadd.f32 %v5546, %v5774
          %v5776 = vpop.f32.mrb[0].mxu0
          %5777 = vmatprep.mubr.f32.mxu0 0.0
          %v5778 = vand.u32 %v4687, 4294901760
          %5779 = vmatmul.mubr.f32.gmra.mrb[0].mxu0 %v5778
          %v5780 = vpop.f32.mrb[0].mxu0
          %v5781 = vadd.f32 %v5554, %v5780
          %v5782 = vpop.f32.mrb[0].mxu0
          %5783 = vmatprep.mubr.f32.mxu0 0.0
          %v5784 = vand.u32 %v4688, 4294901760
          %5785 = vmatmul.mubr.f32.gmra.mrb[0].mxu0 %v5784
          %v5786 = vpop.f32.mrb[0].mxu0
          %v5787 = vadd.f32 %v5562, %v5786
          %v5788 = vpop.f32.mrb[0].mxu0
          %5789 = vmatprep.mubr.f32.mxu0 0.0
          %v5790 = vand.u32 %v4689, 4294901760
          %5791 = vmatmul.mubr.f32.gmra.mrb[0].mxu0 %v5790
          %v5792 = vpop.f32.mrb[0].mxu0
          %v5793 = vadd.f32 %v5570, %v5792
          %v5794 = vpop.f32.mrb[0].mxu0
          %5795 = vmatprep.mubr.f32.mxu0 0.0
          %v5796 = vand.u32 %v4690, 4294901760
          %5797 = vmatmul.mubr.f32.gmra.mrb[0].mxu0 %v5796
          %v5798 = vpop.f32.mrb[0].mxu0
          %v5799 = vadd.f32 %v5578, %v5798
          %v5800 = vpop.f32.mrb[0].mxu0
          %5801 = vmatprep.mubr.f32.mxu0 0.0
          %v5802 = vand.u32 %v4691, 4294901760
          %5803 = vmatmul.mubr.f32.gmra.mrb[0].mxu0 %v5802
          %v5804 = vpop.f32.mrb[0].mxu0
          %v5805 = vadd.f32 %v5586, %v5804
          %v5806 = vpop.f32.mrb[0].mxu0
          %5807 = vmatprep.mubr.f32.mxu0 0.0
          %v5808 = vand.u32 %v4692, 4294901760
          %5809 = vmatmul.mubr.f32.gmra.mrb[0].mxu0 %v5808
          %v5810 = vpop.f32.mrb[0].mxu0
          %v5811 = vadd.f32 %v5594, %v5810
          %v5812 = vpop.f32.mrb[0].mxu0
          %5813 = vmatprep.mubr.f32.mxu0 0.0
          %v5814 = vand.u32 %v4693, 4294901760
          %5815 = vmatmul.mubr.f32.gmra.mrb[0].mxu0 %v5814
          %v5816 = vpop.f32.mrb[0].mxu0
          %v5817 = vadd.f32 %v5602, %v5816
          %v5818 = vpop.f32.mrb[0].mxu0
          %5819 = vmatprep.mubr.f32.mxu0 0.0
          %v5820 = vand.u32 %v4694, 4294901760
          %5821 = vmatmul.mubr.f32.gmra.mrb[0].mxu0 %v5820
          %v5822 = vpop.f32.mrb[0].mxu0
          %v5823 = vadd.f32 %v5610, %v5822
          %v5824 = vpop.f32.mrb[0].mxu0
          %5825 = vmatprep.mubr.f32.mxu0 0.0
          %v5826 = vand.u32 %v4695, 4294901760
          %5827 = vmatmul.mubr.f32.gmra.mrb[0].mxu0 %v5826
          %v5828 = vpop.f32.mrb[0].mxu0
          %v5829 = vadd.f32 %v5618, %v5828
          %v5830 = vpop.f32.mrb[0].mxu0
          %5831 = vmatprep.mubr.f32.mxu0 0.0
          %v5832 = vand.u32 %v4696, 4294901760
          %5833 = vmatmul.mubr.f32.gmra.mrb[0].mxu0 %v5832
          %v5834 = vpop.f32.mrb[0].mxu0
          %v5835 = vadd.f32 %v5626, %v5834
          %v5836 = vpop.f32.mrb[0].mxu0
          %5837 = vdwg.mxu0
          %5838 = vmatprep.subr.mxu0 0.0
          %v5839 = vand.u32 %v4713, 4294901760
          %5840 = vmatpush1.msra.mxu0 %v5839
          %5841 = vmatprep.subr.mxu0 0.0
          %v5842 = vand.u32 %v4714, 4294901760
          %5843 = vmatpush1.msra.mxu0 %v5842
          %5844 = vmatprep.subr.mxu0 0.0
          %v5845 = vand.u32 %v4715, 4294901760
          %5846 = vmatpush1.msra.mxu0 %v5845
          %5847 = vmatprep.subr.mxu0 0.0
          %v5848 = vand.u32 %v4716, 4294901760
          %5849 = vmatpush1.msra.mxu0 %v5848
          %5850 = vmatprep.subr.mxu0 0.0
          %v5851 = vand.u32 %v4717, 4294901760
          %5852 = vmatpush1.msra.mxu0 %v5851
          %5853 = vmatprep.subr.mxu0 0.0
          %v5854 = vand.u32 %v4718, 4294901760
          %5855 = vmatpush1.msra.mxu0 %v5854
          %5856 = vmatprep.subr.mxu0 0.0
          %v5857 = vand.u32 %v4719, 4294901760
          %5858 = vmatpush1.msra.mxu0 %v5857
          %5859 = vmatprep.subr.mxu0 0.0
          %v5860 = vand.u32 %v4720, 4294901760
          %5861 = vmatpush1.msra.mxu0 %v5860
          %5862 = vmatprep.subr.mxu0 0.0
          %v5863 = vand.u32 %v4721, 4294901760
          %5864 = vmatpush1.msra.mxu0 %v5863
          %5865 = vmatprep.subr.mxu0 0.0
          %v5866 = vand.u32 %v4722, 4294901760
          %5867 = vmatpush1.msra.mxu0 %v5866
          %5868 = vmatprep.subr.mxu0 0.0
          %v5869 = vand.u32 %v4723, 4294901760
          %5870 = vmatpush1.msra.mxu0 %v5869
          %5871 = vmatprep.subr.mxu0 0.0
          %v5872 = vand.u32 %v4724, 4294901760
          %5873 = vmatpush1.msra.mxu0 %v5872
          %5874 = vmatprep.subr.mxu0 0.0
          %v5875 = vand.u32 %v4725, 4294901760
          %5876 = vmatpush1.msra.mxu0 %v5875
          %5877 = vmatprep.subr.mxu0 0.0
          %v5878 = vand.u32 %v4726, 4294901760
          %5879 = vmatpush1.msra.mxu0 %v5878
          %5880 = vmatprep.subr.mxu0 0.0
          %v5881 = vand.u32 %v4727, 4294901760
          %5882 = vmatpush1.msra.mxu0 %v5881
          %5883 = vmatprep.subr.mxu0 0.0
          %v5884 = vand.u32 %v4728, 4294901760
          %5885 = vmatpush1.msra.mxu0 %v5884
          %5886 = vmatprep.subr.mxu0 0.0
          %5887 = vmatpush1.msra.mxu0 0.0
          %5888 = vmatprep.subr.mxu0 0.0
          %5889 = vmatpush1.msra.mxu0 0.0
          %5890 = vmatprep.subr.mxu0 0.0
          %5891 = vmatpush1.msra.mxu0 0.0
          %5892 = vmatprep.subr.mxu0 0.0
          %5893 = vmatpush1.msra.mxu0 0.0
          %5894 = vmatprep.subr.mxu0 0.0
          %5895 = vmatpush1.msra.mxu0 0.0
          %5896 = vmatprep.subr.mxu0 0.0
          %5897 = vmatpush1.msra.mxu0 0.0
          %5898 = vmatprep.subr.mxu0 0.0
          %5899 = vmatpush1.msra.mxu0 0.0
          %5900 = vmatprep.subr.mxu0 0.0
          %5901 = vmatpush1.msra.mxu0 0.0
          %5902 = vmatprep.subr.mxu0 0.0
          %5903 = vmatpush1.msra.mxu0 0.0
          %5904 = vmatprep.subr.mxu0 0.0
          %5905 = vmatpush1.msra.mxu0 0.0
          %5906 = vmatprep.subr.mxu0 0.0
          %5907 = vmatpush1.msra.mxu0 0.0
          %5908 = vmatprep.subr.mxu0 0.0
          %5909 = vmatpush1.msra.mxu0 0.0
          %5910 = vmatprep.subr.mxu0 0.0
          %5911 = vmatpush1.msra.mxu0 0.0
          %5912 = vmatprep.subr.mxu0 0.0
          %5913 = vmatpush1.msra.mxu0 0.0
          %5914 = vmatprep.subr.mxu0 0.0
          %5915 = vmatpush1.msra.mxu0 0.0
          %5916 = vmatprep.subr.mxu0 0.0
          %5917 = vmatpush1.msra.mxu0 0.0
          %5918 = vmatprep.mubr.f32.mxu0 0.0
          %v5919 = vand.u32 %v4681, 4294901760
          %5920 = vmatmul.mubr.f32.gmra.mrb[0].mxu0 %v5919
          %v5921 = vpop.f32.mrb[0].mxu0
          %v5922 = vadd.f32 %v5745, %v5921
          %v5923 = vpop.f32.mrb[0].mxu0
          %5924 = vmatprep.mubr.f32.mxu0 0.0
          %v5925 = vand.u32 %v4682, 4294901760
          %5926 = vmatmul.mubr.f32.gmra.mrb[0].mxu0 %v5925
          %v5927 = vpop.f32.mrb[0].mxu0
          %v5928 = vadd.f32 %v5751, %v5927
          %v5929 = vpop.f32.mrb[0].mxu0
          %5930 = vmatprep.mubr.f32.mxu0 0.0
          %v5931 = vand.u32 %v4683, 4294901760
          %5932 = vmatmul.mubr.f32.gmra.mrb[0].mxu0 %v5931
          %v5933 = vpop.f32.mrb[0].mxu0
          %v5934 = vadd.f32 %v5757, %v5933
          %v5935 = vpop.f32.mrb[0].mxu0
          %5936 = vmatprep.mubr.f32.mxu0 0.0
          %v5937 = vand.u32 %v4684, 4294901760
          %5938 = vmatmul.mubr.f32.gmra.mrb[0].mxu0 %v5937
          %v5939 = vpop.f32.mrb[0].mxu0
          %v5940 = vadd.f32 %v5763, %v5939
          %v5941 = vpop.f32.mrb[0].mxu0
          %5942 = vmatprep.mubr.f32.mxu0 0.0
          %v5943 = vand.u32 %v4685, 4294901760
          %5944 = vmatmul.mubr.f32.gmra.mrb[0].mxu0 %v5943
          %v5945 = vpop.f32.mrb[0].mxu0
          %v5946 = vadd.f32 %v5769, %v5945
          %v5947 = vpop.f32.mrb[0].mxu0
          %5948 = vmatprep.mubr.f32.mxu0 0.0
          %v5949 = vand.u32 %v4686, 4294901760
          %5950 = vmatmul.mubr.f32.gmra.mrb[0].mxu0 %v5949
          %v5951 = vpop.f32.mrb[0].mxu0
          %v5952 = vadd.f32 %v5775, %v5951
          %v5953 = vpop.f32.mrb[0].mxu0
          %5954 = vmatprep.mubr.f32.mxu0 0.0
          %v5955 = vand.u32 %v4687, 4294901760
          %5956 = vmatmul.mubr.f32.gmra.mrb[0].mxu0 %v5955
          %v5957 = vpop.f32.mrb[0].mxu0
          %v5958 = vadd.f32 %v5781, %v5957
          %v5959 = vpop.f32.mrb[0].mxu0
          %5960 = vmatprep.mubr.f32.mxu0 0.0
          %v5961 = vand.u32 %v4688, 4294901760
          %5962 = vmatmul.mubr.f32.gmra.mrb[0].mxu0 %v5961
          %v5963 = vpop.f32.mrb[0].mxu0
          %v5964 = vadd.f32 %v5787, %v5963
          %v5965 = vpop.f32.mrb[0].mxu0
          %5966 = vmatprep.mubr.f32.mxu0 0.0
          %v5967 = vand.u32 %v4689, 4294901760
          %5968 = vmatmul.mubr.f32.gmra.mrb[0].mxu0 %v5967
          %v5969 = vpop.f32.mrb[0].mxu0
          %v5970 = vadd.f32 %v5793, %v5969
          %v5971 = vpop.f32.mrb[0].mxu0
          %5972 = vmatprep.mubr.f32.mxu0 0.0
          %v5973 = vand.u32 %v4690, 4294901760
          %5974 = vmatmul.mubr.f32.gmra.mrb[0].mxu0 %v5973
          %v5975 = vpop.f32.mrb[0].mxu0
          %v5976 = vadd.f32 %v5799, %v5975
          %v5977 = vpop.f32.mrb[0].mxu0
          %5978 = vmatprep.mubr.f32.mxu0 0.0
          %v5979 = vand.u32 %v4691, 4294901760
          %5980 = vmatmul.mubr.f32.gmra.mrb[0].mxu0 %v5979
          %v5981 = vpop.f32.mrb[0].mxu0
          %v5982 = vadd.f32 %v5805, %v5981
          %v5983 = vpop.f32.mrb[0].mxu0
          %5984 = vmatprep.mubr.f32.mxu0 0.0
          %v5985 = vand.u32 %v4692, 4294901760
          %5986 = vmatmul.mubr.f32.gmra.mrb[0].mxu0 %v5985
          %v5987 = vpop.f32.mrb[0].mxu0
          %v5988 = vadd.f32 %v5811, %v5987
          %v5989 = vpop.f32.mrb[0].mxu0
          %5990 = vmatprep.mubr.f32.mxu0 0.0
          %v5991 = vand.u32 %v4693, 4294901760
          %5992 = vmatmul.mubr.f32.gmra.mrb[0].mxu0 %v5991
          %v5993 = vpop.f32.mrb[0].mxu0
          %v5994 = vadd.f32 %v5817, %v5993
          %v5995 = vpop.f32.mrb[0].mxu0
          %5996 = vmatprep.mubr.f32.mxu0 0.0
          %v5997 = vand.u32 %v4694, 4294901760
          %5998 = vmatmul.mubr.f32.gmra.mrb[0].mxu0 %v5997
          %v5999 = vpop.f32.mrb[0].mxu0
          %v6000 = vadd.f32 %v5823, %v5999
          %v6001 = vpop.f32.mrb[0].mxu0
          %6002 = vmatprep.mubr.f32.mxu0 0.0
          %v6003 = vand.u32 %v4695, 4294901760
          %6004 = vmatmul.mubr.f32.gmra.mrb[0].mxu0 %v6003
          %v6005 = vpop.f32.mrb[0].mxu0
          %v6006 = vadd.f32 %v5829, %v6005
          %v6007 = vpop.f32.mrb[0].mxu0
          %6008 = vmatprep.mubr.f32.mxu0 0.0
          %v6009 = vand.u32 %v4696, 4294901760
          %6010 = vmatmul.mubr.f32.gmra.mrb[0].mxu0 %v6009
          %v6011 = vpop.f32.mrb[0].mxu0
          %v6012 = vadd.f32 %v5835, %v6011
          %v6013 = vpop.f32.mrb[0].mxu0
          %6014 = vdwg.mxu0
          %v6015 = vadd.f32 %v4633, %v5922
          %v6016 = vadd.f32 %v4634, %v5928
          %v6017 = vadd.f32 %v4635, %v5934
          %v6018 = vadd.f32 %v4636, %v5940
          %v6019 = vadd.f32 %v4637, %v5946
          %v6020 = vadd.f32 %v4638, %v5952
          %v6021 = vadd.f32 %v4639, %v5958
          %v6022 = vadd.f32 %v4640, %v5964
          %v6023 = vadd.f32 %v4641, %v5970
          %v6024 = vadd.f32 %v4642, %v5976
          %v6025 = vadd.f32 %v4643, %v5982
          %v6026 = vadd.f32 %v4644, %v5988
          %v6027 = vadd.f32 %v4645, %v5994
          %v6028 = vadd.f32 %v4646, %v6000
          %v6029 = vadd.f32 %v4647, %v6006
          %v6030 = vadd.f32 %v4648, %v6012
          %6031 = vst [vmem:[%s297] sm:$0xff] %v6015
          %6032 = vst [vmem:[%s297 + $0x8] sm:$0xff] %v6016
          %6033 = vst [vmem:[%s297 + $0x10] sm:$0xff] %v6017
          %6034 = vst [vmem:[%s297 + $0x18] sm:$0xff] %v6018
          %6035 = vst [vmem:[%s297 + $0x20] sm:$0xff] %v6019
          %6036 = vst [vmem:[%s297 + $0x28] sm:$0xff] %v6020
          %6037 = vst [vmem:[%s297 + $0x30] sm:$0xff] %v6021
          %6038 = vst [vmem:[%s297 + $0x38] sm:$0xff] %v6022
          %6039 = vst [vmem:[%s297 + $0x40] sm:$0xff] %v6023
          %6040 = vst [vmem:[%s297 + $0x48] sm:$0xff] %v6024
          %6041 = vst [vmem:[%s297 + $0x50] sm:$0xff] %v6025
          %6042 = vst [vmem:[%s297 + $0x58] sm:$0xff] %v6026
          %6043 = vst [vmem:[%s297 + $0x60] sm:$0xff] %v6027
          %6044 = vst [vmem:[%s297 + $0x68] sm:$0xff] %v6028
          %6045 = vst [vmem:[%s297 + $0x70] sm:$0xff] %v6029
          %6046 = vst [vmem:[%s297 + $0x78] sm:$0xff] %v6030
        $region60: #{tpu_custom_call.1} parent=27 // pred_fallthru
          _
        %s6047 = sand.u32 %s157, 1
        %s6048 = scalar_lea.sflag [#allocation9], %s6047
        %s6049 = sand.u32 %s157, 1
        %s6050 = smul.addr %s6049, 128
        %s6051 = scalar_lea.vmem [#allocation12], %s6050
        // Predicated region
        $region61: #{tpu_custom_call.1} parent=27 // pred_check
          %p6052 = pneg %p167
        $region62: #{tpu_custom_call.1} parent=27 // pred_check_branch
          %6054 = sbr.rel (%p6052) target = $region64
        $region63: #{tpu_custom_call.1} parent=27 // pred_region
          %s6055 = smul.u32 %s41, 16
          %s6056 = sadd.s32 %s6055, %s42
          %s6057 = sld [smem:[#allocation4 + %s6056]]
          %s6058 = sld [smem:[#allocation5 + %s6056]]
          %s6059 = smul.u32 16, %s6057
          %s6061 = ssub.s32 2048, 2048
          %6062 = vsyncadd %s6048, %s6061
          %s6063 = smul.addr %s6059, 4
          %s6064 = sadd.s32 %s6058, %s6063
          %s6065 = smul.addr %s6064, 128
          %s6066 = scalar_lea.hbm %s5, %s6065
          %s6067 = sshll.u32 %s6051, 4
          %s6068 = int_to_ptr.vmem [resolvable:$true] %s6067
          %6073 = dma.vmem_to_hbm [thread:$0]  %s6068, 2048, %s6066, %s6048, 128, 512, 8
        $region64: #{tpu_custom_call.1} parent=27 // pred_fallthru
          _
      $region28: #{tpu_custom_call.1} parent=5 // pred_fallthru
        _
      %p6074 = scmp.le.s32.totalorder 2, %s32
      // Predicated region
      $region65: #{tpu_custom_call.1} parent=5 // pred_check
        %p6075 = pneg %p6074
      $region66: #{tpu_custom_call.1} parent=5 // pred_check_branch
        %6077 = sbr.rel (%p6075) target = $region68
      $region67: #{tpu_custom_call.1} parent=5 // pred_region
        %s6078 = ssub.s32 %s32, 2
        // Predicated region
        $region69: #{tpu_custom_call.1} parent=67 // pred_check
          %p6079 = pneg %p173
        $region70: #{tpu_custom_call.1} parent=67 // pred_check_branch
          %6081 = sbr.rel (%p6079) target = $region72
        $region71: #{tpu_custom_call.1} parent=67 // pred_region
          %s6082 = sand.u32 %s158, 1
          %s6083 = scalar_lea.sflag [#allocation9], %s6082
          %s6084 = sand.u32 %s158, 1
          %s6085 = smul.addr %s6084, 128
          %s6086 = scalar_lea.vmem [#allocation12], %s6085
          %6087 = dma.done %s6083, 2048
        $region72: #{tpu_custom_call.1} parent=67 // pred_fallthru
          _
      $region68: #{tpu_custom_call.1} parent=5 // pred_fallthru
        _
    $region6: #{tpu_custom_call.1} parent=1 // loop_footer
      %s36 = sadd.s32 1, %s32
    $region7: #{tpu_custom_call.1} parent=1 // loop_footer_branch
      %31 = sbr.rel target = $region3
    $region8: #{tpu_custom_call.1} parent=1 // loop_exit
      _
    %6088 = vsyncpa [#allocation8], 1
    %s6089 = scalar_lea.sflag [#allocation8], 1
    %6090 = vsyncpa %s6089, 1
    %6091 = vsyncpa [#allocation11], 1
    %s6092 = scalar_lea.sflag [#allocation11], 1
    %6093 = vsyncpa %s6092, 1
    %6094 = vsyncpa [#allocation9], 1
    %s6095 = scalar_lea.sflag [#allocation9], 1
    %6096 = vsyncpa %s6095, 1

</llo_original>
